<compile_context>
chip_gen: v7x
topology: tpu7x:2x2x1
jax: 0.10.0
libtpu: 0.0.40
codegen_flags: <defaults>
</compile_context>

<pallas_src>
import functools

import numpy as np

import jax
import jax.numpy as jnp
from jax import lax
from jax.experimental import pallas as pl
from jax.experimental.pallas import tpu as pltpu


# Use the Pallas kernel only when the packed spatial size fills at least one
# full 128-lane row; below that every vreg / store is mostly padding and the
# per-call overhead dominates, so XLA handles those deep, tiny levels.
_MIN_DHW_FOR_PALLAS = 128


# ---------------------------------------------------------------------------
# Padded "halo" layout helpers (XLA side)
# ---------------------------------------------------------------------------

def _padded_dims(sp):
    D, H, W = sp
    ROW = W + 2
    PLANE = (H + 2) * ROW
    P = (D + 2) * PLANE
    return ROW, PLANE, P


def pad5(x, sp):
    """(N, C, D, H, W) packed -> (N, C, P) flattened padded layout, zero halo."""
    D, H, W = sp
    N, C = x.shape[:2]
    xp = jnp.pad(x, ((0, 0), (0, 0), (1, 1), (1, 1), (1, 1)))
    return xp.reshape(N, C, (D + 2) * (H + 2) * (W + 2)).astype(jnp.float32)


def unpad5(y, sp):
    """(N, C, P) padded layout -> (N, C, D, H, W) packed."""
    D, H, W = sp
    N, C = y.shape[:2]
    y = y.reshape(N, C, D + 2, H + 2, W + 2)
    return y[:, :, 1:D + 1, 1:H + 1, 1:W + 1]


def _halo_mask(sp):
    """(1, P) float mask: 1 at real voxels of the padded grid, 0 on the halo."""
    D, H, W = sp
    m = np.zeros((D + 2, H + 2, W + 2), np.float32)
    m[1:D + 1, 1:H + 1, 1:W + 1] = 1.0
    return jnp.asarray(m.reshape(1, -1))


# ---------------------------------------------------------------------------
# Fused conv-chain Pallas kernel
# ---------------------------------------------------------------------------

def _conv_chain_kernel(*refs, cins, chans, P, ROW, PLANE, G, last_act):
    """Chain of 3x3x3 'same' Conv3d + bias + ELU layers for ONE batch element;
    the final layer may instead apply a channel softmax.

    Layout: channels on sublanes, flattened padded (D+2)*(H+2)*(W+2) spatial
    axis on lanes.

    refs (in order):
      x_refs[i] : (1, cins[i], P)              input parts (channel concat)
      m_ref     : (1, P)                       halo mask (1 = real voxel)
      w_ref[l]  : (9, chans[l+1], 3*chans[l])  bf16 weights, kh stacked on K
      b_ref[l]  : (chans[l+1], 1)              f32 bias
      o_ref     : (1, chans[-1], P)            output
      stk_ref   : (3*max_cin, P + 2G) bf16     stacked / guarded staging buffer
    """
    nin = len(cins)
    nl = len(chans) - 1
    x_refs = refs[:nin]
    m_ref = refs[nin]
    w_refs = [refs[nin + 1 + 2 * i] for i in range(nl)]
    b_refs = [refs[nin + 2 + 2 * i] for i in range(nl)]
    o_ref = refs[nin + 1 + 2 * nl]
    stk_ref = refs[nin + 2 + 2 * nl]

    keep = m_ref[...] > 0.5          # (1, P) bool, hoisted out of the layer loop

    act = None
    for li in range(nl):
        cin, cout = chans[li], chans[li + 1]
        K = 3 * cin

        # --- stage THREE row(kh)-shifted bf16 copies of the layer input -----
        # After staging:   stk[kh*cin + c, G + s] == x_in[c, s + (kh-1)*ROW]
        # for every column s a *real* output voxel can touch, so the kd / kw
        # tap shifts become free lane-slices of this one stacked buffer.
        # The guard columns ([0,G) and [G+P, G+2G)) are never read for real
        # output voxels and are therefore never initialized (the halo
        # jnp.where below squashes anything computed from them).
        src_cs = cins if li == 0 else (cin,)
        for kh in range(3):
            dh = kh - 1
            roff = kh * cin
            for p in range(len(src_cs)):
                c = src_cs[p]
                if li == 0:
                    src = lambda a, b: x_refs[p][0, :, a:b].astype(stk_ref.dtype)
                else:
                    src = lambda a, b: act[:, a:b].astype(stk_ref.dtype)
                if dh == 0:
                    stk_ref[roff:roff + c, G:G + P] = src(0, P)
                elif dh == 1:
                    stk_ref[roff:roff + c, G:G + P - ROW] = src(ROW, P)
                else:  # dh == -1
                    stk_ref[roff:roff + c, G + ROW:G + P] = src(0, P - ROW)
                roff += c

        # --- 9 MXU matmuls with K = 3*cin (kh stacked on the contraction) ---
        acc = None
        for kd in range(3):
            for kw in range(3):
                start = G + (kd - 1) * PLANE + (kw - 1)
                rhs = stk_ref[0:K, start:start + P]        # bf16 (K, P)
                lhs = w_refs[li][kd * 3 + kw]              # bf16 (cout, K)
                if K >= 8:
                    d = jnp.dot(lhs, rhs, preferred_element_type=jnp.float32)
                else:
                    # degenerate K (first conv, cin=1): outer-product path
                    d = None
                    for k in range(K):
                        t = (lhs[:, k:k + 1].astype(jnp.float32) *
                             rhs[k:k + 1, :].astype(jnp.float32))
                        d = t if d is None else d + t
                acc = d if acc is None else acc + d

        # --- bias + activation, fused ---------------------------------------
        z = acc + b_refs[li][...]                          # (cout, P) f32
        if li == nl - 1 and last_act == "softmax":
            z = z - jnp.max(z, axis=0, keepdims=True)
            e = jnp.exp(z)
            y = e / jnp.sum(e, axis=0, keepdims=True)
        else:
            y = jnp.where(z > 0.0, z, jnp.exp(jnp.minimum(z, 0.0)) - 1.0)  # ELU
        # Re-zero the halo (also squashes anything computed from the
        # never-initialized guard columns).  Single where per layer instead of
        # 27 per-tap mask multiplies.
        act = jnp.where(keep, y, 0.0)

    o_ref[0] = act.astype(o_ref.dtype)


def conv_chain_pallas(parts, layers, sp, *, last_act="elu"):
    """Run a chain of 3x3x3 'same' Conv3d+ELU layers (last optionally softmax)
    as ONE fused pallas_call.  `parts` are padded-layout (N, C_i, P) arrays
    whose channels are concatenated inside the kernel; `layers` is a list of
    (w27, b) with w27: (27, Cout, Cin), b: (Cout, 1).  Returns padded (N, C, P).
    """
    D, H, W = sp
    ROW, PLANE, P = _padded_dims(sp)
    N = int(parts[0].shape[0])
    cins = tuple(int(p.shape[1]) for p in parts)
    chans = [sum(cins)] + [int(w.shape[1]) for w, _ in layers]
    nl = len(layers)
    G = ((PLANE + 1 + 127) // 128) * 128      # lane-aligned guard width
    GP = P + 2 * G
    cmax = max(chans[:-1])
    mask = _halo_mask(sp)

    # Pre-stack the weights: wstk[kd*3+kw, o, kh*cin + i] = w27[(kd*3+kh)*3+kw, o, i]
    wstk, biases = [], []
    for li, (w27, b) in enumerate(layers):
        cout, cin = int(w27.shape[1]), int(w27.shape[2])
        assert (cout, cin) == (chans[li + 1], chans[li])
        w = jnp.transpose(w27.reshape(3, 3, 3, cout, cin), (0, 2, 3, 1, 4))
        wstk.append(w.reshape(9, cout, 3 * cin).astype(jnp.bfloat16))
        biases.append(b.astype(jnp.float32))

    kernel = functools.partial(
        _conv_chain_kernel, cins=cins, chans=tuple(chans), P=P, ROW=ROW,
        PLANE=PLANE, G=G, last_act=last_act)

    in_specs = [pl.BlockSpec((1, c, P), lambda n: (n, 0, 0)) for c in cins]
    args = [p.astype(jnp.float32) for p in parts]
    in_specs.append(pl.BlockSpec((1, P), lambda n: (0, 0)))
    args.append(mask)
    for w, b in zip(wstk, biases):
        in_specs.append(pl.BlockSpec(tuple(w.shape), lambda n: (0, 0, 0)))
        args.append(w)
        in_specs.append(pl.BlockSpec(tuple(b.shape), lambda n: (0, 0)))
        args.append(b)

    # Explicit VMEM budget (review: v7x has 64 MiB physical) with ~2x headroom,
    # capped so the same figure is valid on v5e / v6e / v7x.
    bytes_io = 4 * P * (sum(cins) + 1 + chans[-1])
    bytes_w = sum(int(np.prod(w.shape)) * 2 + int(np.prod(b.shape)) * 4
                  for w, b in zip(wstk, biases))
    bytes_stk = 3 * cmax * GP * 2
    bytes_tmp = 6 * max(chans[1:]) * P * 4          # acc / act / exp temporaries
    vmem_budget = 2 * (bytes_io + bytes_w) + bytes_stk + bytes_tmp + (8 << 20)
    vmem_budget = int(max(32 << 20, min(vmem_budget, 64 << 20)))

    out = pl.pallas_call(
        kernel,
        out_shape=jax.ShapeDtypeStruct((N, chans[-1], P), jnp.float32),
        grid=(N,),
        in_specs=in_specs,
        out_specs=pl.BlockSpec((1, chans[-1], P), lambda n: (n, 0, 0)),
        scratch_shapes=[pltpu.VMEM((3 * cmax, GP), jnp.bfloat16)],
        compiler_params=pltpu.CompilerParams(
            dimension_semantics=("parallel",),
            vmem_limit_bytes=vmem_budget),
    )(*args)
    return out


# ---------------------------------------------------------------------------
# XLA conv (reference + fallback for the tiny deep levels)
# ---------------------------------------------------------------------------

def _conv3d_ref(x, w27, b, act="elu", quant=True):
    """3x3x3 'same' Conv3d + bias + activation on packed (N,C,D,H,W).
    With quant=True the operands are cast to bf16 (f32 accumulation) exactly
    like the Pallas kernel, so kernel-vs-reference comparisons are tight."""
    cout, cin = int(w27.shape[1]), int(w27.shape[2])
    w = jnp.transpose(w27, (1, 2, 0)).reshape(cout, cin, 3, 3, 3)
    if quant:
        x = x.astype(jnp.bfloat16)
        w = w.astype(jnp.bfloat16)
    y = lax.conv_general_dilated(
        x, w, (1, 1, 1), "SAME",
        dimension_numbers=("NCDHW", "OIDHW", "NCDHW"),
        preferred_element_type=jnp.float32)
    y = y + b.reshape(1, cout, 1, 1, 1)
    if act == "elu":
        return jax.nn.elu(y)
    if act == "softmax":
        return jax.nn.softmax(y, axis=1)
    return y


def conv_chain_xla(parts, layers, sp, *, last_act="elu"):
    x = jnp.concatenate([unpad5(p, sp) for p in parts], axis=1)
    for i, (w, b) in enumerate(layers):
        a = last_act if i == len(layers) - 1 else "elu"
        x = _conv3d_ref(x, w, b, act=a, quant=True)
    return pad5(x, sp)


def conv_chain(parts, layers, sp, *, last_act="elu"):
    D, H, W = sp
    if D * H * W >= _MIN_DHW_FOR_PALLAS:
        return conv_chain_pallas(parts, layers, sp, last_act=last_act)
    return conv_chain_xla(parts, layers, sp, last_act=last_act)


# ---------------------------------------------------------------------------
# Pool / unpool glue (plain JAX; data-dependent scatter -> no Pallas kernel)
# ---------------------------------------------------------------------------

def maxpool3d_with_argmax(x):
    """2x2x2 max pool (stride 2) returning values and the within-window argmax
    code (0..7, ordered dz*4 + dy*2 + dx)."""
    N, C, D, H, W = x.shape
    xr = x.reshape(N, C, D // 2, 2, H // 2, 2, W // 2, 2)
    xr = jnp.transpose(xr, (0, 1, 2, 4, 6, 3, 5, 7))
    xr = xr.reshape(N, C, D // 2, H // 2, W // 2, 8)
    vals = jnp.max(xr, axis=-1)
    idx = jnp.argmax(xr, axis=-1).astype(jnp.int32)
    return vals, idx


def maxunpool3d(vals, idx):
    """Place each pooled value back at its argmax location (zeros elsewhere)."""
    N, C, d, h, w = vals.shape
    onehot = (idx[..., None] == jnp.arange(8, dtype=jnp.int32)).astype(vals.dtype)
    out = vals[..., None] * onehot
    out = out.reshape(N, C, d, h, w, 2, 2, 2)
    out = jnp.transpose(out, (0, 1, 2, 5, 3, 6, 4, 7))
    return out.reshape(N, C, 2 * d, 2 * h, 2 * w)


# ---------------------------------------------------------------------------
# Parameters and forward pass
# ---------------------------------------------------------------------------

_CONV_DEFS = [
    ("first", 1, 64), ("down1", 64, 64), ("int1", 64, 64), ("down2", 64, 64),
    ("int2", 64, 64), ("down3", 64, 64), ("int3", 64, 64), ("up1", 128, 64),
    ("int4", 64, 64), ("up2", 128, 64), ("int5", 64, 64), ("up3", 128, 64),
    ("last", 64, 64), ("out", 64, 9),
]


def init_params(key):
    params = {}
    for name, cin, cout in _CONV_DEFS:
        key, kw_, kb_ = jax.random.split(key, 3)
        bound = float(np.sqrt(6.0 / (27 * cin)))
        w = jax.random.uniform(kw_, (27, cout, cin), jnp.float32, -bound, bound)
        b = jax.random.uniform(kb_, (cout, 1), jnp.float32, -bound, bound)
        params[name] = (w, b)
    return params


def hoffentlich_forward(params, x):
    """x: (N, 1, D, H, W) float32 (NCDHW, like the PyTorch module)."""
    N, _, D, H, W = x.shape
    p = params
    sp0 = (D, H, W)
    sp1 = (D // 2, H // 2, W // 2)
    sp2 = (D // 4, H // 4, W // 4)
    sp3 = (D // 8, H // 8, W // 8)

    # ---- encoder (activations between chains stay in the padded layout) ----
    data = conv_chain([pad5(x, sp0)], [p["first"]], sp0)
    pre1 = conv_chain([data], [p["down1"]], sp0)
    x1, idx1 = maxpool3d_with_argmax(unpad5(pre1, sp0))
    x2 = conv_chain([pad5(x1, sp1)], [p["int1"]], sp1)
    pre2 = conv_chain([x2], [p["down2"]], sp1)
    x3, idx2 = maxpool3d_with_argmax(unpad5(pre2, sp1))
    x4 = conv_chain([pad5(x3, sp2)], [p["int2"]], sp2)
    pre3 = conv_chain([x4], [p["down3"]], sp2)
    x5, idx3 = maxpool3d_with_argmax(unpad5(pre3, sp2))
    x6 = conv_chain([pad5(x5, sp3)], [p["int3"]], sp3)

    # ---- decoder (fused chains; intermediates never leave VMEM) ------------
    u1 = maxunpool3d(unpad5(x6, sp3), idx3)
    x8 = conv_chain([pad5(u1, sp2), x4], [p["up1"], p["int4"]], sp2)
    u2 = maxunpool3d(unpad5(x8, sp2), idx2)
    x10 = conv_chain([pad5(u2, sp1), x2], [p["up2"], p["int5"]], sp1)
    u3 = maxunpool3d(unpad5(x10, sp1), idx1)
    out_p = conv_chain([pad5(u3, sp0), data], [p["up3"], p["last"], p["out"]],
                       sp0, last_act="softmax")
    return unpad5(out_p, sp0)


# ---------------------------------------------------------------------------
# Pure-JAX (XLA) reference forward for correctness checking
# ---------------------------------------------------------------------------

def reference_forward(params, x, quant):
    p = params
    c = functools.partial(_conv3d_ref, quant=quant)
    data = c(x, *p["first"])
    pre1 = c(data, *p["down1"])
    x1, idx1 = maxpool3d_with_argmax(pre1)
    x2 = c(x1, *p["int1"])
    pre2 = c(x2, *p["down2"])
    x3, idx2 = maxpool3d_with_argmax(pre2)
    x4 = c(x3, *p["int2"])
    pre3 = c(x4, *p["down3"])
    x5, idx3 = maxpool3d_with_argmax(pre3)
    x6 = c(x5, *p["int3"])
    x7 = jnp.concatenate([maxunpool3d(x6, idx3), x4], axis=1)
    x8 = c(c(x7, *p["up1"]), *p["int4"])
    x9 = jnp.concatenate([maxunpool3d(x8, idx2), x2], axis=1)
    x10 = c(c(x9, *p["up2"]), *p["int5"])
    x11 = jnp.concatenate([maxunpool3d(x10, idx1), data], axis=1)
    x11 = c(x11, *p["up3"])
    x11 = c(x11, *p["last"])
    return c(x11, *p["out"], act="softmax")


# ---------------------------------------------------------------------------
# Direct kernel unit test (no pooling in between -> tight tolerance)
# ---------------------------------------------------------------------------

def _check_chain(key, cins, couts, sp, last_act, tol=2e-3):
    N = 2
    D, H, W = sp
    keys = jax.random.split(key, len(cins) + 2 * len(couts))
    ki = 0
    parts = []
    for c in cins:
        parts.append(jax.random.normal(keys[ki], (N, c, D, H, W), jnp.float32))
        ki += 1
    layers = []
    cin = sum(cins)
    for co in couts:
        bound = float(np.sqrt(6.0 / (27 * cin)))
        w = jax.random.uniform(keys[ki], (27, co, cin), jnp.float32, -bound, bound)
        ki += 1
        b = jax.random.uniform(keys[ki], (co, 1), jnp.float32, -bound, bound)
        ki += 1
        layers.append((w, b))
        cin = co
    got = unpad5(conv_chain_pallas([pad5(pt, sp) for pt in parts], layers, sp,
                                   last_act=last_act), sp)
    ref = jnp.concatenate(parts, axis=1)
    for i, (w, b) in enumerate(layers):
        a = last_act if i == len(layers) - 1 else "elu"
        ref = _conv3d_ref(ref, w, b, act=a, quant=True)
    err = float(jnp.max(jnp.abs(got - ref)))
    assert err < tol, (cins, couts, sp, err)


# ---------------------------------------------------------------------------

if __name__ == "__main__":
    key = jax.random.PRNGKey(0)
    key, pkey, xkey, k1, k2, k3, k4 = jax.random.split(key, 7)

    # --- unit tests of the fused conv-chain kernel vs the XLA reference ---
    _check_chain(k1, (1,), (64,), (8, 8, 8), "elu")          # cin=1 (K<8) path
    _check_chain(k2, (64,), (64,), (8, 8, 8), "elu")
    _check_chain(k3, (16,), (16,), (4, 8, 16), "elu")        # non-cubic volume
    _check_chain(k4, (64, 64), (64, 64, 9), (8, 8, 8), "softmax")  # fused decoder

    # --- end-to-end forward pass ---
    params = init_params(pkey)
    # PyTorch-style NCDHW input: batch=2, 1 channel, 8x8x8 volume
    # (spatial must be divisible by 8 for the three 2x downsamplings).
    x = jax.random.normal(xkey, (2, 1, 8, 8, 8), dtype=jnp.float32)

    fwd = jax.jit(hoffentlich_forward)
    out = jax.block_until_ready(fwd(params, x))
    assert out.shape == (2, 9, 8, 8, 8), out.shape
    assert bool(jnp.all(jnp.isfinite(out)))
    # channel softmax must sum to 1
    assert bool(jnp.all(jnp.abs(out.sum(axis=1) - 1.0) < 1e-3))

    # End-to-end vs. bf16-operand XLA reference.  Mean / fraction metrics are
    # used (instead of max-abs) so the check stays robust to a rare max-pool
    # argmax tie flip between two numerically-adjacent f32 paths.
    ref_q = jax.block_until_ready(
        jax.jit(lambda p_, x_: reference_forward(p_, x_, True))(params, x))
    diff = jnp.abs(out - ref_q)
    mean_err = float(jnp.mean(diff))
    frac_big = float(jnp.mean((diff > 0.1).astype(jnp.float32)))
    assert mean_err < 2e-2, mean_err
    assert frac_big < 0.10, frac_big

    # Loose sanity check vs the full-f32 reference (documents the bf16-operand
    # accuracy envelope; accumulation is f32 everywhere).
    ref_f = jax.block_until_ready(
        jax.jit(lambda p_, x_: reference_forward(p_, x_, False))(params, x))
    assert float(jnp.max(jnp.abs(out - ref_f))) < 0.5

    print("KERNEL_OK")
</pallas_src>

<mosaic_0001>
module attributes {stable_mosaic.version = 11 : i64} {
  func.func @_conv_chain_kernel(%arg0: i32, %arg1: memref<1x1x1000xf32, #tpu.memory_space<vmem>>, %arg2: memref<1x1000xf32, #tpu.memory_space<vmem>>, %arg3: memref<9x64x3xbf16, #tpu.memory_space<vmem>>, %arg4: memref<64x1xf32, #tpu.memory_space<vmem>>, %arg5: memref<1x64x1000xf32, #tpu.memory_space<vmem>>, %arg6: memref<3x1256xbf16, #tpu.memory_space<vmem>>) attributes {dimension_semantics = [#tpu.dimension_semantics<parallel>], iteration_bounds = array<i64: 2>, scalar_prefetch = 0 : i64, scratch_operands = 1 : i64, tpu.core_type = #tpu.core_type<tc>, window_params = [{transform_indices = @transform_0, window_bounds = array<i64: 1, 1, 1000>}, {pipeline_mode = #tpu.pipeline_mode<synchronous>, transform_indices = @transform_1, window_bounds = array<i64: 1, 1000>}, {pipeline_mode = #tpu.pipeline_mode<synchronous>, transform_indices = @transform_2, window_bounds = array<i64: 9, 64, 3>}, {pipeline_mode = #tpu.pipeline_mode<synchronous>, transform_indices = @transform_3, window_bounds = array<i64: 64, 1>}, {transform_indices = @transform_4, window_bounds = array<i64: 1, 64, 1000>}]} {
    %c0 = arith.constant 0 : index
    %c0_0 = arith.constant 0 : index
    %0 = vector.load %arg2[%c0, %c0_0] : memref<1x1000xf32, #tpu.memory_space<vmem>>, vector<1x1000xf32>
    %cst = arith.constant 5.000000e-01 : f32
    %1 = vector.broadcast %cst : f32 to vector<1x1000xf32>
    %2 = arith.cmpf ogt, %0, %1 : vector<1x1000xf32>
    %c0_1 = arith.constant 0 : index
    %c0_2 = arith.constant 0 : index
    %c0_3 = arith.constant 0 : index
    %3 = vector.load %arg1[%c0_1, %c0_2, %c0_3] : memref<1x1x1000xf32, #tpu.memory_space<vmem>>, vector<1x1x990xf32>
    %4 = vector.shape_cast %3 : vector<1x1x990xf32> to vector<1x990xf32>
    %5 = arith.truncf %4 : vector<1x990xf32> to vector<1x990xbf16>
    %c0_4 = arith.constant 0 : index
    %c138 = arith.constant 138 : index
    %6 = vector.load %arg6[%c0_4, %c138] : memref<3x1256xbf16, #tpu.memory_space<vmem>>, vector<1x990xbf16>
    tpu.vector_store %arg6[%c0_4, %c138], %5 {strides = array<i32>} : memref<3x1256xbf16, #tpu.memory_space<vmem>>, vector<1x990xbf16>,
    %c0_5 = arith.constant 0 : index
    %c0_6 = arith.constant 0 : index
    %c0_7 = arith.constant 0 : index
    %7 = vector.load %arg1[%c0_5, %c0_6, %c0_7] : memref<1x1x1000xf32, #tpu.memory_space<vmem>>, vector<1x1x1000xf32>
    %8 = vector.shape_cast %7 : vector<1x1x1000xf32> to vector<1x1000xf32>
    %9 = arith.truncf %8 : vector<1x1000xf32> to vector<1x1000xbf16>
    %c1 = arith.constant 1 : index
    %c128 = arith.constant 128 : index
    %10 = vector.load %arg6[%c1, %c128] : memref<3x1256xbf16, #tpu.memory_space<vmem>>, vector<1x1000xbf16>
    tpu.vector_store %arg6[%c1, %c128], %9 {strides = array<i32>} : memref<3x1256xbf16, #tpu.memory_space<vmem>>, vector<1x1000xbf16>,
    %c0_8 = arith.constant 0 : index
    %c0_9 = arith.constant 0 : index
    %c10 = arith.constant 10 : index
    %11 = vector.load %arg1[%c0_8, %c0_9, %c10] : memref<1x1x1000xf32, #tpu.memory_space<vmem>>, vector<1x1x990xf32>
    %12 = vector.shape_cast %11 : vector<1x1x990xf32> to vector<1x990xf32>
    %13 = arith.truncf %12 : vector<1x990xf32> to vector<1x990xbf16>
    %c2 = arith.constant 2 : index
    %c128_10 = arith.constant 128 : index
    %14 = vector.load %arg6[%c2, %c128_10] : memref<3x1256xbf16, #tpu.memory_space<vmem>>, vector<1x990xbf16>
    tpu.vector_store %arg6[%c2, %c128_10], %13 {strides = array<i32>} : memref<3x1256xbf16, #tpu.memory_space<vmem>>, vector<1x990xbf16>,
    %c0_11 = arith.constant 0 : index
    %c27 = arith.constant 27 : index
    %15 = vector.load %arg6[%c0_11, %c27] : memref<3x1256xbf16, #tpu.memory_space<vmem>>, vector<3x1000xbf16>
    %c0_12 = arith.constant 0 : index
    %c0_13 = arith.constant 0 : index
    %c0_14 = arith.constant 0 : index
    %16 = vector.load %arg3[%c0_12, %c0_13, %c0_14] : memref<9x64x3xbf16, #tpu.memory_space<vmem>>, vector<1x64x3xbf16>
    %17 = vector.shape_cast %16 : vector<1x64x3xbf16> to vector<64x3xbf16>
    %18 = vector.extract_strided_slice %17 {offsets = [0, 0], sizes = [64, 1], strides = [1, 1]} : vector<64x3xbf16> to vector<64x1xbf16>
    %19 = arith.extf %18 : vector<64x1xbf16> to vector<64x1xf32>
    %20 = vector.extract_strided_slice %15 {offsets = [0, 0], sizes = [1, 1000], strides = [1, 1]} : vector<3x1000xbf16> to vector<1x1000xbf16>
    %21 = arith.extf %20 : vector<1x1000xbf16> to vector<1x1000xf32>
    %22 = vector.broadcast %19 : vector<64x1xf32> to vector<64x1000xf32>
    %23 = vector.broadcast %21 : vector<1x1000xf32> to vector<64x1000xf32>
    %24 = arith.mulf %22, %23 : vector<64x1000xf32>
    %25 = vector.extract_strided_slice %17 {offsets = [0, 1], sizes = [64, 1], strides = [1, 1]} : vector<64x3xbf16> to vector<64x1xbf16>
    %26 = arith.extf %25 : vector<64x1xbf16> to vector<64x1xf32>
    %27 = vector.extract_strided_slice %15 {offsets = [1, 0], sizes = [1, 1000], strides = [1, 1]} : vector<3x1000xbf16> to vector<1x1000xbf16>
    %28 = arith.extf %27 : vector<1x1000xbf16> to vector<1x1000xf32>
    %29 = vector.broadcast %26 : vector<64x1xf32> to vector<64x1000xf32>
    %30 = vector.broadcast %28 : vector<1x1000xf32> to vector<64x1000xf32>
    %31 = arith.mulf %29, %30 : vector<64x1000xf32>
    %32 = arith.addf %24, %31 : vector<64x1000xf32>
    %33 = vector.extract_strided_slice %17 {offsets = [0, 2], sizes = [64, 1], strides = [1, 1]} : vector<64x3xbf16> to vector<64x1xbf16>
    %34 = arith.extf %33 : vector<64x1xbf16> to vector<64x1xf32>
    %35 = vector.extract_strided_slice %15 {offsets = [2, 0], sizes = [1, 1000], strides = [1, 1]} : vector<3x1000xbf16> to vector<1x1000xbf16>
    %36 = arith.extf %35 : vector<1x1000xbf16> to vector<1x1000xf32>
    %37 = vector.broadcast %34 : vector<64x1xf32> to vector<64x1000xf32>
    %38 = vector.broadcast %36 : vector<1x1000xf32> to vector<64x1000xf32>
    %39 = arith.mulf %37, %38 : vector<64x1000xf32>
    %40 = arith.addf %32, %39 : vector<64x1000xf32>
    %c0_15 = arith.constant 0 : index
    %c28 = arith.constant 28 : index
    %41 = vector.load %arg6[%c0_15, %c28] : memref<3x1256xbf16, #tpu.memory_space<vmem>>, vector<3x1000xbf16>
    %c1_16 = arith.constant 1 : index
    %c0_17 = arith.constant 0 : index
    %c0_18 = arith.constant 0 : index
    %42 = vector.load %arg3[%c1_16, %c0_17, %c0_18] : memref<9x64x3xbf16, #tpu.memory_space<vmem>>, vector<1x64x3xbf16>
    %43 = vector.shape_cast %42 : vector<1x64x3xbf16> to vector<64x3xbf16>
    %44 = vector.extract_strided_slice %43 {offsets = [0, 0], sizes = [64, 1], strides = [1, 1]} : vector<64x3xbf16> to vector<64x1xbf16>
    %45 = arith.extf %44 : vector<64x1xbf16> to vector<64x1xf32>
    %46 = vector.extract_strided_slice %41 {offsets = [0, 0], sizes = [1, 1000], strides = [1, 1]} : vector<3x1000xbf16> to vector<1x1000xbf16>
    %47 = arith.extf %46 : vector<1x1000xbf16> to vector<1x1000xf32>
    %48 = vector.broadcast %45 : vector<64x1xf32> to vector<64x1000xf32>
    %49 = vector.broadcast %47 : vector<1x1000xf32> to vector<64x1000xf32>
    %50 = arith.mulf %48, %49 : vector<64x1000xf32>
    %51 = vector.extract_strided_slice %43 {offsets = [0, 1], sizes = [64, 1], strides = [1, 1]} : vector<64x3xbf16> to vector<64x1xbf16>
    %52 = arith.extf %51 : vector<64x1xbf16> to vector<64x1xf32>
    %53 = vector.extract_strided_slice %41 {offsets = [1, 0], sizes = [1, 1000], strides = [1, 1]} : vector<3x1000xbf16> to vector<1x1000xbf16>
    %54 = arith.extf %53 : vector<1x1000xbf16> to vector<1x1000xf32>
    %55 = vector.broadcast %52 : vector<64x1xf32> to vector<64x1000xf32>
    %56 = vector.broadcast %54 : vector<1x1000xf32> to vector<64x1000xf32>
    %57 = arith.mulf %55, %56 : vector<64x1000xf32>
    %58 = arith.addf %50, %57 : vector<64x1000xf32>
    %59 = vector.extract_strided_slice %43 {offsets = [0, 2], sizes = [64, 1], strides = [1, 1]} : vector<64x3xbf16> to vector<64x1xbf16>
    %60 = arith.extf %59 : vector<64x1xbf16> to vector<64x1xf32>
    %61 = vector.extract_strided_slice %41 {offsets = [2, 0], sizes = [1, 1000], strides = [1, 1]} : vector<3x1000xbf16> to vector<1x1000xbf16>
    %62 = arith.extf %61 : vector<1x1000xbf16> to vector<1x1000xf32>
    %63 = vector.broadcast %60 : vector<64x1xf32> to vector<64x1000xf32>
    %64 = vector.broadcast %62 : vector<1x1000xf32> to vector<64x1000xf32>
    %65 = arith.mulf %63, %64 : vector<64x1000xf32>
    %66 = arith.addf %58, %65 : vector<64x1000xf32>
    %67 = arith.addf %40, %66 : vector<64x1000xf32>
    %c0_19 = arith.constant 0 : index
    %c29 = arith.constant 29 : index
    %68 = vector.load %arg6[%c0_19, %c29] : memref<3x1256xbf16, #tpu.memory_space<vmem>>, vector<3x1000xbf16>
    %c2_20 = arith.constant 2 : index
    %c0_21 = arith.constant 0 : index
    %c0_22 = arith.constant 0 : index
    %69 = vector.load %arg3[%c2_20, %c0_21, %c0_22] : memref<9x64x3xbf16, #tpu.memory_space<vmem>>, vector<1x64x3xbf16>
    %70 = vector.shape_cast %69 : vector<1x64x3xbf16> to vector<64x3xbf16>
    %71 = vector.extract_strided_slice %70 {offsets = [0, 0], sizes = [64, 1], strides = [1, 1]} : vector<64x3xbf16> to vector<64x1xbf16>
    %72 = arith.extf %71 : vector<64x1xbf16> to vector<64x1xf32>
    %73 = vector.extract_strided_slice %68 {offsets = [0, 0], sizes = [1, 1000], strides = [1, 1]} : vector<3x1000xbf16> to vector<1x1000xbf16>
    %74 = arith.extf %73 : vector<1x1000xbf16> to vector<1x1000xf32>
    %75 = vector.broadcast %72 : vector<64x1xf32> to vector<64x1000xf32>
    %76 = vector.broadcast %74 : vector<1x1000xf32> to vector<64x1000xf32>
    %77 = arith.mulf %75, %76 : vector<64x1000xf32>
    %78 = vector.extract_strided_slice %70 {offsets = [0, 1], sizes = [64, 1], strides = [1, 1]} : vector<64x3xbf16> to vector<64x1xbf16>
    %79 = arith.extf %78 : vector<64x1xbf16> to vector<64x1xf32>
    %80 = vector.extract_strided_slice %68 {offsets = [1, 0], sizes = [1, 1000], strides = [1, 1]} : vector<3x1000xbf16> to vector<1x1000xbf16>
    %81 = arith.extf %80 : vector<1x1000xbf16> to vector<1x1000xf32>
    %82 = vector.broadcast %79 : vector<64x1xf32> to vector<64x1000xf32>
    %83 = vector.broadcast %81 : vector<1x1000xf32> to vector<64x1000xf32>
    %84 = arith.mulf %82, %83 : vector<64x1000xf32>
    %85 = arith.addf %77, %84 : vector<64x1000xf32>
    %86 = vector.extract_strided_slice %70 {offsets = [0, 2], sizes = [64, 1], strides = [1, 1]} : vector<64x3xbf16> to vector<64x1xbf16>
    %87 = arith.extf %86 : vector<64x1xbf16> to vector<64x1xf32>
    %88 = vector.extract_strided_slice %68 {offsets = [2, 0], sizes = [1, 1000], strides = [1, 1]} : vector<3x1000xbf16> to vector<1x1000xbf16>
    %89 = arith.extf %88 : vector<1x1000xbf16> to vector<1x1000xf32>
    %90 = vector.broadcast %87 : vector<64x1xf32> to vector<64x1000xf32>
    %91 = vector.broadcast %89 : vector<1x1000xf32> to vector<64x1000xf32>
    %92 = arith.mulf %90, %91 : vector<64x1000xf32>
    %93 = arith.addf %85, %92 : vector<64x1000xf32>
    %94 = arith.addf %67, %93 : vector<64x1000xf32>
    %c0_23 = arith.constant 0 : index
    %c127 = arith.constant 127 : index
    %95 = vector.load %arg6[%c0_23, %c127] : memref<3x1256xbf16, #tpu.memory_space<vmem>>, vector<3x1000xbf16>
    %c3 = arith.constant 3 : index
    %c0_24 = arith.constant 0 : index
    %c0_25 = arith.constant 0 : index
    %96 = vector.load %arg3[%c3, %c0_24, %c0_25] : memref<9x64x3xbf16, #tpu.memory_space<vmem>>, vector<1x64x3xbf16>
    %97 = vector.shape_cast %96 : vector<1x64x3xbf16> to vector<64x3xbf16>
    %98 = vector.extract_strided_slice %97 {offsets = [0, 0], sizes = [64, 1], strides = [1, 1]} : vector<64x3xbf16> to vector<64x1xbf16>
    %99 = arith.extf %98 : vector<64x1xbf16> to vector<64x1xf32>
    %100 = vector.extract_strided_slice %95 {offsets = [0, 0], sizes = [1, 1000], strides = [1, 1]} : vector<3x1000xbf16> to vector<1x1000xbf16>
    %101 = arith.extf %100 : vector<1x1000xbf16> to vector<1x1000xf32>
    %102 = vector.broadcast %99 : vector<64x1xf32> to vector<64x1000xf32>
    %103 = vector.broadcast %101 : vector<1x1000xf32> to vector<64x1000xf32>
    %104 = arith.mulf %102, %103 : vector<64x1000xf32>
    %105 = vector.extract_strided_slice %97 {offsets = [0, 1], sizes = [64, 1], strides = [1, 1]} : vector<64x3xbf16> to vector<64x1xbf16>
    %106 = arith.extf %105 : vector<64x1xbf16> to vector<64x1xf32>
    %107 = vector.extract_strided_slice %95 {offsets = [1, 0], sizes = [1, 1000], strides = [1, 1]} : vector<3x1000xbf16> to vector<1x1000xbf16>
    %108 = arith.extf %107 : vector<1x1000xbf16> to vector<1x1000xf32>
    %109 = vector.broadcast %106 : vector<64x1xf32> to vector<64x1000xf32>
    %110 = vector.broadcast %108 : vector<1x1000xf32> to vector<64x1000xf32>
    %111 = arith.mulf %109, %110 : vector<64x1000xf32>
    %112 = arith.addf %104, %111 : vector<64x1000xf32>
    %113 = vector.extract_strided_slice %97 {offsets = [0, 2], sizes = [64, 1], strides = [1, 1]} : vector<64x3xbf16> to vector<64x1xbf16>
    %114 = arith.extf %113 : vector<64x1xbf16> to vector<64x1xf32>
    %115 = vector.extract_strided_slice %95 {offsets = [2, 0], sizes = [1, 1000], strides = [1, 1]} : vector<3x1000xbf16> to vector<1x1000xbf16>
    %116 = arith.extf %115 : vector<1x1000xbf16> to vector<1x1000xf32>
    %117 = vector.broadcast %114 : vector<64x1xf32> to vector<64x1000xf32>
    %118 = vector.broadcast %116 : vector<1x1000xf32> to vector<64x1000xf32>
    %119 = arith.mulf %117, %118 : vector<64x1000xf32>
    %120 = arith.addf %112, %119 : vector<64x1000xf32>
    %121 = arith.addf %94, %120 : vector<64x1000xf32>
    %c0_26 = arith.constant 0 : index
    %c128_27 = arith.constant 128 : index
    %122 = vector.load %arg6[%c0_26, %c128_27] : memref<3x1256xbf16, #tpu.memory_space<vmem>>, vector<3x1000xbf16>
    %c4 = arith.constant 4 : index
    %c0_28 = arith.constant 0 : index
    %c0_29 = arith.constant 0 : index
    %123 = vector.load %arg3[%c4, %c0_28, %c0_29] : memref<9x64x3xbf16, #tpu.memory_space<vmem>>, vector<1x64x3xbf16>
    %124 = vector.shape_cast %123 : vector<1x64x3xbf16> to vector<64x3xbf16>
    %125 = vector.extract_strided_slice %124 {offsets = [0, 0], sizes = [64, 1], strides = [1, 1]} : vector<64x3xbf16> to vector<64x1xbf16>
    %126 = arith.extf %125 : vector<64x1xbf16> to vector<64x1xf32>
    %127 = vector.extract_strided_slice %122 {offsets = [0, 0], sizes = [1, 1000], strides = [1, 1]} : vector<3x1000xbf16> to vector<1x1000xbf16>
    %128 = arith.extf %127 : vector<1x1000xbf16> to vector<1x1000xf32>
    %129 = vector.broadcast %126 : vector<64x1xf32> to vector<64x1000xf32>
    %130 = vector.broadcast %128 : vector<1x1000xf32> to vector<64x1000xf32>
    %131 = arith.mulf %129, %130 : vector<64x1000xf32>
    %132 = vector.extract_strided_slice %124 {offsets = [0, 1], sizes = [64, 1], strides = [1, 1]} : vector<64x3xbf16> to vector<64x1xbf16>
    %133 = arith.extf %132 : vector<64x1xbf16> to vector<64x1xf32>
    %134 = vector.extract_strided_slice %122 {offsets = [1, 0], sizes = [1, 1000], strides = [1, 1]} : vector<3x1000xbf16> to vector<1x1000xbf16>
    %135 = arith.extf %134 : vector<1x1000xbf16> to vector<1x1000xf32>
    %136 = vector.broadcast %133 : vector<64x1xf32> to vector<64x1000xf32>
    %137 = vector.broadcast %135 : vector<1x1000xf32> to vector<64x1000xf32>
    %138 = arith.mulf %136, %137 : vector<64x1000xf32>
    %139 = arith.addf %131, %138 : vector<64x1000xf32>
    %140 = vector.extract_strided_slice %124 {offsets = [0, 2], sizes = [64, 1], strides = [1, 1]} : vector<64x3xbf16> to vector<64x1xbf16>
    %141 = arith.extf %140 : vector<64x1xbf16> to vector<64x1xf32>
    %142 = vector.extract_strided_slice %122 {offsets = [2, 0], sizes = [1, 1000], strides = [1, 1]} : vector<3x1000xbf16> to vector<1x1000xbf16>
    %143 = arith.extf %142 : vector<1x1000xbf16> to vector<1x1000xf32>
    %144 = vector.broadcast %141 : vector<64x1xf32> to vector<64x1000xf32>
    %145 = vector.broadcast %143 : vector<1x1000xf32> to vector<64x1000xf32>
    %146 = arith.mulf %144, %145 : vector<64x1000xf32>
    %147 = arith.addf %139, %146 : vector<64x1000xf32>
    %148 = arith.addf %121, %147 : vector<64x1000xf32>
    %c0_30 = arith.constant 0 : index
    %c129 = arith.constant 129 : index
    %149 = vector.load %arg6[%c0_30, %c129] : memref<3x1256xbf16, #tpu.memory_space<vmem>>, vector<3x1000xbf16>
    %c5 = arith.constant 5 : index
    %c0_31 = arith.constant 0 : index
    %c0_32 = arith.constant 0 : index
    %150 = vector.load %arg3[%c5, %c0_31, %c0_32] : memref<9x64x3xbf16, #tpu.memory_space<vmem>>, vector<1x64x3xbf16>
    %151 = vector.shape_cast %150 : vector<1x64x3xbf16> to vector<64x3xbf16>
    %152 = vector.extract_strided_slice %151 {offsets = [0, 0], sizes = [64, 1], strides = [1, 1]} : vector<64x3xbf16> to vector<64x1xbf16>
    %153 = arith.extf %152 : vector<64x1xbf16> to vector<64x1xf32>
    %154 = vector.extract_strided_slice %149 {offsets = [0, 0], sizes = [1, 1000], strides = [1, 1]} : vector<3x1000xbf16> to vector<1x1000xbf16>
    %155 = arith.extf %154 : vector<1x1000xbf16> to vector<1x1000xf32>
    %156 = vector.broadcast %153 : vector<64x1xf32> to vector<64x1000xf32>
    %157 = vector.broadcast %155 : vector<1x1000xf32> to vector<64x1000xf32>
    %158 = arith.mulf %156, %157 : vector<64x1000xf32>
    %159 = vector.extract_strided_slice %151 {offsets = [0, 1], sizes = [64, 1], strides = [1, 1]} : vector<64x3xbf16> to vector<64x1xbf16>
    %160 = arith.extf %159 : vector<64x1xbf16> to vector<64x1xf32>
    %161 = vector.extract_strided_slice %149 {offsets = [1, 0], sizes = [1, 1000], strides = [1, 1]} : vector<3x1000xbf16> to vector<1x1000xbf16>
    %162 = arith.extf %161 : vector<1x1000xbf16> to vector<1x1000xf32>
    %163 = vector.broadcast %160 : vector<64x1xf32> to vector<64x1000xf32>
    %164 = vector.broadcast %162 : vector<1x1000xf32> to vector<64x1000xf32>
    %165 = arith.mulf %163, %164 : vector<64x1000xf32>
    %166 = arith.addf %158, %165 : vector<64x1000xf32>
    %167 = vector.extract_strided_slice %151 {offsets = [0, 2], sizes = [64, 1], strides = [1, 1]} : vector<64x3xbf16> to vector<64x1xbf16>
    %168 = arith.extf %167 : vector<64x1xbf16> to vector<64x1xf32>
    %169 = vector.extract_strided_slice %149 {offsets = [2, 0], sizes = [1, 1000], strides = [1, 1]} : vector<3x1000xbf16> to vector<1x1000xbf16>
    %170 = arith.extf %169 : vector<1x1000xbf16> to vector<1x1000xf32>
    %171 = vector.broadcast %168 : vector<64x1xf32> to vector<64x1000xf32>
    %172 = vector.broadcast %170 : vector<1x1000xf32> to vector<64x1000xf32>
    %173 = arith.mulf %171, %172 : vector<64x1000xf32>
    %174 = arith.addf %166, %173 : vector<64x1000xf32>
    %175 = arith.addf %148, %174 : vector<64x1000xf32>
    %c0_33 = arith.constant 0 : index
    %c227 = arith.constant 227 : index
    %176 = vector.load %arg6[%c0_33, %c227] : memref<3x1256xbf16, #tpu.memory_space<vmem>>, vector<3x1000xbf16>
    %c6 = arith.constant 6 : index
    %c0_34 = arith.constant 0 : index
    %c0_35 = arith.constant 0 : index
    %177 = vector.load %arg3[%c6, %c0_34, %c0_35] : memref<9x64x3xbf16, #tpu.memory_space<vmem>>, vector<1x64x3xbf16>
    %178 = vector.shape_cast %177 : vector<1x64x3xbf16> to vector<64x3xbf16>
    %179 = vector.extract_strided_slice %178 {offsets = [0, 0], sizes = [64, 1], strides = [1, 1]} : vector<64x3xbf16> to vector<64x1xbf16>
    %180 = arith.extf %179 : vector<64x1xbf16> to vector<64x1xf32>
    %181 = vector.extract_strided_slice %176 {offsets = [0, 0], sizes = [1, 1000], strides = [1, 1]} : vector<3x1000xbf16> to vector<1x1000xbf16>
    %182 = arith.extf %181 : vector<1x1000xbf16> to vector<1x1000xf32>
    %183 = vector.broadcast %180 : vector<64x1xf32> to vector<64x1000xf32>
    %184 = vector.broadcast %182 : vector<1x1000xf32> to vector<64x1000xf32>
    %185 = arith.mulf %183, %184 : vector<64x1000xf32>
    %186 = vector.extract_strided_slice %178 {offsets = [0, 1], sizes = [64, 1], strides = [1, 1]} : vector<64x3xbf16> to vector<64x1xbf16>
    %187 = arith.extf %186 : vector<64x1xbf16> to vector<64x1xf32>
    %188 = vector.extract_strided_slice %176 {offsets = [1, 0], sizes = [1, 1000], strides = [1, 1]} : vector<3x1000xbf16> to vector<1x1000xbf16>
    %189 = arith.extf %188 : vector<1x1000xbf16> to vector<1x1000xf32>
    %190 = vector.broadcast %187 : vector<64x1xf32> to vector<64x1000xf32>
    %191 = vector.broadcast %189 : vector<1x1000xf32> to vector<64x1000xf32>
    %192 = arith.mulf %190, %191 : vector<64x1000xf32>
    %193 = arith.addf %185, %192 : vector<64x1000xf32>
    %194 = vector.extract_strided_slice %178 {offsets = [0, 2], sizes = [64, 1], strides = [1, 1]} : vector<64x3xbf16> to vector<64x1xbf16>
    %195 = arith.extf %194 : vector<64x1xbf16> to vector<64x1xf32>
    %196 = vector.extract_strided_slice %176 {offsets = [2, 0], sizes = [1, 1000], strides = [1, 1]} : vector<3x1000xbf16> to vector<1x1000xbf16>
    %197 = arith.extf %196 : vector<1x1000xbf16> to vector<1x1000xf32>
    %198 = vector.broadcast %195 : vector<64x1xf32> to vector<64x1000xf32>
    %199 = vector.broadcast %197 : vector<1x1000xf32> to vector<64x1000xf32>
    %200 = arith.mulf %198, %199 : vector<64x1000xf32>
    %201 = arith.addf %193, %200 : vector<64x1000xf32>
    %202 = arith.addf %175, %201 : vector<64x1000xf32>
    %c0_36 = arith.constant 0 : index
    %c228 = arith.constant 228 : index
    %203 = vector.load %arg6[%c0_36, %c228] : memref<3x1256xbf16, #tpu.memory_space<vmem>>, vector<3x1000xbf16>
    %c7 = arith.constant 7 : index
    %c0_37 = arith.constant 0 : index
    %c0_38 = arith.constant 0 : index
    %204 = vector.load %arg3[%c7, %c0_37, %c0_38] : memref<9x64x3xbf16, #tpu.memory_space<vmem>>, vector<1x64x3xbf16>
    %205 = vector.shape_cast %204 : vector<1x64x3xbf16> to vector<64x3xbf16>
    %206 = vector.extract_strided_slice %205 {offsets = [0, 0], sizes = [64, 1], strides = [1, 1]} : vector<64x3xbf16> to vector<64x1xbf16>
    %207 = arith.extf %206 : vector<64x1xbf16> to vector<64x1xf32>
    %208 = vector.extract_strided_slice %203 {offsets = [0, 0], sizes = [1, 1000], strides = [1, 1]} : vector<3x1000xbf16> to vector<1x1000xbf16>
    %209 = arith.extf %208 : vector<1x1000xbf16> to vector<1x1000xf32>
    %210 = vector.broadcast %207 : vector<64x1xf32> to vector<64x1000xf32>
    %211 = vector.broadcast %209 : vector<1x1000xf32> to vector<64x1000xf32>
    %212 = arith.mulf %210, %211 : vector<64x1000xf32>
    %213 = vector.extract_strided_slice %205 {offsets = [0, 1], sizes = [64, 1], strides = [1, 1]} : vector<64x3xbf16> to vector<64x1xbf16>
    %214 = arith.extf %213 : vector<64x1xbf16> to vector<64x1xf32>
    %215 = vector.extract_strided_slice %203 {offsets = [1, 0], sizes = [1, 1000], strides = [1, 1]} : vector<3x1000xbf16> to vector<1x1000xbf16>
    %216 = arith.extf %215 : vector<1x1000xbf16> to vector<1x1000xf32>
    %217 = vector.broadcast %214 : vector<64x1xf32> to vector<64x1000xf32>
    %218 = vector.broadcast %216 : vector<1x1000xf32> to vector<64x1000xf32>
    %219 = arith.mulf %217, %218 : vector<64x1000xf32>
    %220 = arith.addf %212, %219 : vector<64x1000xf32>
    %221 = vector.extract_strided_slice %205 {offsets = [0, 2], sizes = [64, 1], strides = [1, 1]} : vector<64x3xbf16> to vector<64x1xbf16>
    %222 = arith.extf %221 : vector<64x1xbf16> to vector<64x1xf32>
    %223 = vector.extract_strided_slice %203 {offsets = [2, 0], sizes = [1, 1000], strides = [1, 1]} : vector<3x1000xbf16> to vector<1x1000xbf16>
    %224 = arith.extf %223 : vector<1x1000xbf16> to vector<1x1000xf32>
    %225 = vector.broadcast %222 : vector<64x1xf32> to vector<64x1000xf32>
    %226 = vector.broadcast %224 : vector<1x1000xf32> to vector<64x1000xf32>
    %227 = arith.mulf %225, %226 : vector<64x1000xf32>
    %228 = arith.addf %220, %227 : vector<64x1000xf32>
    %229 = arith.addf %202, %228 : vector<64x1000xf32>
    %c0_39 = arith.constant 0 : index
    %c229 = arith.constant 229 : index
    %230 = vector.load %arg6[%c0_39, %c229] : memref<3x1256xbf16, #tpu.memory_space<vmem>>, vector<3x1000xbf16>
    %c8 = arith.constant 8 : index
    %c0_40 = arith.constant 0 : index
    %c0_41 = arith.constant 0 : index
    %231 = vector.load %arg3[%c8, %c0_40, %c0_41] : memref<9x64x3xbf16, #tpu.memory_space<vmem>>, vector<1x64x3xbf16>
    %232 = vector.shape_cast %231 : vector<1x64x3xbf16> to vector<64x3xbf16>
    %233 = vector.extract_strided_slice %232 {offsets = [0, 0], sizes = [64, 1], strides = [1, 1]} : vector<64x3xbf16> to vector<64x1xbf16>
    %234 = arith.extf %233 : vector<64x1xbf16> to vector<64x1xf32>
    %235 = vector.extract_strided_slice %230 {offsets = [0, 0], sizes = [1, 1000], strides = [1, 1]} : vector<3x1000xbf16> to vector<1x1000xbf16>
    %236 = arith.extf %235 : vector<1x1000xbf16> to vector<1x1000xf32>
    %237 = vector.broadcast %234 : vector<64x1xf32> to vector<64x1000xf32>
    %238 = vector.broadcast %236 : vector<1x1000xf32> to vector<64x1000xf32>
    %239 = arith.mulf %237, %238 : vector<64x1000xf32>
    %240 = vector.extract_strided_slice %232 {offsets = [0, 1], sizes = [64, 1], strides = [1, 1]} : vector<64x3xbf16> to vector<64x1xbf16>
    %241 = arith.extf %240 : vector<64x1xbf16> to vector<64x1xf32>
    %242 = vector.extract_strided_slice %230 {offsets = [1, 0], sizes = [1, 1000], strides = [1, 1]} : vector<3x1000xbf16> to vector<1x1000xbf16>
    %243 = arith.extf %242 : vector<1x1000xbf16> to vector<1x1000xf32>
    %244 = vector.broadcast %241 : vector<64x1xf32> to vector<64x1000xf32>
    %245 = vector.broadcast %243 : vector<1x1000xf32> to vector<64x1000xf32>
    %246 = arith.mulf %244, %245 : vector<64x1000xf32>
    %247 = arith.addf %239, %246 : vector<64x1000xf32>
    %248 = vector.extract_strided_slice %232 {offsets = [0, 2], sizes = [64, 1], strides = [1, 1]} : vector<64x3xbf16> to vector<64x1xbf16>
    %249 = arith.extf %248 : vector<64x1xbf16> to vector<64x1xf32>
    %250 = vector.extract_strided_slice %230 {offsets = [2, 0], sizes = [1, 1000], strides = [1, 1]} : vector<3x1000xbf16> to vector<1x1000xbf16>
    %251 = arith.extf %250 : vector<1x1000xbf16> to vector<1x1000xf32>
    %252 = vector.broadcast %249 : vector<64x1xf32> to vector<64x1000xf32>
    %253 = vector.broadcast %251 : vector<1x1000xf32> to vector<64x1000xf32>
    %254 = arith.mulf %252, %253 : vector<64x1000xf32>
    %255 = arith.addf %247, %254 : vector<64x1000xf32>
    %256 = arith.addf %229, %255 : vector<64x1000xf32>
    %c0_42 = arith.constant 0 : index
    %c0_43 = arith.constant 0 : index
    %257 = vector.load %arg4[%c0_42, %c0_43] : memref<64x1xf32, #tpu.memory_space<vmem>>, vector<64x1xf32>
    %258 = vector.broadcast %257 : vector<64x1xf32> to vector<64x1000xf32>
    %259 = arith.addf %256, %258 : vector<64x1000xf32>
    %cst_44 = arith.constant 0.000000e+00 : f32
    %260 = vector.broadcast %cst_44 : f32 to vector<64x1000xf32>
    %261 = arith.cmpf ogt, %259, %260 : vector<64x1000xf32>
    %cst_45 = arith.constant 0.000000e+00 : f32
    %262 = vector.broadcast %cst_45 : f32 to vector<64x1000xf32>
    %263 = arith.minimumf %259, %262 : vector<64x1000xf32>
    %264 = math.exp %263 : vector<64x1000xf32>
    %cst_46 = arith.constant 1.000000e+00 : f32
    %265 = vector.broadcast %cst_46 : f32 to vector<64x1000xf32>
    %266 = arith.subf %264, %265 : vector<64x1000xf32>
    %267 = arith.select %261, %259, %266 : vector<64x1000xi1>, vector<64x1000xf32>
    %cst_47 = arith.constant 0.000000e+00 : f32
    %268 = vector.shape_cast %2 : vector<1x1000xi1> to vector<1x1000xi1>
    %269 = vector.broadcast %268 : vector<1x1000xi1> to vector<64x1000xi1>
    %270 = vector.broadcast %cst_47 : f32 to vector<64x1000xf32>
    %271 = arith.select %269, %267, %270 : vector<64x1000xi1>, vector<64x1000xf32>
    %c0_48 = arith.constant 0 : index
    %c0_49 = arith.constant 0 : index
    %c0_50 = arith.constant 0 : index
    %272 = vector.load %arg5[%c0_48, %c0_49, %c0_50] : memref<1x64x1000xf32, #tpu.memory_space<vmem>>, vector<1x64x1000xf32>
    %273 = vector.shape_cast %272 : vector<1x64x1000xf32> to vector<64x1000xf32>
    %274 = vector.shape_cast %271 : vector<64x1000xf32> to vector<1x64x1000xf32>
    tpu.vector_store %arg5[%c0_48, %c0_49, %c0_50], %274 {strides = array<i32>} : memref<1x64x1000xf32, #tpu.memory_space<vmem>>, vector<1x64x1000xf32>,
    return
  }
  func.func @transform_0(%arg0: i32) -> (i32, i32, i32) {
    %c0_i32 = arith.constant 0 : i32
    %c0_i32_0 = arith.constant 0 : i32
    %c0_i32_1 = arith.constant 0 : i32
    return %arg0, %c0_i32, %c0_i32_0 : i32, i32, i32
  }
  func.func @transform_1(%arg0: i32) -> (i32, i32) {
    %c0_i32 = arith.constant 0 : i32
    %c0_i32_0 = arith.constant 0 : i32
    %c0_i32_1 = arith.constant 0 : i32
    return %c0_i32, %c0_i32_0 : i32, i32
  }
  func.func @transform_2(%arg0: i32) -> (i32, i32, i32) {
    %c0_i32 = arith.constant 0 : i32
    %c0_i32_0 = arith.constant 0 : i32
    %c0_i32_1 = arith.constant 0 : i32
    %c0_i32_2 = arith.constant 0 : i32
    return %c0_i32, %c0_i32_0, %c0_i32_1 : i32, i32, i32
  }
  func.func @transform_3(%arg0: i32) -> (i32, i32) {
    %c0_i32 = arith.constant 0 : i32
    %c0_i32_0 = arith.constant 0 : i32
    %c0_i32_1 = arith.constant 0 : i32
    return %c0_i32, %c0_i32_0 : i32, i32
  }
  func.func @transform_4(%arg0: i32) -> (i32, i32, i32) {
    %c0_i32 = arith.constant 0 : i32
    %c0_i32_0 = arith.constant 0 : i32
    %c0_i32_1 = arith.constant 0 : i32
    return %arg0, %c0_i32, %c0_i32_0 : i32, i32, i32
  }
}

</mosaic_0001>

<llo_original>
// kernel: tpu_custom_call.1
$region0: #{tpu_custom_call.1}
  #allocation0 [shape = 'u32[]', space=smem, size = 0x4, offset = 0x4, fixed_abs, tag = 'smem constant byte address 0x4 - core index']
  #allocation1 [shape = 'u32[144,128]{1,0:T(1,128)}', space=vmem, size = 0x12000, scoped, tag = 'internal scratch']
  #allocation2 [shape = 'bf16[3,1256]{1,0:T(4,128)(2,1)}', space=vmem, size = 0x2800, scoped, tag = 'scratch operand']
  %s0 = inlined_call_operand.vmem [shape: f32[2,1,1000], index: 0, kind: input, shape index: {}]
  %s1 = inlined_call_operand.vmem [shape: f32[1,1000], index: 1, kind: input, shape index: {}]
  %s2 = inlined_call_operand.vmem [shape: bf16[9,64,3], index: 2, kind: input, shape index: {}]
  %s3 = inlined_call_operand.vmem [shape: f32[64,1], index: 3, kind: input, shape index: {}]
  %s4 = inlined_call_operand.hbm [shape: f32[2,64,1000], index: 4, kind: output, shape index: {}]
  %s5 = sld [smem:[#allocation0]]
  $region49: #{tpu_custom_call.1} parent=0
    _
  %s7 = ssub.s32 1, %s5
  %s8 = scalar_select 0, %s7, %s5
  $region1: #{tpu_custom_call.1} parent=0
    #allocation3 [shape = 'u8[524288]{0}', space=vmem, size = 0x80000, scoped, tag = 'output window, operand 0']
    #allocation4 [shape = 's32[2]{0}', space=sflag, size = 0x8, scoped, tag = 'scoped memory for tpu_custom_call.1']
    %9 = vsyncpa [#allocation4], 0
    %s10 = scalar_lea.sflag [#allocation4], 1
    %11 = vsyncpa %s10, 0
    loop: start=0, step=1, limit=4
    $region2: #{tpu_custom_call.1} parent=1 // loop_pre_header
      _
    $region3: #{tpu_custom_call.1} parent=1 // loop_header
      %s13 = sphi 0, %s17
      %p14 = scmp.ge.s32.totalorder %s13, 4
      %s23 = sphi 0, %s25
      %s26 = sphi 0, %s23
      %s27 = sphi 0, %s26
      %s43 = sphi 0, %s27
      %s47 = sphi 0, %s47
      %s49 = sphi 0, %s47
      %s50 = sphi 0, %s49
      %s64 = sphi 0, %s50
      %s68 = sphi 0, %s68
      %s70 = sphi 0, %s68
      %s71 = sphi 0, %s70
      %s85 = sphi 0, %s71
      %s89 = sphi 0, %s89
      %s91 = sphi 0, %s89
      %s92 = sphi 0, %s91
      %s106 = sphi 0, %s92
      %s112 = sphi 0, %s114
      %s115 = sphi 0, %s112
      %s116 = sphi 0, %s115
      %s132 = sphi 0, %s116
    $region4: #{tpu_custom_call.1} parent=1 // loop_header_branch
      %16 = sbr.rel (%p14) target = $region8
    $region5: #{tpu_custom_call.1} parent=1 // loop_body
      %s18 = ssub.s32 %s13, 1
      %s19 = ssub.s32 %s13, 2
      %s20 = sadd.s32 %s13, 1
      %s21 = ssub.s32 %s13, %s20
      %p22 = scmp.eq.s32.totalorder %s21, 0
      %s24 = sadd.s32 %s23, 1
      %s25 = scalar_select %p22, %s23, %s24
      %p28 = pneg %p22
      %p29 = scmp.eq.s32.totalorder %s13, 1
      %p30 = por %p28, %p29
      %p31 = scmp.ne.s32.totalorder %s23, %s26
      %p32 = scmp.eq.s32.totalorder %s13, 0
      %p33 = por %p31, %p32
      %p34 = scmp.ne.s32.totalorder %s23, %s26
      %p35 = scmp.eq.s32.totalorder %s18, 1
      %p36 = por %p34, %p35
      %p37 = scmp.ne.s32.totalorder %s26, %s27
      %p38 = scmp.eq.s32.totalorder %s18, 0
      %p39 = por %p37, %p38
      %p40 = scmp.ne.s32.totalorder %s26, %s27
      %p41 = scmp.eq.s32.totalorder %s19, 1
      %p42 = por %p40, %p41
      %p44 = scmp.ne.s32.totalorder %s27, %s43
      %p45 = scmp.eq.s32.totalorder %s19, 0
      %p46 = por %p44, %p45
      %s48 = sadd.s32 %s47, 1
      %p51 = scmp.eq.s32.totalorder %s13, 1
      %p52 = scmp.ne.s32.totalorder %s47, %s49
      %p53 = scmp.eq.s32.totalorder %s13, 0
      %p54 = por %p52, %p53
      %p55 = scmp.ne.s32.totalorder %s47, %s49
      %p56 = scmp.eq.s32.totalorder %s18, 1
      %p57 = por %p55, %p56
      %p58 = scmp.ne.s32.totalorder %s49, %s50
      %p59 = scmp.eq.s32.totalorder %s18, 0
      %p60 = por %p58, %p59
      %p61 = scmp.ne.s32.totalorder %s49, %s50
      %p62 = scmp.eq.s32.totalorder %s19, 1
      %p63 = por %p61, %p62
      %p65 = scmp.ne.s32.totalorder %s50, %s64
      %p66 = scmp.eq.s32.totalorder %s19, 0
      %p67 = por %p65, %p66
      %s69 = sadd.s32 %s68, 1
      %p72 = scmp.eq.s32.totalorder %s13, 1
      %p73 = scmp.ne.s32.totalorder %s68, %s70
      %p74 = scmp.eq.s32.totalorder %s13, 0
      %p75 = por %p73, %p74
      %p76 = scmp.ne.s32.totalorder %s68, %s70
      %p77 = scmp.eq.s32.totalorder %s18, 1
      %p78 = por %p76, %p77
      %p79 = scmp.ne.s32.totalorder %s70, %s71
      %p80 = scmp.eq.s32.totalorder %s18, 0
      %p81 = por %p79, %p80
      %p82 = scmp.ne.s32.totalorder %s70, %s71
      %p83 = scmp.eq.s32.totalorder %s19, 1
      %p84 = por %p82, %p83
      %p86 = scmp.ne.s32.totalorder %s71, %s85
      %p87 = scmp.eq.s32.totalorder %s19, 0
      %p88 = por %p86, %p87
      %s90 = sadd.s32 %s89, 1
      %p93 = scmp.eq.s32.totalorder %s13, 1
      %p94 = scmp.ne.s32.totalorder %s89, %s91
      %p95 = scmp.eq.s32.totalorder %s13, 0
      %p96 = por %p94, %p95
      %p97 = scmp.ne.s32.totalorder %s89, %s91
      %p98 = scmp.eq.s32.totalorder %s18, 1
      %p99 = por %p97, %p98
      %p100 = scmp.ne.s32.totalorder %s91, %s92
      %p101 = scmp.eq.s32.totalorder %s18, 0
      %p102 = por %p100, %p101
      %p103 = scmp.ne.s32.totalorder %s91, %s92
      %p104 = scmp.eq.s32.totalorder %s19, 1
      %p105 = por %p103, %p104
      %p107 = scmp.ne.s32.totalorder %s92, %s106
      %p108 = scmp.eq.s32.totalorder %s19, 0
      %p109 = por %p107, %p108
      %s110 = ssub.s32 %s13, %s20
      %p111 = scmp.eq.s32.totalorder %s110, 0
      %s113 = sadd.s32 %s112, 1
      %s114 = scalar_select %p111, %s112, %s113
      %p117 = pneg %p111
      %p118 = scmp.eq.s32.totalorder %s13, 1
      %p119 = por %p117, %p118
      %p120 = scmp.ne.s32.totalorder %s112, %s115
      %p121 = scmp.eq.s32.totalorder %s13, 0
      %p122 = por %p120, %p121
      %p123 = scmp.ne.s32.totalorder %s112, %s115
      %p124 = scmp.eq.s32.totalorder %s18, 1
      %p125 = por %p123, %p124
      %p126 = scmp.ne.s32.totalorder %s115, %s116
      %p127 = scmp.eq.s32.totalorder %s18, 0
      %p128 = por %p126, %p127
      %p129 = scmp.ne.s32.totalorder %s115, %s116
      %p130 = scmp.eq.s32.totalorder %s19, 1
      %p131 = por %p129, %p130
      %p133 = scmp.ne.s32.totalorder %s116, %s132
      %p134 = scmp.eq.s32.totalorder %s19, 0
      %p135 = por %p133, %p134
      %p136 = scmp.le.s32.totalorder 1, %s13
      %p137 = scmp.lt.s32.totalorder %s13, 3
      %p138 = pnand %p136, %p137
      %p139 = pneg %p138
      // Predicated region
      $region9: #{tpu_custom_call.1} parent=5 // pred_check
        _
      $region10: #{tpu_custom_call.1} parent=5 // pred_check_branch
        %141 = sbr.rel (%p138) target = $region12
      $region11: #{tpu_custom_call.1} parent=5 // pred_region
        %s142 = ssub.s32 %s13, 1
        // Predicated region
        $region13: #{tpu_custom_call.1} parent=11 // pred_check
          %p143 = pneg %p60
        $region14: #{tpu_custom_call.1} parent=11 // pred_check_branch
          %145 = sbr.rel (%p143) target = $region16
        $region15: #{tpu_custom_call.1} parent=11 // pred_region
          _
        $region16: #{tpu_custom_call.1} parent=11 // pred_fallthru
          _
        // Predicated region
        $region17: #{tpu_custom_call.1} parent=11 // pred_check
          %p146 = pneg %p81
        $region18: #{tpu_custom_call.1} parent=11 // pred_check_branch
          %148 = sbr.rel (%p146) target = $region20
        $region19: #{tpu_custom_call.1} parent=11 // pred_region
          _
        $region20: #{tpu_custom_call.1} parent=11 // pred_fallthru
          _
        // Predicated region
        $region21: #{tpu_custom_call.1} parent=11 // pred_check
          %p149 = pneg %p102
        $region22: #{tpu_custom_call.1} parent=11 // pred_check_branch
          %151 = sbr.rel (%p149) target = $region24
        $region23: #{tpu_custom_call.1} parent=11 // pred_region
          _
        $region24: #{tpu_custom_call.1} parent=11 // pred_fallthru
          _
      $region12: #{tpu_custom_call.1} parent=5 // pred_fallthru
        _
      %p152 = scmp.lt.s32.totalorder %s13, 2
      // Predicated region
      $region25: #{tpu_custom_call.1} parent=5 // pred_check
        %p153 = pneg %p152
      $region26: #{tpu_custom_call.1} parent=5 // pred_check_branch
        %155 = sbr.rel (%p153) target = $region28
      $region27: #{tpu_custom_call.1} parent=5 // pred_region
        // Predicated region
        $region29: #{tpu_custom_call.1} parent=27 // pred_check
          %p156 = pneg %p33
        $region30: #{tpu_custom_call.1} parent=27 // pred_check_branch
          %158 = sbr.rel (%p156) target = $region32
        $region31: #{tpu_custom_call.1} parent=27 // pred_region
          %p159 = scmp.lt.s32.totalorder %s13, 1
          %s160 = scalar_select %p159, %s13, 1
          %s161 = smul.addr %s160, 8
          %s162 = scalar_lea.vmem %s0, %s161
        $region32: #{tpu_custom_call.1} parent=27 // pred_fallthru
          _
      $region28: #{tpu_custom_call.1} parent=5 // pred_fallthru
        _
      %p163 = scmp.le.s32.totalorder 1, %s13
      %p164 = scmp.lt.s32.totalorder %s13, 3
      %p165 = pnand %p163, %p164
      %p166 = pneg %p165
      // Predicated region
      $region33: #{tpu_custom_call.1} parent=5 // pred_check
        _
      $region34: #{tpu_custom_call.1} parent=5 // pred_check_branch
        %168 = sbr.rel (%p165) target = $region36
      $region35: #{tpu_custom_call.1} parent=5 // pred_region
        %s169 = ssub.s32 %s13, 1
        %p170 = scmp.lt.s32.totalorder %s18, 1
        %s171 = scalar_select %p170, %s18, 1
        %s172 = smul.addr %s171, 8
        %s173 = scalar_lea.vmem %s0, %s172
        %p174 = pneg %p39
        %p175 = pneg %p36
        %p176 = pneg %p60
        %p177 = pneg %p57
        %p178 = pneg %p81
        %p179 = pneg %p78
        %p180 = pneg %p102
        %p181 = pneg %p99
        %p182 = pneg %p128
        %p183 = pneg %p125
        %s184 = sand.u32 %s115, 1
        %s185 = scalar_lea.sflag [#allocation4], %s184
        %s186 = sand.u32 %s115, 1
        %s187 = smul.addr %s186, 512
        %s188 = scalar_lea.vmem [#allocation3], %s187
        %p189 = scmp.lt.s32.totalorder %s18, 1
        %s190 = scalar_select %p189, %s18, 1
        %s191 = smul.addr %s190, 8
        %s192 = scalar_lea.vmem %s0, %s191
        %v193 = vld [vmem:[%s1] sm:$0xff]
        %vm194 = vcmp.gt.f32.partialorder %v193, 0.5
        %v195 = vld [vmem:[%s192] sm:$0xff]
        %v197 = vlaneseq
        %v198 = vshrl.u32 %v197, 7
        %v199 = vsub.s32 0, %v198
        %v200 = vrot.slane %v195, %v199
        %v201 = vlaneseq
        %v202 = vshrl.u32 %v201, 7
        %v203 = vsub.s32 1, %v202
        %v204 = vrot.slane %v195, %v203
        %v205 = vlaneseq
        %v206 = vshrl.u32 %v205, 7
        %v207 = vsub.s32 2, %v206
        %v208 = vrot.slane %v195, %v207
        %v209 = vlaneseq
        %v210 = vshrl.u32 %v209, 7
        %v211 = vsub.s32 3, %v210
        %v212 = vrot.slane %v195, %v211
        %v213 = vlaneseq
        %v214 = vshrl.u32 %v213, 7
        %v215 = vsub.s32 4, %v214
        %v216 = vrot.slane %v195, %v215
        %v217 = vlaneseq
        %v218 = vshrl.u32 %v217, 7
        %v219 = vsub.s32 5, %v218
        %v220 = vrot.slane %v195, %v219
        %v221 = vlaneseq
        %v222 = vshrl.u32 %v221, 7
        %v223 = vsub.s32 6, %v222
        %v224 = vrot.slane %v195, %v223
        %v225 = vlaneseq
        %v226 = vshrl.u32 %v225, 7
        %v227 = vsub.s32 7, %v226
        %v228 = vrot.slane %v195, %v227
        %v237 = vpack.c.bf16 %v200, %v200
        %v238 = vpack.c.bf16 %v204, %v204
        %v239 = vpack.c.bf16 %v208, %v208
        %v240 = vpack.c.bf16 %v212, %v212
        %v241 = vpack.c.bf16 %v216, %v216
        %v242 = vpack.c.bf16 %v220, %v220
        %v243 = vpack.c.bf16 %v224, %v224
        %v244 = vpack.c.bf16 %v228, %v228
        %v253 = vcombine.low %v237, %v238
        %v254 = vcombine.low %v239, %v240
        %v256 = vunpack.c.l.s4 1983009808
        %v257 = vunpack.c.0.s8 %v256
        %v258 = vlaneseq
        %v259 = vshrl.u32 %v258, 7
        %v260 = vsub.s32 %v257, %v259
        %v261 = vrot.slane %v253, %v260
        %v263 = vunpack.c.l.s4 1983009808
        %v264 = vunpack.c.0.s8 %v263
        %v265 = vlaneseq
        %v266 = vshrl.u32 %v265, 7
        %v267 = vsub.s32 %v264, %v266
        %v268 = vrot.slane %v254, %v267
        %v269 = vcombine.low %v261, %v268
        %v270 = vcombine.low %v241, %v242
        %v271 = vcombine.low %v243, %v244
        %v273 = vunpack.c.l.s4 1983009808
        %v274 = vunpack.c.0.s8 %v273
        %v275 = vlaneseq
        %v276 = vshrl.u32 %v275, 7
        %v277 = vsub.s32 %v274, %v276
        %v278 = vrot.slane %v270, %v277
        %v280 = vunpack.c.l.s4 1983009808
        %v281 = vunpack.c.0.s8 %v280
        %v282 = vlaneseq
        %v283 = vshrl.u32 %v282, 7
        %v284 = vsub.s32 %v281, %v283
        %v285 = vrot.slane %v271, %v284
        %v286 = vcombine.low %v278, %v285
        %287 = vrot.lane.b32.xlu0 %v269, 10
        %v288 = vpop.permute.xlu0 %287
        %289 = vrot.lane.b32.xlu0 %v286, 10
        %v290 = vpop.permute.xlu0 %289
        %v291 = vrot.slane %v288, 6
        %v292 = vrot.slane %v290, 6
        %vm293 = vcmask 80896
        %v294 = vsel %vm293, %v291, %v288
        %vm295 = vcmask 1041408
        %v296 = vsel %vm295, %v291, %v292
        %v297 = vsel %vm293, %v296, %v290
        %vm300 = vcmask 1040464
        %vm301 = vsmask.f32 256
        %vm302 = vmand %vm300, %vm301
        %vm303 = vcmask 1042434
        %vm304 = vsmask.f32 2304
        %vm305 = vmand %vm303, %vm304
        %vm306 = vmor %vm305, %vm302
        %vm307 = vcmask 1044484
        %vm308 = vsmask.f32 4352
        %vm309 = vmand %vm307, %vm308
        %vm310 = vmor %vm309, %vm306
        %vm311 = vcmask 1046534
        %vm312 = vsmask.f32 6400
        %vm313 = vmand %vm311, %vm312
        %vm314 = vmor %vm313, %vm310
        %v315 = vld [vmem:[#allocation2 + $0x2] sm:$0x55]
        %v316 = vsel %vm314, %v294, %v315
        %317 = vst [vmem:[#allocation2 + $0x2] sm:$0x55] %v316
        %vm318 = vcmask 1040384
        %vm319 = vmand %vm318, %vm301
        %vm320 = vmor %vm305, %vm319
        %vm321 = vmor %vm309, %vm320
        %vm322 = vcmask 849926
        %vm323 = vmand %vm322, %vm312
        %vm324 = vmor %vm323, %vm321
        %v325 = vld [vmem:[#allocation2 + $0xa] sm:$0x55]
        %v326 = vsel %vm324, %v297, %v325
        %327 = vst [vmem:[#allocation2 + $0xa] sm:$0x55] %v326
        %v328 = vld [vmem:[%s192] sm:$0xff]
        %v330 = vlaneseq
        %v331 = vshrl.u32 %v330, 7
        %v332 = vsub.s32 0, %v331
        %v333 = vrot.slane %v328, %v332
        %v334 = vlaneseq
        %v335 = vshrl.u32 %v334, 7
        %v336 = vsub.s32 1, %v335
        %v337 = vrot.slane %v328, %v336
        %v338 = vlaneseq
        %v339 = vshrl.u32 %v338, 7
        %v340 = vsub.s32 2, %v339
        %v341 = vrot.slane %v328, %v340
        %v342 = vlaneseq
        %v343 = vshrl.u32 %v342, 7
        %v344 = vsub.s32 3, %v343
        %v345 = vrot.slane %v328, %v344
        %v346 = vlaneseq
        %v347 = vshrl.u32 %v346, 7
        %v348 = vsub.s32 4, %v347
        %v349 = vrot.slane %v328, %v348
        %v350 = vlaneseq
        %v351 = vshrl.u32 %v350, 7
        %v352 = vsub.s32 5, %v351
        %v353 = vrot.slane %v328, %v352
        %v354 = vlaneseq
        %v355 = vshrl.u32 %v354, 7
        %v356 = vsub.s32 6, %v355
        %v357 = vrot.slane %v328, %v356
        %v358 = vlaneseq
        %v359 = vshrl.u32 %v358, 7
        %v360 = vsub.s32 7, %v359
        %v361 = vrot.slane %v328, %v360
        %v370 = vpack.c.bf16 %v333, %v333
        %v371 = vpack.c.bf16 %v337, %v337
        %v372 = vpack.c.bf16 %v341, %v341
        %v373 = vpack.c.bf16 %v345, %v345
        %v374 = vpack.c.bf16 %v349, %v349
        %v375 = vpack.c.bf16 %v353, %v353
        %v376 = vpack.c.bf16 %v357, %v357
        %v377 = vpack.c.bf16 %v361, %v361
        %v386 = vcombine.low %v370, %v371
        %v387 = vcombine.low %v372, %v373
        %v389 = vunpack.c.l.s4 1983009808
        %v390 = vunpack.c.0.s8 %v389
        %v391 = vlaneseq
        %v392 = vshrl.u32 %v391, 7
        %v393 = vsub.s32 %v390, %v392
        %v394 = vrot.slane %v386, %v393
        %v396 = vunpack.c.l.s4 1983009808
        %v397 = vunpack.c.0.s8 %v396
        %v398 = vlaneseq
        %v399 = vshrl.u32 %v398, 7
        %v400 = vsub.s32 %v397, %v399
        %v401 = vrot.slane %v387, %v400
        %v402 = vcombine.low %v394, %v401
        %v403 = vcombine.low %v374, %v375
        %v404 = vcombine.low %v376, %v377
        %v406 = vunpack.c.l.s4 1983009808
        %v407 = vunpack.c.0.s8 %v406
        %v408 = vlaneseq
        %v409 = vshrl.u32 %v408, 7
        %v410 = vsub.s32 %v407, %v409
        %v411 = vrot.slane %v403, %v410
        %v413 = vunpack.c.l.s4 1983009808
        %v414 = vunpack.c.0.s8 %v413
        %v415 = vlaneseq
        %v416 = vshrl.u32 %v415, 7
        %v417 = vsub.s32 %v414, %v416
        %v418 = vrot.slane %v404, %v417
        %v419 = vcombine.low %v411, %v418
        %v421 = vshll.u32 %v402, 16
        %v424 = vshll.u32 %v419, 16
        %vm428 = vsmask.f32 7938
        %vm429 = vmand %vm318, %vm428
        %vm430 = vsmask.f32 7946
        %vm431 = vmand %vm303, %vm430
        %vm432 = vmor %vm431, %vm429
        %vm433 = vsmask.f32 7954
        %vm434 = vmand %vm307, %vm433
        %vm435 = vmor %vm434, %vm432
        %vm436 = vsmask.f32 7962
        %vm437 = vmand %vm311, %vm436
        %vm438 = vmor %vm437, %vm435
        %v439 = vld [vmem:[#allocation2 + $0x2] sm:$0x55]
        %v440 = vsel %vm438, %v421, %v439
        %441 = vst [vmem:[#allocation2 + $0x2] sm:$0x55] %v440
        %vm442 = vmand %vm322, %vm436
        %vm443 = vmor %vm442, %vm435
        %v444 = vld [vmem:[#allocation2 + $0xa] sm:$0x55]
        %v445 = vsel %vm443, %v424, %v444
        %446 = vst [vmem:[#allocation2 + $0xa] sm:$0x55] %v445
        %v447 = vld [vmem:[%s192] sm:$0xff]
        %v449 = vlaneseq
        %v450 = vshrl.u32 %v449, 7
        %v451 = vsub.s32 0, %v450
        %v452 = vrot.slane %v447, %v451
        %v453 = vlaneseq
        %v454 = vshrl.u32 %v453, 7
        %v455 = vsub.s32 1, %v454
        %v456 = vrot.slane %v447, %v455
        %v457 = vlaneseq
        %v458 = vshrl.u32 %v457, 7
        %v459 = vsub.s32 2, %v458
        %v460 = vrot.slane %v447, %v459
        %v461 = vlaneseq
        %v462 = vshrl.u32 %v461, 7
        %v463 = vsub.s32 3, %v462
        %v464 = vrot.slane %v447, %v463
        %v465 = vlaneseq
        %v466 = vshrl.u32 %v465, 7
        %v467 = vsub.s32 4, %v466
        %v468 = vrot.slane %v447, %v467
        %v469 = vlaneseq
        %v470 = vshrl.u32 %v469, 7
        %v471 = vsub.s32 5, %v470
        %v472 = vrot.slane %v447, %v471
        %v473 = vlaneseq
        %v474 = vshrl.u32 %v473, 7
        %v475 = vsub.s32 6, %v474
        %v476 = vrot.slane %v447, %v475
        %v477 = vlaneseq
        %v478 = vshrl.u32 %v477, 7
        %v479 = vsub.s32 7, %v478
        %v480 = vrot.slane %v447, %v479
        %v489 = vpack.c.bf16 %v452, %v452
        %v490 = vpack.c.bf16 %v456, %v456
        %v491 = vpack.c.bf16 %v460, %v460
        %v492 = vpack.c.bf16 %v464, %v464
        %v493 = vpack.c.bf16 %v468, %v468
        %v494 = vpack.c.bf16 %v472, %v472
        %v495 = vpack.c.bf16 %v476, %v476
        %v496 = vpack.c.bf16 %v480, %v480
        %v505 = vcombine.low %v489, %v490
        %v506 = vcombine.low %v491, %v492
        %v508 = vunpack.c.l.s4 1983009808
        %v509 = vunpack.c.0.s8 %v508
        %v510 = vlaneseq
        %v511 = vshrl.u32 %v510, 7
        %v512 = vsub.s32 %v509, %v511
        %v513 = vrot.slane %v505, %v512
        %v515 = vunpack.c.l.s4 1983009808
        %v516 = vunpack.c.0.s8 %v515
        %v517 = vlaneseq
        %v518 = vshrl.u32 %v517, 7
        %v519 = vsub.s32 %v516, %v518
        %v520 = vrot.slane %v506, %v519
        %v521 = vcombine.low %v513, %v520
        %v522 = vcombine.low %v493, %v494
        %v523 = vcombine.low %v495, %v496
        %v525 = vunpack.c.l.s4 1983009808
        %v526 = vunpack.c.0.s8 %v525
        %v527 = vlaneseq
        %v528 = vshrl.u32 %v527, 7
        %v529 = vsub.s32 %v526, %v528
        %v530 = vrot.slane %v522, %v529
        %v532 = vunpack.c.l.s4 1983009808
        %v533 = vunpack.c.0.s8 %v532
        %v534 = vlaneseq
        %v535 = vshrl.u32 %v534, 7
        %v536 = vsub.s32 %v533, %v535
        %v537 = vrot.slane %v523, %v536
        %v538 = vcombine.low %v530, %v537
        %v539 = vrot.slane %v521, 7
        %v540 = vrot.slane %v538, 7
        %541 = vrot.lane.b32.xlu0 %v539, 118
        %v542 = vpop.permute.xlu0 %541
        %543 = vrot.lane.b32.xlu0 %v540, 118
        %v544 = vpop.permute.xlu0 %543
        %v545 = vrot.slane %v542, 2
        %v546 = vrot.slane %v544, 2
        %vm547 = vcmask 1045504
        %v548 = vsel %vm547, %v545, %v546
        %vm549 = vcmask 965632
        %v550 = vsel %vm549, %v542, %v548
        %v551 = vsel %vm549, %v544, %v546
        %vm554 = vcmask 1041409
        %vm555 = vsmask.f32 1280
        %vm556 = vmand %vm554, %vm555
        %vm557 = vcmask 1043459
        %vm558 = vsmask.f32 3328
        %vm559 = vmand %vm557, %vm558
        %vm560 = vmor %vm559, %vm556
        %vm561 = vcmask 1045509
        %vm562 = vsmask.f32 5376
        %vm563 = vmand %vm561, %vm562
        %vm564 = vmor %vm563, %vm560
        %vm565 = vcmask 1047559
        %vm566 = vsmask.f32 7424
        %vm567 = vmand %vm565, %vm566
        %vm568 = vmor %vm567, %vm564
        %v569 = vld [vmem:[#allocation2 + $0x2] sm:$0xaa]
        %v570 = vsel %vm568, %v550, %v569
        %571 = vst [vmem:[#allocation2 + $0x2] sm:$0xaa] %v570
        %vm572 = vcmask 769031
        %vm573 = vmand %vm572, %vm566
        %vm574 = vmor %vm573, %vm564
        %v575 = vld [vmem:[#allocation2 + $0xa] sm:$0xaa]
        %v576 = vsel %vm574, %v551, %v575
        %577 = vst [vmem:[#allocation2 + $0xa] sm:$0xaa] %v576
        %v578 = vld [vmem:[#allocation2] sm:$0xff]
        %v579 = vld [vmem:[#allocation2 + $0x8] sm:$0xff]
        %v580 = vld [vmem:[#allocation2 + $0x10] sm:$0x3]
        %v581 = vld [vmem:[%s2] sm:$0xf]
        %v582 = vld [vmem:[%s2 + $0x4] sm:$0xf]
        %v583 = vld [vmem:[%s2 + $0x8] sm:$0xf]
        %v584 = vld [vmem:[%s2 + $0xc] sm:$0xf]
        %v585 = vld [vmem:[%s2 + $0x10] sm:$0xf]
        %v586 = vld [vmem:[%s2 + $0x14] sm:$0xf]
        %v587 = vld [vmem:[%s2 + $0x18] sm:$0xf]
        %v588 = vld [vmem:[%s2 + $0x1c] sm:$0xf]
        %v589 = vunpack.c.l.bf16 %v581
        %v590 = vunpack.c.l.bf16 %v582
        %v591 = vunpack.c.l.bf16 %v583
        %v592 = vunpack.c.l.bf16 %v584
        %v593 = vunpack.c.l.bf16 %v585
        %v594 = vunpack.c.l.bf16 %v586
        %v595 = vunpack.c.l.bf16 %v587
        %v596 = vunpack.c.l.bf16 %v588
        %v597 = vunpack.c.l.bf16 %v578
        %v598 = vunpack.c.h.bf16 %v578
        %v599 = vunpack.c.l.bf16 %v579
        %v600 = vunpack.c.h.bf16 %v579
        %v601 = vunpack.c.l.bf16 %v580
        %603 = vset.pattern.permute.xlu0 0
        %604 = vperm.xlu0 %603, %v589
        %v605 = vpop.permute.xlu0 %604
        %608 = vset.pattern.permute.xlu0 0
        %609 = vperm.xlu0 %608, %v590
        %v610 = vpop.permute.xlu0 %609
        %613 = vset.pattern.permute.xlu0 0
        %614 = vperm.xlu0 %613, %v591
        %v615 = vpop.permute.xlu0 %614
        %618 = vset.pattern.permute.xlu0 0
        %619 = vperm.xlu0 %618, %v592
        %v620 = vpop.permute.xlu0 %619
        %623 = vset.pattern.permute.xlu0 0
        %624 = vperm.xlu0 %623, %v593
        %v625 = vpop.permute.xlu0 %624
        %628 = vset.pattern.permute.xlu0 0
        %629 = vperm.xlu0 %628, %v594
        %v630 = vpop.permute.xlu0 %629
        %633 = vset.pattern.permute.xlu0 0
        %634 = vperm.xlu0 %633, %v595
        %v635 = vpop.permute.xlu0 %634
        %638 = vset.pattern.permute.xlu0 0
        %639 = vperm.xlu0 %638, %v596
        %v640 = vpop.permute.xlu0 %639
        %v647 = vlaneseq
        %v648 = vshrl.u32 %v647, 7
        %v649 = vsub.s32 0, %v648
        %v650 = vrot.slane %v597, %v649
        %v651 = vlaneseq
        %v652 = vshrl.u32 %v651, 7
        %v653 = vsub.s32 4, %v652
        %v654 = vrot.slane %v597, %v653
        %v655 = vlaneseq
        %v656 = vshrl.u32 %v655, 7
        %v657 = vsub.s32 0, %v656
        %v658 = vrot.slane %v598, %v657
        %v659 = vlaneseq
        %v660 = vshrl.u32 %v659, 7
        %v661 = vsub.s32 4, %v660
        %v662 = vrot.slane %v598, %v661
        %v663 = vlaneseq
        %v664 = vshrl.u32 %v663, 7
        %v665 = vsub.s32 0, %v664
        %v666 = vrot.slane %v599, %v665
        %v667 = vlaneseq
        %v668 = vshrl.u32 %v667, 7
        %v669 = vsub.s32 4, %v668
        %v670 = vrot.slane %v599, %v669
        %v671 = vlaneseq
        %v672 = vshrl.u32 %v671, 7
        %v673 = vsub.s32 0, %v672
        %v674 = vrot.slane %v600, %v673
        %v675 = vlaneseq
        %v676 = vshrl.u32 %v675, 7
        %v677 = vsub.s32 4, %v676
        %v678 = vrot.slane %v600, %v677
        %v679 = vlaneseq
        %v680 = vshrl.u32 %v679, 7
        %v681 = vsub.s32 0, %v680
        %v682 = vrot.slane %v601, %v681
        %v692 = vlaneseq
        %v693 = vshrl.u32 %v692, 7
        %v694 = vsub.s32 0, %v693
        %v695 = vrot.slane %v650, %v694
        %v696 = vlaneseq
        %v697 = vshrl.u32 %v696, 7
        %v698 = vsub.s32 0, %v697
        %v699 = vrot.slane %v654, %v698
        %v700 = vlaneseq
        %v701 = vshrl.u32 %v700, 7
        %v702 = vsub.s32 0, %v701
        %v703 = vrot.slane %v658, %v702
        %v704 = vlaneseq
        %v705 = vshrl.u32 %v704, 7
        %v706 = vsub.s32 0, %v705
        %v707 = vrot.slane %v662, %v706
        %v708 = vlaneseq
        %v709 = vshrl.u32 %v708, 7
        %v710 = vsub.s32 0, %v709
        %v711 = vrot.slane %v666, %v710
        %v712 = vlaneseq
        %v713 = vshrl.u32 %v712, 7
        %v714 = vsub.s32 0, %v713
        %v715 = vrot.slane %v670, %v714
        %v716 = vlaneseq
        %v717 = vshrl.u32 %v716, 7
        %v718 = vsub.s32 0, %v717
        %v719 = vrot.slane %v674, %v718
        %v720 = vlaneseq
        %v721 = vshrl.u32 %v720, 7
        %v722 = vsub.s32 0, %v721
        %v723 = vrot.slane %v678, %v722
        %v724 = vlaneseq
        %v725 = vshrl.u32 %v724, 7
        %v726 = vsub.s32 0, %v725
        %v727 = vrot.slane %v682, %v726
        %v728 = vmul.f32 %v605, %v695
        %v729 = vmul.f32 %v605, %v699
        %v730 = vmul.f32 %v605, %v703
        %v731 = vmul.f32 %v605, %v707
        %v732 = vmul.f32 %v605, %v711
        %v733 = vmul.f32 %v605, %v715
        %v734 = vmul.f32 %v605, %v719
        %v735 = vmul.f32 %v605, %v723
        %v736 = vmul.f32 %v605, %v727
        %v737 = vmul.f32 %v610, %v695
        %v738 = vmul.f32 %v610, %v699
        %v739 = vmul.f32 %v610, %v703
        %v740 = vmul.f32 %v610, %v707
        %v741 = vmul.f32 %v610, %v711
        %v742 = vmul.f32 %v610, %v715
        %v743 = vmul.f32 %v610, %v719
        %v744 = vmul.f32 %v610, %v723
        %v745 = vmul.f32 %v610, %v727
        %v746 = vmul.f32 %v615, %v695
        %v747 = vmul.f32 %v615, %v699
        %v748 = vmul.f32 %v615, %v703
        %v749 = vmul.f32 %v615, %v707
        %v750 = vmul.f32 %v615, %v711
        %v751 = vmul.f32 %v615, %v715
        %v752 = vmul.f32 %v615, %v719
        %v753 = vmul.f32 %v615, %v723
        %v754 = vmul.f32 %v615, %v727
        %v755 = vmul.f32 %v620, %v695
        %v756 = vmul.f32 %v620, %v699
        %v757 = vmul.f32 %v620, %v703
        %v758 = vmul.f32 %v620, %v707
        %v759 = vmul.f32 %v620, %v711
        %v760 = vmul.f32 %v620, %v715
        %v761 = vmul.f32 %v620, %v719
        %v762 = vmul.f32 %v620, %v723
        %v763 = vmul.f32 %v620, %v727
        %v764 = vmul.f32 %v625, %v695
        %v765 = vmul.f32 %v625, %v699
        %v766 = vmul.f32 %v625, %v703
        %v767 = vmul.f32 %v625, %v707
        %v768 = vmul.f32 %v625, %v711
        %v769 = vmul.f32 %v625, %v715
        %v770 = vmul.f32 %v625, %v719
        %v771 = vmul.f32 %v625, %v723
        %v772 = vmul.f32 %v625, %v727
        %v773 = vmul.f32 %v630, %v695
        %v774 = vmul.f32 %v630, %v699
        %v775 = vmul.f32 %v630, %v703
        %v776 = vmul.f32 %v630, %v707
        %v777 = vmul.f32 %v630, %v711
        %v778 = vmul.f32 %v630, %v715
        %v779 = vmul.f32 %v630, %v719
        %v780 = vmul.f32 %v630, %v723
        %v781 = vmul.f32 %v630, %v727
        %v782 = vmul.f32 %v635, %v695
        %v783 = vmul.f32 %v635, %v699
        %v784 = vmul.f32 %v635, %v703
        %v785 = vmul.f32 %v635, %v707
        %v786 = vmul.f32 %v635, %v711
        %v787 = vmul.f32 %v635, %v715
        %v788 = vmul.f32 %v635, %v719
        %v789 = vmul.f32 %v635, %v723
        %v790 = vmul.f32 %v635, %v727
        %v791 = vmul.f32 %v640, %v695
        %v792 = vmul.f32 %v640, %v699
        %v793 = vmul.f32 %v640, %v703
        %v794 = vmul.f32 %v640, %v707
        %v795 = vmul.f32 %v640, %v711
        %v796 = vmul.f32 %v640, %v715
        %v797 = vmul.f32 %v640, %v719
        %v798 = vmul.f32 %v640, %v723
        %v799 = vmul.f32 %v640, %v727
        %800 = vset.pattern.permute.xlu0 1
        %801 = vperm.xlu0 %800, %v589
        %v802 = vpop.permute.xlu0 %801
        %804 = vset.pattern.permute.xlu0 1
        %805 = vperm.xlu0 %804, %v590
        %v806 = vpop.permute.xlu0 %805
        %808 = vset.pattern.permute.xlu0 1
        %809 = vperm.xlu0 %808, %v591
        %v810 = vpop.permute.xlu0 %809
        %812 = vset.pattern.permute.xlu0 1
        %813 = vperm.xlu0 %812, %v592
        %v814 = vpop.permute.xlu0 %813
        %816 = vset.pattern.permute.xlu0 1
        %817 = vperm.xlu0 %816, %v593
        %v818 = vpop.permute.xlu0 %817
        %820 = vset.pattern.permute.xlu0 1
        %821 = vperm.xlu0 %820, %v594
        %v822 = vpop.permute.xlu0 %821
        %824 = vset.pattern.permute.xlu0 1
        %825 = vperm.xlu0 %824, %v595
        %v826 = vpop.permute.xlu0 %825
        %828 = vset.pattern.permute.xlu0 1
        %829 = vperm.xlu0 %828, %v596
        %v830 = vpop.permute.xlu0 %829
        %v832 = vlaneseq
        %v833 = vshrl.u32 %v832, 7
        %v834 = vsub.s32 1, %v833
        %v835 = vrot.slane %v597, %v834
        %v836 = vlaneseq
        %v837 = vshrl.u32 %v836, 7
        %v838 = vsub.s32 5, %v837
        %v839 = vrot.slane %v597, %v838
        %v840 = vlaneseq
        %v841 = vshrl.u32 %v840, 7
        %v842 = vsub.s32 1, %v841
        %v843 = vrot.slane %v598, %v842
        %v844 = vlaneseq
        %v845 = vshrl.u32 %v844, 7
        %v846 = vsub.s32 5, %v845
        %v847 = vrot.slane %v598, %v846
        %v848 = vlaneseq
        %v849 = vshrl.u32 %v848, 7
        %v850 = vsub.s32 1, %v849
        %v851 = vrot.slane %v599, %v850
        %v852 = vlaneseq
        %v853 = vshrl.u32 %v852, 7
        %v854 = vsub.s32 5, %v853
        %v855 = vrot.slane %v599, %v854
        %v856 = vlaneseq
        %v857 = vshrl.u32 %v856, 7
        %v858 = vsub.s32 1, %v857
        %v859 = vrot.slane %v600, %v858
        %v860 = vlaneseq
        %v861 = vshrl.u32 %v860, 7
        %v862 = vsub.s32 5, %v861
        %v863 = vrot.slane %v600, %v862
        %v864 = vlaneseq
        %v865 = vshrl.u32 %v864, 7
        %v866 = vsub.s32 1, %v865
        %v867 = vrot.slane %v601, %v866
        %v877 = vlaneseq
        %v878 = vshrl.u32 %v877, 7
        %v879 = vsub.s32 1, %v878
        %v880 = vrot.slane %v835, %v879
        %v881 = vlaneseq
        %v882 = vshrl.u32 %v881, 7
        %v883 = vsub.s32 1, %v882
        %v884 = vrot.slane %v839, %v883
        %v885 = vlaneseq
        %v886 = vshrl.u32 %v885, 7
        %v887 = vsub.s32 1, %v886
        %v888 = vrot.slane %v843, %v887
        %v889 = vlaneseq
        %v890 = vshrl.u32 %v889, 7
        %v891 = vsub.s32 1, %v890
        %v892 = vrot.slane %v847, %v891
        %v893 = vlaneseq
        %v894 = vshrl.u32 %v893, 7
        %v895 = vsub.s32 1, %v894
        %v896 = vrot.slane %v851, %v895
        %v897 = vlaneseq
        %v898 = vshrl.u32 %v897, 7
        %v899 = vsub.s32 1, %v898
        %v900 = vrot.slane %v855, %v899
        %v901 = vlaneseq
        %v902 = vshrl.u32 %v901, 7
        %v903 = vsub.s32 1, %v902
        %v904 = vrot.slane %v859, %v903
        %v905 = vlaneseq
        %v906 = vshrl.u32 %v905, 7
        %v907 = vsub.s32 1, %v906
        %v908 = vrot.slane %v863, %v907
        %v909 = vlaneseq
        %v910 = vshrl.u32 %v909, 7
        %v911 = vsub.s32 1, %v910
        %v912 = vrot.slane %v867, %v911
        %v913 = vmul.f32 %v802, %v880
        %v914 = vmul.f32 %v802, %v884
        %v915 = vmul.f32 %v802, %v888
        %v916 = vmul.f32 %v802, %v892
        %v917 = vmul.f32 %v802, %v896
        %v918 = vmul.f32 %v802, %v900
        %v919 = vmul.f32 %v802, %v904
        %v920 = vmul.f32 %v802, %v908
        %v921 = vmul.f32 %v802, %v912
        %v922 = vmul.f32 %v806, %v880
        %v923 = vmul.f32 %v806, %v884
        %v924 = vmul.f32 %v806, %v888
        %v925 = vmul.f32 %v806, %v892
        %v926 = vmul.f32 %v806, %v896
        %v927 = vmul.f32 %v806, %v900
        %v928 = vmul.f32 %v806, %v904
        %v929 = vmul.f32 %v806, %v908
        %v930 = vmul.f32 %v806, %v912
        %v931 = vmul.f32 %v810, %v880
        %v932 = vmul.f32 %v810, %v884
        %v933 = vmul.f32 %v810, %v888
        %v934 = vmul.f32 %v810, %v892
        %v935 = vmul.f32 %v810, %v896
        %v936 = vmul.f32 %v810, %v900
        %v937 = vmul.f32 %v810, %v904
        %v938 = vmul.f32 %v810, %v908
        %v939 = vmul.f32 %v810, %v912
        %v940 = vmul.f32 %v814, %v880
        %v941 = vmul.f32 %v814, %v884
        %v942 = vmul.f32 %v814, %v888
        %v943 = vmul.f32 %v814, %v892
        %v944 = vmul.f32 %v814, %v896
        %v945 = vmul.f32 %v814, %v900
        %v946 = vmul.f32 %v814, %v904
        %v947 = vmul.f32 %v814, %v908
        %v948 = vmul.f32 %v814, %v912
        %v949 = vmul.f32 %v818, %v880
        %v950 = vmul.f32 %v818, %v884
        %v951 = vmul.f32 %v818, %v888
        %v952 = vmul.f32 %v818, %v892
        %v953 = vmul.f32 %v818, %v896
        %v954 = vmul.f32 %v818, %v900
        %v955 = vmul.f32 %v818, %v904
        %v956 = vmul.f32 %v818, %v908
        %v957 = vmul.f32 %v818, %v912
        %v958 = vmul.f32 %v822, %v880
        %v959 = vmul.f32 %v822, %v884
        %v960 = vmul.f32 %v822, %v888
        %v961 = vmul.f32 %v822, %v892
        %v962 = vmul.f32 %v822, %v896
        %v963 = vmul.f32 %v822, %v900
        %v964 = vmul.f32 %v822, %v904
        %v965 = vmul.f32 %v822, %v908
        %v966 = vmul.f32 %v822, %v912
        %v967 = vmul.f32 %v826, %v880
        %v968 = vmul.f32 %v826, %v884
        %v969 = vmul.f32 %v826, %v888
        %v970 = vmul.f32 %v826, %v892
        %v971 = vmul.f32 %v826, %v896
        %v972 = vmul.f32 %v826, %v900
        %v973 = vmul.f32 %v826, %v904
        %v974 = vmul.f32 %v826, %v908
        %v975 = vmul.f32 %v826, %v912
        %v976 = vmul.f32 %v830, %v880
        %v977 = vmul.f32 %v830, %v884
        %v978 = vmul.f32 %v830, %v888
        %v979 = vmul.f32 %v830, %v892
        %v980 = vmul.f32 %v830, %v896
        %v981 = vmul.f32 %v830, %v900
        %v982 = vmul.f32 %v830, %v904
        %v983 = vmul.f32 %v830, %v908
        %v984 = vmul.f32 %v830, %v912
        %v985 = vadd.f32 %v728, %v913
        %v986 = vadd.f32 %v729, %v914
        %v987 = vadd.f32 %v730, %v915
        %v988 = vadd.f32 %v731, %v916
        %v989 = vadd.f32 %v732, %v917
        %v990 = vadd.f32 %v733, %v918
        %v991 = vadd.f32 %v734, %v919
        %v992 = vadd.f32 %v735, %v920
        %v993 = vadd.f32 %v736, %v921
        %v994 = vadd.f32 %v737, %v922
        %v995 = vadd.f32 %v738, %v923
        %v996 = vadd.f32 %v739, %v924
        %v997 = vadd.f32 %v740, %v925
        %v998 = vadd.f32 %v741, %v926
        %v999 = vadd.f32 %v742, %v927
        %v1000 = vadd.f32 %v743, %v928
        %v1001 = vadd.f32 %v744, %v929
        %v1002 = vadd.f32 %v745, %v930
        %v1003 = vadd.f32 %v746, %v931
        %v1004 = vadd.f32 %v747, %v932
        %v1005 = vadd.f32 %v748, %v933
        %v1006 = vadd.f32 %v749, %v934
        %v1007 = vadd.f32 %v750, %v935
        %v1008 = vadd.f32 %v751, %v936
        %v1009 = vadd.f32 %v752, %v937
        %v1010 = vadd.f32 %v753, %v938
        %v1011 = vadd.f32 %v754, %v939
        %v1012 = vadd.f32 %v755, %v940
        %v1013 = vadd.f32 %v756, %v941
        %v1014 = vadd.f32 %v757, %v942
        %v1015 = vadd.f32 %v758, %v943
        %v1016 = vadd.f32 %v759, %v944
        %v1017 = vadd.f32 %v760, %v945
        %v1018 = vadd.f32 %v761, %v946
        %v1019 = vadd.f32 %v762, %v947
        %v1020 = vadd.f32 %v763, %v948
        %v1021 = vadd.f32 %v764, %v949
        %v1022 = vadd.f32 %v765, %v950
        %v1023 = vadd.f32 %v766, %v951
        %v1024 = vadd.f32 %v767, %v952
        %v1025 = vadd.f32 %v768, %v953
        %v1026 = vadd.f32 %v769, %v954
        %v1027 = vadd.f32 %v770, %v955
        %v1028 = vadd.f32 %v771, %v956
        %v1029 = vadd.f32 %v772, %v957
        %v1030 = vadd.f32 %v773, %v958
        %v1031 = vadd.f32 %v774, %v959
        %v1032 = vadd.f32 %v775, %v960
        %v1033 = vadd.f32 %v776, %v961
        %v1034 = vadd.f32 %v777, %v962
        %v1035 = vadd.f32 %v778, %v963
        %v1036 = vadd.f32 %v779, %v964
        %v1037 = vadd.f32 %v780, %v965
        %v1038 = vadd.f32 %v781, %v966
        %v1039 = vadd.f32 %v782, %v967
        %v1040 = vadd.f32 %v783, %v968
        %v1041 = vadd.f32 %v784, %v969
        %v1042 = vadd.f32 %v785, %v970
        %v1043 = vadd.f32 %v786, %v971
        %v1044 = vadd.f32 %v787, %v972
        %v1045 = vadd.f32 %v788, %v973
        %v1046 = vadd.f32 %v789, %v974
        %v1047 = vadd.f32 %v790, %v975
        %v1048 = vadd.f32 %v791, %v976
        %v1049 = vadd.f32 %v792, %v977
        %v1050 = vadd.f32 %v793, %v978
        %v1051 = vadd.f32 %v794, %v979
        %v1052 = vadd.f32 %v795, %v980
        %v1053 = vadd.f32 %v796, %v981
        %v1054 = vadd.f32 %v797, %v982
        %v1055 = vadd.f32 %v798, %v983
        %v1056 = vadd.f32 %v799, %v984
        %1057 = vset.pattern.permute.xlu0 2
        %1058 = vperm.xlu0 %1057, %v589
        %v1059 = vpop.permute.xlu0 %1058
        %1061 = vset.pattern.permute.xlu0 2
        %1062 = vperm.xlu0 %1061, %v590
        %v1063 = vpop.permute.xlu0 %1062
        %1065 = vset.pattern.permute.xlu0 2
        %1066 = vperm.xlu0 %1065, %v591
        %v1067 = vpop.permute.xlu0 %1066
        %1069 = vset.pattern.permute.xlu0 2
        %1070 = vperm.xlu0 %1069, %v592
        %v1071 = vpop.permute.xlu0 %1070
        %1073 = vset.pattern.permute.xlu0 2
        %1074 = vperm.xlu0 %1073, %v593
        %v1075 = vpop.permute.xlu0 %1074
        %1077 = vset.pattern.permute.xlu0 2
        %1078 = vperm.xlu0 %1077, %v594
        %v1079 = vpop.permute.xlu0 %1078
        %1081 = vset.pattern.permute.xlu0 2
        %1082 = vperm.xlu0 %1081, %v595
        %v1083 = vpop.permute.xlu0 %1082
        %1085 = vset.pattern.permute.xlu0 2
        %1086 = vperm.xlu0 %1085, %v596
        %v1087 = vpop.permute.xlu0 %1086
        %v1089 = vlaneseq
        %v1090 = vshrl.u32 %v1089, 7
        %v1091 = vsub.s32 2, %v1090
        %v1092 = vrot.slane %v597, %v1091
        %v1093 = vlaneseq
        %v1094 = vshrl.u32 %v1093, 7
        %v1095 = vsub.s32 6, %v1094
        %v1096 = vrot.slane %v597, %v1095
        %v1097 = vlaneseq
        %v1098 = vshrl.u32 %v1097, 7
        %v1099 = vsub.s32 2, %v1098
        %v1100 = vrot.slane %v598, %v1099
        %v1101 = vlaneseq
        %v1102 = vshrl.u32 %v1101, 7
        %v1103 = vsub.s32 6, %v1102
        %v1104 = vrot.slane %v598, %v1103
        %v1105 = vlaneseq
        %v1106 = vshrl.u32 %v1105, 7
        %v1107 = vsub.s32 2, %v1106
        %v1108 = vrot.slane %v599, %v1107
        %v1109 = vlaneseq
        %v1110 = vshrl.u32 %v1109, 7
        %v1111 = vsub.s32 6, %v1110
        %v1112 = vrot.slane %v599, %v1111
        %v1113 = vlaneseq
        %v1114 = vshrl.u32 %v1113, 7
        %v1115 = vsub.s32 2, %v1114
        %v1116 = vrot.slane %v600, %v1115
        %v1117 = vlaneseq
        %v1118 = vshrl.u32 %v1117, 7
        %v1119 = vsub.s32 6, %v1118
        %v1120 = vrot.slane %v600, %v1119
        %v1121 = vlaneseq
        %v1122 = vshrl.u32 %v1121, 7
        %v1123 = vsub.s32 2, %v1122
        %v1124 = vrot.slane %v601, %v1123
        %v1134 = vlaneseq
        %v1135 = vshrl.u32 %v1134, 7
        %v1136 = vsub.s32 2, %v1135
        %v1137 = vrot.slane %v1092, %v1136
        %v1138 = vlaneseq
        %v1139 = vshrl.u32 %v1138, 7
        %v1140 = vsub.s32 2, %v1139
        %v1141 = vrot.slane %v1096, %v1140
        %v1142 = vlaneseq
        %v1143 = vshrl.u32 %v1142, 7
        %v1144 = vsub.s32 2, %v1143
        %v1145 = vrot.slane %v1100, %v1144
        %v1146 = vlaneseq
        %v1147 = vshrl.u32 %v1146, 7
        %v1148 = vsub.s32 2, %v1147
        %v1149 = vrot.slane %v1104, %v1148
        %v1150 = vlaneseq
        %v1151 = vshrl.u32 %v1150, 7
        %v1152 = vsub.s32 2, %v1151
        %v1153 = vrot.slane %v1108, %v1152
        %v1154 = vlaneseq
        %v1155 = vshrl.u32 %v1154, 7
        %v1156 = vsub.s32 2, %v1155
        %v1157 = vrot.slane %v1112, %v1156
        %v1158 = vlaneseq
        %v1159 = vshrl.u32 %v1158, 7
        %v1160 = vsub.s32 2, %v1159
        %v1161 = vrot.slane %v1116, %v1160
        %v1162 = vlaneseq
        %v1163 = vshrl.u32 %v1162, 7
        %v1164 = vsub.s32 2, %v1163
        %v1165 = vrot.slane %v1120, %v1164
        %v1166 = vlaneseq
        %v1167 = vshrl.u32 %v1166, 7
        %v1168 = vsub.s32 2, %v1167
        %v1169 = vrot.slane %v1124, %v1168
        %v1170 = vmul.f32 %v1059, %v1137
        %v1171 = vmul.f32 %v1059, %v1141
        %v1172 = vmul.f32 %v1059, %v1145
        %v1173 = vmul.f32 %v1059, %v1149
        %v1174 = vmul.f32 %v1059, %v1153
        %v1175 = vmul.f32 %v1059, %v1157
        %v1176 = vmul.f32 %v1059, %v1161
        %v1177 = vmul.f32 %v1059, %v1165
        %v1178 = vmul.f32 %v1059, %v1169
        %v1179 = vmul.f32 %v1063, %v1137
        %v1180 = vmul.f32 %v1063, %v1141
        %v1181 = vmul.f32 %v1063, %v1145
        %v1182 = vmul.f32 %v1063, %v1149
        %v1183 = vmul.f32 %v1063, %v1153
        %v1184 = vmul.f32 %v1063, %v1157
        %v1185 = vmul.f32 %v1063, %v1161
        %v1186 = vmul.f32 %v1063, %v1165
        %v1187 = vmul.f32 %v1063, %v1169
        %v1188 = vmul.f32 %v1067, %v1137
        %v1189 = vmul.f32 %v1067, %v1141
        %v1190 = vmul.f32 %v1067, %v1145
        %v1191 = vmul.f32 %v1067, %v1149
        %v1192 = vmul.f32 %v1067, %v1153
        %v1193 = vmul.f32 %v1067, %v1157
        %v1194 = vmul.f32 %v1067, %v1161
        %v1195 = vmul.f32 %v1067, %v1165
        %v1196 = vmul.f32 %v1067, %v1169
        %v1197 = vmul.f32 %v1071, %v1137
        %v1198 = vmul.f32 %v1071, %v1141
        %v1199 = vmul.f32 %v1071, %v1145
        %v1200 = vmul.f32 %v1071, %v1149
        %v1201 = vmul.f32 %v1071, %v1153
        %v1202 = vmul.f32 %v1071, %v1157
        %v1203 = vmul.f32 %v1071, %v1161
        %v1204 = vmul.f32 %v1071, %v1165
        %v1205 = vmul.f32 %v1071, %v1169
        %v1206 = vmul.f32 %v1075, %v1137
        %v1207 = vmul.f32 %v1075, %v1141
        %v1208 = vmul.f32 %v1075, %v1145
        %v1209 = vmul.f32 %v1075, %v1149
        %v1210 = vmul.f32 %v1075, %v1153
        %v1211 = vmul.f32 %v1075, %v1157
        %v1212 = vmul.f32 %v1075, %v1161
        %v1213 = vmul.f32 %v1075, %v1165
        %v1214 = vmul.f32 %v1075, %v1169
        %v1215 = vmul.f32 %v1079, %v1137
        %v1216 = vmul.f32 %v1079, %v1141
        %v1217 = vmul.f32 %v1079, %v1145
        %v1218 = vmul.f32 %v1079, %v1149
        %v1219 = vmul.f32 %v1079, %v1153
        %v1220 = vmul.f32 %v1079, %v1157
        %v1221 = vmul.f32 %v1079, %v1161
        %v1222 = vmul.f32 %v1079, %v1165
        %v1223 = vmul.f32 %v1079, %v1169
        %v1224 = vmul.f32 %v1083, %v1137
        %v1225 = vmul.f32 %v1083, %v1141
        %v1226 = vmul.f32 %v1083, %v1145
        %v1227 = vmul.f32 %v1083, %v1149
        %v1228 = vmul.f32 %v1083, %v1153
        %v1229 = vmul.f32 %v1083, %v1157
        %v1230 = vmul.f32 %v1083, %v1161
        %v1231 = vmul.f32 %v1083, %v1165
        %v1232 = vmul.f32 %v1083, %v1169
        %v1233 = vmul.f32 %v1087, %v1137
        %v1234 = vmul.f32 %v1087, %v1141
        %v1235 = vmul.f32 %v1087, %v1145
        %v1236 = vmul.f32 %v1087, %v1149
        %v1237 = vmul.f32 %v1087, %v1153
        %v1238 = vmul.f32 %v1087, %v1157
        %v1239 = vmul.f32 %v1087, %v1161
        %v1240 = vmul.f32 %v1087, %v1165
        %v1241 = vmul.f32 %v1087, %v1169
        %v1242 = vadd.f32 %v985, %v1170
        %v1243 = vadd.f32 %v986, %v1171
        %v1244 = vadd.f32 %v987, %v1172
        %v1245 = vadd.f32 %v988, %v1173
        %v1246 = vadd.f32 %v989, %v1174
        %v1247 = vadd.f32 %v990, %v1175
        %v1248 = vadd.f32 %v991, %v1176
        %v1249 = vadd.f32 %v992, %v1177
        %v1250 = vadd.f32 %v993, %v1178
        %v1251 = vadd.f32 %v994, %v1179
        %v1252 = vadd.f32 %v995, %v1180
        %v1253 = vadd.f32 %v996, %v1181
        %v1254 = vadd.f32 %v997, %v1182
        %v1255 = vadd.f32 %v998, %v1183
        %v1256 = vadd.f32 %v999, %v1184
        %v1257 = vadd.f32 %v1000, %v1185
        %v1258 = vadd.f32 %v1001, %v1186
        %v1259 = vadd.f32 %v1002, %v1187
        %v1260 = vadd.f32 %v1003, %v1188
        %v1261 = vadd.f32 %v1004, %v1189
        %v1262 = vadd.f32 %v1005, %v1190
        %v1263 = vadd.f32 %v1006, %v1191
        %v1264 = vadd.f32 %v1007, %v1192
        %v1265 = vadd.f32 %v1008, %v1193
        %v1266 = vadd.f32 %v1009, %v1194
        %v1267 = vadd.f32 %v1010, %v1195
        %v1268 = vadd.f32 %v1011, %v1196
        %v1269 = vadd.f32 %v1012, %v1197
        %v1270 = vadd.f32 %v1013, %v1198
        %v1271 = vadd.f32 %v1014, %v1199
        %v1272 = vadd.f32 %v1015, %v1200
        %v1273 = vadd.f32 %v1016, %v1201
        %v1274 = vadd.f32 %v1017, %v1202
        %v1275 = vadd.f32 %v1018, %v1203
        %v1276 = vadd.f32 %v1019, %v1204
        %v1277 = vadd.f32 %v1020, %v1205
        %v1278 = vadd.f32 %v1021, %v1206
        %v1279 = vadd.f32 %v1022, %v1207
        %v1280 = vadd.f32 %v1023, %v1208
        %v1281 = vadd.f32 %v1024, %v1209
        %v1282 = vadd.f32 %v1025, %v1210
        %v1283 = vadd.f32 %v1026, %v1211
        %v1284 = vadd.f32 %v1027, %v1212
        %v1285 = vadd.f32 %v1028, %v1213
        %v1286 = vadd.f32 %v1029, %v1214
        %v1287 = vadd.f32 %v1030, %v1215
        %v1288 = vadd.f32 %v1031, %v1216
        %v1289 = vadd.f32 %v1032, %v1217
        %v1290 = vadd.f32 %v1033, %v1218
        %v1291 = vadd.f32 %v1034, %v1219
        %v1292 = vadd.f32 %v1035, %v1220
        %v1293 = vadd.f32 %v1036, %v1221
        %v1294 = vadd.f32 %v1037, %v1222
        %v1295 = vadd.f32 %v1038, %v1223
        %v1296 = vadd.f32 %v1039, %v1224
        %v1297 = vadd.f32 %v1040, %v1225
        %v1298 = vadd.f32 %v1041, %v1226
        %v1299 = vadd.f32 %v1042, %v1227
        %v1300 = vadd.f32 %v1043, %v1228
        %v1301 = vadd.f32 %v1044, %v1229
        %v1302 = vadd.f32 %v1045, %v1230
        %v1303 = vadd.f32 %v1046, %v1231
        %v1304 = vadd.f32 %v1047, %v1232
        %v1305 = vadd.f32 %v1048, %v1233
        %v1306 = vadd.f32 %v1049, %v1234
        %v1307 = vadd.f32 %v1050, %v1235
        %v1308 = vadd.f32 %v1051, %v1236
        %v1309 = vadd.f32 %v1052, %v1237
        %v1310 = vadd.f32 %v1053, %v1238
        %v1311 = vadd.f32 %v1054, %v1239
        %v1312 = vadd.f32 %v1055, %v1240
        %v1313 = vadd.f32 %v1056, %v1241
        %s1314 = scalar_lea.vmem %s2, 32
        %v1315 = vld [vmem:[%s1314] sm:$0xf]
        %v1316 = vld [vmem:[%s1314 + $0x4] sm:$0xf]
        %v1317 = vld [vmem:[%s1314 + $0x8] sm:$0xf]
        %v1318 = vld [vmem:[%s1314 + $0xc] sm:$0xf]
        %v1319 = vld [vmem:[%s1314 + $0x10] sm:$0xf]
        %v1320 = vld [vmem:[%s1314 + $0x14] sm:$0xf]
        %v1321 = vld [vmem:[%s1314 + $0x18] sm:$0xf]
        %v1322 = vld [vmem:[%s1314 + $0x1c] sm:$0xf]
        %v1323 = vunpack.c.l.bf16 %v1315
        %v1324 = vunpack.c.l.bf16 %v1316
        %v1325 = vunpack.c.l.bf16 %v1317
        %v1326 = vunpack.c.l.bf16 %v1318
        %v1327 = vunpack.c.l.bf16 %v1319
        %v1328 = vunpack.c.l.bf16 %v1320
        %v1329 = vunpack.c.l.bf16 %v1321
        %v1330 = vunpack.c.l.bf16 %v1322
        %1332 = vset.pattern.permute.xlu0 0
        %1333 = vperm.xlu0 %1332, %v1323
        %v1334 = vpop.permute.xlu0 %1333
        %1337 = vset.pattern.permute.xlu0 0
        %1338 = vperm.xlu0 %1337, %v1324
        %v1339 = vpop.permute.xlu0 %1338
        %1342 = vset.pattern.permute.xlu0 0
        %1343 = vperm.xlu0 %1342, %v1325
        %v1344 = vpop.permute.xlu0 %1343
        %1347 = vset.pattern.permute.xlu0 0
        %1348 = vperm.xlu0 %1347, %v1326
        %v1349 = vpop.permute.xlu0 %1348
        %1352 = vset.pattern.permute.xlu0 0
        %1353 = vperm.xlu0 %1352, %v1327
        %v1354 = vpop.permute.xlu0 %1353
        %1357 = vset.pattern.permute.xlu0 0
        %1358 = vperm.xlu0 %1357, %v1328
        %v1359 = vpop.permute.xlu0 %1358
        %1362 = vset.pattern.permute.xlu0 0
        %1363 = vperm.xlu0 %1362, %v1329
        %v1364 = vpop.permute.xlu0 %1363
        %1367 = vset.pattern.permute.xlu0 0
        %1368 = vperm.xlu0 %1367, %v1330
        %v1369 = vpop.permute.xlu0 %1368
        %v1371 = vmul.f32 %v1334, %v695
        %v1372 = vmul.f32 %v1334, %v699
        %v1373 = vmul.f32 %v1334, %v703
        %v1374 = vmul.f32 %v1334, %v707
        %v1375 = vmul.f32 %v1334, %v711
        %v1376 = vmul.f32 %v1334, %v715
        %v1377 = vmul.f32 %v1334, %v719
        %v1378 = vmul.f32 %v1334, %v723
        %v1379 = vmul.f32 %v1334, %v727
        %v1380 = vmul.f32 %v1339, %v695
        %v1381 = vmul.f32 %v1339, %v699
        %v1382 = vmul.f32 %v1339, %v703
        %v1383 = vmul.f32 %v1339, %v707
        %v1384 = vmul.f32 %v1339, %v711
        %v1385 = vmul.f32 %v1339, %v715
        %v1386 = vmul.f32 %v1339, %v719
        %v1387 = vmul.f32 %v1339, %v723
        %v1388 = vmul.f32 %v1339, %v727
        %v1389 = vmul.f32 %v1344, %v695
        %v1390 = vmul.f32 %v1344, %v699
        %v1391 = vmul.f32 %v1344, %v703
        %v1392 = vmul.f32 %v1344, %v707
        %v1393 = vmul.f32 %v1344, %v711
        %v1394 = vmul.f32 %v1344, %v715
        %v1395 = vmul.f32 %v1344, %v719
        %v1396 = vmul.f32 %v1344, %v723
        %v1397 = vmul.f32 %v1344, %v727
        %v1398 = vmul.f32 %v1349, %v695
        %v1399 = vmul.f32 %v1349, %v699
        %v1400 = vmul.f32 %v1349, %v703
        %v1401 = vmul.f32 %v1349, %v707
        %v1402 = vmul.f32 %v1349, %v711
        %v1403 = vmul.f32 %v1349, %v715
        %v1404 = vmul.f32 %v1349, %v719
        %v1405 = vmul.f32 %v1349, %v723
        %v1406 = vmul.f32 %v1349, %v727
        %v1407 = vmul.f32 %v1354, %v695
        %v1408 = vmul.f32 %v1354, %v699
        %v1409 = vmul.f32 %v1354, %v703
        %v1410 = vmul.f32 %v1354, %v707
        %v1411 = vmul.f32 %v1354, %v711
        %v1412 = vmul.f32 %v1354, %v715
        %v1413 = vmul.f32 %v1354, %v719
        %v1414 = vmul.f32 %v1354, %v723
        %v1415 = vmul.f32 %v1354, %v727
        %v1416 = vmul.f32 %v1359, %v695
        %v1417 = vmul.f32 %v1359, %v699
        %v1418 = vmul.f32 %v1359, %v703
        %v1419 = vmul.f32 %v1359, %v707
        %v1420 = vmul.f32 %v1359, %v711
        %v1421 = vmul.f32 %v1359, %v715
        %v1422 = vmul.f32 %v1359, %v719
        %v1423 = vmul.f32 %v1359, %v723
        %v1424 = vmul.f32 %v1359, %v727
        %v1425 = vmul.f32 %v1364, %v695
        %v1426 = vmul.f32 %v1364, %v699
        %v1427 = vmul.f32 %v1364, %v703
        %v1428 = vmul.f32 %v1364, %v707
        %v1429 = vmul.f32 %v1364, %v711
        %v1430 = vmul.f32 %v1364, %v715
        %v1431 = vmul.f32 %v1364, %v719
        %v1432 = vmul.f32 %v1364, %v723
        %v1433 = vmul.f32 %v1364, %v727
        %v1434 = vmul.f32 %v1369, %v695
        %v1435 = vmul.f32 %v1369, %v699
        %v1436 = vmul.f32 %v1369, %v703
        %v1437 = vmul.f32 %v1369, %v707
        %v1438 = vmul.f32 %v1369, %v711
        %v1439 = vmul.f32 %v1369, %v715
        %v1440 = vmul.f32 %v1369, %v719
        %v1441 = vmul.f32 %v1369, %v723
        %v1442 = vmul.f32 %v1369, %v727
        %1443 = vset.pattern.permute.xlu0 1
        %1444 = vperm.xlu0 %1443, %v1323
        %v1445 = vpop.permute.xlu0 %1444
        %1447 = vset.pattern.permute.xlu0 1
        %1448 = vperm.xlu0 %1447, %v1324
        %v1449 = vpop.permute.xlu0 %1448
        %1451 = vset.pattern.permute.xlu0 1
        %1452 = vperm.xlu0 %1451, %v1325
        %v1453 = vpop.permute.xlu0 %1452
        %1455 = vset.pattern.permute.xlu0 1
        %1456 = vperm.xlu0 %1455, %v1326
        %v1457 = vpop.permute.xlu0 %1456
        %1459 = vset.pattern.permute.xlu0 1
        %1460 = vperm.xlu0 %1459, %v1327
        %v1461 = vpop.permute.xlu0 %1460
        %1463 = vset.pattern.permute.xlu0 1
        %1464 = vperm.xlu0 %1463, %v1328
        %v1465 = vpop.permute.xlu0 %1464
        %1467 = vset.pattern.permute.xlu0 1
        %1468 = vperm.xlu0 %1467, %v1329
        %v1469 = vpop.permute.xlu0 %1468
        %1471 = vset.pattern.permute.xlu0 1
        %1472 = vperm.xlu0 %1471, %v1330
        %v1473 = vpop.permute.xlu0 %1472
        %v1475 = vmul.f32 %v1445, %v880
        %v1476 = vmul.f32 %v1445, %v884
        %v1477 = vmul.f32 %v1445, %v888
        %v1478 = vmul.f32 %v1445, %v892
        %v1479 = vmul.f32 %v1445, %v896
        %v1480 = vmul.f32 %v1445, %v900
        %v1481 = vmul.f32 %v1445, %v904
        %v1482 = vmul.f32 %v1445, %v908
        %v1483 = vmul.f32 %v1445, %v912
        %v1484 = vmul.f32 %v1449, %v880
        %v1485 = vmul.f32 %v1449, %v884
        %v1486 = vmul.f32 %v1449, %v888
        %v1487 = vmul.f32 %v1449, %v892
        %v1488 = vmul.f32 %v1449, %v896
        %v1489 = vmul.f32 %v1449, %v900
        %v1490 = vmul.f32 %v1449, %v904
        %v1491 = vmul.f32 %v1449, %v908
        %v1492 = vmul.f32 %v1449, %v912
        %v1493 = vmul.f32 %v1453, %v880
        %v1494 = vmul.f32 %v1453, %v884
        %v1495 = vmul.f32 %v1453, %v888
        %v1496 = vmul.f32 %v1453, %v892
        %v1497 = vmul.f32 %v1453, %v896
        %v1498 = vmul.f32 %v1453, %v900
        %v1499 = vmul.f32 %v1453, %v904
        %v1500 = vmul.f32 %v1453, %v908
        %v1501 = vmul.f32 %v1453, %v912
        %v1502 = vmul.f32 %v1457, %v880
        %v1503 = vmul.f32 %v1457, %v884
        %v1504 = vmul.f32 %v1457, %v888
        %v1505 = vmul.f32 %v1457, %v892
        %v1506 = vmul.f32 %v1457, %v896
        %v1507 = vmul.f32 %v1457, %v900
        %v1508 = vmul.f32 %v1457, %v904
        %v1509 = vmul.f32 %v1457, %v908
        %v1510 = vmul.f32 %v1457, %v912
        %v1511 = vmul.f32 %v1461, %v880
        %v1512 = vmul.f32 %v1461, %v884
        %v1513 = vmul.f32 %v1461, %v888
        %v1514 = vmul.f32 %v1461, %v892
        %v1515 = vmul.f32 %v1461, %v896
        %v1516 = vmul.f32 %v1461, %v900
        %v1517 = vmul.f32 %v1461, %v904
        %v1518 = vmul.f32 %v1461, %v908
        %v1519 = vmul.f32 %v1461, %v912
        %v1520 = vmul.f32 %v1465, %v880
        %v1521 = vmul.f32 %v1465, %v884
        %v1522 = vmul.f32 %v1465, %v888
        %v1523 = vmul.f32 %v1465, %v892
        %v1524 = vmul.f32 %v1465, %v896
        %v1525 = vmul.f32 %v1465, %v900
        %v1526 = vmul.f32 %v1465, %v904
        %v1527 = vmul.f32 %v1465, %v908
        %v1528 = vmul.f32 %v1465, %v912
        %v1529 = vmul.f32 %v1469, %v880
        %v1530 = vmul.f32 %v1469, %v884
        %v1531 = vmul.f32 %v1469, %v888
        %v1532 = vmul.f32 %v1469, %v892
        %v1533 = vmul.f32 %v1469, %v896
        %v1534 = vmul.f32 %v1469, %v900
        %v1535 = vmul.f32 %v1469, %v904
        %v1536 = vmul.f32 %v1469, %v908
        %v1537 = vmul.f32 %v1469, %v912
        %v1538 = vmul.f32 %v1473, %v880
        %v1539 = vmul.f32 %v1473, %v884
        %v1540 = vmul.f32 %v1473, %v888
        %v1541 = vmul.f32 %v1473, %v892
        %v1542 = vmul.f32 %v1473, %v896
        %v1543 = vmul.f32 %v1473, %v900
        %v1544 = vmul.f32 %v1473, %v904
        %v1545 = vmul.f32 %v1473, %v908
        %v1546 = vmul.f32 %v1473, %v912
        %v1547 = vadd.f32 %v1371, %v1475
        %v1548 = vadd.f32 %v1372, %v1476
        %v1549 = vadd.f32 %v1373, %v1477
        %v1550 = vadd.f32 %v1374, %v1478
        %v1551 = vadd.f32 %v1375, %v1479
        %v1552 = vadd.f32 %v1376, %v1480
        %v1553 = vadd.f32 %v1377, %v1481
        %v1554 = vadd.f32 %v1378, %v1482
        %v1555 = vadd.f32 %v1379, %v1483
        %v1556 = vadd.f32 %v1380, %v1484
        %v1557 = vadd.f32 %v1381, %v1485
        %v1558 = vadd.f32 %v1382, %v1486
        %v1559 = vadd.f32 %v1383, %v1487
        %v1560 = vadd.f32 %v1384, %v1488
        %v1561 = vadd.f32 %v1385, %v1489
        %v1562 = vadd.f32 %v1386, %v1490
        %v1563 = vadd.f32 %v1387, %v1491
        %v1564 = vadd.f32 %v1388, %v1492
        %v1565 = vadd.f32 %v1389, %v1493
        %v1566 = vadd.f32 %v1390, %v1494
        %v1567 = vadd.f32 %v1391, %v1495
        %v1568 = vadd.f32 %v1392, %v1496
        %v1569 = vadd.f32 %v1393, %v1497
        %v1570 = vadd.f32 %v1394, %v1498
        %v1571 = vadd.f32 %v1395, %v1499
        %v1572 = vadd.f32 %v1396, %v1500
        %v1573 = vadd.f32 %v1397, %v1501
        %v1574 = vadd.f32 %v1398, %v1502
        %v1575 = vadd.f32 %v1399, %v1503
        %v1576 = vadd.f32 %v1400, %v1504
        %v1577 = vadd.f32 %v1401, %v1505
        %v1578 = vadd.f32 %v1402, %v1506
        %v1579 = vadd.f32 %v1403, %v1507
        %v1580 = vadd.f32 %v1404, %v1508
        %v1581 = vadd.f32 %v1405, %v1509
        %v1582 = vadd.f32 %v1406, %v1510
        %v1583 = vadd.f32 %v1407, %v1511
        %v1584 = vadd.f32 %v1408, %v1512
        %v1585 = vadd.f32 %v1409, %v1513
        %v1586 = vadd.f32 %v1410, %v1514
        %v1587 = vadd.f32 %v1411, %v1515
        %v1588 = vadd.f32 %v1412, %v1516
        %v1589 = vadd.f32 %v1413, %v1517
        %v1590 = vadd.f32 %v1414, %v1518
        %v1591 = vadd.f32 %v1415, %v1519
        %v1592 = vadd.f32 %v1416, %v1520
        %v1593 = vadd.f32 %v1417, %v1521
        %v1594 = vadd.f32 %v1418, %v1522
        %v1595 = vadd.f32 %v1419, %v1523
        %v1596 = vadd.f32 %v1420, %v1524
        %v1597 = vadd.f32 %v1421, %v1525
        %v1598 = vadd.f32 %v1422, %v1526
        %v1599 = vadd.f32 %v1423, %v1527
        %v1600 = vadd.f32 %v1424, %v1528
        %v1601 = vadd.f32 %v1425, %v1529
        %v1602 = vadd.f32 %v1426, %v1530
        %v1603 = vadd.f32 %v1427, %v1531
        %v1604 = vadd.f32 %v1428, %v1532
        %v1605 = vadd.f32 %v1429, %v1533
        %v1606 = vadd.f32 %v1430, %v1534
        %v1607 = vadd.f32 %v1431, %v1535
        %v1608 = vadd.f32 %v1432, %v1536
        %v1609 = vadd.f32 %v1433, %v1537
        %v1610 = vadd.f32 %v1434, %v1538
        %v1611 = vadd.f32 %v1435, %v1539
        %v1612 = vadd.f32 %v1436, %v1540
        %v1613 = vadd.f32 %v1437, %v1541
        %v1614 = vadd.f32 %v1438, %v1542
        %v1615 = vadd.f32 %v1439, %v1543
        %v1616 = vadd.f32 %v1440, %v1544
        %v1617 = vadd.f32 %v1441, %v1545
        %v1618 = vadd.f32 %v1442, %v1546
        %1619 = vset.pattern.permute.xlu0 2
        %1620 = vperm.xlu0 %1619, %v1323
        %v1621 = vpop.permute.xlu0 %1620
        %1623 = vset.pattern.permute.xlu0 2
        %1624 = vperm.xlu0 %1623, %v1324
        %v1625 = vpop.permute.xlu0 %1624
        %1627 = vset.pattern.permute.xlu0 2
        %1628 = vperm.xlu0 %1627, %v1325
        %v1629 = vpop.permute.xlu0 %1628
        %1631 = vset.pattern.permute.xlu0 2
        %1632 = vperm.xlu0 %1631, %v1326
        %v1633 = vpop.permute.xlu0 %1632
        %1635 = vset.pattern.permute.xlu0 2
        %1636 = vperm.xlu0 %1635, %v1327
        %v1637 = vpop.permute.xlu0 %1636
        %1639 = vset.pattern.permute.xlu0 2
        %1640 = vperm.xlu0 %1639, %v1328
        %v1641 = vpop.permute.xlu0 %1640
        %1643 = vset.pattern.permute.xlu0 2
        %1644 = vperm.xlu0 %1643, %v1329
        %v1645 = vpop.permute.xlu0 %1644
        %1647 = vset.pattern.permute.xlu0 2
        %1648 = vperm.xlu0 %1647, %v1330
        %v1649 = vpop.permute.xlu0 %1648
        %v1651 = vmul.f32 %v1621, %v1137
        %v1652 = vmul.f32 %v1621, %v1141
        %v1653 = vmul.f32 %v1621, %v1145
        %v1654 = vmul.f32 %v1621, %v1149
        %v1655 = vmul.f32 %v1621, %v1153
        %v1656 = vmul.f32 %v1621, %v1157
        %v1657 = vmul.f32 %v1621, %v1161
        %v1658 = vmul.f32 %v1621, %v1165
        %v1659 = vmul.f32 %v1621, %v1169
        %v1660 = vmul.f32 %v1625, %v1137
        %v1661 = vmul.f32 %v1625, %v1141
        %v1662 = vmul.f32 %v1625, %v1145
        %v1663 = vmul.f32 %v1625, %v1149
        %v1664 = vmul.f32 %v1625, %v1153
        %v1665 = vmul.f32 %v1625, %v1157
        %v1666 = vmul.f32 %v1625, %v1161
        %v1667 = vmul.f32 %v1625, %v1165
        %v1668 = vmul.f32 %v1625, %v1169
        %v1669 = vmul.f32 %v1629, %v1137
        %v1670 = vmul.f32 %v1629, %v1141
        %v1671 = vmul.f32 %v1629, %v1145
        %v1672 = vmul.f32 %v1629, %v1149
        %v1673 = vmul.f32 %v1629, %v1153
        %v1674 = vmul.f32 %v1629, %v1157
        %v1675 = vmul.f32 %v1629, %v1161
        %v1676 = vmul.f32 %v1629, %v1165
        %v1677 = vmul.f32 %v1629, %v1169
        %v1678 = vmul.f32 %v1633, %v1137
        %v1679 = vmul.f32 %v1633, %v1141
        %v1680 = vmul.f32 %v1633, %v1145
        %v1681 = vmul.f32 %v1633, %v1149
        %v1682 = vmul.f32 %v1633, %v1153
        %v1683 = vmul.f32 %v1633, %v1157
        %v1684 = vmul.f32 %v1633, %v1161
        %v1685 = vmul.f32 %v1633, %v1165
        %v1686 = vmul.f32 %v1633, %v1169
        %v1687 = vmul.f32 %v1637, %v1137
        %v1688 = vmul.f32 %v1637, %v1141
        %v1689 = vmul.f32 %v1637, %v1145
        %v1690 = vmul.f32 %v1637, %v1149
        %v1691 = vmul.f32 %v1637, %v1153
        %v1692 = vmul.f32 %v1637, %v1157
        %v1693 = vmul.f32 %v1637, %v1161
        %v1694 = vmul.f32 %v1637, %v1165
        %v1695 = vmul.f32 %v1637, %v1169
        %v1696 = vmul.f32 %v1641, %v1137
        %v1697 = vmul.f32 %v1641, %v1141
        %v1698 = vmul.f32 %v1641, %v1145
        %v1699 = vmul.f32 %v1641, %v1149
        %v1700 = vmul.f32 %v1641, %v1153
        %v1701 = vmul.f32 %v1641, %v1157
        %v1702 = vmul.f32 %v1641, %v1161
        %v1703 = vmul.f32 %v1641, %v1165
        %v1704 = vmul.f32 %v1641, %v1169
        %v1705 = vmul.f32 %v1645, %v1137
        %v1706 = vmul.f32 %v1645, %v1141
        %v1707 = vmul.f32 %v1645, %v1145
        %v1708 = vmul.f32 %v1645, %v1149
        %v1709 = vmul.f32 %v1645, %v1153
        %v1710 = vmul.f32 %v1645, %v1157
        %v1711 = vmul.f32 %v1645, %v1161
        %v1712 = vmul.f32 %v1645, %v1165
        %v1713 = vmul.f32 %v1645, %v1169
        %v1714 = vmul.f32 %v1649, %v1137
        %v1715 = vmul.f32 %v1649, %v1141
        %v1716 = vmul.f32 %v1649, %v1145
        %v1717 = vmul.f32 %v1649, %v1149
        %v1718 = vmul.f32 %v1649, %v1153
        %v1719 = vmul.f32 %v1649, %v1157
        %v1720 = vmul.f32 %v1649, %v1161
        %v1721 = vmul.f32 %v1649, %v1165
        %v1722 = vmul.f32 %v1649, %v1169
        %v1723 = vadd.f32 %v1547, %v1651
        %v1724 = vadd.f32 %v1548, %v1652
        %v1725 = vadd.f32 %v1549, %v1653
        %v1726 = vadd.f32 %v1550, %v1654
        %v1727 = vadd.f32 %v1551, %v1655
        %v1728 = vadd.f32 %v1552, %v1656
        %v1729 = vadd.f32 %v1553, %v1657
        %v1730 = vadd.f32 %v1554, %v1658
        %v1731 = vadd.f32 %v1555, %v1659
        %v1732 = vadd.f32 %v1556, %v1660
        %v1733 = vadd.f32 %v1557, %v1661
        %v1734 = vadd.f32 %v1558, %v1662
        %v1735 = vadd.f32 %v1559, %v1663
        %v1736 = vadd.f32 %v1560, %v1664
        %v1737 = vadd.f32 %v1561, %v1665
        %v1738 = vadd.f32 %v1562, %v1666
        %v1739 = vadd.f32 %v1563, %v1667
        %v1740 = vadd.f32 %v1564, %v1668
        %v1741 = vadd.f32 %v1565, %v1669
        %v1742 = vadd.f32 %v1566, %v1670
        %v1743 = vadd.f32 %v1567, %v1671
        %v1744 = vadd.f32 %v1568, %v1672
        %v1745 = vadd.f32 %v1569, %v1673
        %v1746 = vadd.f32 %v1570, %v1674
        %v1747 = vadd.f32 %v1571, %v1675
        %v1748 = vadd.f32 %v1572, %v1676
        %v1749 = vadd.f32 %v1573, %v1677
        %v1750 = vadd.f32 %v1574, %v1678
        %v1751 = vadd.f32 %v1575, %v1679
        %v1752 = vadd.f32 %v1576, %v1680
        %v1753 = vadd.f32 %v1577, %v1681
        %v1754 = vadd.f32 %v1578, %v1682
        %v1755 = vadd.f32 %v1579, %v1683
        %v1756 = vadd.f32 %v1580, %v1684
        %v1757 = vadd.f32 %v1581, %v1685
        %v1758 = vadd.f32 %v1582, %v1686
        %v1759 = vadd.f32 %v1583, %v1687
        %v1760 = vadd.f32 %v1584, %v1688
        %v1761 = vadd.f32 %v1585, %v1689
        %v1762 = vadd.f32 %v1586, %v1690
        %v1763 = vadd.f32 %v1587, %v1691
        %v1764 = vadd.f32 %v1588, %v1692
        %v1765 = vadd.f32 %v1589, %v1693
        %v1766 = vadd.f32 %v1590, %v1694
        %v1767 = vadd.f32 %v1591, %v1695
        %v1768 = vadd.f32 %v1592, %v1696
        %v1769 = vadd.f32 %v1593, %v1697
        %v1770 = vadd.f32 %v1594, %v1698
        %v1771 = vadd.f32 %v1595, %v1699
        %v1772 = vadd.f32 %v1596, %v1700
        %v1773 = vadd.f32 %v1597, %v1701
        %v1774 = vadd.f32 %v1598, %v1702
        %v1775 = vadd.f32 %v1599, %v1703
        %v1776 = vadd.f32 %v1600, %v1704
        %v1777 = vadd.f32 %v1601, %v1705
        %v1778 = vadd.f32 %v1602, %v1706
        %v1779 = vadd.f32 %v1603, %v1707
        %v1780 = vadd.f32 %v1604, %v1708
        %v1781 = vadd.f32 %v1605, %v1709
        %v1782 = vadd.f32 %v1606, %v1710
        %v1783 = vadd.f32 %v1607, %v1711
        %v1784 = vadd.f32 %v1608, %v1712
        %v1785 = vadd.f32 %v1609, %v1713
        %v1786 = vadd.f32 %v1610, %v1714
        %v1787 = vadd.f32 %v1611, %v1715
        %v1788 = vadd.f32 %v1612, %v1716
        %v1789 = vadd.f32 %v1613, %v1717
        %v1790 = vadd.f32 %v1614, %v1718
        %v1791 = vadd.f32 %v1615, %v1719
        %v1792 = vadd.f32 %v1616, %v1720
        %v1793 = vadd.f32 %v1617, %v1721
        %v1794 = vadd.f32 %v1618, %v1722
        %1867 = vrot.lane.b32.xlu0 %v1723, 127
        %v1868 = vpop.permute.xlu0 %1867
        %1869 = vrot.lane.b32.xlu0 %v1724, 127
        %v1870 = vpop.permute.xlu0 %1869
        %1871 = vrot.lane.b32.xlu0 %v1725, 127
        %v1872 = vpop.permute.xlu0 %1871
        %1873 = vrot.lane.b32.xlu0 %v1726, 127
        %v1874 = vpop.permute.xlu0 %1873
        %1875 = vrot.lane.b32.xlu0 %v1727, 127
        %v1876 = vpop.permute.xlu0 %1875
        %1877 = vrot.lane.b32.xlu0 %v1728, 127
        %v1878 = vpop.permute.xlu0 %1877
        %1879 = vrot.lane.b32.xlu0 %v1729, 127
        %v1880 = vpop.permute.xlu0 %1879
        %1881 = vrot.lane.b32.xlu0 %v1730, 127
        %v1882 = vpop.permute.xlu0 %1881
        %1883 = vrot.lane.b32.xlu0 %v1731, 127
        %v1884 = vpop.permute.xlu0 %1883
        %1885 = vrot.lane.b32.xlu0 %v1732, 127
        %v1886 = vpop.permute.xlu0 %1885
        %1887 = vrot.lane.b32.xlu0 %v1733, 127
        %v1888 = vpop.permute.xlu0 %1887
        %1889 = vrot.lane.b32.xlu0 %v1734, 127
        %v1890 = vpop.permute.xlu0 %1889
        %1891 = vrot.lane.b32.xlu0 %v1735, 127
        %v1892 = vpop.permute.xlu0 %1891
        %1893 = vrot.lane.b32.xlu0 %v1736, 127
        %v1894 = vpop.permute.xlu0 %1893
        %1895 = vrot.lane.b32.xlu0 %v1737, 127
        %v1896 = vpop.permute.xlu0 %1895
        %1897 = vrot.lane.b32.xlu0 %v1738, 127
        %v1898 = vpop.permute.xlu0 %1897
        %1899 = vrot.lane.b32.xlu0 %v1739, 127
        %v1900 = vpop.permute.xlu0 %1899
        %1901 = vrot.lane.b32.xlu0 %v1740, 127
        %v1902 = vpop.permute.xlu0 %1901
        %1903 = vrot.lane.b32.xlu0 %v1741, 127
        %v1904 = vpop.permute.xlu0 %1903
        %1905 = vrot.lane.b32.xlu0 %v1742, 127
        %v1906 = vpop.permute.xlu0 %1905
        %1907 = vrot.lane.b32.xlu0 %v1743, 127
        %v1908 = vpop.permute.xlu0 %1907
        %1909 = vrot.lane.b32.xlu0 %v1744, 127
        %v1910 = vpop.permute.xlu0 %1909
        %1911 = vrot.lane.b32.xlu0 %v1745, 127
        %v1912 = vpop.permute.xlu0 %1911
        %1913 = vrot.lane.b32.xlu0 %v1746, 127
        %v1914 = vpop.permute.xlu0 %1913
        %1915 = vrot.lane.b32.xlu0 %v1747, 127
        %v1916 = vpop.permute.xlu0 %1915
        %1917 = vrot.lane.b32.xlu0 %v1748, 127
        %v1918 = vpop.permute.xlu0 %1917
        %1919 = vrot.lane.b32.xlu0 %v1749, 127
        %v1920 = vpop.permute.xlu0 %1919
        %1921 = vrot.lane.b32.xlu0 %v1750, 127
        %v1922 = vpop.permute.xlu0 %1921
        %1923 = vrot.lane.b32.xlu0 %v1751, 127
        %v1924 = vpop.permute.xlu0 %1923
        %1925 = vrot.lane.b32.xlu0 %v1752, 127
        %v1926 = vpop.permute.xlu0 %1925
        %1927 = vrot.lane.b32.xlu0 %v1753, 127
        %v1928 = vpop.permute.xlu0 %1927
        %1929 = vrot.lane.b32.xlu0 %v1754, 127
        %v1930 = vpop.permute.xlu0 %1929
        %1931 = vrot.lane.b32.xlu0 %v1755, 127
        %v1932 = vpop.permute.xlu0 %1931
        %1933 = vrot.lane.b32.xlu0 %v1756, 127
        %v1934 = vpop.permute.xlu0 %1933
        %1935 = vrot.lane.b32.xlu0 %v1757, 127
        %v1936 = vpop.permute.xlu0 %1935
        %1937 = vrot.lane.b32.xlu0 %v1758, 127
        %v1938 = vpop.permute.xlu0 %1937
        %1939 = vrot.lane.b32.xlu0 %v1759, 127
        %v1940 = vpop.permute.xlu0 %1939
        %1941 = vrot.lane.b32.xlu0 %v1760, 127
        %v1942 = vpop.permute.xlu0 %1941
        %1943 = vrot.lane.b32.xlu0 %v1761, 127
        %v1944 = vpop.permute.xlu0 %1943
        %1945 = vrot.lane.b32.xlu0 %v1762, 127
        %v1946 = vpop.permute.xlu0 %1945
        %1947 = vrot.lane.b32.xlu0 %v1763, 127
        %v1948 = vpop.permute.xlu0 %1947
        %1949 = vrot.lane.b32.xlu0 %v1764, 127
        %v1950 = vpop.permute.xlu0 %1949
        %1951 = vrot.lane.b32.xlu0 %v1765, 127
        %v1952 = vpop.permute.xlu0 %1951
        %1953 = vrot.lane.b32.xlu0 %v1766, 127
        %v1954 = vpop.permute.xlu0 %1953
        %1955 = vrot.lane.b32.xlu0 %v1767, 127
        %v1956 = vpop.permute.xlu0 %1955
        %1957 = vrot.lane.b32.xlu0 %v1768, 127
        %v1958 = vpop.permute.xlu0 %1957
        %1959 = vrot.lane.b32.xlu0 %v1769, 127
        %v1960 = vpop.permute.xlu0 %1959
        %1961 = vrot.lane.b32.xlu0 %v1770, 127
        %v1962 = vpop.permute.xlu0 %1961
        %1963 = vrot.lane.b32.xlu0 %v1771, 127
        %v1964 = vpop.permute.xlu0 %1963
        %1965 = vrot.lane.b32.xlu0 %v1772, 127
        %v1966 = vpop.permute.xlu0 %1965
        %1967 = vrot.lane.b32.xlu0 %v1773, 127
        %v1968 = vpop.permute.xlu0 %1967
        %1969 = vrot.lane.b32.xlu0 %v1774, 127
        %v1970 = vpop.permute.xlu0 %1969
        %1971 = vrot.lane.b32.xlu0 %v1775, 127
        %v1972 = vpop.permute.xlu0 %1971
        %1973 = vrot.lane.b32.xlu0 %v1776, 127
        %v1974 = vpop.permute.xlu0 %1973
        %1975 = vrot.lane.b32.xlu0 %v1777, 127
        %v1976 = vpop.permute.xlu0 %1975
        %1977 = vrot.lane.b32.xlu0 %v1778, 127
        %v1978 = vpop.permute.xlu0 %1977
        %1979 = vrot.lane.b32.xlu0 %v1779, 127
        %v1980 = vpop.permute.xlu0 %1979
        %1981 = vrot.lane.b32.xlu0 %v1780, 127
        %v1982 = vpop.permute.xlu0 %1981
        %1983 = vrot.lane.b32.xlu0 %v1781, 127
        %v1984 = vpop.permute.xlu0 %1983
        %1985 = vrot.lane.b32.xlu0 %v1782, 127
        %v1986 = vpop.permute.xlu0 %1985
        %1987 = vrot.lane.b32.xlu0 %v1783, 127
        %v1988 = vpop.permute.xlu0 %1987
        %1989 = vrot.lane.b32.xlu0 %v1784, 127
        %v1990 = vpop.permute.xlu0 %1989
        %1991 = vrot.lane.b32.xlu0 %v1785, 127
        %v1992 = vpop.permute.xlu0 %1991
        %1993 = vrot.lane.b32.xlu0 %v1786, 127
        %v1994 = vpop.permute.xlu0 %1993
        %1995 = vrot.lane.b32.xlu0 %v1787, 127
        %v1996 = vpop.permute.xlu0 %1995
        %1997 = vrot.lane.b32.xlu0 %v1788, 127
        %v1998 = vpop.permute.xlu0 %1997
        %1999 = vrot.lane.b32.xlu0 %v1789, 127
        %v2000 = vpop.permute.xlu0 %1999
        %2001 = vrot.lane.b32.xlu0 %v1790, 127
        %v2002 = vpop.permute.xlu0 %2001
        %2003 = vrot.lane.b32.xlu0 %v1791, 127
        %v2004 = vpop.permute.xlu0 %2003
        %2005 = vrot.lane.b32.xlu0 %v1792, 127
        %v2006 = vpop.permute.xlu0 %2005
        %2007 = vrot.lane.b32.xlu0 %v1793, 127
        %v2008 = vpop.permute.xlu0 %2007
        %2009 = vrot.lane.b32.xlu0 %v1794, 127
        %v2010 = vpop.permute.xlu0 %2009
        %vm2011 = vcmask 1039360
        %v2012 = vsel %vm2011, %v1868, %v1870
        %v2013 = vsel %vm2011, %v1870, %v1872
        %v2014 = vsel %vm2011, %v1872, %v1874
        %v2015 = vsel %vm2011, %v1874, %v1876
        %v2016 = vsel %vm2011, %v1876, %v1878
        %v2017 = vsel %vm2011, %v1878, %v1880
        %v2018 = vsel %vm2011, %v1880, %v1882
        %v2019 = vsel %vm2011, %v1882, %v1884
        %v2020 = vsel %vm2011, %v1886, %v1888
        %v2021 = vsel %vm2011, %v1888, %v1890
        %v2022 = vsel %vm2011, %v1890, %v1892
        %v2023 = vsel %vm2011, %v1892, %v1894
        %v2024 = vsel %vm2011, %v1894, %v1896
        %v2025 = vsel %vm2011, %v1896, %v1898
        %v2026 = vsel %vm2011, %v1898, %v1900
        %v2027 = vsel %vm2011, %v1900, %v1902
        %v2028 = vsel %vm2011, %v1904, %v1906
        %v2029 = vsel %vm2011, %v1906, %v1908
        %v2030 = vsel %vm2011, %v1908, %v1910
        %v2031 = vsel %vm2011, %v1910, %v1912
        %v2032 = vsel %vm2011, %v1912, %v1914
        %v2033 = vsel %vm2011, %v1914, %v1916
        %v2034 = vsel %vm2011, %v1916, %v1918
        %v2035 = vsel %vm2011, %v1918, %v1920
        %v2036 = vsel %vm2011, %v1922, %v1924
        %v2037 = vsel %vm2011, %v1924, %v1926
        %v2038 = vsel %vm2011, %v1926, %v1928
        %v2039 = vsel %vm2011, %v1928, %v1930
        %v2040 = vsel %vm2011, %v1930, %v1932
        %v2041 = vsel %vm2011, %v1932, %v1934
        %v2042 = vsel %vm2011, %v1934, %v1936
        %v2043 = vsel %vm2011, %v1936, %v1938
        %v2044 = vsel %vm2011, %v1940, %v1942
        %v2045 = vsel %vm2011, %v1942, %v1944
        %v2046 = vsel %vm2011, %v1944, %v1946
        %v2047 = vsel %vm2011, %v1946, %v1948
        %v2048 = vsel %vm2011, %v1948, %v1950
        %v2049 = vsel %vm2011, %v1950, %v1952
        %v2050 = vsel %vm2011, %v1952, %v1954
        %v2051 = vsel %vm2011, %v1954, %v1956
        %v2052 = vsel %vm2011, %v1958, %v1960
        %v2053 = vsel %vm2011, %v1960, %v1962
        %v2054 = vsel %vm2011, %v1962, %v1964
        %v2055 = vsel %vm2011, %v1964, %v1966
        %v2056 = vsel %vm2011, %v1966, %v1968
        %v2057 = vsel %vm2011, %v1968, %v1970
        %v2058 = vsel %vm2011, %v1970, %v1972
        %v2059 = vsel %vm2011, %v1972, %v1974
        %v2060 = vsel %vm2011, %v1976, %v1978
        %v2061 = vsel %vm2011, %v1978, %v1980
        %v2062 = vsel %vm2011, %v1980, %v1982
        %v2063 = vsel %vm2011, %v1982, %v1984
        %v2064 = vsel %vm2011, %v1984, %v1986
        %v2065 = vsel %vm2011, %v1986, %v1988
        %v2066 = vsel %vm2011, %v1988, %v1990
        %v2067 = vsel %vm2011, %v1990, %v1992
        %v2068 = vsel %vm2011, %v1994, %v1996
        %v2069 = vsel %vm2011, %v1996, %v1998
        %v2070 = vsel %vm2011, %v1998, %v2000
        %v2071 = vsel %vm2011, %v2000, %v2002
        %v2072 = vsel %vm2011, %v2002, %v2004
        %v2073 = vsel %vm2011, %v2004, %v2006
        %v2074 = vsel %vm2011, %v2006, %v2008
        %v2075 = vsel %vm2011, %v2008, %v2010
        %v2148 = vadd.f32 %v1242, %v2012
        %v2149 = vadd.f32 %v1243, %v2013
        %v2150 = vadd.f32 %v1244, %v2014
        %v2151 = vadd.f32 %v1245, %v2015
        %v2152 = vadd.f32 %v1246, %v2016
        %v2153 = vadd.f32 %v1247, %v2017
        %v2154 = vadd.f32 %v1248, %v2018
        %v2155 = vadd.f32 %v1249, %v2019
        %v2156 = vadd.f32 %v1250, %v1884
        %v2157 = vadd.f32 %v1251, %v2020
        %v2158 = vadd.f32 %v1252, %v2021
        %v2159 = vadd.f32 %v1253, %v2022
        %v2160 = vadd.f32 %v1254, %v2023
        %v2161 = vadd.f32 %v1255, %v2024
        %v2162 = vadd.f32 %v1256, %v2025
        %v2163 = vadd.f32 %v1257, %v2026
        %v2164 = vadd.f32 %v1258, %v2027
        %v2165 = vadd.f32 %v1259, %v1902
        %v2166 = vadd.f32 %v1260, %v2028
        %v2167 = vadd.f32 %v1261, %v2029
        %v2168 = vadd.f32 %v1262, %v2030
        %v2169 = vadd.f32 %v1263, %v2031
        %v2170 = vadd.f32 %v1264, %v2032
        %v2171 = vadd.f32 %v1265, %v2033
        %v2172 = vadd.f32 %v1266, %v2034
        %v2173 = vadd.f32 %v1267, %v2035
        %v2174 = vadd.f32 %v1268, %v1920
        %v2175 = vadd.f32 %v1269, %v2036
        %v2176 = vadd.f32 %v1270, %v2037
        %v2177 = vadd.f32 %v1271, %v2038
        %v2178 = vadd.f32 %v1272, %v2039
        %v2179 = vadd.f32 %v1273, %v2040
        %v2180 = vadd.f32 %v1274, %v2041
        %v2181 = vadd.f32 %v1275, %v2042
        %v2182 = vadd.f32 %v1276, %v2043
        %v2183 = vadd.f32 %v1277, %v1938
        %v2184 = vadd.f32 %v1278, %v2044
        %v2185 = vadd.f32 %v1279, %v2045
        %v2186 = vadd.f32 %v1280, %v2046
        %v2187 = vadd.f32 %v1281, %v2047
        %v2188 = vadd.f32 %v1282, %v2048
        %v2189 = vadd.f32 %v1283, %v2049
        %v2190 = vadd.f32 %v1284, %v2050
        %v2191 = vadd.f32 %v1285, %v2051
        %v2192 = vadd.f32 %v1286, %v1956
        %v2193 = vadd.f32 %v1287, %v2052
        %v2194 = vadd.f32 %v1288, %v2053
        %v2195 = vadd.f32 %v1289, %v2054
        %v2196 = vadd.f32 %v1290, %v2055
        %v2197 = vadd.f32 %v1291, %v2056
        %v2198 = vadd.f32 %v1292, %v2057
        %v2199 = vadd.f32 %v1293, %v2058
        %v2200 = vadd.f32 %v1294, %v2059
        %v2201 = vadd.f32 %v1295, %v1974
        %v2202 = vadd.f32 %v1296, %v2060
        %v2203 = vadd.f32 %v1297, %v2061
        %v2204 = vadd.f32 %v1298, %v2062
        %v2205 = vadd.f32 %v1299, %v2063
        %v2206 = vadd.f32 %v1300, %v2064
        %v2207 = vadd.f32 %v1301, %v2065
        %v2208 = vadd.f32 %v1302, %v2066
        %v2209 = vadd.f32 %v1303, %v2067
        %v2210 = vadd.f32 %v1304, %v1992
        %v2211 = vadd.f32 %v1305, %v2068
        %v2212 = vadd.f32 %v1306, %v2069
        %v2213 = vadd.f32 %v1307, %v2070
        %v2214 = vadd.f32 %v1308, %v2071
        %v2215 = vadd.f32 %v1309, %v2072
        %v2216 = vadd.f32 %v1310, %v2073
        %v2217 = vadd.f32 %v1311, %v2074
        %v2218 = vadd.f32 %v1312, %v2075
        %v2219 = vadd.f32 %v1313, %v2010
        %s2220 = scalar_lea.vmem %s2, 64
        %v2221 = vld [vmem:[%s2220] sm:$0xf]
        %v2222 = vld [vmem:[%s2220 + $0x4] sm:$0xf]
        %v2223 = vld [vmem:[%s2220 + $0x8] sm:$0xf]
        %v2224 = vld [vmem:[%s2220 + $0xc] sm:$0xf]
        %v2225 = vld [vmem:[%s2220 + $0x10] sm:$0xf]
        %v2226 = vld [vmem:[%s2220 + $0x14] sm:$0xf]
        %v2227 = vld [vmem:[%s2220 + $0x18] sm:$0xf]
        %v2228 = vld [vmem:[%s2220 + $0x1c] sm:$0xf]
        %v2229 = vunpack.c.l.bf16 %v2221
        %v2230 = vunpack.c.l.bf16 %v2222
        %v2231 = vunpack.c.l.bf16 %v2223
        %v2232 = vunpack.c.l.bf16 %v2224
        %v2233 = vunpack.c.l.bf16 %v2225
        %v2234 = vunpack.c.l.bf16 %v2226
        %v2235 = vunpack.c.l.bf16 %v2227
        %v2236 = vunpack.c.l.bf16 %v2228
        %2238 = vset.pattern.permute.xlu0 0
        %2239 = vperm.xlu0 %2238, %v2229
        %v2240 = vpop.permute.xlu0 %2239
        %2243 = vset.pattern.permute.xlu0 0
        %2244 = vperm.xlu0 %2243, %v2230
        %v2245 = vpop.permute.xlu0 %2244
        %2248 = vset.pattern.permute.xlu0 0
        %2249 = vperm.xlu0 %2248, %v2231
        %v2250 = vpop.permute.xlu0 %2249
        %2253 = vset.pattern.permute.xlu0 0
        %2254 = vperm.xlu0 %2253, %v2232
        %v2255 = vpop.permute.xlu0 %2254
        %2258 = vset.pattern.permute.xlu0 0
        %2259 = vperm.xlu0 %2258, %v2233
        %v2260 = vpop.permute.xlu0 %2259
        %2263 = vset.pattern.permute.xlu0 0
        %2264 = vperm.xlu0 %2263, %v2234
        %v2265 = vpop.permute.xlu0 %2264
        %2268 = vset.pattern.permute.xlu0 0
        %2269 = vperm.xlu0 %2268, %v2235
        %v2270 = vpop.permute.xlu0 %2269
        %2273 = vset.pattern.permute.xlu0 0
        %2274 = vperm.xlu0 %2273, %v2236
        %v2275 = vpop.permute.xlu0 %2274
        %v2277 = vmul.f32 %v2240, %v695
        %v2278 = vmul.f32 %v2240, %v699
        %v2279 = vmul.f32 %v2240, %v703
        %v2280 = vmul.f32 %v2240, %v707
        %v2281 = vmul.f32 %v2240, %v711
        %v2282 = vmul.f32 %v2240, %v715
        %v2283 = vmul.f32 %v2240, %v719
        %v2284 = vmul.f32 %v2240, %v723
        %v2285 = vmul.f32 %v2240, %v727
        %v2286 = vmul.f32 %v2245, %v695
        %v2287 = vmul.f32 %v2245, %v699
        %v2288 = vmul.f32 %v2245, %v703
        %v2289 = vmul.f32 %v2245, %v707
        %v2290 = vmul.f32 %v2245, %v711
        %v2291 = vmul.f32 %v2245, %v715
        %v2292 = vmul.f32 %v2245, %v719
        %v2293 = vmul.f32 %v2245, %v723
        %v2294 = vmul.f32 %v2245, %v727
        %v2295 = vmul.f32 %v2250, %v695
        %v2296 = vmul.f32 %v2250, %v699
        %v2297 = vmul.f32 %v2250, %v703
        %v2298 = vmul.f32 %v2250, %v707
        %v2299 = vmul.f32 %v2250, %v711
        %v2300 = vmul.f32 %v2250, %v715
        %v2301 = vmul.f32 %v2250, %v719
        %v2302 = vmul.f32 %v2250, %v723
        %v2303 = vmul.f32 %v2250, %v727
        %v2304 = vmul.f32 %v2255, %v695
        %v2305 = vmul.f32 %v2255, %v699
        %v2306 = vmul.f32 %v2255, %v703
        %v2307 = vmul.f32 %v2255, %v707
        %v2308 = vmul.f32 %v2255, %v711
        %v2309 = vmul.f32 %v2255, %v715
        %v2310 = vmul.f32 %v2255, %v719
        %v2311 = vmul.f32 %v2255, %v723
        %v2312 = vmul.f32 %v2255, %v727
        %v2313 = vmul.f32 %v2260, %v695
        %v2314 = vmul.f32 %v2260, %v699
        %v2315 = vmul.f32 %v2260, %v703
        %v2316 = vmul.f32 %v2260, %v707
        %v2317 = vmul.f32 %v2260, %v711
        %v2318 = vmul.f32 %v2260, %v715
        %v2319 = vmul.f32 %v2260, %v719
        %v2320 = vmul.f32 %v2260, %v723
        %v2321 = vmul.f32 %v2260, %v727
        %v2322 = vmul.f32 %v2265, %v695
        %v2323 = vmul.f32 %v2265, %v699
        %v2324 = vmul.f32 %v2265, %v703
        %v2325 = vmul.f32 %v2265, %v707
        %v2326 = vmul.f32 %v2265, %v711
        %v2327 = vmul.f32 %v2265, %v715
        %v2328 = vmul.f32 %v2265, %v719
        %v2329 = vmul.f32 %v2265, %v723
        %v2330 = vmul.f32 %v2265, %v727
        %v2331 = vmul.f32 %v2270, %v695
        %v2332 = vmul.f32 %v2270, %v699
        %v2333 = vmul.f32 %v2270, %v703
        %v2334 = vmul.f32 %v2270, %v707
        %v2335 = vmul.f32 %v2270, %v711
        %v2336 = vmul.f32 %v2270, %v715
        %v2337 = vmul.f32 %v2270, %v719
        %v2338 = vmul.f32 %v2270, %v723
        %v2339 = vmul.f32 %v2270, %v727
        %v2340 = vmul.f32 %v2275, %v695
        %v2341 = vmul.f32 %v2275, %v699
        %v2342 = vmul.f32 %v2275, %v703
        %v2343 = vmul.f32 %v2275, %v707
        %v2344 = vmul.f32 %v2275, %v711
        %v2345 = vmul.f32 %v2275, %v715
        %v2346 = vmul.f32 %v2275, %v719
        %v2347 = vmul.f32 %v2275, %v723
        %v2348 = vmul.f32 %v2275, %v727
        %2349 = vset.pattern.permute.xlu0 1
        %2350 = vperm.xlu0 %2349, %v2229
        %v2351 = vpop.permute.xlu0 %2350
        %2353 = vset.pattern.permute.xlu0 1
        %2354 = vperm.xlu0 %2353, %v2230
        %v2355 = vpop.permute.xlu0 %2354
        %2357 = vset.pattern.permute.xlu0 1
        %2358 = vperm.xlu0 %2357, %v2231
        %v2359 = vpop.permute.xlu0 %2358
        %2361 = vset.pattern.permute.xlu0 1
        %2362 = vperm.xlu0 %2361, %v2232
        %v2363 = vpop.permute.xlu0 %2362
        %2365 = vset.pattern.permute.xlu0 1
        %2366 = vperm.xlu0 %2365, %v2233
        %v2367 = vpop.permute.xlu0 %2366
        %2369 = vset.pattern.permute.xlu0 1
        %2370 = vperm.xlu0 %2369, %v2234
        %v2371 = vpop.permute.xlu0 %2370
        %2373 = vset.pattern.permute.xlu0 1
        %2374 = vperm.xlu0 %2373, %v2235
        %v2375 = vpop.permute.xlu0 %2374
        %2377 = vset.pattern.permute.xlu0 1
        %2378 = vperm.xlu0 %2377, %v2236
        %v2379 = vpop.permute.xlu0 %2378
        %v2381 = vmul.f32 %v2351, %v880
        %v2382 = vmul.f32 %v2351, %v884
        %v2383 = vmul.f32 %v2351, %v888
        %v2384 = vmul.f32 %v2351, %v892
        %v2385 = vmul.f32 %v2351, %v896
        %v2386 = vmul.f32 %v2351, %v900
        %v2387 = vmul.f32 %v2351, %v904
        %v2388 = vmul.f32 %v2351, %v908
        %v2389 = vmul.f32 %v2351, %v912
        %v2390 = vmul.f32 %v2355, %v880
        %v2391 = vmul.f32 %v2355, %v884
        %v2392 = vmul.f32 %v2355, %v888
        %v2393 = vmul.f32 %v2355, %v892
        %v2394 = vmul.f32 %v2355, %v896
        %v2395 = vmul.f32 %v2355, %v900
        %v2396 = vmul.f32 %v2355, %v904
        %v2397 = vmul.f32 %v2355, %v908
        %v2398 = vmul.f32 %v2355, %v912
        %v2399 = vmul.f32 %v2359, %v880
        %v2400 = vmul.f32 %v2359, %v884
        %v2401 = vmul.f32 %v2359, %v888
        %v2402 = vmul.f32 %v2359, %v892
        %v2403 = vmul.f32 %v2359, %v896
        %v2404 = vmul.f32 %v2359, %v900
        %v2405 = vmul.f32 %v2359, %v904
        %v2406 = vmul.f32 %v2359, %v908
        %v2407 = vmul.f32 %v2359, %v912
        %v2408 = vmul.f32 %v2363, %v880
        %v2409 = vmul.f32 %v2363, %v884
        %v2410 = vmul.f32 %v2363, %v888
        %v2411 = vmul.f32 %v2363, %v892
        %v2412 = vmul.f32 %v2363, %v896
        %v2413 = vmul.f32 %v2363, %v900
        %v2414 = vmul.f32 %v2363, %v904
        %v2415 = vmul.f32 %v2363, %v908
        %v2416 = vmul.f32 %v2363, %v912
        %v2417 = vmul.f32 %v2367, %v880
        %v2418 = vmul.f32 %v2367, %v884
        %v2419 = vmul.f32 %v2367, %v888
        %v2420 = vmul.f32 %v2367, %v892
        %v2421 = vmul.f32 %v2367, %v896
        %v2422 = vmul.f32 %v2367, %v900
        %v2423 = vmul.f32 %v2367, %v904
        %v2424 = vmul.f32 %v2367, %v908
        %v2425 = vmul.f32 %v2367, %v912
        %v2426 = vmul.f32 %v2371, %v880
        %v2427 = vmul.f32 %v2371, %v884
        %v2428 = vmul.f32 %v2371, %v888
        %v2429 = vmul.f32 %v2371, %v892
        %v2430 = vmul.f32 %v2371, %v896
        %v2431 = vmul.f32 %v2371, %v900
        %v2432 = vmul.f32 %v2371, %v904
        %v2433 = vmul.f32 %v2371, %v908
        %v2434 = vmul.f32 %v2371, %v912
        %v2435 = vmul.f32 %v2375, %v880
        %v2436 = vmul.f32 %v2375, %v884
        %v2437 = vmul.f32 %v2375, %v888
        %v2438 = vmul.f32 %v2375, %v892
        %v2439 = vmul.f32 %v2375, %v896
        %v2440 = vmul.f32 %v2375, %v900
        %v2441 = vmul.f32 %v2375, %v904
        %v2442 = vmul.f32 %v2375, %v908
        %v2443 = vmul.f32 %v2375, %v912
        %v2444 = vmul.f32 %v2379, %v880
        %v2445 = vmul.f32 %v2379, %v884
        %v2446 = vmul.f32 %v2379, %v888
        %v2447 = vmul.f32 %v2379, %v892
        %v2448 = vmul.f32 %v2379, %v896
        %v2449 = vmul.f32 %v2379, %v900
        %v2450 = vmul.f32 %v2379, %v904
        %v2451 = vmul.f32 %v2379, %v908
        %v2452 = vmul.f32 %v2379, %v912
        %v2453 = vadd.f32 %v2277, %v2381
        %v2454 = vadd.f32 %v2278, %v2382
        %v2455 = vadd.f32 %v2279, %v2383
        %v2456 = vadd.f32 %v2280, %v2384
        %v2457 = vadd.f32 %v2281, %v2385
        %v2458 = vadd.f32 %v2282, %v2386
        %v2459 = vadd.f32 %v2283, %v2387
        %v2460 = vadd.f32 %v2284, %v2388
        %v2461 = vadd.f32 %v2285, %v2389
        %v2462 = vadd.f32 %v2286, %v2390
        %v2463 = vadd.f32 %v2287, %v2391
        %v2464 = vadd.f32 %v2288, %v2392
        %v2465 = vadd.f32 %v2289, %v2393
        %v2466 = vadd.f32 %v2290, %v2394
        %v2467 = vadd.f32 %v2291, %v2395
        %v2468 = vadd.f32 %v2292, %v2396
        %v2469 = vadd.f32 %v2293, %v2397
        %v2470 = vadd.f32 %v2294, %v2398
        %v2471 = vadd.f32 %v2295, %v2399
        %v2472 = vadd.f32 %v2296, %v2400
        %v2473 = vadd.f32 %v2297, %v2401
        %v2474 = vadd.f32 %v2298, %v2402
        %v2475 = vadd.f32 %v2299, %v2403
        %v2476 = vadd.f32 %v2300, %v2404
        %v2477 = vadd.f32 %v2301, %v2405
        %v2478 = vadd.f32 %v2302, %v2406
        %v2479 = vadd.f32 %v2303, %v2407
        %v2480 = vadd.f32 %v2304, %v2408
        %v2481 = vadd.f32 %v2305, %v2409
        %v2482 = vadd.f32 %v2306, %v2410
        %v2483 = vadd.f32 %v2307, %v2411
        %v2484 = vadd.f32 %v2308, %v2412
        %v2485 = vadd.f32 %v2309, %v2413
        %v2486 = vadd.f32 %v2310, %v2414
        %v2487 = vadd.f32 %v2311, %v2415
        %v2488 = vadd.f32 %v2312, %v2416
        %v2489 = vadd.f32 %v2313, %v2417
        %v2490 = vadd.f32 %v2314, %v2418
        %v2491 = vadd.f32 %v2315, %v2419
        %v2492 = vadd.f32 %v2316, %v2420
        %v2493 = vadd.f32 %v2317, %v2421
        %v2494 = vadd.f32 %v2318, %v2422
        %v2495 = vadd.f32 %v2319, %v2423
        %v2496 = vadd.f32 %v2320, %v2424
        %v2497 = vadd.f32 %v2321, %v2425
        %v2498 = vadd.f32 %v2322, %v2426
        %v2499 = vadd.f32 %v2323, %v2427
        %v2500 = vadd.f32 %v2324, %v2428
        %v2501 = vadd.f32 %v2325, %v2429
        %v2502 = vadd.f32 %v2326, %v2430
        %v2503 = vadd.f32 %v2327, %v2431
        %v2504 = vadd.f32 %v2328, %v2432
        %v2505 = vadd.f32 %v2329, %v2433
        %v2506 = vadd.f32 %v2330, %v2434
        %v2507 = vadd.f32 %v2331, %v2435
        %v2508 = vadd.f32 %v2332, %v2436
        %v2509 = vadd.f32 %v2333, %v2437
        %v2510 = vadd.f32 %v2334, %v2438
        %v2511 = vadd.f32 %v2335, %v2439
        %v2512 = vadd.f32 %v2336, %v2440
        %v2513 = vadd.f32 %v2337, %v2441
        %v2514 = vadd.f32 %v2338, %v2442
        %v2515 = vadd.f32 %v2339, %v2443
        %v2516 = vadd.f32 %v2340, %v2444
        %v2517 = vadd.f32 %v2341, %v2445
        %v2518 = vadd.f32 %v2342, %v2446
        %v2519 = vadd.f32 %v2343, %v2447
        %v2520 = vadd.f32 %v2344, %v2448
        %v2521 = vadd.f32 %v2345, %v2449
        %v2522 = vadd.f32 %v2346, %v2450
        %v2523 = vadd.f32 %v2347, %v2451
        %v2524 = vadd.f32 %v2348, %v2452
        %2525 = vset.pattern.permute.xlu0 2
        %2526 = vperm.xlu0 %2525, %v2229
        %v2527 = vpop.permute.xlu0 %2526
        %2529 = vset.pattern.permute.xlu0 2
        %2530 = vperm.xlu0 %2529, %v2230
        %v2531 = vpop.permute.xlu0 %2530
        %2533 = vset.pattern.permute.xlu0 2
        %2534 = vperm.xlu0 %2533, %v2231
        %v2535 = vpop.permute.xlu0 %2534
        %2537 = vset.pattern.permute.xlu0 2
        %2538 = vperm.xlu0 %2537, %v2232
        %v2539 = vpop.permute.xlu0 %2538
        %2541 = vset.pattern.permute.xlu0 2
        %2542 = vperm.xlu0 %2541, %v2233
        %v2543 = vpop.permute.xlu0 %2542
        %2545 = vset.pattern.permute.xlu0 2
        %2546 = vperm.xlu0 %2545, %v2234
        %v2547 = vpop.permute.xlu0 %2546
        %2549 = vset.pattern.permute.xlu0 2
        %2550 = vperm.xlu0 %2549, %v2235
        %v2551 = vpop.permute.xlu0 %2550
        %2553 = vset.pattern.permute.xlu0 2
        %2554 = vperm.xlu0 %2553, %v2236
        %v2555 = vpop.permute.xlu0 %2554
        %v2557 = vmul.f32 %v2527, %v1137
        %v2558 = vmul.f32 %v2527, %v1141
        %v2559 = vmul.f32 %v2527, %v1145
        %v2560 = vmul.f32 %v2527, %v1149
        %v2561 = vmul.f32 %v2527, %v1153
        %v2562 = vmul.f32 %v2527, %v1157
        %v2563 = vmul.f32 %v2527, %v1161
        %v2564 = vmul.f32 %v2527, %v1165
        %v2565 = vmul.f32 %v2527, %v1169
        %v2566 = vmul.f32 %v2531, %v1137
        %v2567 = vmul.f32 %v2531, %v1141
        %v2568 = vmul.f32 %v2531, %v1145
        %v2569 = vmul.f32 %v2531, %v1149
        %v2570 = vmul.f32 %v2531, %v1153
        %v2571 = vmul.f32 %v2531, %v1157
        %v2572 = vmul.f32 %v2531, %v1161
        %v2573 = vmul.f32 %v2531, %v1165
        %v2574 = vmul.f32 %v2531, %v1169
        %v2575 = vmul.f32 %v2535, %v1137
        %v2576 = vmul.f32 %v2535, %v1141
        %v2577 = vmul.f32 %v2535, %v1145
        %v2578 = vmul.f32 %v2535, %v1149
        %v2579 = vmul.f32 %v2535, %v1153
        %v2580 = vmul.f32 %v2535, %v1157
        %v2581 = vmul.f32 %v2535, %v1161
        %v2582 = vmul.f32 %v2535, %v1165
        %v2583 = vmul.f32 %v2535, %v1169
        %v2584 = vmul.f32 %v2539, %v1137
        %v2585 = vmul.f32 %v2539, %v1141
        %v2586 = vmul.f32 %v2539, %v1145
        %v2587 = vmul.f32 %v2539, %v1149
        %v2588 = vmul.f32 %v2539, %v1153
        %v2589 = vmul.f32 %v2539, %v1157
        %v2590 = vmul.f32 %v2539, %v1161
        %v2591 = vmul.f32 %v2539, %v1165
        %v2592 = vmul.f32 %v2539, %v1169
        %v2593 = vmul.f32 %v2543, %v1137
        %v2594 = vmul.f32 %v2543, %v1141
        %v2595 = vmul.f32 %v2543, %v1145
        %v2596 = vmul.f32 %v2543, %v1149
        %v2597 = vmul.f32 %v2543, %v1153
        %v2598 = vmul.f32 %v2543, %v1157
        %v2599 = vmul.f32 %v2543, %v1161
        %v2600 = vmul.f32 %v2543, %v1165
        %v2601 = vmul.f32 %v2543, %v1169
        %v2602 = vmul.f32 %v2547, %v1137
        %v2603 = vmul.f32 %v2547, %v1141
        %v2604 = vmul.f32 %v2547, %v1145
        %v2605 = vmul.f32 %v2547, %v1149
        %v2606 = vmul.f32 %v2547, %v1153
        %v2607 = vmul.f32 %v2547, %v1157
        %v2608 = vmul.f32 %v2547, %v1161
        %v2609 = vmul.f32 %v2547, %v1165
        %v2610 = vmul.f32 %v2547, %v1169
        %v2611 = vmul.f32 %v2551, %v1137
        %v2612 = vmul.f32 %v2551, %v1141
        %v2613 = vmul.f32 %v2551, %v1145
        %v2614 = vmul.f32 %v2551, %v1149
        %v2615 = vmul.f32 %v2551, %v1153
        %v2616 = vmul.f32 %v2551, %v1157
        %v2617 = vmul.f32 %v2551, %v1161
        %v2618 = vmul.f32 %v2551, %v1165
        %v2619 = vmul.f32 %v2551, %v1169
        %v2620 = vmul.f32 %v2555, %v1137
        %v2621 = vmul.f32 %v2555, %v1141
        %v2622 = vmul.f32 %v2555, %v1145
        %v2623 = vmul.f32 %v2555, %v1149
        %v2624 = vmul.f32 %v2555, %v1153
        %v2625 = vmul.f32 %v2555, %v1157
        %v2626 = vmul.f32 %v2555, %v1161
        %v2627 = vmul.f32 %v2555, %v1165
        %v2628 = vmul.f32 %v2555, %v1169
        %v2629 = vadd.f32 %v2453, %v2557
        %v2630 = vadd.f32 %v2454, %v2558
        %v2631 = vadd.f32 %v2455, %v2559
        %v2632 = vadd.f32 %v2456, %v2560
        %v2633 = vadd.f32 %v2457, %v2561
        %v2634 = vadd.f32 %v2458, %v2562
        %v2635 = vadd.f32 %v2459, %v2563
        %v2636 = vadd.f32 %v2460, %v2564
        %v2637 = vadd.f32 %v2461, %v2565
        %v2638 = vadd.f32 %v2462, %v2566
        %v2639 = vadd.f32 %v2463, %v2567
        %v2640 = vadd.f32 %v2464, %v2568
        %v2641 = vadd.f32 %v2465, %v2569
        %v2642 = vadd.f32 %v2466, %v2570
        %v2643 = vadd.f32 %v2467, %v2571
        %v2644 = vadd.f32 %v2468, %v2572
        %v2645 = vadd.f32 %v2469, %v2573
        %v2646 = vadd.f32 %v2470, %v2574
        %v2647 = vadd.f32 %v2471, %v2575
        %v2648 = vadd.f32 %v2472, %v2576
        %v2649 = vadd.f32 %v2473, %v2577
        %v2650 = vadd.f32 %v2474, %v2578
        %v2651 = vadd.f32 %v2475, %v2579
        %v2652 = vadd.f32 %v2476, %v2580
        %v2653 = vadd.f32 %v2477, %v2581
        %v2654 = vadd.f32 %v2478, %v2582
        %v2655 = vadd.f32 %v2479, %v2583
        %v2656 = vadd.f32 %v2480, %v2584
        %v2657 = vadd.f32 %v2481, %v2585
        %v2658 = vadd.f32 %v2482, %v2586
        %v2659 = vadd.f32 %v2483, %v2587
        %v2660 = vadd.f32 %v2484, %v2588
        %v2661 = vadd.f32 %v2485, %v2589
        %v2662 = vadd.f32 %v2486, %v2590
        %v2663 = vadd.f32 %v2487, %v2591
        %v2664 = vadd.f32 %v2488, %v2592
        %v2665 = vadd.f32 %v2489, %v2593
        %v2666 = vadd.f32 %v2490, %v2594
        %v2667 = vadd.f32 %v2491, %v2595
        %v2668 = vadd.f32 %v2492, %v2596
        %v2669 = vadd.f32 %v2493, %v2597
        %v2670 = vadd.f32 %v2494, %v2598
        %v2671 = vadd.f32 %v2495, %v2599
        %v2672 = vadd.f32 %v2496, %v2600
        %v2673 = vadd.f32 %v2497, %v2601
        %v2674 = vadd.f32 %v2498, %v2602
        %v2675 = vadd.f32 %v2499, %v2603
        %v2676 = vadd.f32 %v2500, %v2604
        %v2677 = vadd.f32 %v2501, %v2605
        %v2678 = vadd.f32 %v2502, %v2606
        %v2679 = vadd.f32 %v2503, %v2607
        %v2680 = vadd.f32 %v2504, %v2608
        %v2681 = vadd.f32 %v2505, %v2609
        %v2682 = vadd.f32 %v2506, %v2610
        %v2683 = vadd.f32 %v2507, %v2611
        %v2684 = vadd.f32 %v2508, %v2612
        %v2685 = vadd.f32 %v2509, %v2613
        %v2686 = vadd.f32 %v2510, %v2614
        %v2687 = vadd.f32 %v2511, %v2615
        %v2688 = vadd.f32 %v2512, %v2616
        %v2689 = vadd.f32 %v2513, %v2617
        %v2690 = vadd.f32 %v2514, %v2618
        %v2691 = vadd.f32 %v2515, %v2619
        %v2692 = vadd.f32 %v2516, %v2620
        %v2693 = vadd.f32 %v2517, %v2621
        %v2694 = vadd.f32 %v2518, %v2622
        %v2695 = vadd.f32 %v2519, %v2623
        %v2696 = vadd.f32 %v2520, %v2624
        %v2697 = vadd.f32 %v2521, %v2625
        %v2698 = vadd.f32 %v2522, %v2626
        %v2699 = vadd.f32 %v2523, %v2627
        %v2700 = vadd.f32 %v2524, %v2628
        %2773 = vrot.lane.b32.xlu0 %v2629, 126
        %v2774 = vpop.permute.xlu0 %2773
        %2775 = vrot.lane.b32.xlu0 %v2630, 126
        %v2776 = vpop.permute.xlu0 %2775
        %2777 = vrot.lane.b32.xlu0 %v2631, 126
        %v2778 = vpop.permute.xlu0 %2777
        %2779 = vrot.lane.b32.xlu0 %v2632, 126
        %v2780 = vpop.permute.xlu0 %2779
        %2781 = vrot.lane.b32.xlu0 %v2633, 126
        %v2782 = vpop.permute.xlu0 %2781
        %2783 = vrot.lane.b32.xlu0 %v2634, 126
        %v2784 = vpop.permute.xlu0 %2783
        %2785 = vrot.lane.b32.xlu0 %v2635, 126
        %v2786 = vpop.permute.xlu0 %2785
        %2787 = vrot.lane.b32.xlu0 %v2636, 126
        %v2788 = vpop.permute.xlu0 %2787
        %2789 = vrot.lane.b32.xlu0 %v2637, 126
        %v2790 = vpop.permute.xlu0 %2789
        %2791 = vrot.lane.b32.xlu0 %v2638, 126
        %v2792 = vpop.permute.xlu0 %2791
        %2793 = vrot.lane.b32.xlu0 %v2639, 126
        %v2794 = vpop.permute.xlu0 %2793
        %2795 = vrot.lane.b32.xlu0 %v2640, 126
        %v2796 = vpop.permute.xlu0 %2795
        %2797 = vrot.lane.b32.xlu0 %v2641, 126
        %v2798 = vpop.permute.xlu0 %2797
        %2799 = vrot.lane.b32.xlu0 %v2642, 126
        %v2800 = vpop.permute.xlu0 %2799
        %2801 = vrot.lane.b32.xlu0 %v2643, 126
        %v2802 = vpop.permute.xlu0 %2801
        %2803 = vrot.lane.b32.xlu0 %v2644, 126
        %v2804 = vpop.permute.xlu0 %2803
        %2805 = vrot.lane.b32.xlu0 %v2645, 126
        %v2806 = vpop.permute.xlu0 %2805
        %2807 = vrot.lane.b32.xlu0 %v2646, 126
        %v2808 = vpop.permute.xlu0 %2807
        %2809 = vrot.lane.b32.xlu0 %v2647, 126
        %v2810 = vpop.permute.xlu0 %2809
        %2811 = vrot.lane.b32.xlu0 %v2648, 126
        %v2812 = vpop.permute.xlu0 %2811
        %2813 = vrot.lane.b32.xlu0 %v2649, 126
        %v2814 = vpop.permute.xlu0 %2813
        %2815 = vrot.lane.b32.xlu0 %v2650, 126
        %v2816 = vpop.permute.xlu0 %2815
        %2817 = vrot.lane.b32.xlu0 %v2651, 126
        %v2818 = vpop.permute.xlu0 %2817
        %2819 = vrot.lane.b32.xlu0 %v2652, 126
        %v2820 = vpop.permute.xlu0 %2819
        %2821 = vrot.lane.b32.xlu0 %v2653, 126
        %v2822 = vpop.permute.xlu0 %2821
        %2823 = vrot.lane.b32.xlu0 %v2654, 126
        %v2824 = vpop.permute.xlu0 %2823
        %2825 = vrot.lane.b32.xlu0 %v2655, 126
        %v2826 = vpop.permute.xlu0 %2825
        %2827 = vrot.lane.b32.xlu0 %v2656, 126
        %v2828 = vpop.permute.xlu0 %2827
        %2829 = vrot.lane.b32.xlu0 %v2657, 126
        %v2830 = vpop.permute.xlu0 %2829
        %2831 = vrot.lane.b32.xlu0 %v2658, 126
        %v2832 = vpop.permute.xlu0 %2831
        %2833 = vrot.lane.b32.xlu0 %v2659, 126
        %v2834 = vpop.permute.xlu0 %2833
        %2835 = vrot.lane.b32.xlu0 %v2660, 126
        %v2836 = vpop.permute.xlu0 %2835
        %2837 = vrot.lane.b32.xlu0 %v2661, 126
        %v2838 = vpop.permute.xlu0 %2837
        %2839 = vrot.lane.b32.xlu0 %v2662, 126
        %v2840 = vpop.permute.xlu0 %2839
        %2841 = vrot.lane.b32.xlu0 %v2663, 126
        %v2842 = vpop.permute.xlu0 %2841
        %2843 = vrot.lane.b32.xlu0 %v2664, 126
        %v2844 = vpop.permute.xlu0 %2843
        %2845 = vrot.lane.b32.xlu0 %v2665, 126
        %v2846 = vpop.permute.xlu0 %2845
        %2847 = vrot.lane.b32.xlu0 %v2666, 126
        %v2848 = vpop.permute.xlu0 %2847
        %2849 = vrot.lane.b32.xlu0 %v2667, 126
        %v2850 = vpop.permute.xlu0 %2849
        %2851 = vrot.lane.b32.xlu0 %v2668, 126
        %v2852 = vpop.permute.xlu0 %2851
        %2853 = vrot.lane.b32.xlu0 %v2669, 126
        %v2854 = vpop.permute.xlu0 %2853
        %2855 = vrot.lane.b32.xlu0 %v2670, 126
        %v2856 = vpop.permute.xlu0 %2855
        %2857 = vrot.lane.b32.xlu0 %v2671, 126
        %v2858 = vpop.permute.xlu0 %2857
        %2859 = vrot.lane.b32.xlu0 %v2672, 126
        %v2860 = vpop.permute.xlu0 %2859
        %2861 = vrot.lane.b32.xlu0 %v2673, 126
        %v2862 = vpop.permute.xlu0 %2861
        %2863 = vrot.lane.b32.xlu0 %v2674, 126
        %v2864 = vpop.permute.xlu0 %2863
        %2865 = vrot.lane.b32.xlu0 %v2675, 126
        %v2866 = vpop.permute.xlu0 %2865
        %2867 = vrot.lane.b32.xlu0 %v2676, 126
        %v2868 = vpop.permute.xlu0 %2867
        %2869 = vrot.lane.b32.xlu0 %v2677, 126
        %v2870 = vpop.permute.xlu0 %2869
        %2871 = vrot.lane.b32.xlu0 %v2678, 126
        %v2872 = vpop.permute.xlu0 %2871
        %2873 = vrot.lane.b32.xlu0 %v2679, 126
        %v2874 = vpop.permute.xlu0 %2873
        %2875 = vrot.lane.b32.xlu0 %v2680, 126
        %v2876 = vpop.permute.xlu0 %2875
        %2877 = vrot.lane.b32.xlu0 %v2681, 126
        %v2878 = vpop.permute.xlu0 %2877
        %2879 = vrot.lane.b32.xlu0 %v2682, 126
        %v2880 = vpop.permute.xlu0 %2879
        %2881 = vrot.lane.b32.xlu0 %v2683, 126
        %v2882 = vpop.permute.xlu0 %2881
        %2883 = vrot.lane.b32.xlu0 %v2684, 126
        %v2884 = vpop.permute.xlu0 %2883
        %2885 = vrot.lane.b32.xlu0 %v2685, 126
        %v2886 = vpop.permute.xlu0 %2885
        %2887 = vrot.lane.b32.xlu0 %v2686, 126
        %v2888 = vpop.permute.xlu0 %2887
        %2889 = vrot.lane.b32.xlu0 %v2687, 126
        %v2890 = vpop.permute.xlu0 %2889
        %2891 = vrot.lane.b32.xlu0 %v2688, 126
        %v2892 = vpop.permute.xlu0 %2891
        %2893 = vrot.lane.b32.xlu0 %v2689, 126
        %v2894 = vpop.permute.xlu0 %2893
        %2895 = vrot.lane.b32.xlu0 %v2690, 126
        %v2896 = vpop.permute.xlu0 %2895
        %2897 = vrot.lane.b32.xlu0 %v2691, 126
        %v2898 = vpop.permute.xlu0 %2897
        %2899 = vrot.lane.b32.xlu0 %v2692, 126
        %v2900 = vpop.permute.xlu0 %2899
        %2901 = vrot.lane.b32.xlu0 %v2693, 126
        %v2902 = vpop.permute.xlu0 %2901
        %2903 = vrot.lane.b32.xlu0 %v2694, 126
        %v2904 = vpop.permute.xlu0 %2903
        %2905 = vrot.lane.b32.xlu0 %v2695, 126
        %v2906 = vpop.permute.xlu0 %2905
        %2907 = vrot.lane.b32.xlu0 %v2696, 126
        %v2908 = vpop.permute.xlu0 %2907
        %2909 = vrot.lane.b32.xlu0 %v2697, 126
        %v2910 = vpop.permute.xlu0 %2909
        %2911 = vrot.lane.b32.xlu0 %v2698, 126
        %v2912 = vpop.permute.xlu0 %2911
        %2913 = vrot.lane.b32.xlu0 %v2699, 126
        %v2914 = vpop.permute.xlu0 %2913
        %2915 = vrot.lane.b32.xlu0 %v2700, 126
        %v2916 = vpop.permute.xlu0 %2915
        %vm2917 = vcmask 1031168
        %v2918 = vsel %vm2917, %v2774, %v2776
        %v2919 = vsel %vm2917, %v2776, %v2778
        %v2920 = vsel %vm2917, %v2778, %v2780
        %v2921 = vsel %vm2917, %v2780, %v2782
        %v2922 = vsel %vm2917, %v2782, %v2784
        %v2923 = vsel %vm2917, %v2784, %v2786
        %v2924 = vsel %vm2917, %v2786, %v2788
        %v2925 = vsel %vm2917, %v2788, %v2790
        %v2926 = vsel %vm2917, %v2792, %v2794
        %v2927 = vsel %vm2917, %v2794, %v2796
        %v2928 = vsel %vm2917, %v2796, %v2798
        %v2929 = vsel %vm2917, %v2798, %v2800
        %v2930 = vsel %vm2917, %v2800, %v2802
        %v2931 = vsel %vm2917, %v2802, %v2804
        %v2932 = vsel %vm2917, %v2804, %v2806
        %v2933 = vsel %vm2917, %v2806, %v2808
        %v2934 = vsel %vm2917, %v2810, %v2812
        %v2935 = vsel %vm2917, %v2812, %v2814
        %v2936 = vsel %vm2917, %v2814, %v2816
        %v2937 = vsel %vm2917, %v2816, %v2818
        %v2938 = vsel %vm2917, %v2818, %v2820
        %v2939 = vsel %vm2917, %v2820, %v2822
        %v2940 = vsel %vm2917, %v2822, %v2824
        %v2941 = vsel %vm2917, %v2824, %v2826
        %v2942 = vsel %vm2917, %v2828, %v2830
        %v2943 = vsel %vm2917, %v2830, %v2832
        %v2944 = vsel %vm2917, %v2832, %v2834
        %v2945 = vsel %vm2917, %v2834, %v2836
        %v2946 = vsel %vm2917, %v2836, %v2838
        %v2947 = vsel %vm2917, %v2838, %v2840
        %v2948 = vsel %vm2917, %v2840, %v2842
        %v2949 = vsel %vm2917, %v2842, %v2844
        %v2950 = vsel %vm2917, %v2846, %v2848
        %v2951 = vsel %vm2917, %v2848, %v2850
        %v2952 = vsel %vm2917, %v2850, %v2852
        %v2953 = vsel %vm2917, %v2852, %v2854
        %v2954 = vsel %vm2917, %v2854, %v2856
        %v2955 = vsel %vm2917, %v2856, %v2858
        %v2956 = vsel %vm2917, %v2858, %v2860
        %v2957 = vsel %vm2917, %v2860, %v2862
        %v2958 = vsel %vm2917, %v2864, %v2866
        %v2959 = vsel %vm2917, %v2866, %v2868
        %v2960 = vsel %vm2917, %v2868, %v2870
        %v2961 = vsel %vm2917, %v2870, %v2872
        %v2962 = vsel %vm2917, %v2872, %v2874
        %v2963 = vsel %vm2917, %v2874, %v2876
        %v2964 = vsel %vm2917, %v2876, %v2878
        %v2965 = vsel %vm2917, %v2878, %v2880
        %v2966 = vsel %vm2917, %v2882, %v2884
        %v2967 = vsel %vm2917, %v2884, %v2886
        %v2968 = vsel %vm2917, %v2886, %v2888
        %v2969 = vsel %vm2917, %v2888, %v2890
        %v2970 = vsel %vm2917, %v2890, %v2892
        %v2971 = vsel %vm2917, %v2892, %v2894
        %v2972 = vsel %vm2917, %v2894, %v2896
        %v2973 = vsel %vm2917, %v2896, %v2898
        %v2974 = vsel %vm2917, %v2900, %v2902
        %v2975 = vsel %vm2917, %v2902, %v2904
        %v2976 = vsel %vm2917, %v2904, %v2906
        %v2977 = vsel %vm2917, %v2906, %v2908
        %v2978 = vsel %vm2917, %v2908, %v2910
        %v2979 = vsel %vm2917, %v2910, %v2912
        %v2980 = vsel %vm2917, %v2912, %v2914
        %v2981 = vsel %vm2917, %v2914, %v2916
        %v3054 = vadd.f32 %v2148, %v2918
        %v3055 = vadd.f32 %v2149, %v2919
        %v3056 = vadd.f32 %v2150, %v2920
        %v3057 = vadd.f32 %v2151, %v2921
        %v3058 = vadd.f32 %v2152, %v2922
        %v3059 = vadd.f32 %v2153, %v2923
        %v3060 = vadd.f32 %v2154, %v2924
        %v3061 = vadd.f32 %v2155, %v2925
        %v3062 = vadd.f32 %v2156, %v2790
        %v3063 = vadd.f32 %v2157, %v2926
        %v3064 = vadd.f32 %v2158, %v2927
        %v3065 = vadd.f32 %v2159, %v2928
        %v3066 = vadd.f32 %v2160, %v2929
        %v3067 = vadd.f32 %v2161, %v2930
        %v3068 = vadd.f32 %v2162, %v2931
        %v3069 = vadd.f32 %v2163, %v2932
        %v3070 = vadd.f32 %v2164, %v2933
        %v3071 = vadd.f32 %v2165, %v2808
        %v3072 = vadd.f32 %v2166, %v2934
        %v3073 = vadd.f32 %v2167, %v2935
        %v3074 = vadd.f32 %v2168, %v2936
        %v3075 = vadd.f32 %v2169, %v2937
        %v3076 = vadd.f32 %v2170, %v2938
        %v3077 = vadd.f32 %v2171, %v2939
        %v3078 = vadd.f32 %v2172, %v2940
        %v3079 = vadd.f32 %v2173, %v2941
        %v3080 = vadd.f32 %v2174, %v2826
        %v3081 = vadd.f32 %v2175, %v2942
        %v3082 = vadd.f32 %v2176, %v2943
        %v3083 = vadd.f32 %v2177, %v2944
        %v3084 = vadd.f32 %v2178, %v2945
        %v3085 = vadd.f32 %v2179, %v2946
        %v3086 = vadd.f32 %v2180, %v2947
        %v3087 = vadd.f32 %v2181, %v2948
        %v3088 = vadd.f32 %v2182, %v2949
        %v3089 = vadd.f32 %v2183, %v2844
        %v3090 = vadd.f32 %v2184, %v2950
        %v3091 = vadd.f32 %v2185, %v2951
        %v3092 = vadd.f32 %v2186, %v2952
        %v3093 = vadd.f32 %v2187, %v2953
        %v3094 = vadd.f32 %v2188, %v2954
        %v3095 = vadd.f32 %v2189, %v2955
        %v3096 = vadd.f32 %v2190, %v2956
        %v3097 = vadd.f32 %v2191, %v2957
        %v3098 = vadd.f32 %v2192, %v2862
        %v3099 = vadd.f32 %v2193, %v2958
        %v3100 = vadd.f32 %v2194, %v2959
        %v3101 = vadd.f32 %v2195, %v2960
        %v3102 = vadd.f32 %v2196, %v2961
        %v3103 = vadd.f32 %v2197, %v2962
        %v3104 = vadd.f32 %v2198, %v2963
        %v3105 = vadd.f32 %v2199, %v2964
        %v3106 = vadd.f32 %v2200, %v2965
        %v3107 = vadd.f32 %v2201, %v2880
        %v3108 = vadd.f32 %v2202, %v2966
        %v3109 = vadd.f32 %v2203, %v2967
        %v3110 = vadd.f32 %v2204, %v2968
        %v3111 = vadd.f32 %v2205, %v2969
        %v3112 = vadd.f32 %v2206, %v2970
        %v3113 = vadd.f32 %v2207, %v2971
        %v3114 = vadd.f32 %v2208, %v2972
        %v3115 = vadd.f32 %v2209, %v2973
        %v3116 = vadd.f32 %v2210, %v2898
        %v3117 = vadd.f32 %v2211, %v2974
        %v3118 = vadd.f32 %v2212, %v2975
        %v3119 = vadd.f32 %v2213, %v2976
        %v3120 = vadd.f32 %v2214, %v2977
        %v3121 = vadd.f32 %v2215, %v2978
        %v3122 = vadd.f32 %v2216, %v2979
        %v3123 = vadd.f32 %v2217, %v2980
        %v3124 = vadd.f32 %v2218, %v2981
        %v3125 = vadd.f32 %v2219, %v2916
        %s3126 = scalar_lea.vmem %s2, 96
        %v3127 = vld [vmem:[%s3126] sm:$0xf]
        %v3128 = vld [vmem:[%s3126 + $0x4] sm:$0xf]
        %v3129 = vld [vmem:[%s3126 + $0x8] sm:$0xf]
        %v3130 = vld [vmem:[%s3126 + $0xc] sm:$0xf]
        %v3131 = vld [vmem:[%s3126 + $0x10] sm:$0xf]
        %v3132 = vld [vmem:[%s3126 + $0x14] sm:$0xf]
        %v3133 = vld [vmem:[%s3126 + $0x18] sm:$0xf]
        %v3134 = vld [vmem:[%s3126 + $0x1c] sm:$0xf]
        %v3135 = vunpack.c.l.bf16 %v3127
        %v3136 = vunpack.c.l.bf16 %v3128
        %v3137 = vunpack.c.l.bf16 %v3129
        %v3138 = vunpack.c.l.bf16 %v3130
        %v3139 = vunpack.c.l.bf16 %v3131
        %v3140 = vunpack.c.l.bf16 %v3132
        %v3141 = vunpack.c.l.bf16 %v3133
        %v3142 = vunpack.c.l.bf16 %v3134
        %3144 = vset.pattern.permute.xlu0 0
        %3145 = vperm.xlu0 %3144, %v3135
        %v3146 = vpop.permute.xlu0 %3145
        %3149 = vset.pattern.permute.xlu0 0
        %3150 = vperm.xlu0 %3149, %v3136
        %v3151 = vpop.permute.xlu0 %3150
        %3154 = vset.pattern.permute.xlu0 0
        %3155 = vperm.xlu0 %3154, %v3137
        %v3156 = vpop.permute.xlu0 %3155
        %3159 = vset.pattern.permute.xlu0 0
        %3160 = vperm.xlu0 %3159, %v3138
        %v3161 = vpop.permute.xlu0 %3160
        %3164 = vset.pattern.permute.xlu0 0
        %3165 = vperm.xlu0 %3164, %v3139
        %v3166 = vpop.permute.xlu0 %3165
        %3169 = vset.pattern.permute.xlu0 0
        %3170 = vperm.xlu0 %3169, %v3140
        %v3171 = vpop.permute.xlu0 %3170
        %3174 = vset.pattern.permute.xlu0 0
        %3175 = vperm.xlu0 %3174, %v3141
        %v3176 = vpop.permute.xlu0 %3175
        %3179 = vset.pattern.permute.xlu0 0
        %3180 = vperm.xlu0 %3179, %v3142
        %v3181 = vpop.permute.xlu0 %3180
        %v3183 = vmul.f32 %v3146, %v695
        %v3184 = vmul.f32 %v3146, %v699
        %v3185 = vmul.f32 %v3146, %v703
        %v3186 = vmul.f32 %v3146, %v707
        %v3187 = vmul.f32 %v3146, %v711
        %v3188 = vmul.f32 %v3146, %v715
        %v3189 = vmul.f32 %v3146, %v719
        %v3190 = vmul.f32 %v3146, %v723
        %v3191 = vmul.f32 %v3146, %v727
        %v3192 = vmul.f32 %v3151, %v695
        %v3193 = vmul.f32 %v3151, %v699
        %v3194 = vmul.f32 %v3151, %v703
        %v3195 = vmul.f32 %v3151, %v707
        %v3196 = vmul.f32 %v3151, %v711
        %v3197 = vmul.f32 %v3151, %v715
        %v3198 = vmul.f32 %v3151, %v719
        %v3199 = vmul.f32 %v3151, %v723
        %v3200 = vmul.f32 %v3151, %v727
        %v3201 = vmul.f32 %v3156, %v695
        %v3202 = vmul.f32 %v3156, %v699
        %v3203 = vmul.f32 %v3156, %v703
        %v3204 = vmul.f32 %v3156, %v707
        %v3205 = vmul.f32 %v3156, %v711
        %v3206 = vmul.f32 %v3156, %v715
        %v3207 = vmul.f32 %v3156, %v719
        %v3208 = vmul.f32 %v3156, %v723
        %v3209 = vmul.f32 %v3156, %v727
        %v3210 = vmul.f32 %v3161, %v695
        %v3211 = vmul.f32 %v3161, %v699
        %v3212 = vmul.f32 %v3161, %v703
        %v3213 = vmul.f32 %v3161, %v707
        %v3214 = vmul.f32 %v3161, %v711
        %v3215 = vmul.f32 %v3161, %v715
        %v3216 = vmul.f32 %v3161, %v719
        %v3217 = vmul.f32 %v3161, %v723
        %v3218 = vmul.f32 %v3161, %v727
        %v3219 = vmul.f32 %v3166, %v695
        %v3220 = vmul.f32 %v3166, %v699
        %v3221 = vmul.f32 %v3166, %v703
        %v3222 = vmul.f32 %v3166, %v707
        %v3223 = vmul.f32 %v3166, %v711
        %v3224 = vmul.f32 %v3166, %v715
        %v3225 = vmul.f32 %v3166, %v719
        %v3226 = vmul.f32 %v3166, %v723
        %v3227 = vmul.f32 %v3166, %v727
        %v3228 = vmul.f32 %v3171, %v695
        %v3229 = vmul.f32 %v3171, %v699
        %v3230 = vmul.f32 %v3171, %v703
        %v3231 = vmul.f32 %v3171, %v707
        %v3232 = vmul.f32 %v3171, %v711
        %v3233 = vmul.f32 %v3171, %v715
        %v3234 = vmul.f32 %v3171, %v719
        %v3235 = vmul.f32 %v3171, %v723
        %v3236 = vmul.f32 %v3171, %v727
        %v3237 = vmul.f32 %v3176, %v695
        %v3238 = vmul.f32 %v3176, %v699
        %v3239 = vmul.f32 %v3176, %v703
        %v3240 = vmul.f32 %v3176, %v707
        %v3241 = vmul.f32 %v3176, %v711
        %v3242 = vmul.f32 %v3176, %v715
        %v3243 = vmul.f32 %v3176, %v719
        %v3244 = vmul.f32 %v3176, %v723
        %v3245 = vmul.f32 %v3176, %v727
        %v3246 = vmul.f32 %v3181, %v695
        %v3247 = vmul.f32 %v3181, %v699
        %v3248 = vmul.f32 %v3181, %v703
        %v3249 = vmul.f32 %v3181, %v707
        %v3250 = vmul.f32 %v3181, %v711
        %v3251 = vmul.f32 %v3181, %v715
        %v3252 = vmul.f32 %v3181, %v719
        %v3253 = vmul.f32 %v3181, %v723
        %v3254 = vmul.f32 %v3181, %v727
        %3255 = vset.pattern.permute.xlu0 1
        %3256 = vperm.xlu0 %3255, %v3135
        %v3257 = vpop.permute.xlu0 %3256
        %3259 = vset.pattern.permute.xlu0 1
        %3260 = vperm.xlu0 %3259, %v3136
        %v3261 = vpop.permute.xlu0 %3260
        %3263 = vset.pattern.permute.xlu0 1
        %3264 = vperm.xlu0 %3263, %v3137
        %v3265 = vpop.permute.xlu0 %3264
        %3267 = vset.pattern.permute.xlu0 1
        %3268 = vperm.xlu0 %3267, %v3138
        %v3269 = vpop.permute.xlu0 %3268
        %3271 = vset.pattern.permute.xlu0 1
        %3272 = vperm.xlu0 %3271, %v3139
        %v3273 = vpop.permute.xlu0 %3272
        %3275 = vset.pattern.permute.xlu0 1
        %3276 = vperm.xlu0 %3275, %v3140
        %v3277 = vpop.permute.xlu0 %3276
        %3279 = vset.pattern.permute.xlu0 1
        %3280 = vperm.xlu0 %3279, %v3141
        %v3281 = vpop.permute.xlu0 %3280
        %3283 = vset.pattern.permute.xlu0 1
        %3284 = vperm.xlu0 %3283, %v3142
        %v3285 = vpop.permute.xlu0 %3284
        %v3287 = vmul.f32 %v3257, %v880
        %v3288 = vmul.f32 %v3257, %v884
        %v3289 = vmul.f32 %v3257, %v888
        %v3290 = vmul.f32 %v3257, %v892
        %v3291 = vmul.f32 %v3257, %v896
        %v3292 = vmul.f32 %v3257, %v900
        %v3293 = vmul.f32 %v3257, %v904
        %v3294 = vmul.f32 %v3257, %v908
        %v3295 = vmul.f32 %v3257, %v912
        %v3296 = vmul.f32 %v3261, %v880
        %v3297 = vmul.f32 %v3261, %v884
        %v3298 = vmul.f32 %v3261, %v888
        %v3299 = vmul.f32 %v3261, %v892
        %v3300 = vmul.f32 %v3261, %v896
        %v3301 = vmul.f32 %v3261, %v900
        %v3302 = vmul.f32 %v3261, %v904
        %v3303 = vmul.f32 %v3261, %v908
        %v3304 = vmul.f32 %v3261, %v912
        %v3305 = vmul.f32 %v3265, %v880
        %v3306 = vmul.f32 %v3265, %v884
        %v3307 = vmul.f32 %v3265, %v888
        %v3308 = vmul.f32 %v3265, %v892
        %v3309 = vmul.f32 %v3265, %v896
        %v3310 = vmul.f32 %v3265, %v900
        %v3311 = vmul.f32 %v3265, %v904
        %v3312 = vmul.f32 %v3265, %v908
        %v3313 = vmul.f32 %v3265, %v912
        %v3314 = vmul.f32 %v3269, %v880
        %v3315 = vmul.f32 %v3269, %v884
        %v3316 = vmul.f32 %v3269, %v888
        %v3317 = vmul.f32 %v3269, %v892
        %v3318 = vmul.f32 %v3269, %v896
        %v3319 = vmul.f32 %v3269, %v900
        %v3320 = vmul.f32 %v3269, %v904
        %v3321 = vmul.f32 %v3269, %v908
        %v3322 = vmul.f32 %v3269, %v912
        %v3323 = vmul.f32 %v3273, %v880
        %v3324 = vmul.f32 %v3273, %v884
        %v3325 = vmul.f32 %v3273, %v888
        %v3326 = vmul.f32 %v3273, %v892
        %v3327 = vmul.f32 %v3273, %v896
        %v3328 = vmul.f32 %v3273, %v900
        %v3329 = vmul.f32 %v3273, %v904
        %v3330 = vmul.f32 %v3273, %v908
        %v3331 = vmul.f32 %v3273, %v912
        %v3332 = vmul.f32 %v3277, %v880
        %v3333 = vmul.f32 %v3277, %v884
        %v3334 = vmul.f32 %v3277, %v888
        %v3335 = vmul.f32 %v3277, %v892
        %v3336 = vmul.f32 %v3277, %v896
        %v3337 = vmul.f32 %v3277, %v900
        %v3338 = vmul.f32 %v3277, %v904
        %v3339 = vmul.f32 %v3277, %v908
        %v3340 = vmul.f32 %v3277, %v912
        %v3341 = vmul.f32 %v3281, %v880
        %v3342 = vmul.f32 %v3281, %v884
        %v3343 = vmul.f32 %v3281, %v888
        %v3344 = vmul.f32 %v3281, %v892
        %v3345 = vmul.f32 %v3281, %v896
        %v3346 = vmul.f32 %v3281, %v900
        %v3347 = vmul.f32 %v3281, %v904
        %v3348 = vmul.f32 %v3281, %v908
        %v3349 = vmul.f32 %v3281, %v912
        %v3350 = vmul.f32 %v3285, %v880
        %v3351 = vmul.f32 %v3285, %v884
        %v3352 = vmul.f32 %v3285, %v888
        %v3353 = vmul.f32 %v3285, %v892
        %v3354 = vmul.f32 %v3285, %v896
        %v3355 = vmul.f32 %v3285, %v900
        %v3356 = vmul.f32 %v3285, %v904
        %v3357 = vmul.f32 %v3285, %v908
        %v3358 = vmul.f32 %v3285, %v912
        %v3359 = vadd.f32 %v3183, %v3287
        %v3360 = vadd.f32 %v3184, %v3288
        %v3361 = vadd.f32 %v3185, %v3289
        %v3362 = vadd.f32 %v3186, %v3290
        %v3363 = vadd.f32 %v3187, %v3291
        %v3364 = vadd.f32 %v3188, %v3292
        %v3365 = vadd.f32 %v3189, %v3293
        %v3366 = vadd.f32 %v3190, %v3294
        %v3367 = vadd.f32 %v3191, %v3295
        %v3368 = vadd.f32 %v3192, %v3296
        %v3369 = vadd.f32 %v3193, %v3297
        %v3370 = vadd.f32 %v3194, %v3298
        %v3371 = vadd.f32 %v3195, %v3299
        %v3372 = vadd.f32 %v3196, %v3300
        %v3373 = vadd.f32 %v3197, %v3301
        %v3374 = vadd.f32 %v3198, %v3302
        %v3375 = vadd.f32 %v3199, %v3303
        %v3376 = vadd.f32 %v3200, %v3304
        %v3377 = vadd.f32 %v3201, %v3305
        %v3378 = vadd.f32 %v3202, %v3306
        %v3379 = vadd.f32 %v3203, %v3307
        %v3380 = vadd.f32 %v3204, %v3308
        %v3381 = vadd.f32 %v3205, %v3309
        %v3382 = vadd.f32 %v3206, %v3310
        %v3383 = vadd.f32 %v3207, %v3311
        %v3384 = vadd.f32 %v3208, %v3312
        %v3385 = vadd.f32 %v3209, %v3313
        %v3386 = vadd.f32 %v3210, %v3314
        %v3387 = vadd.f32 %v3211, %v3315
        %v3388 = vadd.f32 %v3212, %v3316
        %v3389 = vadd.f32 %v3213, %v3317
        %v3390 = vadd.f32 %v3214, %v3318
        %v3391 = vadd.f32 %v3215, %v3319
        %v3392 = vadd.f32 %v3216, %v3320
        %v3393 = vadd.f32 %v3217, %v3321
        %v3394 = vadd.f32 %v3218, %v3322
        %v3395 = vadd.f32 %v3219, %v3323
        %v3396 = vadd.f32 %v3220, %v3324
        %v3397 = vadd.f32 %v3221, %v3325
        %v3398 = vadd.f32 %v3222, %v3326
        %v3399 = vadd.f32 %v3223, %v3327
        %v3400 = vadd.f32 %v3224, %v3328
        %v3401 = vadd.f32 %v3225, %v3329
        %v3402 = vadd.f32 %v3226, %v3330
        %v3403 = vadd.f32 %v3227, %v3331
        %v3404 = vadd.f32 %v3228, %v3332
        %v3405 = vadd.f32 %v3229, %v3333
        %v3406 = vadd.f32 %v3230, %v3334
        %v3407 = vadd.f32 %v3231, %v3335
        %v3408 = vadd.f32 %v3232, %v3336
        %v3409 = vadd.f32 %v3233, %v3337
        %v3410 = vadd.f32 %v3234, %v3338
        %v3411 = vadd.f32 %v3235, %v3339
        %v3412 = vadd.f32 %v3236, %v3340
        %v3413 = vadd.f32 %v3237, %v3341
        %v3414 = vadd.f32 %v3238, %v3342
        %v3415 = vadd.f32 %v3239, %v3343
        %v3416 = vadd.f32 %v3240, %v3344
        %v3417 = vadd.f32 %v3241, %v3345
        %v3418 = vadd.f32 %v3242, %v3346
        %v3419 = vadd.f32 %v3243, %v3347
        %v3420 = vadd.f32 %v3244, %v3348
        %v3421 = vadd.f32 %v3245, %v3349
        %v3422 = vadd.f32 %v3246, %v3350
        %v3423 = vadd.f32 %v3247, %v3351
        %v3424 = vadd.f32 %v3248, %v3352
        %v3425 = vadd.f32 %v3249, %v3353
        %v3426 = vadd.f32 %v3250, %v3354
        %v3427 = vadd.f32 %v3251, %v3355
        %v3428 = vadd.f32 %v3252, %v3356
        %v3429 = vadd.f32 %v3253, %v3357
        %v3430 = vadd.f32 %v3254, %v3358
        %3431 = vset.pattern.permute.xlu0 2
        %3432 = vperm.xlu0 %3431, %v3135
        %v3433 = vpop.permute.xlu0 %3432
        %3435 = vset.pattern.permute.xlu0 2
        %3436 = vperm.xlu0 %3435, %v3136
        %v3437 = vpop.permute.xlu0 %3436
        %3439 = vset.pattern.permute.xlu0 2
        %3440 = vperm.xlu0 %3439, %v3137
        %v3441 = vpop.permute.xlu0 %3440
        %3443 = vset.pattern.permute.xlu0 2
        %3444 = vperm.xlu0 %3443, %v3138
        %v3445 = vpop.permute.xlu0 %3444
        %3447 = vset.pattern.permute.xlu0 2
        %3448 = vperm.xlu0 %3447, %v3139
        %v3449 = vpop.permute.xlu0 %3448
        %3451 = vset.pattern.permute.xlu0 2
        %3452 = vperm.xlu0 %3451, %v3140
        %v3453 = vpop.permute.xlu0 %3452
        %3455 = vset.pattern.permute.xlu0 2
        %3456 = vperm.xlu0 %3455, %v3141
        %v3457 = vpop.permute.xlu0 %3456
        %3459 = vset.pattern.permute.xlu0 2
        %3460 = vperm.xlu0 %3459, %v3142
        %v3461 = vpop.permute.xlu0 %3460
        %v3463 = vmul.f32 %v3433, %v1137
        %v3464 = vmul.f32 %v3433, %v1141
        %v3465 = vmul.f32 %v3433, %v1145
        %v3466 = vmul.f32 %v3433, %v1149
        %v3467 = vmul.f32 %v3433, %v1153
        %v3468 = vmul.f32 %v3433, %v1157
        %v3469 = vmul.f32 %v3433, %v1161
        %v3470 = vmul.f32 %v3433, %v1165
        %v3471 = vmul.f32 %v3433, %v1169
        %v3472 = vmul.f32 %v3437, %v1137
        %v3473 = vmul.f32 %v3437, %v1141
        %v3474 = vmul.f32 %v3437, %v1145
        %v3475 = vmul.f32 %v3437, %v1149
        %v3476 = vmul.f32 %v3437, %v1153
        %v3477 = vmul.f32 %v3437, %v1157
        %v3478 = vmul.f32 %v3437, %v1161
        %v3479 = vmul.f32 %v3437, %v1165
        %v3480 = vmul.f32 %v3437, %v1169
        %v3481 = vmul.f32 %v3441, %v1137
        %v3482 = vmul.f32 %v3441, %v1141
        %v3483 = vmul.f32 %v3441, %v1145
        %v3484 = vmul.f32 %v3441, %v1149
        %v3485 = vmul.f32 %v3441, %v1153
        %v3486 = vmul.f32 %v3441, %v1157
        %v3487 = vmul.f32 %v3441, %v1161
        %v3488 = vmul.f32 %v3441, %v1165
        %v3489 = vmul.f32 %v3441, %v1169
        %v3490 = vmul.f32 %v3445, %v1137
        %v3491 = vmul.f32 %v3445, %v1141
        %v3492 = vmul.f32 %v3445, %v1145
        %v3493 = vmul.f32 %v3445, %v1149
        %v3494 = vmul.f32 %v3445, %v1153
        %v3495 = vmul.f32 %v3445, %v1157
        %v3496 = vmul.f32 %v3445, %v1161
        %v3497 = vmul.f32 %v3445, %v1165
        %v3498 = vmul.f32 %v3445, %v1169
        %v3499 = vmul.f32 %v3449, %v1137
        %v3500 = vmul.f32 %v3449, %v1141
        %v3501 = vmul.f32 %v3449, %v1145
        %v3502 = vmul.f32 %v3449, %v1149
        %v3503 = vmul.f32 %v3449, %v1153
        %v3504 = vmul.f32 %v3449, %v1157
        %v3505 = vmul.f32 %v3449, %v1161
        %v3506 = vmul.f32 %v3449, %v1165
        %v3507 = vmul.f32 %v3449, %v1169
        %v3508 = vmul.f32 %v3453, %v1137
        %v3509 = vmul.f32 %v3453, %v1141
        %v3510 = vmul.f32 %v3453, %v1145
        %v3511 = vmul.f32 %v3453, %v1149
        %v3512 = vmul.f32 %v3453, %v1153
        %v3513 = vmul.f32 %v3453, %v1157
        %v3514 = vmul.f32 %v3453, %v1161
        %v3515 = vmul.f32 %v3453, %v1165
        %v3516 = vmul.f32 %v3453, %v1169
        %v3517 = vmul.f32 %v3457, %v1137
        %v3518 = vmul.f32 %v3457, %v1141
        %v3519 = vmul.f32 %v3457, %v1145
        %v3520 = vmul.f32 %v3457, %v1149
        %v3521 = vmul.f32 %v3457, %v1153
        %v3522 = vmul.f32 %v3457, %v1157
        %v3523 = vmul.f32 %v3457, %v1161
        %v3524 = vmul.f32 %v3457, %v1165
        %v3525 = vmul.f32 %v3457, %v1169
        %v3526 = vmul.f32 %v3461, %v1137
        %v3527 = vmul.f32 %v3461, %v1141
        %v3528 = vmul.f32 %v3461, %v1145
        %v3529 = vmul.f32 %v3461, %v1149
        %v3530 = vmul.f32 %v3461, %v1153
        %v3531 = vmul.f32 %v3461, %v1157
        %v3532 = vmul.f32 %v3461, %v1161
        %v3533 = vmul.f32 %v3461, %v1165
        %v3534 = vmul.f32 %v3461, %v1169
        %v3535 = vadd.f32 %v3359, %v3463
        %v3536 = vadd.f32 %v3360, %v3464
        %v3537 = vadd.f32 %v3361, %v3465
        %v3538 = vadd.f32 %v3362, %v3466
        %v3539 = vadd.f32 %v3363, %v3467
        %v3540 = vadd.f32 %v3364, %v3468
        %v3541 = vadd.f32 %v3365, %v3469
        %v3542 = vadd.f32 %v3366, %v3470
        %v3543 = vadd.f32 %v3367, %v3471
        %v3544 = vadd.f32 %v3368, %v3472
        %v3545 = vadd.f32 %v3369, %v3473
        %v3546 = vadd.f32 %v3370, %v3474
        %v3547 = vadd.f32 %v3371, %v3475
        %v3548 = vadd.f32 %v3372, %v3476
        %v3549 = vadd.f32 %v3373, %v3477
        %v3550 = vadd.f32 %v3374, %v3478
        %v3551 = vadd.f32 %v3375, %v3479
        %v3552 = vadd.f32 %v3376, %v3480
        %v3553 = vadd.f32 %v3377, %v3481
        %v3554 = vadd.f32 %v3378, %v3482
        %v3555 = vadd.f32 %v3379, %v3483
        %v3556 = vadd.f32 %v3380, %v3484
        %v3557 = vadd.f32 %v3381, %v3485
        %v3558 = vadd.f32 %v3382, %v3486
        %v3559 = vadd.f32 %v3383, %v3487
        %v3560 = vadd.f32 %v3384, %v3488
        %v3561 = vadd.f32 %v3385, %v3489
        %v3562 = vadd.f32 %v3386, %v3490
        %v3563 = vadd.f32 %v3387, %v3491
        %v3564 = vadd.f32 %v3388, %v3492
        %v3565 = vadd.f32 %v3389, %v3493
        %v3566 = vadd.f32 %v3390, %v3494
        %v3567 = vadd.f32 %v3391, %v3495
        %v3568 = vadd.f32 %v3392, %v3496
        %v3569 = vadd.f32 %v3393, %v3497
        %v3570 = vadd.f32 %v3394, %v3498
        %v3571 = vadd.f32 %v3395, %v3499
        %v3572 = vadd.f32 %v3396, %v3500
        %v3573 = vadd.f32 %v3397, %v3501
        %v3574 = vadd.f32 %v3398, %v3502
        %v3575 = vadd.f32 %v3399, %v3503
        %v3576 = vadd.f32 %v3400, %v3504
        %v3577 = vadd.f32 %v3401, %v3505
        %v3578 = vadd.f32 %v3402, %v3506
        %v3579 = vadd.f32 %v3403, %v3507
        %v3580 = vadd.f32 %v3404, %v3508
        %v3581 = vadd.f32 %v3405, %v3509
        %v3582 = vadd.f32 %v3406, %v3510
        %v3583 = vadd.f32 %v3407, %v3511
        %v3584 = vadd.f32 %v3408, %v3512
        %v3585 = vadd.f32 %v3409, %v3513
        %v3586 = vadd.f32 %v3410, %v3514
        %v3587 = vadd.f32 %v3411, %v3515
        %v3588 = vadd.f32 %v3412, %v3516
        %v3589 = vadd.f32 %v3413, %v3517
        %v3590 = vadd.f32 %v3414, %v3518
        %v3591 = vadd.f32 %v3415, %v3519
        %v3592 = vadd.f32 %v3416, %v3520
        %v3593 = vadd.f32 %v3417, %v3521
        %v3594 = vadd.f32 %v3418, %v3522
        %v3595 = vadd.f32 %v3419, %v3523
        %v3596 = vadd.f32 %v3420, %v3524
        %v3597 = vadd.f32 %v3421, %v3525
        %v3598 = vadd.f32 %v3422, %v3526
        %v3599 = vadd.f32 %v3423, %v3527
        %v3600 = vadd.f32 %v3424, %v3528
        %v3601 = vadd.f32 %v3425, %v3529
        %v3602 = vadd.f32 %v3426, %v3530
        %v3603 = vadd.f32 %v3427, %v3531
        %v3604 = vadd.f32 %v3428, %v3532
        %v3605 = vadd.f32 %v3429, %v3533
        %v3606 = vadd.f32 %v3430, %v3534
        %3679 = vrot.lane.b32.xlu0 %v3535, 28
        %v3680 = vpop.permute.xlu0 %3679
        %3681 = vrot.lane.b32.xlu0 %v3536, 28
        %v3682 = vpop.permute.xlu0 %3681
        %3683 = vrot.lane.b32.xlu0 %v3537, 28
        %v3684 = vpop.permute.xlu0 %3683
        %3685 = vrot.lane.b32.xlu0 %v3538, 28
        %v3686 = vpop.permute.xlu0 %3685
        %3687 = vrot.lane.b32.xlu0 %v3539, 28
        %v3688 = vpop.permute.xlu0 %3687
        %3689 = vrot.lane.b32.xlu0 %v3540, 28
        %v3690 = vpop.permute.xlu0 %3689
        %3691 = vrot.lane.b32.xlu0 %v3541, 28
        %v3692 = vpop.permute.xlu0 %3691
        %3693 = vrot.lane.b32.xlu0 %v3542, 28
        %v3694 = vpop.permute.xlu0 %3693
        %3695 = vrot.lane.b32.xlu0 %v3543, 28
        %v3696 = vpop.permute.xlu0 %3695
        %3697 = vrot.lane.b32.xlu0 %v3544, 28
        %v3698 = vpop.permute.xlu0 %3697
        %3699 = vrot.lane.b32.xlu0 %v3545, 28
        %v3700 = vpop.permute.xlu0 %3699
        %3701 = vrot.lane.b32.xlu0 %v3546, 28
        %v3702 = vpop.permute.xlu0 %3701
        %3703 = vrot.lane.b32.xlu0 %v3547, 28
        %v3704 = vpop.permute.xlu0 %3703
        %3705 = vrot.lane.b32.xlu0 %v3548, 28
        %v3706 = vpop.permute.xlu0 %3705
        %3707 = vrot.lane.b32.xlu0 %v3549, 28
        %v3708 = vpop.permute.xlu0 %3707
        %3709 = vrot.lane.b32.xlu0 %v3550, 28
        %v3710 = vpop.permute.xlu0 %3709
        %3711 = vrot.lane.b32.xlu0 %v3551, 28
        %v3712 = vpop.permute.xlu0 %3711
        %3713 = vrot.lane.b32.xlu0 %v3552, 28
        %v3714 = vpop.permute.xlu0 %3713
        %3715 = vrot.lane.b32.xlu0 %v3553, 28
        %v3716 = vpop.permute.xlu0 %3715
        %3717 = vrot.lane.b32.xlu0 %v3554, 28
        %v3718 = vpop.permute.xlu0 %3717
        %3719 = vrot.lane.b32.xlu0 %v3555, 28
        %v3720 = vpop.permute.xlu0 %3719
        %3721 = vrot.lane.b32.xlu0 %v3556, 28
        %v3722 = vpop.permute.xlu0 %3721
        %3723 = vrot.lane.b32.xlu0 %v3557, 28
        %v3724 = vpop.permute.xlu0 %3723
        %3725 = vrot.lane.b32.xlu0 %v3558, 28
        %v3726 = vpop.permute.xlu0 %3725
        %3727 = vrot.lane.b32.xlu0 %v3559, 28
        %v3728 = vpop.permute.xlu0 %3727
        %3729 = vrot.lane.b32.xlu0 %v3560, 28
        %v3730 = vpop.permute.xlu0 %3729
        %3731 = vrot.lane.b32.xlu0 %v3561, 28
        %v3732 = vpop.permute.xlu0 %3731
        %3733 = vrot.lane.b32.xlu0 %v3562, 28
        %v3734 = vpop.permute.xlu0 %3733
        %3735 = vrot.lane.b32.xlu0 %v3563, 28
        %v3736 = vpop.permute.xlu0 %3735
        %3737 = vrot.lane.b32.xlu0 %v3564, 28
        %v3738 = vpop.permute.xlu0 %3737
        %3739 = vrot.lane.b32.xlu0 %v3565, 28
        %v3740 = vpop.permute.xlu0 %3739
        %3741 = vrot.lane.b32.xlu0 %v3566, 28
        %v3742 = vpop.permute.xlu0 %3741
        %3743 = vrot.lane.b32.xlu0 %v3567, 28
        %v3744 = vpop.permute.xlu0 %3743
        %3745 = vrot.lane.b32.xlu0 %v3568, 28
        %v3746 = vpop.permute.xlu0 %3745
        %3747 = vrot.lane.b32.xlu0 %v3569, 28
        %v3748 = vpop.permute.xlu0 %3747
        %3749 = vrot.lane.b32.xlu0 %v3570, 28
        %v3750 = vpop.permute.xlu0 %3749
        %3751 = vrot.lane.b32.xlu0 %v3571, 28
        %v3752 = vpop.permute.xlu0 %3751
        %3753 = vrot.lane.b32.xlu0 %v3572, 28
        %v3754 = vpop.permute.xlu0 %3753
        %3755 = vrot.lane.b32.xlu0 %v3573, 28
        %v3756 = vpop.permute.xlu0 %3755
        %3757 = vrot.lane.b32.xlu0 %v3574, 28
        %v3758 = vpop.permute.xlu0 %3757
        %3759 = vrot.lane.b32.xlu0 %v3575, 28
        %v3760 = vpop.permute.xlu0 %3759
        %3761 = vrot.lane.b32.xlu0 %v3576, 28
        %v3762 = vpop.permute.xlu0 %3761
        %3763 = vrot.lane.b32.xlu0 %v3577, 28
        %v3764 = vpop.permute.xlu0 %3763
        %3765 = vrot.lane.b32.xlu0 %v3578, 28
        %v3766 = vpop.permute.xlu0 %3765
        %3767 = vrot.lane.b32.xlu0 %v3579, 28
        %v3768 = vpop.permute.xlu0 %3767
        %3769 = vrot.lane.b32.xlu0 %v3580, 28
        %v3770 = vpop.permute.xlu0 %3769
        %3771 = vrot.lane.b32.xlu0 %v3581, 28
        %v3772 = vpop.permute.xlu0 %3771
        %3773 = vrot.lane.b32.xlu0 %v3582, 28
        %v3774 = vpop.permute.xlu0 %3773
        %3775 = vrot.lane.b32.xlu0 %v3583, 28
        %v3776 = vpop.permute.xlu0 %3775
        %3777 = vrot.lane.b32.xlu0 %v3584, 28
        %v3778 = vpop.permute.xlu0 %3777
        %3779 = vrot.lane.b32.xlu0 %v3585, 28
        %v3780 = vpop.permute.xlu0 %3779
        %3781 = vrot.lane.b32.xlu0 %v3586, 28
        %v3782 = vpop.permute.xlu0 %3781
        %3783 = vrot.lane.b32.xlu0 %v3587, 28
        %v3784 = vpop.permute.xlu0 %3783
        %3785 = vrot.lane.b32.xlu0 %v3588, 28
        %v3786 = vpop.permute.xlu0 %3785
        %3787 = vrot.lane.b32.xlu0 %v3589, 28
        %v3788 = vpop.permute.xlu0 %3787
        %3789 = vrot.lane.b32.xlu0 %v3590, 28
        %v3790 = vpop.permute.xlu0 %3789
        %3791 = vrot.lane.b32.xlu0 %v3591, 28
        %v3792 = vpop.permute.xlu0 %3791
        %3793 = vrot.lane.b32.xlu0 %v3592, 28
        %v3794 = vpop.permute.xlu0 %3793
        %3795 = vrot.lane.b32.xlu0 %v3593, 28
        %v3796 = vpop.permute.xlu0 %3795
        %3797 = vrot.lane.b32.xlu0 %v3594, 28
        %v3798 = vpop.permute.xlu0 %3797
        %3799 = vrot.lane.b32.xlu0 %v3595, 28
        %v3800 = vpop.permute.xlu0 %3799
        %3801 = vrot.lane.b32.xlu0 %v3596, 28
        %v3802 = vpop.permute.xlu0 %3801
        %3803 = vrot.lane.b32.xlu0 %v3597, 28
        %v3804 = vpop.permute.xlu0 %3803
        %3805 = vrot.lane.b32.xlu0 %v3598, 28
        %v3806 = vpop.permute.xlu0 %3805
        %3807 = vrot.lane.b32.xlu0 %v3599, 28
        %v3808 = vpop.permute.xlu0 %3807
        %3809 = vrot.lane.b32.xlu0 %v3600, 28
        %v3810 = vpop.permute.xlu0 %3809
        %3811 = vrot.lane.b32.xlu0 %v3601, 28
        %v3812 = vpop.permute.xlu0 %3811
        %3813 = vrot.lane.b32.xlu0 %v3602, 28
        %v3814 = vpop.permute.xlu0 %3813
        %3815 = vrot.lane.b32.xlu0 %v3603, 28
        %v3816 = vpop.permute.xlu0 %3815
        %3817 = vrot.lane.b32.xlu0 %v3604, 28
        %v3818 = vpop.permute.xlu0 %3817
        %3819 = vrot.lane.b32.xlu0 %v3605, 28
        %v3820 = vpop.permute.xlu0 %3819
        %3821 = vrot.lane.b32.xlu0 %v3606, 28
        %v3822 = vpop.permute.xlu0 %3821
        %vm3823 = vcmask 228352
        %v3824 = vsel %vm3823, %v3680, %v3682
        %v3825 = vsel %vm3823, %v3682, %v3684
        %v3826 = vsel %vm3823, %v3684, %v3686
        %v3827 = vsel %vm3823, %v3686, %v3688
        %v3828 = vsel %vm3823, %v3688, %v3690
        %v3829 = vsel %vm3823, %v3690, %v3692
        %v3830 = vsel %vm3823, %v3692, %v3694
        %v3831 = vsel %vm3823, %v3694, %v3696
        %v3832 = vsel %vm3823, %v3698, %v3700
        %v3833 = vsel %vm3823, %v3700, %v3702
        %v3834 = vsel %vm3823, %v3702, %v3704
        %v3835 = vsel %vm3823, %v3704, %v3706
        %v3836 = vsel %vm3823, %v3706, %v3708
        %v3837 = vsel %vm3823, %v3708, %v3710
        %v3838 = vsel %vm3823, %v3710, %v3712
        %v3839 = vsel %vm3823, %v3712, %v3714
        %v3840 = vsel %vm3823, %v3716, %v3718
        %v3841 = vsel %vm3823, %v3718, %v3720
        %v3842 = vsel %vm3823, %v3720, %v3722
        %v3843 = vsel %vm3823, %v3722, %v3724
        %v3844 = vsel %vm3823, %v3724, %v3726
        %v3845 = vsel %vm3823, %v3726, %v3728
        %v3846 = vsel %vm3823, %v3728, %v3730
        %v3847 = vsel %vm3823, %v3730, %v3732
        %v3848 = vsel %vm3823, %v3734, %v3736
        %v3849 = vsel %vm3823, %v3736, %v3738
        %v3850 = vsel %vm3823, %v3738, %v3740
        %v3851 = vsel %vm3823, %v3740, %v3742
        %v3852 = vsel %vm3823, %v3742, %v3744
        %v3853 = vsel %vm3823, %v3744, %v3746
        %v3854 = vsel %vm3823, %v3746, %v3748
        %v3855 = vsel %vm3823, %v3748, %v3750
        %v3856 = vsel %vm3823, %v3752, %v3754
        %v3857 = vsel %vm3823, %v3754, %v3756
        %v3858 = vsel %vm3823, %v3756, %v3758
        %v3859 = vsel %vm3823, %v3758, %v3760
        %v3860 = vsel %vm3823, %v3760, %v3762
        %v3861 = vsel %vm3823, %v3762, %v3764
        %v3862 = vsel %vm3823, %v3764, %v3766
        %v3863 = vsel %vm3823, %v3766, %v3768
        %v3864 = vsel %vm3823, %v3770, %v3772
        %v3865 = vsel %vm3823, %v3772, %v3774
        %v3866 = vsel %vm3823, %v3774, %v3776
        %v3867 = vsel %vm3823, %v3776, %v3778
        %v3868 = vsel %vm3823, %v3778, %v3780
        %v3869 = vsel %vm3823, %v3780, %v3782
        %v3870 = vsel %vm3823, %v3782, %v3784
        %v3871 = vsel %vm3823, %v3784, %v3786
        %v3872 = vsel %vm3823, %v3788, %v3790
        %v3873 = vsel %vm3823, %v3790, %v3792
        %v3874 = vsel %vm3823, %v3792, %v3794
        %v3875 = vsel %vm3823, %v3794, %v3796
        %v3876 = vsel %vm3823, %v3796, %v3798
        %v3877 = vsel %vm3823, %v3798, %v3800
        %v3878 = vsel %vm3823, %v3800, %v3802
        %v3879 = vsel %vm3823, %v3802, %v3804
        %v3880 = vsel %vm3823, %v3806, %v3808
        %v3881 = vsel %vm3823, %v3808, %v3810
        %v3882 = vsel %vm3823, %v3810, %v3812
        %v3883 = vsel %vm3823, %v3812, %v3814
        %v3884 = vsel %vm3823, %v3814, %v3816
        %v3885 = vsel %vm3823, %v3816, %v3818
        %v3886 = vsel %vm3823, %v3818, %v3820
        %v3887 = vsel %vm3823, %v3820, %v3822
        %v3960 = vadd.f32 %v3054, %v3824
        %v3961 = vadd.f32 %v3055, %v3825
        %v3962 = vadd.f32 %v3056, %v3826
        %v3963 = vadd.f32 %v3057, %v3827
        %v3964 = vadd.f32 %v3058, %v3828
        %v3965 = vadd.f32 %v3059, %v3829
        %v3966 = vadd.f32 %v3060, %v3830
        %v3967 = vadd.f32 %v3061, %v3831
        %v3968 = vadd.f32 %v3062, %v3696
        %v3969 = vadd.f32 %v3063, %v3832
        %v3970 = vadd.f32 %v3064, %v3833
        %v3971 = vadd.f32 %v3065, %v3834
        %v3972 = vadd.f32 %v3066, %v3835
        %v3973 = vadd.f32 %v3067, %v3836
        %v3974 = vadd.f32 %v3068, %v3837
        %v3975 = vadd.f32 %v3069, %v3838
        %v3976 = vadd.f32 %v3070, %v3839
        %v3977 = vadd.f32 %v3071, %v3714
        %v3978 = vadd.f32 %v3072, %v3840
        %v3979 = vadd.f32 %v3073, %v3841
        %v3980 = vadd.f32 %v3074, %v3842
        %v3981 = vadd.f32 %v3075, %v3843
        %v3982 = vadd.f32 %v3076, %v3844
        %v3983 = vadd.f32 %v3077, %v3845
        %v3984 = vadd.f32 %v3078, %v3846
        %v3985 = vadd.f32 %v3079, %v3847
        %v3986 = vadd.f32 %v3080, %v3732
        %v3987 = vadd.f32 %v3081, %v3848
        %v3988 = vadd.f32 %v3082, %v3849
        %v3989 = vadd.f32 %v3083, %v3850
        %v3990 = vadd.f32 %v3084, %v3851
        %v3991 = vadd.f32 %v3085, %v3852
        %v3992 = vadd.f32 %v3086, %v3853
        %v3993 = vadd.f32 %v3087, %v3854
        %v3994 = vadd.f32 %v3088, %v3855
        %v3995 = vadd.f32 %v3089, %v3750
        %v3996 = vadd.f32 %v3090, %v3856
        %v3997 = vadd.f32 %v3091, %v3857
        %v3998 = vadd.f32 %v3092, %v3858
        %v3999 = vadd.f32 %v3093, %v3859
        %v4000 = vadd.f32 %v3094, %v3860
        %v4001 = vadd.f32 %v3095, %v3861
        %v4002 = vadd.f32 %v3096, %v3862
        %v4003 = vadd.f32 %v3097, %v3863
        %v4004 = vadd.f32 %v3098, %v3768
        %v4005 = vadd.f32 %v3099, %v3864
        %v4006 = vadd.f32 %v3100, %v3865
        %v4007 = vadd.f32 %v3101, %v3866
        %v4008 = vadd.f32 %v3102, %v3867
        %v4009 = vadd.f32 %v3103, %v3868
        %v4010 = vadd.f32 %v3104, %v3869
        %v4011 = vadd.f32 %v3105, %v3870
        %v4012 = vadd.f32 %v3106, %v3871
        %v4013 = vadd.f32 %v3107, %v3786
        %v4014 = vadd.f32 %v3108, %v3872
        %v4015 = vadd.f32 %v3109, %v3873
        %v4016 = vadd.f32 %v3110, %v3874
        %v4017 = vadd.f32 %v3111, %v3875
        %v4018 = vadd.f32 %v3112, %v3876
        %v4019 = vadd.f32 %v3113, %v3877
        %v4020 = vadd.f32 %v3114, %v3878
        %v4021 = vadd.f32 %v3115, %v3879
        %v4022 = vadd.f32 %v3116, %v3804
        %v4023 = vadd.f32 %v3117, %v3880
        %v4024 = vadd.f32 %v3118, %v3881
        %v4025 = vadd.f32 %v3119, %v3882
        %v4026 = vadd.f32 %v3120, %v3883
        %v4027 = vadd.f32 %v3121, %v3884
        %v4028 = vadd.f32 %v3122, %v3885
        %v4029 = vadd.f32 %v3123, %v3886
        %v4030 = vadd.f32 %v3124, %v3887
        %v4031 = vadd.f32 %v3125, %v3822
        %v4032 = vld [vmem:[#allocation2 + $0x2] sm:$0xff]
        %v4033 = vld [vmem:[#allocation2 + $0xa] sm:$0xff]
        %s4034 = scalar_lea.vmem %s2, 128
        %v4035 = vld [vmem:[%s4034] sm:$0xf]
        %v4036 = vld [vmem:[%s4034 + $0x4] sm:$0xf]
        %v4037 = vld [vmem:[%s4034 + $0x8] sm:$0xf]
        %v4038 = vld [vmem:[%s4034 + $0xc] sm:$0xf]
        %v4039 = vld [vmem:[%s4034 + $0x10] sm:$0xf]
        %v4040 = vld [vmem:[%s4034 + $0x14] sm:$0xf]
        %v4041 = vld [vmem:[%s4034 + $0x18] sm:$0xf]
        %v4042 = vld [vmem:[%s4034 + $0x1c] sm:$0xf]
        %v4043 = vunpack.c.l.bf16 %v4035
        %v4044 = vunpack.c.l.bf16 %v4036
        %v4045 = vunpack.c.l.bf16 %v4037
        %v4046 = vunpack.c.l.bf16 %v4038
        %v4047 = vunpack.c.l.bf16 %v4039
        %v4048 = vunpack.c.l.bf16 %v4040
        %v4049 = vunpack.c.l.bf16 %v4041
        %v4050 = vunpack.c.l.bf16 %v4042
        %v4051 = vunpack.c.l.bf16 %v4032
        %v4052 = vunpack.c.h.bf16 %v4032
        %v4053 = vunpack.c.l.bf16 %v4033
        %v4054 = vunpack.c.h.bf16 %v4033
        %4056 = vset.pattern.permute.xlu0 0
        %4057 = vperm.xlu0 %4056, %v4043
        %v4058 = vpop.permute.xlu0 %4057
        %4061 = vset.pattern.permute.xlu0 0
        %4062 = vperm.xlu0 %4061, %v4044
        %v4063 = vpop.permute.xlu0 %4062
        %4066 = vset.pattern.permute.xlu0 0
        %4067 = vperm.xlu0 %4066, %v4045
        %v4068 = vpop.permute.xlu0 %4067
        %4071 = vset.pattern.permute.xlu0 0
        %4072 = vperm.xlu0 %4071, %v4046
        %v4073 = vpop.permute.xlu0 %4072
        %4076 = vset.pattern.permute.xlu0 0
        %4077 = vperm.xlu0 %4076, %v4047
        %v4078 = vpop.permute.xlu0 %4077
        %4081 = vset.pattern.permute.xlu0 0
        %4082 = vperm.xlu0 %4081, %v4048
        %v4083 = vpop.permute.xlu0 %4082
        %4086 = vset.pattern.permute.xlu0 0
        %4087 = vperm.xlu0 %4086, %v4049
        %v4088 = vpop.permute.xlu0 %4087
        %4091 = vset.pattern.permute.xlu0 0
        %4092 = vperm.xlu0 %4091, %v4050
        %v4093 = vpop.permute.xlu0 %4092
        %v4099 = vlaneseq
        %v4100 = vshrl.u32 %v4099, 7
        %v4101 = vsub.s32 0, %v4100
        %v4102 = vrot.slane %v4051, %v4101
        %v4103 = vlaneseq
        %v4104 = vshrl.u32 %v4103, 7
        %v4105 = vsub.s32 4, %v4104
        %v4106 = vrot.slane %v4051, %v4105
        %v4107 = vlaneseq
        %v4108 = vshrl.u32 %v4107, 7
        %v4109 = vsub.s32 0, %v4108
        %v4110 = vrot.slane %v4052, %v4109
        %v4111 = vlaneseq
        %v4112 = vshrl.u32 %v4111, 7
        %v4113 = vsub.s32 4, %v4112
        %v4114 = vrot.slane %v4052, %v4113
        %v4115 = vlaneseq
        %v4116 = vshrl.u32 %v4115, 7
        %v4117 = vsub.s32 0, %v4116
        %v4118 = vrot.slane %v4053, %v4117
        %v4119 = vlaneseq
        %v4120 = vshrl.u32 %v4119, 7
        %v4121 = vsub.s32 4, %v4120
        %v4122 = vrot.slane %v4053, %v4121
        %v4123 = vlaneseq
        %v4124 = vshrl.u32 %v4123, 7
        %v4125 = vsub.s32 0, %v4124
        %v4126 = vrot.slane %v4054, %v4125
        %v4127 = vlaneseq
        %v4128 = vshrl.u32 %v4127, 7
        %v4129 = vsub.s32 4, %v4128
        %v4130 = vrot.slane %v4054, %v4129
        %v4139 = vlaneseq
        %v4140 = vshrl.u32 %v4139, 7
        %v4141 = vsub.s32 0, %v4140
        %v4142 = vrot.slane %v4102, %v4141
        %v4143 = vlaneseq
        %v4144 = vshrl.u32 %v4143, 7
        %v4145 = vsub.s32 0, %v4144
        %v4146 = vrot.slane %v4106, %v4145
        %v4147 = vlaneseq
        %v4148 = vshrl.u32 %v4147, 7
        %v4149 = vsub.s32 0, %v4148
        %v4150 = vrot.slane %v4110, %v4149
        %v4151 = vlaneseq
        %v4152 = vshrl.u32 %v4151, 7
        %v4153 = vsub.s32 0, %v4152
        %v4154 = vrot.slane %v4114, %v4153
        %v4155 = vlaneseq
        %v4156 = vshrl.u32 %v4155, 7
        %v4157 = vsub.s32 0, %v4156
        %v4158 = vrot.slane %v4118, %v4157
        %v4159 = vlaneseq
        %v4160 = vshrl.u32 %v4159, 7
        %v4161 = vsub.s32 0, %v4160
        %v4162 = vrot.slane %v4122, %v4161
        %v4163 = vlaneseq
        %v4164 = vshrl.u32 %v4163, 7
        %v4165 = vsub.s32 0, %v4164
        %v4166 = vrot.slane %v4126, %v4165
        %v4167 = vlaneseq
        %v4168 = vshrl.u32 %v4167, 7
        %v4169 = vsub.s32 0, %v4168
        %v4170 = vrot.slane %v4130, %v4169
        %v4171 = vmul.f32 %v4058, %v4142
        %v4172 = vmul.f32 %v4058, %v4146
        %v4173 = vmul.f32 %v4058, %v4150
        %v4174 = vmul.f32 %v4058, %v4154
        %v4175 = vmul.f32 %v4058, %v4158
        %v4176 = vmul.f32 %v4058, %v4162
        %v4177 = vmul.f32 %v4058, %v4166
        %v4178 = vmul.f32 %v4058, %v4170
        %v4179 = vmul.f32 %v4063, %v4142
        %v4180 = vmul.f32 %v4063, %v4146
        %v4181 = vmul.f32 %v4063, %v4150
        %v4182 = vmul.f32 %v4063, %v4154
        %v4183 = vmul.f32 %v4063, %v4158
        %v4184 = vmul.f32 %v4063, %v4162
        %v4185 = vmul.f32 %v4063, %v4166
        %v4186 = vmul.f32 %v4063, %v4170
        %v4187 = vmul.f32 %v4068, %v4142
        %v4188 = vmul.f32 %v4068, %v4146
        %v4189 = vmul.f32 %v4068, %v4150
        %v4190 = vmul.f32 %v4068, %v4154
        %v4191 = vmul.f32 %v4068, %v4158
        %v4192 = vmul.f32 %v4068, %v4162
        %v4193 = vmul.f32 %v4068, %v4166
        %v4194 = vmul.f32 %v4068, %v4170
        %v4195 = vmul.f32 %v4073, %v4142
        %v4196 = vmul.f32 %v4073, %v4146
        %v4197 = vmul.f32 %v4073, %v4150
        %v4198 = vmul.f32 %v4073, %v4154
        %v4199 = vmul.f32 %v4073, %v4158
        %v4200 = vmul.f32 %v4073, %v4162
        %v4201 = vmul.f32 %v4073, %v4166
        %v4202 = vmul.f32 %v4073, %v4170
        %v4203 = vmul.f32 %v4078, %v4142
        %v4204 = vmul.f32 %v4078, %v4146
        %v4205 = vmul.f32 %v4078, %v4150
        %v4206 = vmul.f32 %v4078, %v4154
        %v4207 = vmul.f32 %v4078, %v4158
        %v4208 = vmul.f32 %v4078, %v4162
        %v4209 = vmul.f32 %v4078, %v4166
        %v4210 = vmul.f32 %v4078, %v4170
        %v4211 = vmul.f32 %v4083, %v4142
        %v4212 = vmul.f32 %v4083, %v4146
        %v4213 = vmul.f32 %v4083, %v4150
        %v4214 = vmul.f32 %v4083, %v4154
        %v4215 = vmul.f32 %v4083, %v4158
        %v4216 = vmul.f32 %v4083, %v4162
        %v4217 = vmul.f32 %v4083, %v4166
        %v4218 = vmul.f32 %v4083, %v4170
        %v4219 = vmul.f32 %v4088, %v4142
        %v4220 = vmul.f32 %v4088, %v4146
        %v4221 = vmul.f32 %v4088, %v4150
        %v4222 = vmul.f32 %v4088, %v4154
        %v4223 = vmul.f32 %v4088, %v4158
        %v4224 = vmul.f32 %v4088, %v4162
        %v4225 = vmul.f32 %v4088, %v4166
        %v4226 = vmul.f32 %v4088, %v4170
        %v4227 = vmul.f32 %v4093, %v4142
        %v4228 = vmul.f32 %v4093, %v4146
        %v4229 = vmul.f32 %v4093, %v4150
        %v4230 = vmul.f32 %v4093, %v4154
        %v4231 = vmul.f32 %v4093, %v4158
        %v4232 = vmul.f32 %v4093, %v4162
        %v4233 = vmul.f32 %v4093, %v4166
        %v4234 = vmul.f32 %v4093, %v4170
        %4235 = vset.pattern.permute.xlu0 1
        %4236 = vperm.xlu0 %4235, %v4043
        %v4237 = vpop.permute.xlu0 %4236
        %4239 = vset.pattern.permute.xlu0 1
        %4240 = vperm.xlu0 %4239, %v4044
        %v4241 = vpop.permute.xlu0 %4240
        %4243 = vset.pattern.permute.xlu0 1
        %4244 = vperm.xlu0 %4243, %v4045
        %v4245 = vpop.permute.xlu0 %4244
        %4247 = vset.pattern.permute.xlu0 1
        %4248 = vperm.xlu0 %4247, %v4046
        %v4249 = vpop.permute.xlu0 %4248
        %4251 = vset.pattern.permute.xlu0 1
        %4252 = vperm.xlu0 %4251, %v4047
        %v4253 = vpop.permute.xlu0 %4252
        %4255 = vset.pattern.permute.xlu0 1
        %4256 = vperm.xlu0 %4255, %v4048
        %v4257 = vpop.permute.xlu0 %4256
        %4259 = vset.pattern.permute.xlu0 1
        %4260 = vperm.xlu0 %4259, %v4049
        %v4261 = vpop.permute.xlu0 %4260
        %4263 = vset.pattern.permute.xlu0 1
        %4264 = vperm.xlu0 %4263, %v4050
        %v4265 = vpop.permute.xlu0 %4264
        %v4267 = vlaneseq
        %v4268 = vshrl.u32 %v4267, 7
        %v4269 = vsub.s32 1, %v4268
        %v4270 = vrot.slane %v4051, %v4269
        %v4271 = vlaneseq
        %v4272 = vshrl.u32 %v4271, 7
        %v4273 = vsub.s32 5, %v4272
        %v4274 = vrot.slane %v4051, %v4273
        %v4275 = vlaneseq
        %v4276 = vshrl.u32 %v4275, 7
        %v4277 = vsub.s32 1, %v4276
        %v4278 = vrot.slane %v4052, %v4277
        %v4279 = vlaneseq
        %v4280 = vshrl.u32 %v4279, 7
        %v4281 = vsub.s32 5, %v4280
        %v4282 = vrot.slane %v4052, %v4281
        %v4283 = vlaneseq
        %v4284 = vshrl.u32 %v4283, 7
        %v4285 = vsub.s32 1, %v4284
        %v4286 = vrot.slane %v4053, %v4285
        %v4287 = vlaneseq
        %v4288 = vshrl.u32 %v4287, 7
        %v4289 = vsub.s32 5, %v4288
        %v4290 = vrot.slane %v4053, %v4289
        %v4291 = vlaneseq
        %v4292 = vshrl.u32 %v4291, 7
        %v4293 = vsub.s32 1, %v4292
        %v4294 = vrot.slane %v4054, %v4293
        %v4295 = vlaneseq
        %v4296 = vshrl.u32 %v4295, 7
        %v4297 = vsub.s32 5, %v4296
        %v4298 = vrot.slane %v4054, %v4297
        %v4307 = vlaneseq
        %v4308 = vshrl.u32 %v4307, 7
        %v4309 = vsub.s32 1, %v4308
        %v4310 = vrot.slane %v4270, %v4309
        %v4311 = vlaneseq
        %v4312 = vshrl.u32 %v4311, 7
        %v4313 = vsub.s32 1, %v4312
        %v4314 = vrot.slane %v4274, %v4313
        %v4315 = vlaneseq
        %v4316 = vshrl.u32 %v4315, 7
        %v4317 = vsub.s32 1, %v4316
        %v4318 = vrot.slane %v4278, %v4317
        %v4319 = vlaneseq
        %v4320 = vshrl.u32 %v4319, 7
        %v4321 = vsub.s32 1, %v4320
        %v4322 = vrot.slane %v4282, %v4321
        %v4323 = vlaneseq
        %v4324 = vshrl.u32 %v4323, 7
        %v4325 = vsub.s32 1, %v4324
        %v4326 = vrot.slane %v4286, %v4325
        %v4327 = vlaneseq
        %v4328 = vshrl.u32 %v4327, 7
        %v4329 = vsub.s32 1, %v4328
        %v4330 = vrot.slane %v4290, %v4329
        %v4331 = vlaneseq
        %v4332 = vshrl.u32 %v4331, 7
        %v4333 = vsub.s32 1, %v4332
        %v4334 = vrot.slane %v4294, %v4333
        %v4335 = vlaneseq
        %v4336 = vshrl.u32 %v4335, 7
        %v4337 = vsub.s32 1, %v4336
        %v4338 = vrot.slane %v4298, %v4337
        %v4339 = vmul.f32 %v4237, %v4310
        %v4340 = vmul.f32 %v4237, %v4314
        %v4341 = vmul.f32 %v4237, %v4318
        %v4342 = vmul.f32 %v4237, %v4322
        %v4343 = vmul.f32 %v4237, %v4326
        %v4344 = vmul.f32 %v4237, %v4330
        %v4345 = vmul.f32 %v4237, %v4334
        %v4346 = vmul.f32 %v4237, %v4338
        %v4347 = vmul.f32 %v4241, %v4310
        %v4348 = vmul.f32 %v4241, %v4314
        %v4349 = vmul.f32 %v4241, %v4318
        %v4350 = vmul.f32 %v4241, %v4322
        %v4351 = vmul.f32 %v4241, %v4326
        %v4352 = vmul.f32 %v4241, %v4330
        %v4353 = vmul.f32 %v4241, %v4334
        %v4354 = vmul.f32 %v4241, %v4338
        %v4355 = vmul.f32 %v4245, %v4310
        %v4356 = vmul.f32 %v4245, %v4314
        %v4357 = vmul.f32 %v4245, %v4318
        %v4358 = vmul.f32 %v4245, %v4322
        %v4359 = vmul.f32 %v4245, %v4326
        %v4360 = vmul.f32 %v4245, %v4330
        %v4361 = vmul.f32 %v4245, %v4334
        %v4362 = vmul.f32 %v4245, %v4338
        %v4363 = vmul.f32 %v4249, %v4310
        %v4364 = vmul.f32 %v4249, %v4314
        %v4365 = vmul.f32 %v4249, %v4318
        %v4366 = vmul.f32 %v4249, %v4322
        %v4367 = vmul.f32 %v4249, %v4326
        %v4368 = vmul.f32 %v4249, %v4330
        %v4369 = vmul.f32 %v4249, %v4334
        %v4370 = vmul.f32 %v4249, %v4338
        %v4371 = vmul.f32 %v4253, %v4310
        %v4372 = vmul.f32 %v4253, %v4314
        %v4373 = vmul.f32 %v4253, %v4318
        %v4374 = vmul.f32 %v4253, %v4322
        %v4375 = vmul.f32 %v4253, %v4326
        %v4376 = vmul.f32 %v4253, %v4330
        %v4377 = vmul.f32 %v4253, %v4334
        %v4378 = vmul.f32 %v4253, %v4338
        %v4379 = vmul.f32 %v4257, %v4310
        %v4380 = vmul.f32 %v4257, %v4314
        %v4381 = vmul.f32 %v4257, %v4318
        %v4382 = vmul.f32 %v4257, %v4322
        %v4383 = vmul.f32 %v4257, %v4326
        %v4384 = vmul.f32 %v4257, %v4330
        %v4385 = vmul.f32 %v4257, %v4334
        %v4386 = vmul.f32 %v4257, %v4338
        %v4387 = vmul.f32 %v4261, %v4310
        %v4388 = vmul.f32 %v4261, %v4314
        %v4389 = vmul.f32 %v4261, %v4318
        %v4390 = vmul.f32 %v4261, %v4322
        %v4391 = vmul.f32 %v4261, %v4326
        %v4392 = vmul.f32 %v4261, %v4330
        %v4393 = vmul.f32 %v4261, %v4334
        %v4394 = vmul.f32 %v4261, %v4338
        %v4395 = vmul.f32 %v4265, %v4310
        %v4396 = vmul.f32 %v4265, %v4314
        %v4397 = vmul.f32 %v4265, %v4318
        %v4398 = vmul.f32 %v4265, %v4322
        %v4399 = vmul.f32 %v4265, %v4326
        %v4400 = vmul.f32 %v4265, %v4330
        %v4401 = vmul.f32 %v4265, %v4334
        %v4402 = vmul.f32 %v4265, %v4338
        %v4403 = vadd.f32 %v4171, %v4339
        %v4404 = vadd.f32 %v4172, %v4340
        %v4405 = vadd.f32 %v4173, %v4341
        %v4406 = vadd.f32 %v4174, %v4342
        %v4407 = vadd.f32 %v4175, %v4343
        %v4408 = vadd.f32 %v4176, %v4344
        %v4409 = vadd.f32 %v4177, %v4345
        %v4410 = vadd.f32 %v4178, %v4346
        %v4411 = vadd.f32 %v4179, %v4347
        %v4412 = vadd.f32 %v4180, %v4348
        %v4413 = vadd.f32 %v4181, %v4349
        %v4414 = vadd.f32 %v4182, %v4350
        %v4415 = vadd.f32 %v4183, %v4351
        %v4416 = vadd.f32 %v4184, %v4352
        %v4417 = vadd.f32 %v4185, %v4353
        %v4418 = vadd.f32 %v4186, %v4354
        %v4419 = vadd.f32 %v4187, %v4355
        %v4420 = vadd.f32 %v4188, %v4356
        %v4421 = vadd.f32 %v4189, %v4357
        %v4422 = vadd.f32 %v4190, %v4358
        %v4423 = vadd.f32 %v4191, %v4359
        %v4424 = vadd.f32 %v4192, %v4360
        %v4425 = vadd.f32 %v4193, %v4361
        %v4426 = vadd.f32 %v4194, %v4362
        %v4427 = vadd.f32 %v4195, %v4363
        %v4428 = vadd.f32 %v4196, %v4364
        %v4429 = vadd.f32 %v4197, %v4365
        %v4430 = vadd.f32 %v4198, %v4366
        %v4431 = vadd.f32 %v4199, %v4367
        %v4432 = vadd.f32 %v4200, %v4368
        %v4433 = vadd.f32 %v4201, %v4369
        %v4434 = vadd.f32 %v4202, %v4370
        %v4435 = vadd.f32 %v4203, %v4371
        %v4436 = vadd.f32 %v4204, %v4372
        %v4437 = vadd.f32 %v4205, %v4373
        %v4438 = vadd.f32 %v4206, %v4374
        %v4439 = vadd.f32 %v4207, %v4375
        %v4440 = vadd.f32 %v4208, %v4376
        %v4441 = vadd.f32 %v4209, %v4377
        %v4442 = vadd.f32 %v4210, %v4378
        %v4443 = vadd.f32 %v4211, %v4379
        %v4444 = vadd.f32 %v4212, %v4380
        %v4445 = vadd.f32 %v4213, %v4381
        %v4446 = vadd.f32 %v4214, %v4382
        %v4447 = vadd.f32 %v4215, %v4383
        %v4448 = vadd.f32 %v4216, %v4384
        %v4449 = vadd.f32 %v4217, %v4385
        %v4450 = vadd.f32 %v4218, %v4386
        %v4451 = vadd.f32 %v4219, %v4387
        %v4452 = vadd.f32 %v4220, %v4388
        %v4453 = vadd.f32 %v4221, %v4389
        %v4454 = vadd.f32 %v4222, %v4390
        %v4455 = vadd.f32 %v4223, %v4391
        %v4456 = vadd.f32 %v4224, %v4392
        %v4457 = vadd.f32 %v4225, %v4393
        %v4458 = vadd.f32 %v4226, %v4394
        %v4459 = vadd.f32 %v4227, %v4395
        %v4460 = vadd.f32 %v4228, %v4396
        %v4461 = vadd.f32 %v4229, %v4397
        %v4462 = vadd.f32 %v4230, %v4398
        %v4463 = vadd.f32 %v4231, %v4399
        %v4464 = vadd.f32 %v4232, %v4400
        %v4465 = vadd.f32 %v4233, %v4401
        %v4466 = vadd.f32 %v4234, %v4402
        %4467 = vset.pattern.permute.xlu0 2
        %4468 = vperm.xlu0 %4467, %v4043
        %v4469 = vpop.permute.xlu0 %4468
        %4471 = vset.pattern.permute.xlu0 2
        %4472 = vperm.xlu0 %4471, %v4044
        %v4473 = vpop.permute.xlu0 %4472
        %4475 = vset.pattern.permute.xlu0 2
        %4476 = vperm.xlu0 %4475, %v4045
        %v4477 = vpop.permute.xlu0 %4476
        %4479 = vset.pattern.permute.xlu0 2
        %4480 = vperm.xlu0 %4479, %v4046
        %v4481 = vpop.permute.xlu0 %4480
        %4483 = vset.pattern.permute.xlu0 2
        %4484 = vperm.xlu0 %4483, %v4047
        %v4485 = vpop.permute.xlu0 %4484
        %4487 = vset.pattern.permute.xlu0 2
        %4488 = vperm.xlu0 %4487, %v4048
        %v4489 = vpop.permute.xlu0 %4488
        %4491 = vset.pattern.permute.xlu0 2
        %4492 = vperm.xlu0 %4491, %v4049
        %v4493 = vpop.permute.xlu0 %4492
        %4495 = vset.pattern.permute.xlu0 2
        %4496 = vperm.xlu0 %4495, %v4050
        %v4497 = vpop.permute.xlu0 %4496
        %v4499 = vlaneseq
        %v4500 = vshrl.u32 %v4499, 7
        %v4501 = vsub.s32 2, %v4500
        %v4502 = vrot.slane %v4051, %v4501
        %v4503 = vlaneseq
        %v4504 = vshrl.u32 %v4503, 7
        %v4505 = vsub.s32 6, %v4504
        %v4506 = vrot.slane %v4051, %v4505
        %v4507 = vlaneseq
        %v4508 = vshrl.u32 %v4507, 7
        %v4509 = vsub.s32 2, %v4508
        %v4510 = vrot.slane %v4052, %v4509
        %v4511 = vlaneseq
        %v4512 = vshrl.u32 %v4511, 7
        %v4513 = vsub.s32 6, %v4512
        %v4514 = vrot.slane %v4052, %v4513
        %v4515 = vlaneseq
        %v4516 = vshrl.u32 %v4515, 7
        %v4517 = vsub.s32 2, %v4516
        %v4518 = vrot.slane %v4053, %v4517
        %v4519 = vlaneseq
        %v4520 = vshrl.u32 %v4519, 7
        %v4521 = vsub.s32 6, %v4520
        %v4522 = vrot.slane %v4053, %v4521
        %v4523 = vlaneseq
        %v4524 = vshrl.u32 %v4523, 7
        %v4525 = vsub.s32 2, %v4524
        %v4526 = vrot.slane %v4054, %v4525
        %v4527 = vlaneseq
        %v4528 = vshrl.u32 %v4527, 7
        %v4529 = vsub.s32 6, %v4528
        %v4530 = vrot.slane %v4054, %v4529
        %v4539 = vlaneseq
        %v4540 = vshrl.u32 %v4539, 7
        %v4541 = vsub.s32 2, %v4540
        %v4542 = vrot.slane %v4502, %v4541
        %v4543 = vlaneseq
        %v4544 = vshrl.u32 %v4543, 7
        %v4545 = vsub.s32 2, %v4544
        %v4546 = vrot.slane %v4506, %v4545
        %v4547 = vlaneseq
        %v4548 = vshrl.u32 %v4547, 7
        %v4549 = vsub.s32 2, %v4548
        %v4550 = vrot.slane %v4510, %v4549
        %v4551 = vlaneseq
        %v4552 = vshrl.u32 %v4551, 7
        %v4553 = vsub.s32 2, %v4552
        %v4554 = vrot.slane %v4514, %v4553
        %v4555 = vlaneseq
        %v4556 = vshrl.u32 %v4555, 7
        %v4557 = vsub.s32 2, %v4556
        %v4558 = vrot.slane %v4518, %v4557
        %v4559 = vlaneseq
        %v4560 = vshrl.u32 %v4559, 7
        %v4561 = vsub.s32 2, %v4560
        %v4562 = vrot.slane %v4522, %v4561
        %v4563 = vlaneseq
        %v4564 = vshrl.u32 %v4563, 7
        %v4565 = vsub.s32 2, %v4564
        %v4566 = vrot.slane %v4526, %v4565
        %v4567 = vlaneseq
        %v4568 = vshrl.u32 %v4567, 7
        %v4569 = vsub.s32 2, %v4568
        %v4570 = vrot.slane %v4530, %v4569
        %v4571 = vmul.f32 %v4469, %v4542
        %v4572 = vmul.f32 %v4469, %v4546
        %v4573 = vmul.f32 %v4469, %v4550
        %v4574 = vmul.f32 %v4469, %v4554
        %v4575 = vmul.f32 %v4469, %v4558
        %v4576 = vmul.f32 %v4469, %v4562
        %v4577 = vmul.f32 %v4469, %v4566
        %v4578 = vmul.f32 %v4469, %v4570
        %v4579 = vmul.f32 %v4473, %v4542
        %v4580 = vmul.f32 %v4473, %v4546
        %v4581 = vmul.f32 %v4473, %v4550
        %v4582 = vmul.f32 %v4473, %v4554
        %v4583 = vmul.f32 %v4473, %v4558
        %v4584 = vmul.f32 %v4473, %v4562
        %v4585 = vmul.f32 %v4473, %v4566
        %v4586 = vmul.f32 %v4473, %v4570
        %v4587 = vmul.f32 %v4477, %v4542
        %v4588 = vmul.f32 %v4477, %v4546
        %v4589 = vmul.f32 %v4477, %v4550
        %v4590 = vmul.f32 %v4477, %v4554
        %v4591 = vmul.f32 %v4477, %v4558
        %v4592 = vmul.f32 %v4477, %v4562
        %v4593 = vmul.f32 %v4477, %v4566
        %v4594 = vmul.f32 %v4477, %v4570
        %v4595 = vmul.f32 %v4481, %v4542
        %v4596 = vmul.f32 %v4481, %v4546
        %v4597 = vmul.f32 %v4481, %v4550
        %v4598 = vmul.f32 %v4481, %v4554
        %v4599 = vmul.f32 %v4481, %v4558
        %v4600 = vmul.f32 %v4481, %v4562
        %v4601 = vmul.f32 %v4481, %v4566
        %v4602 = vmul.f32 %v4481, %v4570
        %v4603 = vmul.f32 %v4485, %v4542
        %v4604 = vmul.f32 %v4485, %v4546
        %v4605 = vmul.f32 %v4485, %v4550
        %v4606 = vmul.f32 %v4485, %v4554
        %v4607 = vmul.f32 %v4485, %v4558
        %v4608 = vmul.f32 %v4485, %v4562
        %v4609 = vmul.f32 %v4485, %v4566
        %v4610 = vmul.f32 %v4485, %v4570
        %v4611 = vmul.f32 %v4489, %v4542
        %v4612 = vmul.f32 %v4489, %v4546
        %v4613 = vmul.f32 %v4489, %v4550
        %v4614 = vmul.f32 %v4489, %v4554
        %v4615 = vmul.f32 %v4489, %v4558
        %v4616 = vmul.f32 %v4489, %v4562
        %v4617 = vmul.f32 %v4489, %v4566
        %v4618 = vmul.f32 %v4489, %v4570
        %v4619 = vmul.f32 %v4493, %v4542
        %v4620 = vmul.f32 %v4493, %v4546
        %v4621 = vmul.f32 %v4493, %v4550
        %v4622 = vmul.f32 %v4493, %v4554
        %v4623 = vmul.f32 %v4493, %v4558
        %v4624 = vmul.f32 %v4493, %v4562
        %v4625 = vmul.f32 %v4493, %v4566
        %v4626 = vmul.f32 %v4493, %v4570
        %v4627 = vmul.f32 %v4497, %v4542
        %v4628 = vmul.f32 %v4497, %v4546
        %v4629 = vmul.f32 %v4497, %v4550
        %v4630 = vmul.f32 %v4497, %v4554
        %v4631 = vmul.f32 %v4497, %v4558
        %v4632 = vmul.f32 %v4497, %v4562
        %v4633 = vmul.f32 %v4497, %v4566
        %v4634 = vmul.f32 %v4497, %v4570
        %v4635 = vadd.f32 %v4403, %v4571
        %v4636 = vadd.f32 %v4404, %v4572
        %v4637 = vadd.f32 %v4405, %v4573
        %v4638 = vadd.f32 %v4406, %v4574
        %v4639 = vadd.f32 %v4407, %v4575
        %v4640 = vadd.f32 %v4408, %v4576
        %v4641 = vadd.f32 %v4409, %v4577
        %v4642 = vadd.f32 %v4410, %v4578
        %v4643 = vadd.f32 %v4411, %v4579
        %v4644 = vadd.f32 %v4412, %v4580
        %v4645 = vadd.f32 %v4413, %v4581
        %v4646 = vadd.f32 %v4414, %v4582
        %v4647 = vadd.f32 %v4415, %v4583
        %v4648 = vadd.f32 %v4416, %v4584
        %v4649 = vadd.f32 %v4417, %v4585
        %v4650 = vadd.f32 %v4418, %v4586
        %v4651 = vadd.f32 %v4419, %v4587
        %v4652 = vadd.f32 %v4420, %v4588
        %v4653 = vadd.f32 %v4421, %v4589
        %v4654 = vadd.f32 %v4422, %v4590
        %v4655 = vadd.f32 %v4423, %v4591
        %v4656 = vadd.f32 %v4424, %v4592
        %v4657 = vadd.f32 %v4425, %v4593
        %v4658 = vadd.f32 %v4426, %v4594
        %v4659 = vadd.f32 %v4427, %v4595
        %v4660 = vadd.f32 %v4428, %v4596
        %v4661 = vadd.f32 %v4429, %v4597
        %v4662 = vadd.f32 %v4430, %v4598
        %v4663 = vadd.f32 %v4431, %v4599
        %v4664 = vadd.f32 %v4432, %v4600
        %v4665 = vadd.f32 %v4433, %v4601
        %v4666 = vadd.f32 %v4434, %v4602
        %v4667 = vadd.f32 %v4435, %v4603
        %v4668 = vadd.f32 %v4436, %v4604
        %v4669 = vadd.f32 %v4437, %v4605
        %v4670 = vadd.f32 %v4438, %v4606
        %v4671 = vadd.f32 %v4439, %v4607
        %v4672 = vadd.f32 %v4440, %v4608
        %v4673 = vadd.f32 %v4441, %v4609
        %v4674 = vadd.f32 %v4442, %v4610
        %v4675 = vadd.f32 %v4443, %v4611
        %v4676 = vadd.f32 %v4444, %v4612
        %v4677 = vadd.f32 %v4445, %v4613
        %v4678 = vadd.f32 %v4446, %v4614
        %v4679 = vadd.f32 %v4447, %v4615
        %v4680 = vadd.f32 %v4448, %v4616
        %v4681 = vadd.f32 %v4449, %v4617
        %v4682 = vadd.f32 %v4450, %v4618
        %v4683 = vadd.f32 %v4451, %v4619
        %v4684 = vadd.f32 %v4452, %v4620
        %v4685 = vadd.f32 %v4453, %v4621
        %v4686 = vadd.f32 %v4454, %v4622
        %v4687 = vadd.f32 %v4455, %v4623
        %v4688 = vadd.f32 %v4456, %v4624
        %v4689 = vadd.f32 %v4457, %v4625
        %v4690 = vadd.f32 %v4458, %v4626
        %v4691 = vadd.f32 %v4459, %v4627
        %v4692 = vadd.f32 %v4460, %v4628
        %v4693 = vadd.f32 %v4461, %v4629
        %v4694 = vadd.f32 %v4462, %v4630
        %v4695 = vadd.f32 %v4463, %v4631
        %v4696 = vadd.f32 %v4464, %v4632
        %v4697 = vadd.f32 %v4465, %v4633
        %v4698 = vadd.f32 %v4466, %v4634
        %4763 = vrot.lane.b32.xlu0 %v4635, 27
        %v4764 = vpop.permute.xlu0 %4763
        %4765 = vrot.lane.b32.xlu0 %v4636, 27
        %v4766 = vpop.permute.xlu0 %4765
        %4767 = vrot.lane.b32.xlu0 %v4637, 27
        %v4768 = vpop.permute.xlu0 %4767
        %4769 = vrot.lane.b32.xlu0 %v4638, 27
        %v4770 = vpop.permute.xlu0 %4769
        %4771 = vrot.lane.b32.xlu0 %v4639, 27
        %v4772 = vpop.permute.xlu0 %4771
        %4773 = vrot.lane.b32.xlu0 %v4640, 27
        %v4774 = vpop.permute.xlu0 %4773
        %4775 = vrot.lane.b32.xlu0 %v4641, 27
        %v4776 = vpop.permute.xlu0 %4775
        %4777 = vrot.lane.b32.xlu0 %v4642, 27
        %v4778 = vpop.permute.xlu0 %4777
        %4779 = vrot.lane.b32.xlu0 %v4643, 27
        %v4780 = vpop.permute.xlu0 %4779
        %4781 = vrot.lane.b32.xlu0 %v4644, 27
        %v4782 = vpop.permute.xlu0 %4781
        %4783 = vrot.lane.b32.xlu0 %v4645, 27
        %v4784 = vpop.permute.xlu0 %4783
        %4785 = vrot.lane.b32.xlu0 %v4646, 27
        %v4786 = vpop.permute.xlu0 %4785
        %4787 = vrot.lane.b32.xlu0 %v4647, 27
        %v4788 = vpop.permute.xlu0 %4787
        %4789 = vrot.lane.b32.xlu0 %v4648, 27
        %v4790 = vpop.permute.xlu0 %4789
        %4791 = vrot.lane.b32.xlu0 %v4649, 27
        %v4792 = vpop.permute.xlu0 %4791
        %4793 = vrot.lane.b32.xlu0 %v4650, 27
        %v4794 = vpop.permute.xlu0 %4793
        %4795 = vrot.lane.b32.xlu0 %v4651, 27
        %v4796 = vpop.permute.xlu0 %4795
        %4797 = vrot.lane.b32.xlu0 %v4652, 27
        %v4798 = vpop.permute.xlu0 %4797
        %4799 = vrot.lane.b32.xlu0 %v4653, 27
        %v4800 = vpop.permute.xlu0 %4799
        %4801 = vrot.lane.b32.xlu0 %v4654, 27
        %v4802 = vpop.permute.xlu0 %4801
        %4803 = vrot.lane.b32.xlu0 %v4655, 27
        %v4804 = vpop.permute.xlu0 %4803
        %4805 = vrot.lane.b32.xlu0 %v4656, 27
        %v4806 = vpop.permute.xlu0 %4805
        %4807 = vrot.lane.b32.xlu0 %v4657, 27
        %v4808 = vpop.permute.xlu0 %4807
        %4809 = vrot.lane.b32.xlu0 %v4658, 27
        %v4810 = vpop.permute.xlu0 %4809
        %4811 = vrot.lane.b32.xlu0 %v4659, 27
        %v4812 = vpop.permute.xlu0 %4811
        %4813 = vrot.lane.b32.xlu0 %v4660, 27
        %v4814 = vpop.permute.xlu0 %4813
        %4815 = vrot.lane.b32.xlu0 %v4661, 27
        %v4816 = vpop.permute.xlu0 %4815
        %4817 = vrot.lane.b32.xlu0 %v4662, 27
        %v4818 = vpop.permute.xlu0 %4817
        %4819 = vrot.lane.b32.xlu0 %v4663, 27
        %v4820 = vpop.permute.xlu0 %4819
        %4821 = vrot.lane.b32.xlu0 %v4664, 27
        %v4822 = vpop.permute.xlu0 %4821
        %4823 = vrot.lane.b32.xlu0 %v4665, 27
        %v4824 = vpop.permute.xlu0 %4823
        %4825 = vrot.lane.b32.xlu0 %v4666, 27
        %v4826 = vpop.permute.xlu0 %4825
        %4827 = vrot.lane.b32.xlu0 %v4667, 27
        %v4828 = vpop.permute.xlu0 %4827
        %4829 = vrot.lane.b32.xlu0 %v4668, 27
        %v4830 = vpop.permute.xlu0 %4829
        %4831 = vrot.lane.b32.xlu0 %v4669, 27
        %v4832 = vpop.permute.xlu0 %4831
        %4833 = vrot.lane.b32.xlu0 %v4670, 27
        %v4834 = vpop.permute.xlu0 %4833
        %4835 = vrot.lane.b32.xlu0 %v4671, 27
        %v4836 = vpop.permute.xlu0 %4835
        %4837 = vrot.lane.b32.xlu0 %v4672, 27
        %v4838 = vpop.permute.xlu0 %4837
        %4839 = vrot.lane.b32.xlu0 %v4673, 27
        %v4840 = vpop.permute.xlu0 %4839
        %4841 = vrot.lane.b32.xlu0 %v4674, 27
        %v4842 = vpop.permute.xlu0 %4841
        %4843 = vrot.lane.b32.xlu0 %v4675, 27
        %v4844 = vpop.permute.xlu0 %4843
        %4845 = vrot.lane.b32.xlu0 %v4676, 27
        %v4846 = vpop.permute.xlu0 %4845
        %4847 = vrot.lane.b32.xlu0 %v4677, 27
        %v4848 = vpop.permute.xlu0 %4847
        %4849 = vrot.lane.b32.xlu0 %v4678, 27
        %v4850 = vpop.permute.xlu0 %4849
        %4851 = vrot.lane.b32.xlu0 %v4679, 27
        %v4852 = vpop.permute.xlu0 %4851
        %4853 = vrot.lane.b32.xlu0 %v4680, 27
        %v4854 = vpop.permute.xlu0 %4853
        %4855 = vrot.lane.b32.xlu0 %v4681, 27
        %v4856 = vpop.permute.xlu0 %4855
        %4857 = vrot.lane.b32.xlu0 %v4682, 27
        %v4858 = vpop.permute.xlu0 %4857
        %4859 = vrot.lane.b32.xlu0 %v4683, 27
        %v4860 = vpop.permute.xlu0 %4859
        %4861 = vrot.lane.b32.xlu0 %v4684, 27
        %v4862 = vpop.permute.xlu0 %4861
        %4863 = vrot.lane.b32.xlu0 %v4685, 27
        %v4864 = vpop.permute.xlu0 %4863
        %4865 = vrot.lane.b32.xlu0 %v4686, 27
        %v4866 = vpop.permute.xlu0 %4865
        %4867 = vrot.lane.b32.xlu0 %v4687, 27
        %v4868 = vpop.permute.xlu0 %4867
        %4869 = vrot.lane.b32.xlu0 %v4688, 27
        %v4870 = vpop.permute.xlu0 %4869
        %4871 = vrot.lane.b32.xlu0 %v4689, 27
        %v4872 = vpop.permute.xlu0 %4871
        %4873 = vrot.lane.b32.xlu0 %v4690, 27
        %v4874 = vpop.permute.xlu0 %4873
        %4875 = vrot.lane.b32.xlu0 %v4691, 27
        %v4876 = vpop.permute.xlu0 %4875
        %4877 = vrot.lane.b32.xlu0 %v4692, 27
        %v4878 = vpop.permute.xlu0 %4877
        %4879 = vrot.lane.b32.xlu0 %v4693, 27
        %v4880 = vpop.permute.xlu0 %4879
        %4881 = vrot.lane.b32.xlu0 %v4694, 27
        %v4882 = vpop.permute.xlu0 %4881
        %4883 = vrot.lane.b32.xlu0 %v4695, 27
        %v4884 = vpop.permute.xlu0 %4883
        %4885 = vrot.lane.b32.xlu0 %v4696, 27
        %v4886 = vpop.permute.xlu0 %4885
        %4887 = vrot.lane.b32.xlu0 %v4697, 27
        %v4888 = vpop.permute.xlu0 %4887
        %4889 = vrot.lane.b32.xlu0 %v4698, 27
        %v4890 = vpop.permute.xlu0 %4889
        %vm4891 = vcmask 220160
        %v4892 = vsel %vm4891, %v4764, %v4766
        %v4893 = vsel %vm4891, %v4766, %v4768
        %v4894 = vsel %vm4891, %v4768, %v4770
        %v4895 = vsel %vm4891, %v4770, %v4772
        %v4896 = vsel %vm4891, %v4772, %v4774
        %v4897 = vsel %vm4891, %v4774, %v4776
        %v4898 = vsel %vm4891, %v4776, %v4778
        %v4899 = vsel %vm4891, %v4780, %v4782
        %v4900 = vsel %vm4891, %v4782, %v4784
        %v4901 = vsel %vm4891, %v4784, %v4786
        %v4902 = vsel %vm4891, %v4786, %v4788
        %v4903 = vsel %vm4891, %v4788, %v4790
        %v4904 = vsel %vm4891, %v4790, %v4792
        %v4905 = vsel %vm4891, %v4792, %v4794
        %v4906 = vsel %vm4891, %v4796, %v4798
        %v4907 = vsel %vm4891, %v4798, %v4800
        %v4908 = vsel %vm4891, %v4800, %v4802
        %v4909 = vsel %vm4891, %v4802, %v4804
        %v4910 = vsel %vm4891, %v4804, %v4806
        %v4911 = vsel %vm4891, %v4806, %v4808
        %v4912 = vsel %vm4891, %v4808, %v4810
        %v4913 = vsel %vm4891, %v4812, %v4814
        %v4914 = vsel %vm4891, %v4814, %v4816
        %v4915 = vsel %vm4891, %v4816, %v4818
        %v4916 = vsel %vm4891, %v4818, %v4820
        %v4917 = vsel %vm4891, %v4820, %v4822
        %v4918 = vsel %vm4891, %v4822, %v4824
        %v4919 = vsel %vm4891, %v4824, %v4826
        %v4920 = vsel %vm4891, %v4828, %v4830
        %v4921 = vsel %vm4891, %v4830, %v4832
        %v4922 = vsel %vm4891, %v4832, %v4834
        %v4923 = vsel %vm4891, %v4834, %v4836
        %v4924 = vsel %vm4891, %v4836, %v4838
        %v4925 = vsel %vm4891, %v4838, %v4840
        %v4926 = vsel %vm4891, %v4840, %v4842
        %v4927 = vsel %vm4891, %v4844, %v4846
        %v4928 = vsel %vm4891, %v4846, %v4848
        %v4929 = vsel %vm4891, %v4848, %v4850
        %v4930 = vsel %vm4891, %v4850, %v4852
        %v4931 = vsel %vm4891, %v4852, %v4854
        %v4932 = vsel %vm4891, %v4854, %v4856
        %v4933 = vsel %vm4891, %v4856, %v4858
        %v4934 = vsel %vm4891, %v4860, %v4862
        %v4935 = vsel %vm4891, %v4862, %v4864
        %v4936 = vsel %vm4891, %v4864, %v4866
        %v4937 = vsel %vm4891, %v4866, %v4868
        %v4938 = vsel %vm4891, %v4868, %v4870
        %v4939 = vsel %vm4891, %v4870, %v4872
        %v4940 = vsel %vm4891, %v4872, %v4874
        %v4941 = vsel %vm4891, %v4876, %v4878
        %v4942 = vsel %vm4891, %v4878, %v4880
        %v4943 = vsel %vm4891, %v4880, %v4882
        %v4944 = vsel %vm4891, %v4882, %v4884
        %v4945 = vsel %vm4891, %v4884, %v4886
        %v4946 = vsel %vm4891, %v4886, %v4888
        %v4947 = vsel %vm4891, %v4888, %v4890
        %v5020 = vadd.f32 %v3960, %v4764
        %v5021 = vadd.f32 %v3961, %v4892
        %v5022 = vadd.f32 %v3962, %v4893
        %v5023 = vadd.f32 %v3963, %v4894
        %v5024 = vadd.f32 %v3964, %v4895
        %v5025 = vadd.f32 %v3965, %v4896
        %v5026 = vadd.f32 %v3966, %v4897
        %v5027 = vadd.f32 %v3967, %v4898
        %v5028 = vadd.f32 %v3968, %v4778
        %v5029 = vadd.f32 %v3969, %v4780
        %v5030 = vadd.f32 %v3970, %v4899
        %v5031 = vadd.f32 %v3971, %v4900
        %v5032 = vadd.f32 %v3972, %v4901
        %v5033 = vadd.f32 %v3973, %v4902
        %v5034 = vadd.f32 %v3974, %v4903
        %v5035 = vadd.f32 %v3975, %v4904
        %v5036 = vadd.f32 %v3976, %v4905
        %v5037 = vadd.f32 %v3977, %v4794
        %v5038 = vadd.f32 %v3978, %v4796
        %v5039 = vadd.f32 %v3979, %v4906
        %v5040 = vadd.f32 %v3980, %v4907
        %v5041 = vadd.f32 %v3981, %v4908
        %v5042 = vadd.f32 %v3982, %v4909
        %v5043 = vadd.f32 %v3983, %v4910
        %v5044 = vadd.f32 %v3984, %v4911
        %v5045 = vadd.f32 %v3985, %v4912
        %v5046 = vadd.f32 %v3986, %v4810
        %v5047 = vadd.f32 %v3987, %v4812
        %v5048 = vadd.f32 %v3988, %v4913
        %v5049 = vadd.f32 %v3989, %v4914
        %v5050 = vadd.f32 %v3990, %v4915
        %v5051 = vadd.f32 %v3991, %v4916
        %v5052 = vadd.f32 %v3992, %v4917
        %v5053 = vadd.f32 %v3993, %v4918
        %v5054 = vadd.f32 %v3994, %v4919
        %v5055 = vadd.f32 %v3995, %v4826
        %v5056 = vadd.f32 %v3996, %v4828
        %v5057 = vadd.f32 %v3997, %v4920
        %v5058 = vadd.f32 %v3998, %v4921
        %v5059 = vadd.f32 %v3999, %v4922
        %v5060 = vadd.f32 %v4000, %v4923
        %v5061 = vadd.f32 %v4001, %v4924
        %v5062 = vadd.f32 %v4002, %v4925
        %v5063 = vadd.f32 %v4003, %v4926
        %v5064 = vadd.f32 %v4004, %v4842
        %v5065 = vadd.f32 %v4005, %v4844
        %v5066 = vadd.f32 %v4006, %v4927
        %v5067 = vadd.f32 %v4007, %v4928
        %v5068 = vadd.f32 %v4008, %v4929
        %v5069 = vadd.f32 %v4009, %v4930
        %v5070 = vadd.f32 %v4010, %v4931
        %v5071 = vadd.f32 %v4011, %v4932
        %v5072 = vadd.f32 %v4012, %v4933
        %v5073 = vadd.f32 %v4013, %v4858
        %v5074 = vadd.f32 %v4014, %v4860
        %v5075 = vadd.f32 %v4015, %v4934
        %v5076 = vadd.f32 %v4016, %v4935
        %v5077 = vadd.f32 %v4017, %v4936
        %v5078 = vadd.f32 %v4018, %v4937
        %v5079 = vadd.f32 %v4019, %v4938
        %v5080 = vadd.f32 %v4020, %v4939
        %v5081 = vadd.f32 %v4021, %v4940
        %v5082 = vadd.f32 %v4022, %v4874
        %v5083 = vadd.f32 %v4023, %v4876
        %v5084 = vadd.f32 %v4024, %v4941
        %v5085 = vadd.f32 %v4025, %v4942
        %v5086 = vadd.f32 %v4026, %v4943
        %v5087 = vadd.f32 %v4027, %v4944
        %v5088 = vadd.f32 %v4028, %v4945
        %v5089 = vadd.f32 %v4029, %v4946
        %v5090 = vadd.f32 %v4030, %v4947
        %v5091 = vadd.f32 %v4031, %v4890
        %s5092 = scalar_lea.vmem %s2, 160
        %v5093 = vld [vmem:[%s5092] sm:$0xf]
        %v5094 = vld [vmem:[%s5092 + $0x4] sm:$0xf]
        %v5095 = vld [vmem:[%s5092 + $0x8] sm:$0xf]
        %v5096 = vld [vmem:[%s5092 + $0xc] sm:$0xf]
        %v5097 = vld [vmem:[%s5092 + $0x10] sm:$0xf]
        %v5098 = vld [vmem:[%s5092 + $0x14] sm:$0xf]
        %v5099 = vld [vmem:[%s5092 + $0x18] sm:$0xf]
        %v5100 = vld [vmem:[%s5092 + $0x1c] sm:$0xf]
        %v5101 = vunpack.c.l.bf16 %v5093
        %v5102 = vunpack.c.l.bf16 %v5094
        %v5103 = vunpack.c.l.bf16 %v5095
        %v5104 = vunpack.c.l.bf16 %v5096
        %v5105 = vunpack.c.l.bf16 %v5097
        %v5106 = vunpack.c.l.bf16 %v5098
        %v5107 = vunpack.c.l.bf16 %v5099
        %v5108 = vunpack.c.l.bf16 %v5100
        %5110 = vset.pattern.permute.xlu0 0
        %5111 = vperm.xlu0 %5110, %v5101
        %v5112 = vpop.permute.xlu0 %5111
        %5115 = vset.pattern.permute.xlu0 0
        %5116 = vperm.xlu0 %5115, %v5102
        %v5117 = vpop.permute.xlu0 %5116
        %5120 = vset.pattern.permute.xlu0 0
        %5121 = vperm.xlu0 %5120, %v5103
        %v5122 = vpop.permute.xlu0 %5121
        %5125 = vset.pattern.permute.xlu0 0
        %5126 = vperm.xlu0 %5125, %v5104
        %v5127 = vpop.permute.xlu0 %5126
        %5130 = vset.pattern.permute.xlu0 0
        %5131 = vperm.xlu0 %5130, %v5105
        %v5132 = vpop.permute.xlu0 %5131
        %5135 = vset.pattern.permute.xlu0 0
        %5136 = vperm.xlu0 %5135, %v5106
        %v5137 = vpop.permute.xlu0 %5136
        %5140 = vset.pattern.permute.xlu0 0
        %5141 = vperm.xlu0 %5140, %v5107
        %v5142 = vpop.permute.xlu0 %5141
        %5145 = vset.pattern.permute.xlu0 0
        %5146 = vperm.xlu0 %5145, %v5108
        %v5147 = vpop.permute.xlu0 %5146
        %v5149 = vmul.f32 %v5112, %v4142
        %v5150 = vmul.f32 %v5112, %v4146
        %v5151 = vmul.f32 %v5112, %v4150
        %v5152 = vmul.f32 %v5112, %v4154
        %v5153 = vmul.f32 %v5112, %v4158
        %v5154 = vmul.f32 %v5112, %v4162
        %v5155 = vmul.f32 %v5112, %v4166
        %v5156 = vmul.f32 %v5112, %v4170
        %v5157 = vmul.f32 %v5117, %v4142
        %v5158 = vmul.f32 %v5117, %v4146
        %v5159 = vmul.f32 %v5117, %v4150
        %v5160 = vmul.f32 %v5117, %v4154
        %v5161 = vmul.f32 %v5117, %v4158
        %v5162 = vmul.f32 %v5117, %v4162
        %v5163 = vmul.f32 %v5117, %v4166
        %v5164 = vmul.f32 %v5117, %v4170
        %v5165 = vmul.f32 %v5122, %v4142
        %v5166 = vmul.f32 %v5122, %v4146
        %v5167 = vmul.f32 %v5122, %v4150
        %v5168 = vmul.f32 %v5122, %v4154
        %v5169 = vmul.f32 %v5122, %v4158
        %v5170 = vmul.f32 %v5122, %v4162
        %v5171 = vmul.f32 %v5122, %v4166
        %v5172 = vmul.f32 %v5122, %v4170
        %v5173 = vmul.f32 %v5127, %v4142
        %v5174 = vmul.f32 %v5127, %v4146
        %v5175 = vmul.f32 %v5127, %v4150
        %v5176 = vmul.f32 %v5127, %v4154
        %v5177 = vmul.f32 %v5127, %v4158
        %v5178 = vmul.f32 %v5127, %v4162
        %v5179 = vmul.f32 %v5127, %v4166
        %v5180 = vmul.f32 %v5127, %v4170
        %v5181 = vmul.f32 %v5132, %v4142
        %v5182 = vmul.f32 %v5132, %v4146
        %v5183 = vmul.f32 %v5132, %v4150
        %v5184 = vmul.f32 %v5132, %v4154
        %v5185 = vmul.f32 %v5132, %v4158
        %v5186 = vmul.f32 %v5132, %v4162
        %v5187 = vmul.f32 %v5132, %v4166
        %v5188 = vmul.f32 %v5132, %v4170
        %v5189 = vmul.f32 %v5137, %v4142
        %v5190 = vmul.f32 %v5137, %v4146
        %v5191 = vmul.f32 %v5137, %v4150
        %v5192 = vmul.f32 %v5137, %v4154
        %v5193 = vmul.f32 %v5137, %v4158
        %v5194 = vmul.f32 %v5137, %v4162
        %v5195 = vmul.f32 %v5137, %v4166
        %v5196 = vmul.f32 %v5137, %v4170
        %v5197 = vmul.f32 %v5142, %v4142
        %v5198 = vmul.f32 %v5142, %v4146
        %v5199 = vmul.f32 %v5142, %v4150
        %v5200 = vmul.f32 %v5142, %v4154
        %v5201 = vmul.f32 %v5142, %v4158
        %v5202 = vmul.f32 %v5142, %v4162
        %v5203 = vmul.f32 %v5142, %v4166
        %v5204 = vmul.f32 %v5142, %v4170
        %v5205 = vmul.f32 %v5147, %v4142
        %v5206 = vmul.f32 %v5147, %v4146
        %v5207 = vmul.f32 %v5147, %v4150
        %v5208 = vmul.f32 %v5147, %v4154
        %v5209 = vmul.f32 %v5147, %v4158
        %v5210 = vmul.f32 %v5147, %v4162
        %v5211 = vmul.f32 %v5147, %v4166
        %v5212 = vmul.f32 %v5147, %v4170
        %5213 = vset.pattern.permute.xlu0 1
        %5214 = vperm.xlu0 %5213, %v5101
        %v5215 = vpop.permute.xlu0 %5214
        %5217 = vset.pattern.permute.xlu0 1
        %5218 = vperm.xlu0 %5217, %v5102
        %v5219 = vpop.permute.xlu0 %5218
        %5221 = vset.pattern.permute.xlu0 1
        %5222 = vperm.xlu0 %5221, %v5103
        %v5223 = vpop.permute.xlu0 %5222
        %5225 = vset.pattern.permute.xlu0 1
        %5226 = vperm.xlu0 %5225, %v5104
        %v5227 = vpop.permute.xlu0 %5226
        %5229 = vset.pattern.permute.xlu0 1
        %5230 = vperm.xlu0 %5229, %v5105
        %v5231 = vpop.permute.xlu0 %5230
        %5233 = vset.pattern.permute.xlu0 1
        %5234 = vperm.xlu0 %5233, %v5106
        %v5235 = vpop.permute.xlu0 %5234
        %5237 = vset.pattern.permute.xlu0 1
        %5238 = vperm.xlu0 %5237, %v5107
        %v5239 = vpop.permute.xlu0 %5238
        %5241 = vset.pattern.permute.xlu0 1
        %5242 = vperm.xlu0 %5241, %v5108
        %v5243 = vpop.permute.xlu0 %5242
        %v5245 = vmul.f32 %v5215, %v4310
        %v5246 = vmul.f32 %v5215, %v4314
        %v5247 = vmul.f32 %v5215, %v4318
        %v5248 = vmul.f32 %v5215, %v4322
        %v5249 = vmul.f32 %v5215, %v4326
        %v5250 = vmul.f32 %v5215, %v4330
        %v5251 = vmul.f32 %v5215, %v4334
        %v5252 = vmul.f32 %v5215, %v4338
        %v5253 = vmul.f32 %v5219, %v4310
        %v5254 = vmul.f32 %v5219, %v4314
        %v5255 = vmul.f32 %v5219, %v4318
        %v5256 = vmul.f32 %v5219, %v4322
        %v5257 = vmul.f32 %v5219, %v4326
        %v5258 = vmul.f32 %v5219, %v4330
        %v5259 = vmul.f32 %v5219, %v4334
        %v5260 = vmul.f32 %v5219, %v4338
        %v5261 = vmul.f32 %v5223, %v4310
        %v5262 = vmul.f32 %v5223, %v4314
        %v5263 = vmul.f32 %v5223, %v4318
        %v5264 = vmul.f32 %v5223, %v4322
        %v5265 = vmul.f32 %v5223, %v4326
        %v5266 = vmul.f32 %v5223, %v4330
        %v5267 = vmul.f32 %v5223, %v4334
        %v5268 = vmul.f32 %v5223, %v4338
        %v5269 = vmul.f32 %v5227, %v4310
        %v5270 = vmul.f32 %v5227, %v4314
        %v5271 = vmul.f32 %v5227, %v4318
        %v5272 = vmul.f32 %v5227, %v4322
        %v5273 = vmul.f32 %v5227, %v4326
        %v5274 = vmul.f32 %v5227, %v4330
        %v5275 = vmul.f32 %v5227, %v4334
        %v5276 = vmul.f32 %v5227, %v4338
        %v5277 = vmul.f32 %v5231, %v4310
        %v5278 = vmul.f32 %v5231, %v4314
        %v5279 = vmul.f32 %v5231, %v4318
        %v5280 = vmul.f32 %v5231, %v4322
        %v5281 = vmul.f32 %v5231, %v4326
        %v5282 = vmul.f32 %v5231, %v4330
        %v5283 = vmul.f32 %v5231, %v4334
        %v5284 = vmul.f32 %v5231, %v4338
        %v5285 = vmul.f32 %v5235, %v4310
        %v5286 = vmul.f32 %v5235, %v4314
        %v5287 = vmul.f32 %v5235, %v4318
        %v5288 = vmul.f32 %v5235, %v4322
        %v5289 = vmul.f32 %v5235, %v4326
        %v5290 = vmul.f32 %v5235, %v4330
        %v5291 = vmul.f32 %v5235, %v4334
        %v5292 = vmul.f32 %v5235, %v4338
        %v5293 = vmul.f32 %v5239, %v4310
        %v5294 = vmul.f32 %v5239, %v4314
        %v5295 = vmul.f32 %v5239, %v4318
        %v5296 = vmul.f32 %v5239, %v4322
        %v5297 = vmul.f32 %v5239, %v4326
        %v5298 = vmul.f32 %v5239, %v4330
        %v5299 = vmul.f32 %v5239, %v4334
        %v5300 = vmul.f32 %v5239, %v4338
        %v5301 = vmul.f32 %v5243, %v4310
        %v5302 = vmul.f32 %v5243, %v4314
        %v5303 = vmul.f32 %v5243, %v4318
        %v5304 = vmul.f32 %v5243, %v4322
        %v5305 = vmul.f32 %v5243, %v4326
        %v5306 = vmul.f32 %v5243, %v4330
        %v5307 = vmul.f32 %v5243, %v4334
        %v5308 = vmul.f32 %v5243, %v4338
        %v5309 = vadd.f32 %v5149, %v5245
        %v5310 = vadd.f32 %v5150, %v5246
        %v5311 = vadd.f32 %v5151, %v5247
        %v5312 = vadd.f32 %v5152, %v5248
        %v5313 = vadd.f32 %v5153, %v5249
        %v5314 = vadd.f32 %v5154, %v5250
        %v5315 = vadd.f32 %v5155, %v5251
        %v5316 = vadd.f32 %v5156, %v5252
        %v5317 = vadd.f32 %v5157, %v5253
        %v5318 = vadd.f32 %v5158, %v5254
        %v5319 = vadd.f32 %v5159, %v5255
        %v5320 = vadd.f32 %v5160, %v5256
        %v5321 = vadd.f32 %v5161, %v5257
        %v5322 = vadd.f32 %v5162, %v5258
        %v5323 = vadd.f32 %v5163, %v5259
        %v5324 = vadd.f32 %v5164, %v5260
        %v5325 = vadd.f32 %v5165, %v5261
        %v5326 = vadd.f32 %v5166, %v5262
        %v5327 = vadd.f32 %v5167, %v5263
        %v5328 = vadd.f32 %v5168, %v5264
        %v5329 = vadd.f32 %v5169, %v5265
        %v5330 = vadd.f32 %v5170, %v5266
        %v5331 = vadd.f32 %v5171, %v5267
        %v5332 = vadd.f32 %v5172, %v5268
        %v5333 = vadd.f32 %v5173, %v5269
        %v5334 = vadd.f32 %v5174, %v5270
        %v5335 = vadd.f32 %v5175, %v5271
        %v5336 = vadd.f32 %v5176, %v5272
        %v5337 = vadd.f32 %v5177, %v5273
        %v5338 = vadd.f32 %v5178, %v5274
        %v5339 = vadd.f32 %v5179, %v5275
        %v5340 = vadd.f32 %v5180, %v5276
        %v5341 = vadd.f32 %v5181, %v5277
        %v5342 = vadd.f32 %v5182, %v5278
        %v5343 = vadd.f32 %v5183, %v5279
        %v5344 = vadd.f32 %v5184, %v5280
        %v5345 = vadd.f32 %v5185, %v5281
        %v5346 = vadd.f32 %v5186, %v5282
        %v5347 = vadd.f32 %v5187, %v5283
        %v5348 = vadd.f32 %v5188, %v5284
        %v5349 = vadd.f32 %v5189, %v5285
        %v5350 = vadd.f32 %v5190, %v5286
        %v5351 = vadd.f32 %v5191, %v5287
        %v5352 = vadd.f32 %v5192, %v5288
        %v5353 = vadd.f32 %v5193, %v5289
        %v5354 = vadd.f32 %v5194, %v5290
        %v5355 = vadd.f32 %v5195, %v5291
        %v5356 = vadd.f32 %v5196, %v5292
        %v5357 = vadd.f32 %v5197, %v5293
        %v5358 = vadd.f32 %v5198, %v5294
        %v5359 = vadd.f32 %v5199, %v5295
        %v5360 = vadd.f32 %v5200, %v5296
        %v5361 = vadd.f32 %v5201, %v5297
        %v5362 = vadd.f32 %v5202, %v5298
        %v5363 = vadd.f32 %v5203, %v5299
        %v5364 = vadd.f32 %v5204, %v5300
        %v5365 = vadd.f32 %v5205, %v5301
        %v5366 = vadd.f32 %v5206, %v5302
        %v5367 = vadd.f32 %v5207, %v5303
        %v5368 = vadd.f32 %v5208, %v5304
        %v5369 = vadd.f32 %v5209, %v5305
        %v5370 = vadd.f32 %v5210, %v5306
        %v5371 = vadd.f32 %v5211, %v5307
        %v5372 = vadd.f32 %v5212, %v5308
        %5373 = vset.pattern.permute.xlu0 2
        %5374 = vperm.xlu0 %5373, %v5101
        %v5375 = vpop.permute.xlu0 %5374
        %5377 = vset.pattern.permute.xlu0 2
        %5378 = vperm.xlu0 %5377, %v5102
        %v5379 = vpop.permute.xlu0 %5378
        %5381 = vset.pattern.permute.xlu0 2
        %5382 = vperm.xlu0 %5381, %v5103
        %v5383 = vpop.permute.xlu0 %5382
        %5385 = vset.pattern.permute.xlu0 2
        %5386 = vperm.xlu0 %5385, %v5104
        %v5387 = vpop.permute.xlu0 %5386
        %5389 = vset.pattern.permute.xlu0 2
        %5390 = vperm.xlu0 %5389, %v5105
        %v5391 = vpop.permute.xlu0 %5390
        %5393 = vset.pattern.permute.xlu0 2
        %5394 = vperm.xlu0 %5393, %v5106
        %v5395 = vpop.permute.xlu0 %5394
        %5397 = vset.pattern.permute.xlu0 2
        %5398 = vperm.xlu0 %5397, %v5107
        %v5399 = vpop.permute.xlu0 %5398
        %5401 = vset.pattern.permute.xlu0 2
        %5402 = vperm.xlu0 %5401, %v5108
        %v5403 = vpop.permute.xlu0 %5402
        %v5405 = vmul.f32 %v5375, %v4542
        %v5406 = vmul.f32 %v5375, %v4546
        %v5407 = vmul.f32 %v5375, %v4550
        %v5408 = vmul.f32 %v5375, %v4554
        %v5409 = vmul.f32 %v5375, %v4558
        %v5410 = vmul.f32 %v5375, %v4562
        %v5411 = vmul.f32 %v5375, %v4566
        %v5412 = vmul.f32 %v5375, %v4570
        %v5413 = vmul.f32 %v5379, %v4542
        %v5414 = vmul.f32 %v5379, %v4546
        %v5415 = vmul.f32 %v5379, %v4550
        %v5416 = vmul.f32 %v5379, %v4554
        %v5417 = vmul.f32 %v5379, %v4558
        %v5418 = vmul.f32 %v5379, %v4562
        %v5419 = vmul.f32 %v5379, %v4566
        %v5420 = vmul.f32 %v5379, %v4570
        %v5421 = vmul.f32 %v5383, %v4542
        %v5422 = vmul.f32 %v5383, %v4546
        %v5423 = vmul.f32 %v5383, %v4550
        %v5424 = vmul.f32 %v5383, %v4554
        %v5425 = vmul.f32 %v5383, %v4558
        %v5426 = vmul.f32 %v5383, %v4562
        %v5427 = vmul.f32 %v5383, %v4566
        %v5428 = vmul.f32 %v5383, %v4570
        %v5429 = vmul.f32 %v5387, %v4542
        %v5430 = vmul.f32 %v5387, %v4546
        %v5431 = vmul.f32 %v5387, %v4550
        %v5432 = vmul.f32 %v5387, %v4554
        %v5433 = vmul.f32 %v5387, %v4558
        %v5434 = vmul.f32 %v5387, %v4562
        %v5435 = vmul.f32 %v5387, %v4566
        %v5436 = vmul.f32 %v5387, %v4570
        %v5437 = vmul.f32 %v5391, %v4542
        %v5438 = vmul.f32 %v5391, %v4546
        %v5439 = vmul.f32 %v5391, %v4550
        %v5440 = vmul.f32 %v5391, %v4554
        %v5441 = vmul.f32 %v5391, %v4558
        %v5442 = vmul.f32 %v5391, %v4562
        %v5443 = vmul.f32 %v5391, %v4566
        %v5444 = vmul.f32 %v5391, %v4570
        %v5445 = vmul.f32 %v5395, %v4542
        %v5446 = vmul.f32 %v5395, %v4546
        %v5447 = vmul.f32 %v5395, %v4550
        %v5448 = vmul.f32 %v5395, %v4554
        %v5449 = vmul.f32 %v5395, %v4558
        %v5450 = vmul.f32 %v5395, %v4562
        %v5451 = vmul.f32 %v5395, %v4566
        %v5452 = vmul.f32 %v5395, %v4570
        %v5453 = vmul.f32 %v5399, %v4542
        %v5454 = vmul.f32 %v5399, %v4546
        %v5455 = vmul.f32 %v5399, %v4550
        %v5456 = vmul.f32 %v5399, %v4554
        %v5457 = vmul.f32 %v5399, %v4558
        %v5458 = vmul.f32 %v5399, %v4562
        %v5459 = vmul.f32 %v5399, %v4566
        %v5460 = vmul.f32 %v5399, %v4570
        %v5461 = vmul.f32 %v5403, %v4542
        %v5462 = vmul.f32 %v5403, %v4546
        %v5463 = vmul.f32 %v5403, %v4550
        %v5464 = vmul.f32 %v5403, %v4554
        %v5465 = vmul.f32 %v5403, %v4558
        %v5466 = vmul.f32 %v5403, %v4562
        %v5467 = vmul.f32 %v5403, %v4566
        %v5468 = vmul.f32 %v5403, %v4570
        %v5469 = vadd.f32 %v5309, %v5405
        %v5470 = vadd.f32 %v5310, %v5406
        %v5471 = vadd.f32 %v5311, %v5407
        %v5472 = vadd.f32 %v5312, %v5408
        %v5473 = vadd.f32 %v5313, %v5409
        %v5474 = vadd.f32 %v5314, %v5410
        %v5475 = vadd.f32 %v5315, %v5411
        %v5476 = vadd.f32 %v5316, %v5412
        %v5477 = vadd.f32 %v5317, %v5413
        %v5478 = vadd.f32 %v5318, %v5414
        %v5479 = vadd.f32 %v5319, %v5415
        %v5480 = vadd.f32 %v5320, %v5416
        %v5481 = vadd.f32 %v5321, %v5417
        %v5482 = vadd.f32 %v5322, %v5418
        %v5483 = vadd.f32 %v5323, %v5419
        %v5484 = vadd.f32 %v5324, %v5420
        %v5485 = vadd.f32 %v5325, %v5421
        %v5486 = vadd.f32 %v5326, %v5422
        %v5487 = vadd.f32 %v5327, %v5423
        %v5488 = vadd.f32 %v5328, %v5424
        %v5489 = vadd.f32 %v5329, %v5425
        %v5490 = vadd.f32 %v5330, %v5426
        %v5491 = vadd.f32 %v5331, %v5427
        %v5492 = vadd.f32 %v5332, %v5428
        %v5493 = vadd.f32 %v5333, %v5429
        %v5494 = vadd.f32 %v5334, %v5430
        %v5495 = vadd.f32 %v5335, %v5431
        %v5496 = vadd.f32 %v5336, %v5432
        %v5497 = vadd.f32 %v5337, %v5433
        %v5498 = vadd.f32 %v5338, %v5434
        %v5499 = vadd.f32 %v5339, %v5435
        %v5500 = vadd.f32 %v5340, %v5436
        %v5501 = vadd.f32 %v5341, %v5437
        %v5502 = vadd.f32 %v5342, %v5438
        %v5503 = vadd.f32 %v5343, %v5439
        %v5504 = vadd.f32 %v5344, %v5440
        %v5505 = vadd.f32 %v5345, %v5441
        %v5506 = vadd.f32 %v5346, %v5442
        %v5507 = vadd.f32 %v5347, %v5443
        %v5508 = vadd.f32 %v5348, %v5444
        %v5509 = vadd.f32 %v5349, %v5445
        %v5510 = vadd.f32 %v5350, %v5446
        %v5511 = vadd.f32 %v5351, %v5447
        %v5512 = vadd.f32 %v5352, %v5448
        %v5513 = vadd.f32 %v5353, %v5449
        %v5514 = vadd.f32 %v5354, %v5450
        %v5515 = vadd.f32 %v5355, %v5451
        %v5516 = vadd.f32 %v5356, %v5452
        %v5517 = vadd.f32 %v5357, %v5453
        %v5518 = vadd.f32 %v5358, %v5454
        %v5519 = vadd.f32 %v5359, %v5455
        %v5520 = vadd.f32 %v5360, %v5456
        %v5521 = vadd.f32 %v5361, %v5457
        %v5522 = vadd.f32 %v5362, %v5458
        %v5523 = vadd.f32 %v5363, %v5459
        %v5524 = vadd.f32 %v5364, %v5460
        %v5525 = vadd.f32 %v5365, %v5461
        %v5526 = vadd.f32 %v5366, %v5462
        %v5527 = vadd.f32 %v5367, %v5463
        %v5528 = vadd.f32 %v5368, %v5464
        %v5529 = vadd.f32 %v5369, %v5465
        %v5530 = vadd.f32 %v5370, %v5466
        %v5531 = vadd.f32 %v5371, %v5467
        %v5532 = vadd.f32 %v5372, %v5468
        %5597 = vrot.lane.b32.xlu0 %v5469, 26
        %v5598 = vpop.permute.xlu0 %5597
        %5599 = vrot.lane.b32.xlu0 %v5470, 26
        %v5600 = vpop.permute.xlu0 %5599
        %5601 = vrot.lane.b32.xlu0 %v5471, 26
        %v5602 = vpop.permute.xlu0 %5601
        %5603 = vrot.lane.b32.xlu0 %v5472, 26
        %v5604 = vpop.permute.xlu0 %5603
        %5605 = vrot.lane.b32.xlu0 %v5473, 26
        %v5606 = vpop.permute.xlu0 %5605
        %5607 = vrot.lane.b32.xlu0 %v5474, 26
        %v5608 = vpop.permute.xlu0 %5607
        %5609 = vrot.lane.b32.xlu0 %v5475, 26
        %v5610 = vpop.permute.xlu0 %5609
        %5611 = vrot.lane.b32.xlu0 %v5476, 26
        %v5612 = vpop.permute.xlu0 %5611
        %5613 = vrot.lane.b32.xlu0 %v5477, 26
        %v5614 = vpop.permute.xlu0 %5613
        %5615 = vrot.lane.b32.xlu0 %v5478, 26
        %v5616 = vpop.permute.xlu0 %5615
        %5617 = vrot.lane.b32.xlu0 %v5479, 26
        %v5618 = vpop.permute.xlu0 %5617
        %5619 = vrot.lane.b32.xlu0 %v5480, 26
        %v5620 = vpop.permute.xlu0 %5619
        %5621 = vrot.lane.b32.xlu0 %v5481, 26
        %v5622 = vpop.permute.xlu0 %5621
        %5623 = vrot.lane.b32.xlu0 %v5482, 26
        %v5624 = vpop.permute.xlu0 %5623
        %5625 = vrot.lane.b32.xlu0 %v5483, 26
        %v5626 = vpop.permute.xlu0 %5625
        %5627 = vrot.lane.b32.xlu0 %v5484, 26
        %v5628 = vpop.permute.xlu0 %5627
        %5629 = vrot.lane.b32.xlu0 %v5485, 26
        %v5630 = vpop.permute.xlu0 %5629
        %5631 = vrot.lane.b32.xlu0 %v5486, 26
        %v5632 = vpop.permute.xlu0 %5631
        %5633 = vrot.lane.b32.xlu0 %v5487, 26
        %v5634 = vpop.permute.xlu0 %5633
        %5635 = vrot.lane.b32.xlu0 %v5488, 26
        %v5636 = vpop.permute.xlu0 %5635
        %5637 = vrot.lane.b32.xlu0 %v5489, 26
        %v5638 = vpop.permute.xlu0 %5637
        %5639 = vrot.lane.b32.xlu0 %v5490, 26
        %v5640 = vpop.permute.xlu0 %5639
        %5641 = vrot.lane.b32.xlu0 %v5491, 26
        %v5642 = vpop.permute.xlu0 %5641
        %5643 = vrot.lane.b32.xlu0 %v5492, 26
        %v5644 = vpop.permute.xlu0 %5643
        %5645 = vrot.lane.b32.xlu0 %v5493, 26
        %v5646 = vpop.permute.xlu0 %5645
        %5647 = vrot.lane.b32.xlu0 %v5494, 26
        %v5648 = vpop.permute.xlu0 %5647
        %5649 = vrot.lane.b32.xlu0 %v5495, 26
        %v5650 = vpop.permute.xlu0 %5649
        %5651 = vrot.lane.b32.xlu0 %v5496, 26
        %v5652 = vpop.permute.xlu0 %5651
        %5653 = vrot.lane.b32.xlu0 %v5497, 26
        %v5654 = vpop.permute.xlu0 %5653
        %5655 = vrot.lane.b32.xlu0 %v5498, 26
        %v5656 = vpop.permute.xlu0 %5655
        %5657 = vrot.lane.b32.xlu0 %v5499, 26
        %v5658 = vpop.permute.xlu0 %5657
        %5659 = vrot.lane.b32.xlu0 %v5500, 26
        %v5660 = vpop.permute.xlu0 %5659
        %5661 = vrot.lane.b32.xlu0 %v5501, 26
        %v5662 = vpop.permute.xlu0 %5661
        %5663 = vrot.lane.b32.xlu0 %v5502, 26
        %v5664 = vpop.permute.xlu0 %5663
        %5665 = vrot.lane.b32.xlu0 %v5503, 26
        %v5666 = vpop.permute.xlu0 %5665
        %5667 = vrot.lane.b32.xlu0 %v5504, 26
        %v5668 = vpop.permute.xlu0 %5667
        %5669 = vrot.lane.b32.xlu0 %v5505, 26
        %v5670 = vpop.permute.xlu0 %5669
        %5671 = vrot.lane.b32.xlu0 %v5506, 26
        %v5672 = vpop.permute.xlu0 %5671
        %5673 = vrot.lane.b32.xlu0 %v5507, 26
        %v5674 = vpop.permute.xlu0 %5673
        %5675 = vrot.lane.b32.xlu0 %v5508, 26
        %v5676 = vpop.permute.xlu0 %5675
        %5677 = vrot.lane.b32.xlu0 %v5509, 26
        %v5678 = vpop.permute.xlu0 %5677
        %5679 = vrot.lane.b32.xlu0 %v5510, 26
        %v5680 = vpop.permute.xlu0 %5679
        %5681 = vrot.lane.b32.xlu0 %v5511, 26
        %v5682 = vpop.permute.xlu0 %5681
        %5683 = vrot.lane.b32.xlu0 %v5512, 26
        %v5684 = vpop.permute.xlu0 %5683
        %5685 = vrot.lane.b32.xlu0 %v5513, 26
        %v5686 = vpop.permute.xlu0 %5685
        %5687 = vrot.lane.b32.xlu0 %v5514, 26
        %v5688 = vpop.permute.xlu0 %5687
        %5689 = vrot.lane.b32.xlu0 %v5515, 26
        %v5690 = vpop.permute.xlu0 %5689
        %5691 = vrot.lane.b32.xlu0 %v5516, 26
        %v5692 = vpop.permute.xlu0 %5691
        %5693 = vrot.lane.b32.xlu0 %v5517, 26
        %v5694 = vpop.permute.xlu0 %5693
        %5695 = vrot.lane.b32.xlu0 %v5518, 26
        %v5696 = vpop.permute.xlu0 %5695
        %5697 = vrot.lane.b32.xlu0 %v5519, 26
        %v5698 = vpop.permute.xlu0 %5697
        %5699 = vrot.lane.b32.xlu0 %v5520, 26
        %v5700 = vpop.permute.xlu0 %5699
        %5701 = vrot.lane.b32.xlu0 %v5521, 26
        %v5702 = vpop.permute.xlu0 %5701
        %5703 = vrot.lane.b32.xlu0 %v5522, 26
        %v5704 = vpop.permute.xlu0 %5703
        %5705 = vrot.lane.b32.xlu0 %v5523, 26
        %v5706 = vpop.permute.xlu0 %5705
        %5707 = vrot.lane.b32.xlu0 %v5524, 26
        %v5708 = vpop.permute.xlu0 %5707
        %5709 = vrot.lane.b32.xlu0 %v5525, 26
        %v5710 = vpop.permute.xlu0 %5709
        %5711 = vrot.lane.b32.xlu0 %v5526, 26
        %v5712 = vpop.permute.xlu0 %5711
        %5713 = vrot.lane.b32.xlu0 %v5527, 26
        %v5714 = vpop.permute.xlu0 %5713
        %5715 = vrot.lane.b32.xlu0 %v5528, 26
        %v5716 = vpop.permute.xlu0 %5715
        %5717 = vrot.lane.b32.xlu0 %v5529, 26
        %v5718 = vpop.permute.xlu0 %5717
        %5719 = vrot.lane.b32.xlu0 %v5530, 26
        %v5720 = vpop.permute.xlu0 %5719
        %5721 = vrot.lane.b32.xlu0 %v5531, 26
        %v5722 = vpop.permute.xlu0 %5721
        %5723 = vrot.lane.b32.xlu0 %v5532, 26
        %v5724 = vpop.permute.xlu0 %5723
        %vm5725 = vcmask 211968
        %v5726 = vsel %vm5725, %v5598, %v5600
        %v5727 = vsel %vm5725, %v5600, %v5602
        %v5728 = vsel %vm5725, %v5602, %v5604
        %v5729 = vsel %vm5725, %v5604, %v5606
        %v5730 = vsel %vm5725, %v5606, %v5608
        %v5731 = vsel %vm5725, %v5608, %v5610
        %v5732 = vsel %vm5725, %v5610, %v5612
        %v5733 = vsel %vm5725, %v5614, %v5616
        %v5734 = vsel %vm5725, %v5616, %v5618
        %v5735 = vsel %vm5725, %v5618, %v5620
        %v5736 = vsel %vm5725, %v5620, %v5622
        %v5737 = vsel %vm5725, %v5622, %v5624
        %v5738 = vsel %vm5725, %v5624, %v5626
        %v5739 = vsel %vm5725, %v5626, %v5628
        %v5740 = vsel %vm5725, %v5630, %v5632
        %v5741 = vsel %vm5725, %v5632, %v5634
        %v5742 = vsel %vm5725, %v5634, %v5636
        %v5743 = vsel %vm5725, %v5636, %v5638
        %v5744 = vsel %vm5725, %v5638, %v5640
        %v5745 = vsel %vm5725, %v5640, %v5642
        %v5746 = vsel %vm5725, %v5642, %v5644
        %v5747 = vsel %vm5725, %v5646, %v5648
        %v5748 = vsel %vm5725, %v5648, %v5650
        %v5749 = vsel %vm5725, %v5650, %v5652
        %v5750 = vsel %vm5725, %v5652, %v5654
        %v5751 = vsel %vm5725, %v5654, %v5656
        %v5752 = vsel %vm5725, %v5656, %v5658
        %v5753 = vsel %vm5725, %v5658, %v5660
        %v5754 = vsel %vm5725, %v5662, %v5664
        %v5755 = vsel %vm5725, %v5664, %v5666
        %v5756 = vsel %vm5725, %v5666, %v5668
        %v5757 = vsel %vm5725, %v5668, %v5670
        %v5758 = vsel %vm5725, %v5670, %v5672
        %v5759 = vsel %vm5725, %v5672, %v5674
        %v5760 = vsel %vm5725, %v5674, %v5676
        %v5761 = vsel %vm5725, %v5678, %v5680
        %v5762 = vsel %vm5725, %v5680, %v5682
        %v5763 = vsel %vm5725, %v5682, %v5684
        %v5764 = vsel %vm5725, %v5684, %v5686
        %v5765 = vsel %vm5725, %v5686, %v5688
        %v5766 = vsel %vm5725, %v5688, %v5690
        %v5767 = vsel %vm5725, %v5690, %v5692
        %v5768 = vsel %vm5725, %v5694, %v5696
        %v5769 = vsel %vm5725, %v5696, %v5698
        %v5770 = vsel %vm5725, %v5698, %v5700
        %v5771 = vsel %vm5725, %v5700, %v5702
        %v5772 = vsel %vm5725, %v5702, %v5704
        %v5773 = vsel %vm5725, %v5704, %v5706
        %v5774 = vsel %vm5725, %v5706, %v5708
        %v5775 = vsel %vm5725, %v5710, %v5712
        %v5776 = vsel %vm5725, %v5712, %v5714
        %v5777 = vsel %vm5725, %v5714, %v5716
        %v5778 = vsel %vm5725, %v5716, %v5718
        %v5779 = vsel %vm5725, %v5718, %v5720
        %v5780 = vsel %vm5725, %v5720, %v5722
        %v5781 = vsel %vm5725, %v5722, %v5724
        %v5854 = vadd.f32 %v5020, %v5598
        %v5855 = vadd.f32 %v5021, %v5726
        %v5856 = vadd.f32 %v5022, %v5727
        %v5857 = vadd.f32 %v5023, %v5728
        %v5858 = vadd.f32 %v5024, %v5729
        %v5859 = vadd.f32 %v5025, %v5730
        %v5860 = vadd.f32 %v5026, %v5731
        %v5861 = vadd.f32 %v5027, %v5732
        %v5862 = vadd.f32 %v5028, %v5612
        %v5863 = vadd.f32 %v5029, %v5614
        %v5864 = vadd.f32 %v5030, %v5733
        %v5865 = vadd.f32 %v5031, %v5734
        %v5866 = vadd.f32 %v5032, %v5735
        %v5867 = vadd.f32 %v5033, %v5736
        %v5868 = vadd.f32 %v5034, %v5737
        %v5869 = vadd.f32 %v5035, %v5738
        %v5870 = vadd.f32 %v5036, %v5739
        %v5871 = vadd.f32 %v5037, %v5628
        %v5872 = vadd.f32 %v5038, %v5630
        %v5873 = vadd.f32 %v5039, %v5740
        %v5874 = vadd.f32 %v5040, %v5741
        %v5875 = vadd.f32 %v5041, %v5742
        %v5876 = vadd.f32 %v5042, %v5743
        %v5877 = vadd.f32 %v5043, %v5744
        %v5878 = vadd.f32 %v5044, %v5745
        %v5879 = vadd.f32 %v5045, %v5746
        %v5880 = vadd.f32 %v5046, %v5644
        %v5881 = vadd.f32 %v5047, %v5646
        %v5882 = vadd.f32 %v5048, %v5747
        %v5883 = vadd.f32 %v5049, %v5748
        %v5884 = vadd.f32 %v5050, %v5749
        %v5885 = vadd.f32 %v5051, %v5750
        %v5886 = vadd.f32 %v5052, %v5751
        %v5887 = vadd.f32 %v5053, %v5752
        %v5888 = vadd.f32 %v5054, %v5753
        %v5889 = vadd.f32 %v5055, %v5660
        %v5890 = vadd.f32 %v5056, %v5662
        %v5891 = vadd.f32 %v5057, %v5754
        %v5892 = vadd.f32 %v5058, %v5755
        %v5893 = vadd.f32 %v5059, %v5756
        %v5894 = vadd.f32 %v5060, %v5757
        %v5895 = vadd.f32 %v5061, %v5758
        %v5896 = vadd.f32 %v5062, %v5759
        %v5897 = vadd.f32 %v5063, %v5760
        %v5898 = vadd.f32 %v5064, %v5676
        %v5899 = vadd.f32 %v5065, %v5678
        %v5900 = vadd.f32 %v5066, %v5761
        %v5901 = vadd.f32 %v5067, %v5762
        %v5902 = vadd.f32 %v5068, %v5763
        %v5903 = vadd.f32 %v5069, %v5764
        %v5904 = vadd.f32 %v5070, %v5765
        %v5905 = vadd.f32 %v5071, %v5766
        %v5906 = vadd.f32 %v5072, %v5767
        %v5907 = vadd.f32 %v5073, %v5692
        %v5908 = vadd.f32 %v5074, %v5694
        %v5909 = vadd.f32 %v5075, %v5768
        %v5910 = vadd.f32 %v5076, %v5769
        %v5911 = vadd.f32 %v5077, %v5770
        %v5912 = vadd.f32 %v5078, %v5771
        %v5913 = vadd.f32 %v5079, %v5772
        %v5914 = vadd.f32 %v5080, %v5773
        %v5915 = vadd.f32 %v5081, %v5774
        %v5916 = vadd.f32 %v5082, %v5708
        %v5917 = vadd.f32 %v5083, %v5710
        %v5918 = vadd.f32 %v5084, %v5775
        %v5919 = vadd.f32 %v5085, %v5776
        %v5920 = vadd.f32 %v5086, %v5777
        %v5921 = vadd.f32 %v5087, %v5778
        %v5922 = vadd.f32 %v5088, %v5779
        %v5923 = vadd.f32 %v5089, %v5780
        %v5924 = vadd.f32 %v5090, %v5781
        %v5925 = vadd.f32 %v5091, %v5724
        %v5926 = vld [vmem:[#allocation2 + $0x2] sm:$0xff]
        %v5927 = vld [vmem:[#allocation2 + $0xa] sm:$0xff]
        %v5928 = vld [vmem:[#allocation2 + $0x12] sm:$0x3]
        %s5929 = scalar_lea.vmem %s2, 192
        %v5930 = vld [vmem:[%s5929] sm:$0xf]
        %v5931 = vld [vmem:[%s5929 + $0x4] sm:$0xf]
        %v5932 = vld [vmem:[%s5929 + $0x8] sm:$0xf]
        %v5933 = vld [vmem:[%s5929 + $0xc] sm:$0xf]
        %v5934 = vld [vmem:[%s5929 + $0x10] sm:$0xf]
        %v5935 = vld [vmem:[%s5929 + $0x14] sm:$0xf]
        %v5936 = vld [vmem:[%s5929 + $0x18] sm:$0xf]
        %v5937 = vld [vmem:[%s5929 + $0x1c] sm:$0xf]
        %v5938 = vunpack.c.l.bf16 %v5930
        %v5939 = vunpack.c.l.bf16 %v5931
        %v5940 = vunpack.c.l.bf16 %v5932
        %v5941 = vunpack.c.l.bf16 %v5933
        %v5942 = vunpack.c.l.bf16 %v5934
        %v5943 = vunpack.c.l.bf16 %v5935
        %v5944 = vunpack.c.l.bf16 %v5936
        %v5945 = vunpack.c.l.bf16 %v5937
        %v5946 = vunpack.c.l.bf16 %v5926
        %v5947 = vunpack.c.h.bf16 %v5926
        %v5948 = vunpack.c.l.bf16 %v5927
        %v5949 = vunpack.c.h.bf16 %v5927
        %v5950 = vunpack.c.l.bf16 %v5928
        %5952 = vset.pattern.permute.xlu0 0
        %5953 = vperm.xlu0 %5952, %v5938
        %v5954 = vpop.permute.xlu0 %5953
        %5957 = vset.pattern.permute.xlu0 0
        %5958 = vperm.xlu0 %5957, %v5939
        %v5959 = vpop.permute.xlu0 %5958
        %5962 = vset.pattern.permute.xlu0 0
        %5963 = vperm.xlu0 %5962, %v5940
        %v5964 = vpop.permute.xlu0 %5963
        %5967 = vset.pattern.permute.xlu0 0
        %5968 = vperm.xlu0 %5967, %v5941
        %v5969 = vpop.permute.xlu0 %5968
        %5972 = vset.pattern.permute.xlu0 0
        %5973 = vperm.xlu0 %5972, %v5942
        %v5974 = vpop.permute.xlu0 %5973
        %5977 = vset.pattern.permute.xlu0 0
        %5978 = vperm.xlu0 %5977, %v5943
        %v5979 = vpop.permute.xlu0 %5978
        %5982 = vset.pattern.permute.xlu0 0
        %5983 = vperm.xlu0 %5982, %v5944
        %v5984 = vpop.permute.xlu0 %5983
        %5987 = vset.pattern.permute.xlu0 0
        %5988 = vperm.xlu0 %5987, %v5945
        %v5989 = vpop.permute.xlu0 %5988
        %v5996 = vlaneseq
        %v5997 = vshrl.u32 %v5996, 7
        %v5998 = vsub.s32 0, %v5997
        %v5999 = vrot.slane %v5946, %v5998
        %v6000 = vlaneseq
        %v6001 = vshrl.u32 %v6000, 7
        %v6002 = vsub.s32 4, %v6001
        %v6003 = vrot.slane %v5946, %v6002
        %v6004 = vlaneseq
        %v6005 = vshrl.u32 %v6004, 7
        %v6006 = vsub.s32 0, %v6005
        %v6007 = vrot.slane %v5947, %v6006
        %v6008 = vlaneseq
        %v6009 = vshrl.u32 %v6008, 7
        %v6010 = vsub.s32 4, %v6009
        %v6011 = vrot.slane %v5947, %v6010
        %v6012 = vlaneseq
        %v6013 = vshrl.u32 %v6012, 7
        %v6014 = vsub.s32 0, %v6013
        %v6015 = vrot.slane %v5948, %v6014
        %v6016 = vlaneseq
        %v6017 = vshrl.u32 %v6016, 7
        %v6018 = vsub.s32 4, %v6017
        %v6019 = vrot.slane %v5948, %v6018
        %v6020 = vlaneseq
        %v6021 = vshrl.u32 %v6020, 7
        %v6022 = vsub.s32 0, %v6021
        %v6023 = vrot.slane %v5949, %v6022
        %v6024 = vlaneseq
        %v6025 = vshrl.u32 %v6024, 7
        %v6026 = vsub.s32 4, %v6025
        %v6027 = vrot.slane %v5949, %v6026
        %v6028 = vlaneseq
        %v6029 = vshrl.u32 %v6028, 7
        %v6030 = vsub.s32 0, %v6029
        %v6031 = vrot.slane %v5950, %v6030
        %v6041 = vlaneseq
        %v6042 = vshrl.u32 %v6041, 7
        %v6043 = vsub.s32 0, %v6042
        %v6044 = vrot.slane %v5999, %v6043
        %v6045 = vlaneseq
        %v6046 = vshrl.u32 %v6045, 7
        %v6047 = vsub.s32 0, %v6046
        %v6048 = vrot.slane %v6003, %v6047
        %v6049 = vlaneseq
        %v6050 = vshrl.u32 %v6049, 7
        %v6051 = vsub.s32 0, %v6050
        %v6052 = vrot.slane %v6007, %v6051
        %v6053 = vlaneseq
        %v6054 = vshrl.u32 %v6053, 7
        %v6055 = vsub.s32 0, %v6054
        %v6056 = vrot.slane %v6011, %v6055
        %v6057 = vlaneseq
        %v6058 = vshrl.u32 %v6057, 7
        %v6059 = vsub.s32 0, %v6058
        %v6060 = vrot.slane %v6015, %v6059
        %v6061 = vlaneseq
        %v6062 = vshrl.u32 %v6061, 7
        %v6063 = vsub.s32 0, %v6062
        %v6064 = vrot.slane %v6019, %v6063
        %v6065 = vlaneseq
        %v6066 = vshrl.u32 %v6065, 7
        %v6067 = vsub.s32 0, %v6066
        %v6068 = vrot.slane %v6023, %v6067
        %v6069 = vlaneseq
        %v6070 = vshrl.u32 %v6069, 7
        %v6071 = vsub.s32 0, %v6070
        %v6072 = vrot.slane %v6027, %v6071
        %v6073 = vlaneseq
        %v6074 = vshrl.u32 %v6073, 7
        %v6075 = vsub.s32 0, %v6074
        %v6076 = vrot.slane %v6031, %v6075
        %v6077 = vmul.f32 %v5954, %v6044
        %v6078 = vmul.f32 %v5954, %v6048
        %v6079 = vmul.f32 %v5954, %v6052
        %v6080 = vmul.f32 %v5954, %v6056
        %v6081 = vmul.f32 %v5954, %v6060
        %v6082 = vmul.f32 %v5954, %v6064
        %v6083 = vmul.f32 %v5954, %v6068
        %v6084 = vmul.f32 %v5954, %v6072
        %v6085 = vmul.f32 %v5954, %v6076
        %v6086 = vmul.f32 %v5959, %v6044
        %v6087 = vmul.f32 %v5959, %v6048
        %v6088 = vmul.f32 %v5959, %v6052
        %v6089 = vmul.f32 %v5959, %v6056
        %v6090 = vmul.f32 %v5959, %v6060
        %v6091 = vmul.f32 %v5959, %v6064
        %v6092 = vmul.f32 %v5959, %v6068
        %v6093 = vmul.f32 %v5959, %v6072
        %v6094 = vmul.f32 %v5959, %v6076
        %v6095 = vmul.f32 %v5964, %v6044
        %v6096 = vmul.f32 %v5964, %v6048
        %v6097 = vmul.f32 %v5964, %v6052
        %v6098 = vmul.f32 %v5964, %v6056
        %v6099 = vmul.f32 %v5964, %v6060
        %v6100 = vmul.f32 %v5964, %v6064
        %v6101 = vmul.f32 %v5964, %v6068
        %v6102 = vmul.f32 %v5964, %v6072
        %v6103 = vmul.f32 %v5964, %v6076
        %v6104 = vmul.f32 %v5969, %v6044
        %v6105 = vmul.f32 %v5969, %v6048
        %v6106 = vmul.f32 %v5969, %v6052
        %v6107 = vmul.f32 %v5969, %v6056
        %v6108 = vmul.f32 %v5969, %v6060
        %v6109 = vmul.f32 %v5969, %v6064
        %v6110 = vmul.f32 %v5969, %v6068
        %v6111 = vmul.f32 %v5969, %v6072
        %v6112 = vmul.f32 %v5969, %v6076
        %v6113 = vmul.f32 %v5974, %v6044
        %v6114 = vmul.f32 %v5974, %v6048
        %v6115 = vmul.f32 %v5974, %v6052
        %v6116 = vmul.f32 %v5974, %v6056
        %v6117 = vmul.f32 %v5974, %v6060
        %v6118 = vmul.f32 %v5974, %v6064
        %v6119 = vmul.f32 %v5974, %v6068
        %v6120 = vmul.f32 %v5974, %v6072
        %v6121 = vmul.f32 %v5974, %v6076
        %v6122 = vmul.f32 %v5979, %v6044
        %v6123 = vmul.f32 %v5979, %v6048
        %v6124 = vmul.f32 %v5979, %v6052
        %v6125 = vmul.f32 %v5979, %v6056
        %v6126 = vmul.f32 %v5979, %v6060
        %v6127 = vmul.f32 %v5979, %v6064
        %v6128 = vmul.f32 %v5979, %v6068
        %v6129 = vmul.f32 %v5979, %v6072
        %v6130 = vmul.f32 %v5979, %v6076
        %v6131 = vmul.f32 %v5984, %v6044
        %v6132 = vmul.f32 %v5984, %v6048
        %v6133 = vmul.f32 %v5984, %v6052
        %v6134 = vmul.f32 %v5984, %v6056
        %v6135 = vmul.f32 %v5984, %v6060
        %v6136 = vmul.f32 %v5984, %v6064
        %v6137 = vmul.f32 %v5984, %v6068
        %v6138 = vmul.f32 %v5984, %v6072
        %v6139 = vmul.f32 %v5984, %v6076
        %v6140 = vmul.f32 %v5989, %v6044
        %v6141 = vmul.f32 %v5989, %v6048
        %v6142 = vmul.f32 %v5989, %v6052
        %v6143 = vmul.f32 %v5989, %v6056
        %v6144 = vmul.f32 %v5989, %v6060
        %v6145 = vmul.f32 %v5989, %v6064
        %v6146 = vmul.f32 %v5989, %v6068
        %v6147 = vmul.f32 %v5989, %v6072
        %v6148 = vmul.f32 %v5989, %v6076
        %6149 = vset.pattern.permute.xlu0 1
        %6150 = vperm.xlu0 %6149, %v5938
        %v6151 = vpop.permute.xlu0 %6150
        %6153 = vset.pattern.permute.xlu0 1
        %6154 = vperm.xlu0 %6153, %v5939
        %v6155 = vpop.permute.xlu0 %6154
        %6157 = vset.pattern.permute.xlu0 1
        %6158 = vperm.xlu0 %6157, %v5940
        %v6159 = vpop.permute.xlu0 %6158
        %6161 = vset.pattern.permute.xlu0 1
        %6162 = vperm.xlu0 %6161, %v5941
        %v6163 = vpop.permute.xlu0 %6162
        %6165 = vset.pattern.permute.xlu0 1
        %6166 = vperm.xlu0 %6165, %v5942
        %v6167 = vpop.permute.xlu0 %6166
        %6169 = vset.pattern.permute.xlu0 1
        %6170 = vperm.xlu0 %6169, %v5943
        %v6171 = vpop.permute.xlu0 %6170
        %6173 = vset.pattern.permute.xlu0 1
        %6174 = vperm.xlu0 %6173, %v5944
        %v6175 = vpop.permute.xlu0 %6174
        %6177 = vset.pattern.permute.xlu0 1
        %6178 = vperm.xlu0 %6177, %v5945
        %v6179 = vpop.permute.xlu0 %6178
        %v6181 = vlaneseq
        %v6182 = vshrl.u32 %v6181, 7
        %v6183 = vsub.s32 1, %v6182
        %v6184 = vrot.slane %v5946, %v6183
        %v6185 = vlaneseq
        %v6186 = vshrl.u32 %v6185, 7
        %v6187 = vsub.s32 5, %v6186
        %v6188 = vrot.slane %v5946, %v6187
        %v6189 = vlaneseq
        %v6190 = vshrl.u32 %v6189, 7
        %v6191 = vsub.s32 1, %v6190
        %v6192 = vrot.slane %v5947, %v6191
        %v6193 = vlaneseq
        %v6194 = vshrl.u32 %v6193, 7
        %v6195 = vsub.s32 5, %v6194
        %v6196 = vrot.slane %v5947, %v6195
        %v6197 = vlaneseq
        %v6198 = vshrl.u32 %v6197, 7
        %v6199 = vsub.s32 1, %v6198
        %v6200 = vrot.slane %v5948, %v6199
        %v6201 = vlaneseq
        %v6202 = vshrl.u32 %v6201, 7
        %v6203 = vsub.s32 5, %v6202
        %v6204 = vrot.slane %v5948, %v6203
        %v6205 = vlaneseq
        %v6206 = vshrl.u32 %v6205, 7
        %v6207 = vsub.s32 1, %v6206
        %v6208 = vrot.slane %v5949, %v6207
        %v6209 = vlaneseq
        %v6210 = vshrl.u32 %v6209, 7
        %v6211 = vsub.s32 5, %v6210
        %v6212 = vrot.slane %v5949, %v6211
        %v6213 = vlaneseq
        %v6214 = vshrl.u32 %v6213, 7
        %v6215 = vsub.s32 1, %v6214
        %v6216 = vrot.slane %v5950, %v6215
        %v6226 = vlaneseq
        %v6227 = vshrl.u32 %v6226, 7
        %v6228 = vsub.s32 1, %v6227
        %v6229 = vrot.slane %v6184, %v6228
        %v6230 = vlaneseq
        %v6231 = vshrl.u32 %v6230, 7
        %v6232 = vsub.s32 1, %v6231
        %v6233 = vrot.slane %v6188, %v6232
        %v6234 = vlaneseq
        %v6235 = vshrl.u32 %v6234, 7
        %v6236 = vsub.s32 1, %v6235
        %v6237 = vrot.slane %v6192, %v6236
        %v6238 = vlaneseq
        %v6239 = vshrl.u32 %v6238, 7
        %v6240 = vsub.s32 1, %v6239
        %v6241 = vrot.slane %v6196, %v6240
        %v6242 = vlaneseq
        %v6243 = vshrl.u32 %v6242, 7
        %v6244 = vsub.s32 1, %v6243
        %v6245 = vrot.slane %v6200, %v6244
        %v6246 = vlaneseq
        %v6247 = vshrl.u32 %v6246, 7
        %v6248 = vsub.s32 1, %v6247
        %v6249 = vrot.slane %v6204, %v6248
        %v6250 = vlaneseq
        %v6251 = vshrl.u32 %v6250, 7
        %v6252 = vsub.s32 1, %v6251
        %v6253 = vrot.slane %v6208, %v6252
        %v6254 = vlaneseq
        %v6255 = vshrl.u32 %v6254, 7
        %v6256 = vsub.s32 1, %v6255
        %v6257 = vrot.slane %v6212, %v6256
        %v6258 = vlaneseq
        %v6259 = vshrl.u32 %v6258, 7
        %v6260 = vsub.s32 1, %v6259
        %v6261 = vrot.slane %v6216, %v6260
        %v6262 = vmul.f32 %v6151, %v6229
        %v6263 = vmul.f32 %v6151, %v6233
        %v6264 = vmul.f32 %v6151, %v6237
        %v6265 = vmul.f32 %v6151, %v6241
        %v6266 = vmul.f32 %v6151, %v6245
        %v6267 = vmul.f32 %v6151, %v6249
        %v6268 = vmul.f32 %v6151, %v6253
        %v6269 = vmul.f32 %v6151, %v6257
        %v6270 = vmul.f32 %v6151, %v6261
        %v6271 = vmul.f32 %v6155, %v6229
        %v6272 = vmul.f32 %v6155, %v6233
        %v6273 = vmul.f32 %v6155, %v6237
        %v6274 = vmul.f32 %v6155, %v6241
        %v6275 = vmul.f32 %v6155, %v6245
        %v6276 = vmul.f32 %v6155, %v6249
        %v6277 = vmul.f32 %v6155, %v6253
        %v6278 = vmul.f32 %v6155, %v6257
        %v6279 = vmul.f32 %v6155, %v6261
        %v6280 = vmul.f32 %v6159, %v6229
        %v6281 = vmul.f32 %v6159, %v6233
        %v6282 = vmul.f32 %v6159, %v6237
        %v6283 = vmul.f32 %v6159, %v6241
        %v6284 = vmul.f32 %v6159, %v6245
        %v6285 = vmul.f32 %v6159, %v6249
        %v6286 = vmul.f32 %v6159, %v6253
        %v6287 = vmul.f32 %v6159, %v6257
        %v6288 = vmul.f32 %v6159, %v6261
        %v6289 = vmul.f32 %v6163, %v6229
        %v6290 = vmul.f32 %v6163, %v6233
        %v6291 = vmul.f32 %v6163, %v6237
        %v6292 = vmul.f32 %v6163, %v6241
        %v6293 = vmul.f32 %v6163, %v6245
        %v6294 = vmul.f32 %v6163, %v6249
        %v6295 = vmul.f32 %v6163, %v6253
        %v6296 = vmul.f32 %v6163, %v6257
        %v6297 = vmul.f32 %v6163, %v6261
        %v6298 = vmul.f32 %v6167, %v6229
        %v6299 = vmul.f32 %v6167, %v6233
        %v6300 = vmul.f32 %v6167, %v6237
        %v6301 = vmul.f32 %v6167, %v6241
        %v6302 = vmul.f32 %v6167, %v6245
        %v6303 = vmul.f32 %v6167, %v6249
        %v6304 = vmul.f32 %v6167, %v6253
        %v6305 = vmul.f32 %v6167, %v6257
        %v6306 = vmul.f32 %v6167, %v6261
        %v6307 = vmul.f32 %v6171, %v6229
        %v6308 = vmul.f32 %v6171, %v6233
        %v6309 = vmul.f32 %v6171, %v6237
        %v6310 = vmul.f32 %v6171, %v6241
        %v6311 = vmul.f32 %v6171, %v6245
        %v6312 = vmul.f32 %v6171, %v6249
        %v6313 = vmul.f32 %v6171, %v6253
        %v6314 = vmul.f32 %v6171, %v6257
        %v6315 = vmul.f32 %v6171, %v6261
        %v6316 = vmul.f32 %v6175, %v6229
        %v6317 = vmul.f32 %v6175, %v6233
        %v6318 = vmul.f32 %v6175, %v6237
        %v6319 = vmul.f32 %v6175, %v6241
        %v6320 = vmul.f32 %v6175, %v6245
        %v6321 = vmul.f32 %v6175, %v6249
        %v6322 = vmul.f32 %v6175, %v6253
        %v6323 = vmul.f32 %v6175, %v6257
        %v6324 = vmul.f32 %v6175, %v6261
        %v6325 = vmul.f32 %v6179, %v6229
        %v6326 = vmul.f32 %v6179, %v6233
        %v6327 = vmul.f32 %v6179, %v6237
        %v6328 = vmul.f32 %v6179, %v6241
        %v6329 = vmul.f32 %v6179, %v6245
        %v6330 = vmul.f32 %v6179, %v6249
        %v6331 = vmul.f32 %v6179, %v6253
        %v6332 = vmul.f32 %v6179, %v6257
        %v6333 = vmul.f32 %v6179, %v6261
        %v6334 = vadd.f32 %v6077, %v6262
        %v6335 = vadd.f32 %v6078, %v6263
        %v6336 = vadd.f32 %v6079, %v6264
        %v6337 = vadd.f32 %v6080, %v6265
        %v6338 = vadd.f32 %v6081, %v6266
        %v6339 = vadd.f32 %v6082, %v6267
        %v6340 = vadd.f32 %v6083, %v6268
        %v6341 = vadd.f32 %v6084, %v6269
        %v6342 = vadd.f32 %v6085, %v6270
        %v6343 = vadd.f32 %v6086, %v6271
        %v6344 = vadd.f32 %v6087, %v6272
        %v6345 = vadd.f32 %v6088, %v6273
        %v6346 = vadd.f32 %v6089, %v6274
        %v6347 = vadd.f32 %v6090, %v6275
        %v6348 = vadd.f32 %v6091, %v6276
        %v6349 = vadd.f32 %v6092, %v6277
        %v6350 = vadd.f32 %v6093, %v6278
        %v6351 = vadd.f32 %v6094, %v6279
        %v6352 = vadd.f32 %v6095, %v6280
        %v6353 = vadd.f32 %v6096, %v6281
        %v6354 = vadd.f32 %v6097, %v6282
        %v6355 = vadd.f32 %v6098, %v6283
        %v6356 = vadd.f32 %v6099, %v6284
        %v6357 = vadd.f32 %v6100, %v6285
        %v6358 = vadd.f32 %v6101, %v6286
        %v6359 = vadd.f32 %v6102, %v6287
        %v6360 = vadd.f32 %v6103, %v6288
        %v6361 = vadd.f32 %v6104, %v6289
        %v6362 = vadd.f32 %v6105, %v6290
        %v6363 = vadd.f32 %v6106, %v6291
        %v6364 = vadd.f32 %v6107, %v6292
        %v6365 = vadd.f32 %v6108, %v6293
        %v6366 = vadd.f32 %v6109, %v6294
        %v6367 = vadd.f32 %v6110, %v6295
        %v6368 = vadd.f32 %v6111, %v6296
        %v6369 = vadd.f32 %v6112, %v6297
        %v6370 = vadd.f32 %v6113, %v6298
        %v6371 = vadd.f32 %v6114, %v6299
        %v6372 = vadd.f32 %v6115, %v6300
        %v6373 = vadd.f32 %v6116, %v6301
        %v6374 = vadd.f32 %v6117, %v6302
        %v6375 = vadd.f32 %v6118, %v6303
        %v6376 = vadd.f32 %v6119, %v6304
        %v6377 = vadd.f32 %v6120, %v6305
        %v6378 = vadd.f32 %v6121, %v6306
        %v6379 = vadd.f32 %v6122, %v6307
        %v6380 = vadd.f32 %v6123, %v6308
        %v6381 = vadd.f32 %v6124, %v6309
        %v6382 = vadd.f32 %v6125, %v6310
        %v6383 = vadd.f32 %v6126, %v6311
        %v6384 = vadd.f32 %v6127, %v6312
        %v6385 = vadd.f32 %v6128, %v6313
        %v6386 = vadd.f32 %v6129, %v6314
        %v6387 = vadd.f32 %v6130, %v6315
        %v6388 = vadd.f32 %v6131, %v6316
        %v6389 = vadd.f32 %v6132, %v6317
        %v6390 = vadd.f32 %v6133, %v6318
        %v6391 = vadd.f32 %v6134, %v6319
        %v6392 = vadd.f32 %v6135, %v6320
        %v6393 = vadd.f32 %v6136, %v6321
        %v6394 = vadd.f32 %v6137, %v6322
        %v6395 = vadd.f32 %v6138, %v6323
        %v6396 = vadd.f32 %v6139, %v6324
        %v6397 = vadd.f32 %v6140, %v6325
        %v6398 = vadd.f32 %v6141, %v6326
        %v6399 = vadd.f32 %v6142, %v6327
        %v6400 = vadd.f32 %v6143, %v6328
        %v6401 = vadd.f32 %v6144, %v6329
        %v6402 = vadd.f32 %v6145, %v6330
        %v6403 = vadd.f32 %v6146, %v6331
        %v6404 = vadd.f32 %v6147, %v6332
        %v6405 = vadd.f32 %v6148, %v6333
        %6406 = vset.pattern.permute.xlu0 2
        %6407 = vperm.xlu0 %6406, %v5938
        %v6408 = vpop.permute.xlu0 %6407
        %6410 = vset.pattern.permute.xlu0 2
        %6411 = vperm.xlu0 %6410, %v5939
        %v6412 = vpop.permute.xlu0 %6411
        %6414 = vset.pattern.permute.xlu0 2
        %6415 = vperm.xlu0 %6414, %v5940
        %v6416 = vpop.permute.xlu0 %6415
        %6418 = vset.pattern.permute.xlu0 2
        %6419 = vperm.xlu0 %6418, %v5941
        %v6420 = vpop.permute.xlu0 %6419
        %6422 = vset.pattern.permute.xlu0 2
        %6423 = vperm.xlu0 %6422, %v5942
        %v6424 = vpop.permute.xlu0 %6423
        %6426 = vset.pattern.permute.xlu0 2
        %6427 = vperm.xlu0 %6426, %v5943
        %v6428 = vpop.permute.xlu0 %6427
        %6430 = vset.pattern.permute.xlu0 2
        %6431 = vperm.xlu0 %6430, %v5944
        %v6432 = vpop.permute.xlu0 %6431
        %6434 = vset.pattern.permute.xlu0 2
        %6435 = vperm.xlu0 %6434, %v5945
        %v6436 = vpop.permute.xlu0 %6435
        %v6438 = vlaneseq
        %v6439 = vshrl.u32 %v6438, 7
        %v6440 = vsub.s32 2, %v6439
        %v6441 = vrot.slane %v5946, %v6440
        %v6442 = vlaneseq
        %v6443 = vshrl.u32 %v6442, 7
        %v6444 = vsub.s32 6, %v6443
        %v6445 = vrot.slane %v5946, %v6444
        %v6446 = vlaneseq
        %v6447 = vshrl.u32 %v6446, 7
        %v6448 = vsub.s32 2, %v6447
        %v6449 = vrot.slane %v5947, %v6448
        %v6450 = vlaneseq
        %v6451 = vshrl.u32 %v6450, 7
        %v6452 = vsub.s32 6, %v6451
        %v6453 = vrot.slane %v5947, %v6452
        %v6454 = vlaneseq
        %v6455 = vshrl.u32 %v6454, 7
        %v6456 = vsub.s32 2, %v6455
        %v6457 = vrot.slane %v5948, %v6456
        %v6458 = vlaneseq
        %v6459 = vshrl.u32 %v6458, 7
        %v6460 = vsub.s32 6, %v6459
        %v6461 = vrot.slane %v5948, %v6460
        %v6462 = vlaneseq
        %v6463 = vshrl.u32 %v6462, 7
        %v6464 = vsub.s32 2, %v6463
        %v6465 = vrot.slane %v5949, %v6464
        %v6466 = vlaneseq
        %v6467 = vshrl.u32 %v6466, 7
        %v6468 = vsub.s32 6, %v6467
        %v6469 = vrot.slane %v5949, %v6468
        %v6470 = vlaneseq
        %v6471 = vshrl.u32 %v6470, 7
        %v6472 = vsub.s32 2, %v6471
        %v6473 = vrot.slane %v5950, %v6472
        %v6483 = vlaneseq
        %v6484 = vshrl.u32 %v6483, 7
        %v6485 = vsub.s32 2, %v6484
        %v6486 = vrot.slane %v6441, %v6485
        %v6487 = vlaneseq
        %v6488 = vshrl.u32 %v6487, 7
        %v6489 = vsub.s32 2, %v6488
        %v6490 = vrot.slane %v6445, %v6489
        %v6491 = vlaneseq
        %v6492 = vshrl.u32 %v6491, 7
        %v6493 = vsub.s32 2, %v6492
        %v6494 = vrot.slane %v6449, %v6493
        %v6495 = vlaneseq
        %v6496 = vshrl.u32 %v6495, 7
        %v6497 = vsub.s32 2, %v6496
        %v6498 = vrot.slane %v6453, %v6497
        %v6499 = vlaneseq
        %v6500 = vshrl.u32 %v6499, 7
        %v6501 = vsub.s32 2, %v6500
        %v6502 = vrot.slane %v6457, %v6501
        %v6503 = vlaneseq
        %v6504 = vshrl.u32 %v6503, 7
        %v6505 = vsub.s32 2, %v6504
        %v6506 = vrot.slane %v6461, %v6505
        %v6507 = vlaneseq
        %v6508 = vshrl.u32 %v6507, 7
        %v6509 = vsub.s32 2, %v6508
        %v6510 = vrot.slane %v6465, %v6509
        %v6511 = vlaneseq
        %v6512 = vshrl.u32 %v6511, 7
        %v6513 = vsub.s32 2, %v6512
        %v6514 = vrot.slane %v6469, %v6513
        %v6515 = vlaneseq
        %v6516 = vshrl.u32 %v6515, 7
        %v6517 = vsub.s32 2, %v6516
        %v6518 = vrot.slane %v6473, %v6517
        %v6519 = vmul.f32 %v6408, %v6486
        %v6520 = vmul.f32 %v6408, %v6490
        %v6521 = vmul.f32 %v6408, %v6494
        %v6522 = vmul.f32 %v6408, %v6498
        %v6523 = vmul.f32 %v6408, %v6502
        %v6524 = vmul.f32 %v6408, %v6506
        %v6525 = vmul.f32 %v6408, %v6510
        %v6526 = vmul.f32 %v6408, %v6514
        %v6527 = vmul.f32 %v6408, %v6518
        %v6528 = vmul.f32 %v6412, %v6486
        %v6529 = vmul.f32 %v6412, %v6490
        %v6530 = vmul.f32 %v6412, %v6494
        %v6531 = vmul.f32 %v6412, %v6498
        %v6532 = vmul.f32 %v6412, %v6502
        %v6533 = vmul.f32 %v6412, %v6506
        %v6534 = vmul.f32 %v6412, %v6510
        %v6535 = vmul.f32 %v6412, %v6514
        %v6536 = vmul.f32 %v6412, %v6518
        %v6537 = vmul.f32 %v6416, %v6486
        %v6538 = vmul.f32 %v6416, %v6490
        %v6539 = vmul.f32 %v6416, %v6494
        %v6540 = vmul.f32 %v6416, %v6498
        %v6541 = vmul.f32 %v6416, %v6502
        %v6542 = vmul.f32 %v6416, %v6506
        %v6543 = vmul.f32 %v6416, %v6510
        %v6544 = vmul.f32 %v6416, %v6514
        %v6545 = vmul.f32 %v6416, %v6518
        %v6546 = vmul.f32 %v6420, %v6486
        %v6547 = vmul.f32 %v6420, %v6490
        %v6548 = vmul.f32 %v6420, %v6494
        %v6549 = vmul.f32 %v6420, %v6498
        %v6550 = vmul.f32 %v6420, %v6502
        %v6551 = vmul.f32 %v6420, %v6506
        %v6552 = vmul.f32 %v6420, %v6510
        %v6553 = vmul.f32 %v6420, %v6514
        %v6554 = vmul.f32 %v6420, %v6518
        %v6555 = vmul.f32 %v6424, %v6486
        %v6556 = vmul.f32 %v6424, %v6490
        %v6557 = vmul.f32 %v6424, %v6494
        %v6558 = vmul.f32 %v6424, %v6498
        %v6559 = vmul.f32 %v6424, %v6502
        %v6560 = vmul.f32 %v6424, %v6506
        %v6561 = vmul.f32 %v6424, %v6510
        %v6562 = vmul.f32 %v6424, %v6514
        %v6563 = vmul.f32 %v6424, %v6518
        %v6564 = vmul.f32 %v6428, %v6486
        %v6565 = vmul.f32 %v6428, %v6490
        %v6566 = vmul.f32 %v6428, %v6494
        %v6567 = vmul.f32 %v6428, %v6498
        %v6568 = vmul.f32 %v6428, %v6502
        %v6569 = vmul.f32 %v6428, %v6506
        %v6570 = vmul.f32 %v6428, %v6510
        %v6571 = vmul.f32 %v6428, %v6514
        %v6572 = vmul.f32 %v6428, %v6518
        %v6573 = vmul.f32 %v6432, %v6486
        %v6574 = vmul.f32 %v6432, %v6490
        %v6575 = vmul.f32 %v6432, %v6494
        %v6576 = vmul.f32 %v6432, %v6498
        %v6577 = vmul.f32 %v6432, %v6502
        %v6578 = vmul.f32 %v6432, %v6506
        %v6579 = vmul.f32 %v6432, %v6510
        %v6580 = vmul.f32 %v6432, %v6514
        %v6581 = vmul.f32 %v6432, %v6518
        %v6582 = vmul.f32 %v6436, %v6486
        %v6583 = vmul.f32 %v6436, %v6490
        %v6584 = vmul.f32 %v6436, %v6494
        %v6585 = vmul.f32 %v6436, %v6498
        %v6586 = vmul.f32 %v6436, %v6502
        %v6587 = vmul.f32 %v6436, %v6506
        %v6588 = vmul.f32 %v6436, %v6510
        %v6589 = vmul.f32 %v6436, %v6514
        %v6590 = vmul.f32 %v6436, %v6518
        %v6591 = vadd.f32 %v6334, %v6519
        %v6592 = vadd.f32 %v6335, %v6520
        %v6593 = vadd.f32 %v6336, %v6521
        %v6594 = vadd.f32 %v6337, %v6522
        %v6595 = vadd.f32 %v6338, %v6523
        %v6596 = vadd.f32 %v6339, %v6524
        %v6597 = vadd.f32 %v6340, %v6525
        %v6598 = vadd.f32 %v6341, %v6526
        %v6599 = vadd.f32 %v6342, %v6527
        %v6600 = vadd.f32 %v6343, %v6528
        %v6601 = vadd.f32 %v6344, %v6529
        %v6602 = vadd.f32 %v6345, %v6530
        %v6603 = vadd.f32 %v6346, %v6531
        %v6604 = vadd.f32 %v6347, %v6532
        %v6605 = vadd.f32 %v6348, %v6533
        %v6606 = vadd.f32 %v6349, %v6534
        %v6607 = vadd.f32 %v6350, %v6535
        %v6608 = vadd.f32 %v6351, %v6536
        %v6609 = vadd.f32 %v6352, %v6537
        %v6610 = vadd.f32 %v6353, %v6538
        %v6611 = vadd.f32 %v6354, %v6539
        %v6612 = vadd.f32 %v6355, %v6540
        %v6613 = vadd.f32 %v6356, %v6541
        %v6614 = vadd.f32 %v6357, %v6542
        %v6615 = vadd.f32 %v6358, %v6543
        %v6616 = vadd.f32 %v6359, %v6544
        %v6617 = vadd.f32 %v6360, %v6545
        %v6618 = vadd.f32 %v6361, %v6546
        %v6619 = vadd.f32 %v6362, %v6547
        %v6620 = vadd.f32 %v6363, %v6548
        %v6621 = vadd.f32 %v6364, %v6549
        %v6622 = vadd.f32 %v6365, %v6550
        %v6623 = vadd.f32 %v6366, %v6551
        %v6624 = vadd.f32 %v6367, %v6552
        %v6625 = vadd.f32 %v6368, %v6553
        %v6626 = vadd.f32 %v6369, %v6554
        %v6627 = vadd.f32 %v6370, %v6555
        %v6628 = vadd.f32 %v6371, %v6556
        %v6629 = vadd.f32 %v6372, %v6557
        %v6630 = vadd.f32 %v6373, %v6558
        %v6631 = vadd.f32 %v6374, %v6559
        %v6632 = vadd.f32 %v6375, %v6560
        %v6633 = vadd.f32 %v6376, %v6561
        %v6634 = vadd.f32 %v6377, %v6562
        %v6635 = vadd.f32 %v6378, %v6563
        %v6636 = vadd.f32 %v6379, %v6564
        %v6637 = vadd.f32 %v6380, %v6565
        %v6638 = vadd.f32 %v6381, %v6566
        %v6639 = vadd.f32 %v6382, %v6567
        %v6640 = vadd.f32 %v6383, %v6568
        %v6641 = vadd.f32 %v6384, %v6569
        %v6642 = vadd.f32 %v6385, %v6570
        %v6643 = vadd.f32 %v6386, %v6571
        %v6644 = vadd.f32 %v6387, %v6572
        %v6645 = vadd.f32 %v6388, %v6573
        %v6646 = vadd.f32 %v6389, %v6574
        %v6647 = vadd.f32 %v6390, %v6575
        %v6648 = vadd.f32 %v6391, %v6576
        %v6649 = vadd.f32 %v6392, %v6577
        %v6650 = vadd.f32 %v6393, %v6578
        %v6651 = vadd.f32 %v6394, %v6579
        %v6652 = vadd.f32 %v6395, %v6580
        %v6653 = vadd.f32 %v6396, %v6581
        %v6654 = vadd.f32 %v6397, %v6582
        %v6655 = vadd.f32 %v6398, %v6583
        %v6656 = vadd.f32 %v6399, %v6584
        %v6657 = vadd.f32 %v6400, %v6585
        %v6658 = vadd.f32 %v6401, %v6586
        %v6659 = vadd.f32 %v6402, %v6587
        %v6660 = vadd.f32 %v6403, %v6588
        %v6661 = vadd.f32 %v6404, %v6589
        %v6662 = vadd.f32 %v6405, %v6590
        %6735 = vrot.lane.b32.xlu0 %v6591, 56
        %v6736 = vpop.permute.xlu0 %6735
        %6737 = vrot.lane.b32.xlu0 %v6592, 56
        %v6738 = vpop.permute.xlu0 %6737
        %6739 = vrot.lane.b32.xlu0 %v6593, 56
        %v6740 = vpop.permute.xlu0 %6739
        %6741 = vrot.lane.b32.xlu0 %v6594, 56
        %v6742 = vpop.permute.xlu0 %6741
        %6743 = vrot.lane.b32.xlu0 %v6595, 56
        %v6744 = vpop.permute.xlu0 %6743
        %6745 = vrot.lane.b32.xlu0 %v6596, 56
        %v6746 = vpop.permute.xlu0 %6745
        %6747 = vrot.lane.b32.xlu0 %v6597, 56
        %v6748 = vpop.permute.xlu0 %6747
        %6749 = vrot.lane.b32.xlu0 %v6598, 56
        %v6750 = vpop.permute.xlu0 %6749
        %6751 = vrot.lane.b32.xlu0 %v6599, 56
        %v6752 = vpop.permute.xlu0 %6751
        %6753 = vrot.lane.b32.xlu0 %v6600, 56
        %v6754 = vpop.permute.xlu0 %6753
        %6755 = vrot.lane.b32.xlu0 %v6601, 56
        %v6756 = vpop.permute.xlu0 %6755
        %6757 = vrot.lane.b32.xlu0 %v6602, 56
        %v6758 = vpop.permute.xlu0 %6757
        %6759 = vrot.lane.b32.xlu0 %v6603, 56
        %v6760 = vpop.permute.xlu0 %6759
        %6761 = vrot.lane.b32.xlu0 %v6604, 56
        %v6762 = vpop.permute.xlu0 %6761
        %6763 = vrot.lane.b32.xlu0 %v6605, 56
        %v6764 = vpop.permute.xlu0 %6763
        %6765 = vrot.lane.b32.xlu0 %v6606, 56
        %v6766 = vpop.permute.xlu0 %6765
        %6767 = vrot.lane.b32.xlu0 %v6607, 56
        %v6768 = vpop.permute.xlu0 %6767
        %6769 = vrot.lane.b32.xlu0 %v6608, 56
        %v6770 = vpop.permute.xlu0 %6769
        %6771 = vrot.lane.b32.xlu0 %v6609, 56
        %v6772 = vpop.permute.xlu0 %6771
        %6773 = vrot.lane.b32.xlu0 %v6610, 56
        %v6774 = vpop.permute.xlu0 %6773
        %6775 = vrot.lane.b32.xlu0 %v6611, 56
        %v6776 = vpop.permute.xlu0 %6775
        %6777 = vrot.lane.b32.xlu0 %v6612, 56
        %v6778 = vpop.permute.xlu0 %6777
        %6779 = vrot.lane.b32.xlu0 %v6613, 56
        %v6780 = vpop.permute.xlu0 %6779
        %6781 = vrot.lane.b32.xlu0 %v6614, 56
        %v6782 = vpop.permute.xlu0 %6781
        %6783 = vrot.lane.b32.xlu0 %v6615, 56
        %v6784 = vpop.permute.xlu0 %6783
        %6785 = vrot.lane.b32.xlu0 %v6616, 56
        %v6786 = vpop.permute.xlu0 %6785
        %6787 = vrot.lane.b32.xlu0 %v6617, 56
        %v6788 = vpop.permute.xlu0 %6787
        %6789 = vrot.lane.b32.xlu0 %v6618, 56
        %v6790 = vpop.permute.xlu0 %6789
        %6791 = vrot.lane.b32.xlu0 %v6619, 56
        %v6792 = vpop.permute.xlu0 %6791
        %6793 = vrot.lane.b32.xlu0 %v6620, 56
        %v6794 = vpop.permute.xlu0 %6793
        %6795 = vrot.lane.b32.xlu0 %v6621, 56
        %v6796 = vpop.permute.xlu0 %6795
        %6797 = vrot.lane.b32.xlu0 %v6622, 56
        %v6798 = vpop.permute.xlu0 %6797
        %6799 = vrot.lane.b32.xlu0 %v6623, 56
        %v6800 = vpop.permute.xlu0 %6799
        %6801 = vrot.lane.b32.xlu0 %v6624, 56
        %v6802 = vpop.permute.xlu0 %6801
        %6803 = vrot.lane.b32.xlu0 %v6625, 56
        %v6804 = vpop.permute.xlu0 %6803
        %6805 = vrot.lane.b32.xlu0 %v6626, 56
        %v6806 = vpop.permute.xlu0 %6805
        %6807 = vrot.lane.b32.xlu0 %v6627, 56
        %v6808 = vpop.permute.xlu0 %6807
        %6809 = vrot.lane.b32.xlu0 %v6628, 56
        %v6810 = vpop.permute.xlu0 %6809
        %6811 = vrot.lane.b32.xlu0 %v6629, 56
        %v6812 = vpop.permute.xlu0 %6811
        %6813 = vrot.lane.b32.xlu0 %v6630, 56
        %v6814 = vpop.permute.xlu0 %6813
        %6815 = vrot.lane.b32.xlu0 %v6631, 56
        %v6816 = vpop.permute.xlu0 %6815
        %6817 = vrot.lane.b32.xlu0 %v6632, 56
        %v6818 = vpop.permute.xlu0 %6817
        %6819 = vrot.lane.b32.xlu0 %v6633, 56
        %v6820 = vpop.permute.xlu0 %6819
        %6821 = vrot.lane.b32.xlu0 %v6634, 56
        %v6822 = vpop.permute.xlu0 %6821
        %6823 = vrot.lane.b32.xlu0 %v6635, 56
        %v6824 = vpop.permute.xlu0 %6823
        %6825 = vrot.lane.b32.xlu0 %v6636, 56
        %v6826 = vpop.permute.xlu0 %6825
        %6827 = vrot.lane.b32.xlu0 %v6637, 56
        %v6828 = vpop.permute.xlu0 %6827
        %6829 = vrot.lane.b32.xlu0 %v6638, 56
        %v6830 = vpop.permute.xlu0 %6829
        %6831 = vrot.lane.b32.xlu0 %v6639, 56
        %v6832 = vpop.permute.xlu0 %6831
        %6833 = vrot.lane.b32.xlu0 %v6640, 56
        %v6834 = vpop.permute.xlu0 %6833
        %6835 = vrot.lane.b32.xlu0 %v6641, 56
        %v6836 = vpop.permute.xlu0 %6835
        %6837 = vrot.lane.b32.xlu0 %v6642, 56
        %v6838 = vpop.permute.xlu0 %6837
        %6839 = vrot.lane.b32.xlu0 %v6643, 56
        %v6840 = vpop.permute.xlu0 %6839
        %6841 = vrot.lane.b32.xlu0 %v6644, 56
        %v6842 = vpop.permute.xlu0 %6841
        %6843 = vrot.lane.b32.xlu0 %v6645, 56
        %v6844 = vpop.permute.xlu0 %6843
        %6845 = vrot.lane.b32.xlu0 %v6646, 56
        %v6846 = vpop.permute.xlu0 %6845
        %6847 = vrot.lane.b32.xlu0 %v6647, 56
        %v6848 = vpop.permute.xlu0 %6847
        %6849 = vrot.lane.b32.xlu0 %v6648, 56
        %v6850 = vpop.permute.xlu0 %6849
        %6851 = vrot.lane.b32.xlu0 %v6649, 56
        %v6852 = vpop.permute.xlu0 %6851
        %6853 = vrot.lane.b32.xlu0 %v6650, 56
        %v6854 = vpop.permute.xlu0 %6853
        %6855 = vrot.lane.b32.xlu0 %v6651, 56
        %v6856 = vpop.permute.xlu0 %6855
        %6857 = vrot.lane.b32.xlu0 %v6652, 56
        %v6858 = vpop.permute.xlu0 %6857
        %6859 = vrot.lane.b32.xlu0 %v6653, 56
        %v6860 = vpop.permute.xlu0 %6859
        %6861 = vrot.lane.b32.xlu0 %v6654, 56
        %v6862 = vpop.permute.xlu0 %6861
        %6863 = vrot.lane.b32.xlu0 %v6655, 56
        %v6864 = vpop.permute.xlu0 %6863
        %6865 = vrot.lane.b32.xlu0 %v6656, 56
        %v6866 = vpop.permute.xlu0 %6865
        %6867 = vrot.lane.b32.xlu0 %v6657, 56
        %v6868 = vpop.permute.xlu0 %6867
        %6869 = vrot.lane.b32.xlu0 %v6658, 56
        %v6870 = vpop.permute.xlu0 %6869
        %6871 = vrot.lane.b32.xlu0 %v6659, 56
        %v6872 = vpop.permute.xlu0 %6871
        %6873 = vrot.lane.b32.xlu0 %v6660, 56
        %v6874 = vpop.permute.xlu0 %6873
        %6875 = vrot.lane.b32.xlu0 %v6661, 56
        %v6876 = vpop.permute.xlu0 %6875
        %6877 = vrot.lane.b32.xlu0 %v6662, 56
        %v6878 = vpop.permute.xlu0 %6877
        %vm6879 = vcmask 457728
        %v6880 = vsel %vm6879, %v6736, %v6738
        %v6881 = vsel %vm6879, %v6738, %v6740
        %v6882 = vsel %vm6879, %v6740, %v6742
        %v6883 = vsel %vm6879, %v6742, %v6744
        %v6884 = vsel %vm6879, %v6744, %v6746
        %v6885 = vsel %vm6879, %v6746, %v6748
        %v6886 = vsel %vm6879, %v6748, %v6750
        %v6887 = vsel %vm6879, %v6750, %v6752
        %v6888 = vsel %vm6879, %v6754, %v6756
        %v6889 = vsel %vm6879, %v6756, %v6758
        %v6890 = vsel %vm6879, %v6758, %v6760
        %v6891 = vsel %vm6879, %v6760, %v6762
        %v6892 = vsel %vm6879, %v6762, %v6764
        %v6893 = vsel %vm6879, %v6764, %v6766
        %v6894 = vsel %vm6879, %v6766, %v6768
        %v6895 = vsel %vm6879, %v6768, %v6770
        %v6896 = vsel %vm6879, %v6772, %v6774
        %v6897 = vsel %vm6879, %v6774, %v6776
        %v6898 = vsel %vm6879, %v6776, %v6778
        %v6899 = vsel %vm6879, %v6778, %v6780
        %v6900 = vsel %vm6879, %v6780, %v6782
        %v6901 = vsel %vm6879, %v6782, %v6784
        %v6902 = vsel %vm6879, %v6784, %v6786
        %v6903 = vsel %vm6879, %v6786, %v6788
        %v6904 = vsel %vm6879, %v6790, %v6792
        %v6905 = vsel %vm6879, %v6792, %v6794
        %v6906 = vsel %vm6879, %v6794, %v6796
        %v6907 = vsel %vm6879, %v6796, %v6798
        %v6908 = vsel %vm6879, %v6798, %v6800
        %v6909 = vsel %vm6879, %v6800, %v6802
        %v6910 = vsel %vm6879, %v6802, %v6804
        %v6911 = vsel %vm6879, %v6804, %v6806
        %v6912 = vsel %vm6879, %v6808, %v6810
        %v6913 = vsel %vm6879, %v6810, %v6812
        %v6914 = vsel %vm6879, %v6812, %v6814
        %v6915 = vsel %vm6879, %v6814, %v6816
        %v6916 = vsel %vm6879, %v6816, %v6818
        %v6917 = vsel %vm6879, %v6818, %v6820
        %v6918 = vsel %vm6879, %v6820, %v6822
        %v6919 = vsel %vm6879, %v6822, %v6824
        %v6920 = vsel %vm6879, %v6826, %v6828
        %v6921 = vsel %vm6879, %v6828, %v6830
        %v6922 = vsel %vm6879, %v6830, %v6832
        %v6923 = vsel %vm6879, %v6832, %v6834
        %v6924 = vsel %vm6879, %v6834, %v6836
        %v6925 = vsel %vm6879, %v6836, %v6838
        %v6926 = vsel %vm6879, %v6838, %v6840
        %v6927 = vsel %vm6879, %v6840, %v6842
        %v6928 = vsel %vm6879, %v6844, %v6846
        %v6929 = vsel %vm6879, %v6846, %v6848
        %v6930 = vsel %vm6879, %v6848, %v6850
        %v6931 = vsel %vm6879, %v6850, %v6852
        %v6932 = vsel %vm6879, %v6852, %v6854
        %v6933 = vsel %vm6879, %v6854, %v6856
        %v6934 = vsel %vm6879, %v6856, %v6858
        %v6935 = vsel %vm6879, %v6858, %v6860
        %v6936 = vsel %vm6879, %v6862, %v6864
        %v6937 = vsel %vm6879, %v6864, %v6866
        %v6938 = vsel %vm6879, %v6866, %v6868
        %v6939 = vsel %vm6879, %v6868, %v6870
        %v6940 = vsel %vm6879, %v6870, %v6872
        %v6941 = vsel %vm6879, %v6872, %v6874
        %v6942 = vsel %vm6879, %v6874, %v6876
        %v6943 = vsel %vm6879, %v6876, %v6878
        %v7016 = vadd.f32 %v5854, %v6880
        %v7017 = vadd.f32 %v5855, %v6881
        %v7018 = vadd.f32 %v5856, %v6882
        %v7019 = vadd.f32 %v5857, %v6883
        %v7020 = vadd.f32 %v5858, %v6884
        %v7021 = vadd.f32 %v5859, %v6885
        %v7022 = vadd.f32 %v5860, %v6886
        %v7023 = vadd.f32 %v5861, %v6887
        %v7024 = vadd.f32 %v5862, %v6752
        %v7025 = vadd.f32 %v5863, %v6888
        %v7026 = vadd.f32 %v5864, %v6889
        %v7027 = vadd.f32 %v5865, %v6890
        %v7028 = vadd.f32 %v5866, %v6891
        %v7029 = vadd.f32 %v5867, %v6892
        %v7030 = vadd.f32 %v5868, %v6893
        %v7031 = vadd.f32 %v5869, %v6894
        %v7032 = vadd.f32 %v5870, %v6895
        %v7033 = vadd.f32 %v5871, %v6770
        %v7034 = vadd.f32 %v5872, %v6896
        %v7035 = vadd.f32 %v5873, %v6897
        %v7036 = vadd.f32 %v5874, %v6898
        %v7037 = vadd.f32 %v5875, %v6899
        %v7038 = vadd.f32 %v5876, %v6900
        %v7039 = vadd.f32 %v5877, %v6901
        %v7040 = vadd.f32 %v5878, %v6902
        %v7041 = vadd.f32 %v5879, %v6903
        %v7042 = vadd.f32 %v5880, %v6788
        %v7043 = vadd.f32 %v5881, %v6904
        %v7044 = vadd.f32 %v5882, %v6905
        %v7045 = vadd.f32 %v5883, %v6906
        %v7046 = vadd.f32 %v5884, %v6907
        %v7047 = vadd.f32 %v5885, %v6908
        %v7048 = vadd.f32 %v5886, %v6909
        %v7049 = vadd.f32 %v5887, %v6910
        %v7050 = vadd.f32 %v5888, %v6911
        %v7051 = vadd.f32 %v5889, %v6806
        %v7052 = vadd.f32 %v5890, %v6912
        %v7053 = vadd.f32 %v5891, %v6913
        %v7054 = vadd.f32 %v5892, %v6914
        %v7055 = vadd.f32 %v5893, %v6915
        %v7056 = vadd.f32 %v5894, %v6916
        %v7057 = vadd.f32 %v5895, %v6917
        %v7058 = vadd.f32 %v5896, %v6918
        %v7059 = vadd.f32 %v5897, %v6919
        %v7060 = vadd.f32 %v5898, %v6824
        %v7061 = vadd.f32 %v5899, %v6920
        %v7062 = vadd.f32 %v5900, %v6921
        %v7063 = vadd.f32 %v5901, %v6922
        %v7064 = vadd.f32 %v5902, %v6923
        %v7065 = vadd.f32 %v5903, %v6924
        %v7066 = vadd.f32 %v5904, %v6925
        %v7067 = vadd.f32 %v5905, %v6926
        %v7068 = vadd.f32 %v5906, %v6927
        %v7069 = vadd.f32 %v5907, %v6842
        %v7070 = vadd.f32 %v5908, %v6928
        %v7071 = vadd.f32 %v5909, %v6929
        %v7072 = vadd.f32 %v5910, %v6930
        %v7073 = vadd.f32 %v5911, %v6931
        %v7074 = vadd.f32 %v5912, %v6932
        %v7075 = vadd.f32 %v5913, %v6933
        %v7076 = vadd.f32 %v5914, %v6934
        %v7077 = vadd.f32 %v5915, %v6935
        %v7078 = vadd.f32 %v5916, %v6860
        %v7079 = vadd.f32 %v5917, %v6936
        %v7080 = vadd.f32 %v5918, %v6937
        %v7081 = vadd.f32 %v5919, %v6938
        %v7082 = vadd.f32 %v5920, %v6939
        %v7083 = vadd.f32 %v5921, %v6940
        %v7084 = vadd.f32 %v5922, %v6941
        %v7085 = vadd.f32 %v5923, %v6942
        %v7086 = vadd.f32 %v5924, %v6943
        %v7087 = vadd.f32 %v5925, %v6878
        %s7088 = scalar_lea.vmem %s2, 224
        %v7089 = vld [vmem:[%s7088] sm:$0xf]
        %v7090 = vld [vmem:[%s7088 + $0x4] sm:$0xf]
        %v7091 = vld [vmem:[%s7088 + $0x8] sm:$0xf]
        %v7092 = vld [vmem:[%s7088 + $0xc] sm:$0xf]
        %v7093 = vld [vmem:[%s7088 + $0x10] sm:$0xf]
        %v7094 = vld [vmem:[%s7088 + $0x14] sm:$0xf]
        %v7095 = vld [vmem:[%s7088 + $0x18] sm:$0xf]
        %v7096 = vld [vmem:[%s7088 + $0x1c] sm:$0xf]
        %v7097 = vunpack.c.l.bf16 %v7089
        %v7098 = vunpack.c.l.bf16 %v7090
        %v7099 = vunpack.c.l.bf16 %v7091
        %v7100 = vunpack.c.l.bf16 %v7092
        %v7101 = vunpack.c.l.bf16 %v7093
        %v7102 = vunpack.c.l.bf16 %v7094
        %v7103 = vunpack.c.l.bf16 %v7095
        %v7104 = vunpack.c.l.bf16 %v7096
        %7106 = vset.pattern.permute.xlu0 0
        %7107 = vperm.xlu0 %7106, %v7097
        %v7108 = vpop.permute.xlu0 %7107
        %7111 = vset.pattern.permute.xlu0 0
        %7112 = vperm.xlu0 %7111, %v7098
        %v7113 = vpop.permute.xlu0 %7112
        %7116 = vset.pattern.permute.xlu0 0
        %7117 = vperm.xlu0 %7116, %v7099
        %v7118 = vpop.permute.xlu0 %7117
        %7121 = vset.pattern.permute.xlu0 0
        %7122 = vperm.xlu0 %7121, %v7100
        %v7123 = vpop.permute.xlu0 %7122
        %7126 = vset.pattern.permute.xlu0 0
        %7127 = vperm.xlu0 %7126, %v7101
        %v7128 = vpop.permute.xlu0 %7127
        %7131 = vset.pattern.permute.xlu0 0
        %7132 = vperm.xlu0 %7131, %v7102
        %v7133 = vpop.permute.xlu0 %7132
        %7136 = vset.pattern.permute.xlu0 0
        %7137 = vperm.xlu0 %7136, %v7103
        %v7138 = vpop.permute.xlu0 %7137
        %7141 = vset.pattern.permute.xlu0 0
        %7142 = vperm.xlu0 %7141, %v7104
        %v7143 = vpop.permute.xlu0 %7142
        %v7145 = vmul.f32 %v7108, %v6044
        %v7146 = vmul.f32 %v7108, %v6048
        %v7147 = vmul.f32 %v7108, %v6052
        %v7148 = vmul.f32 %v7108, %v6056
        %v7149 = vmul.f32 %v7108, %v6060
        %v7150 = vmul.f32 %v7108, %v6064
        %v7151 = vmul.f32 %v7108, %v6068
        %v7152 = vmul.f32 %v7108, %v6072
        %v7153 = vmul.f32 %v7108, %v6076
        %v7154 = vmul.f32 %v7113, %v6044
        %v7155 = vmul.f32 %v7113, %v6048
        %v7156 = vmul.f32 %v7113, %v6052
        %v7157 = vmul.f32 %v7113, %v6056
        %v7158 = vmul.f32 %v7113, %v6060
        %v7159 = vmul.f32 %v7113, %v6064
        %v7160 = vmul.f32 %v7113, %v6068
        %v7161 = vmul.f32 %v7113, %v6072
        %v7162 = vmul.f32 %v7113, %v6076
        %v7163 = vmul.f32 %v7118, %v6044
        %v7164 = vmul.f32 %v7118, %v6048
        %v7165 = vmul.f32 %v7118, %v6052
        %v7166 = vmul.f32 %v7118, %v6056
        %v7167 = vmul.f32 %v7118, %v6060
        %v7168 = vmul.f32 %v7118, %v6064
        %v7169 = vmul.f32 %v7118, %v6068
        %v7170 = vmul.f32 %v7118, %v6072
        %v7171 = vmul.f32 %v7118, %v6076
        %v7172 = vmul.f32 %v7123, %v6044
        %v7173 = vmul.f32 %v7123, %v6048
        %v7174 = vmul.f32 %v7123, %v6052
        %v7175 = vmul.f32 %v7123, %v6056
        %v7176 = vmul.f32 %v7123, %v6060
        %v7177 = vmul.f32 %v7123, %v6064
        %v7178 = vmul.f32 %v7123, %v6068
        %v7179 = vmul.f32 %v7123, %v6072
        %v7180 = vmul.f32 %v7123, %v6076
        %v7181 = vmul.f32 %v7128, %v6044
        %v7182 = vmul.f32 %v7128, %v6048
        %v7183 = vmul.f32 %v7128, %v6052
        %v7184 = vmul.f32 %v7128, %v6056
        %v7185 = vmul.f32 %v7128, %v6060
        %v7186 = vmul.f32 %v7128, %v6064
        %v7187 = vmul.f32 %v7128, %v6068
        %v7188 = vmul.f32 %v7128, %v6072
        %v7189 = vmul.f32 %v7128, %v6076
        %v7190 = vmul.f32 %v7133, %v6044
        %v7191 = vmul.f32 %v7133, %v6048
        %v7192 = vmul.f32 %v7133, %v6052
        %v7193 = vmul.f32 %v7133, %v6056
        %v7194 = vmul.f32 %v7133, %v6060
        %v7195 = vmul.f32 %v7133, %v6064
        %v7196 = vmul.f32 %v7133, %v6068
        %v7197 = vmul.f32 %v7133, %v6072
        %v7198 = vmul.f32 %v7133, %v6076
        %v7199 = vmul.f32 %v7138, %v6044
        %v7200 = vmul.f32 %v7138, %v6048
        %v7201 = vmul.f32 %v7138, %v6052
        %v7202 = vmul.f32 %v7138, %v6056
        %v7203 = vmul.f32 %v7138, %v6060
        %v7204 = vmul.f32 %v7138, %v6064
        %v7205 = vmul.f32 %v7138, %v6068
        %v7206 = vmul.f32 %v7138, %v6072
        %v7207 = vmul.f32 %v7138, %v6076
        %v7208 = vmul.f32 %v7143, %v6044
        %v7209 = vmul.f32 %v7143, %v6048
        %v7210 = vmul.f32 %v7143, %v6052
        %v7211 = vmul.f32 %v7143, %v6056
        %v7212 = vmul.f32 %v7143, %v6060
        %v7213 = vmul.f32 %v7143, %v6064
        %v7214 = vmul.f32 %v7143, %v6068
        %v7215 = vmul.f32 %v7143, %v6072
        %v7216 = vmul.f32 %v7143, %v6076
        %7217 = vset.pattern.permute.xlu0 1
        %7218 = vperm.xlu0 %7217, %v7097
        %v7219 = vpop.permute.xlu0 %7218
        %7221 = vset.pattern.permute.xlu0 1
        %7222 = vperm.xlu0 %7221, %v7098
        %v7223 = vpop.permute.xlu0 %7222
        %7225 = vset.pattern.permute.xlu0 1
        %7226 = vperm.xlu0 %7225, %v7099
        %v7227 = vpop.permute.xlu0 %7226
        %7229 = vset.pattern.permute.xlu0 1
        %7230 = vperm.xlu0 %7229, %v7100
        %v7231 = vpop.permute.xlu0 %7230
        %7233 = vset.pattern.permute.xlu0 1
        %7234 = vperm.xlu0 %7233, %v7101
        %v7235 = vpop.permute.xlu0 %7234
        %7237 = vset.pattern.permute.xlu0 1
        %7238 = vperm.xlu0 %7237, %v7102
        %v7239 = vpop.permute.xlu0 %7238
        %7241 = vset.pattern.permute.xlu0 1
        %7242 = vperm.xlu0 %7241, %v7103
        %v7243 = vpop.permute.xlu0 %7242
        %7245 = vset.pattern.permute.xlu0 1
        %7246 = vperm.xlu0 %7245, %v7104
        %v7247 = vpop.permute.xlu0 %7246
        %v7249 = vmul.f32 %v7219, %v6229
        %v7250 = vmul.f32 %v7219, %v6233
        %v7251 = vmul.f32 %v7219, %v6237
        %v7252 = vmul.f32 %v7219, %v6241
        %v7253 = vmul.f32 %v7219, %v6245
        %v7254 = vmul.f32 %v7219, %v6249
        %v7255 = vmul.f32 %v7219, %v6253
        %v7256 = vmul.f32 %v7219, %v6257
        %v7257 = vmul.f32 %v7219, %v6261
        %v7258 = vmul.f32 %v7223, %v6229
        %v7259 = vmul.f32 %v7223, %v6233
        %v7260 = vmul.f32 %v7223, %v6237
        %v7261 = vmul.f32 %v7223, %v6241
        %v7262 = vmul.f32 %v7223, %v6245
        %v7263 = vmul.f32 %v7223, %v6249
        %v7264 = vmul.f32 %v7223, %v6253
        %v7265 = vmul.f32 %v7223, %v6257
        %v7266 = vmul.f32 %v7223, %v6261
        %v7267 = vmul.f32 %v7227, %v6229
        %v7268 = vmul.f32 %v7227, %v6233
        %v7269 = vmul.f32 %v7227, %v6237
        %v7270 = vmul.f32 %v7227, %v6241
        %v7271 = vmul.f32 %v7227, %v6245
        %v7272 = vmul.f32 %v7227, %v6249
        %v7273 = vmul.f32 %v7227, %v6253
        %v7274 = vmul.f32 %v7227, %v6257
        %v7275 = vmul.f32 %v7227, %v6261
        %v7276 = vmul.f32 %v7231, %v6229
        %v7277 = vmul.f32 %v7231, %v6233
        %v7278 = vmul.f32 %v7231, %v6237
        %v7279 = vmul.f32 %v7231, %v6241
        %v7280 = vmul.f32 %v7231, %v6245
        %v7281 = vmul.f32 %v7231, %v6249
        %v7282 = vmul.f32 %v7231, %v6253
        %v7283 = vmul.f32 %v7231, %v6257
        %v7284 = vmul.f32 %v7231, %v6261
        %v7285 = vmul.f32 %v7235, %v6229
        %v7286 = vmul.f32 %v7235, %v6233
        %v7287 = vmul.f32 %v7235, %v6237
        %v7288 = vmul.f32 %v7235, %v6241
        %v7289 = vmul.f32 %v7235, %v6245
        %v7290 = vmul.f32 %v7235, %v6249
        %v7291 = vmul.f32 %v7235, %v6253
        %v7292 = vmul.f32 %v7235, %v6257
        %v7293 = vmul.f32 %v7235, %v6261
        %v7294 = vmul.f32 %v7239, %v6229
        %v7295 = vmul.f32 %v7239, %v6233
        %v7296 = vmul.f32 %v7239, %v6237
        %v7297 = vmul.f32 %v7239, %v6241
        %v7298 = vmul.f32 %v7239, %v6245
        %v7299 = vmul.f32 %v7239, %v6249
        %v7300 = vmul.f32 %v7239, %v6253
        %v7301 = vmul.f32 %v7239, %v6257
        %v7302 = vmul.f32 %v7239, %v6261
        %v7303 = vmul.f32 %v7243, %v6229
        %v7304 = vmul.f32 %v7243, %v6233
        %v7305 = vmul.f32 %v7243, %v6237
        %v7306 = vmul.f32 %v7243, %v6241
        %v7307 = vmul.f32 %v7243, %v6245
        %v7308 = vmul.f32 %v7243, %v6249
        %v7309 = vmul.f32 %v7243, %v6253
        %v7310 = vmul.f32 %v7243, %v6257
        %v7311 = vmul.f32 %v7243, %v6261
        %v7312 = vmul.f32 %v7247, %v6229
        %v7313 = vmul.f32 %v7247, %v6233
        %v7314 = vmul.f32 %v7247, %v6237
        %v7315 = vmul.f32 %v7247, %v6241
        %v7316 = vmul.f32 %v7247, %v6245
        %v7317 = vmul.f32 %v7247, %v6249
        %v7318 = vmul.f32 %v7247, %v6253
        %v7319 = vmul.f32 %v7247, %v6257
        %v7320 = vmul.f32 %v7247, %v6261
        %v7321 = vadd.f32 %v7145, %v7249
        %v7322 = vadd.f32 %v7146, %v7250
        %v7323 = vadd.f32 %v7147, %v7251
        %v7324 = vadd.f32 %v7148, %v7252
        %v7325 = vadd.f32 %v7149, %v7253
        %v7326 = vadd.f32 %v7150, %v7254
        %v7327 = vadd.f32 %v7151, %v7255
        %v7328 = vadd.f32 %v7152, %v7256
        %v7329 = vadd.f32 %v7153, %v7257
        %v7330 = vadd.f32 %v7154, %v7258
        %v7331 = vadd.f32 %v7155, %v7259
        %v7332 = vadd.f32 %v7156, %v7260
        %v7333 = vadd.f32 %v7157, %v7261
        %v7334 = vadd.f32 %v7158, %v7262
        %v7335 = vadd.f32 %v7159, %v7263
        %v7336 = vadd.f32 %v7160, %v7264
        %v7337 = vadd.f32 %v7161, %v7265
        %v7338 = vadd.f32 %v7162, %v7266
        %v7339 = vadd.f32 %v7163, %v7267
        %v7340 = vadd.f32 %v7164, %v7268
        %v7341 = vadd.f32 %v7165, %v7269
        %v7342 = vadd.f32 %v7166, %v7270
        %v7343 = vadd.f32 %v7167, %v7271
        %v7344 = vadd.f32 %v7168, %v7272
        %v7345 = vadd.f32 %v7169, %v7273
        %v7346 = vadd.f32 %v7170, %v7274
        %v7347 = vadd.f32 %v7171, %v7275
        %v7348 = vadd.f32 %v7172, %v7276
        %v7349 = vadd.f32 %v7173, %v7277
        %v7350 = vadd.f32 %v7174, %v7278
        %v7351 = vadd.f32 %v7175, %v7279
        %v7352 = vadd.f32 %v7176, %v7280
        %v7353 = vadd.f32 %v7177, %v7281
        %v7354 = vadd.f32 %v7178, %v7282
        %v7355 = vadd.f32 %v7179, %v7283
        %v7356 = vadd.f32 %v7180, %v7284
        %v7357 = vadd.f32 %v7181, %v7285
        %v7358 = vadd.f32 %v7182, %v7286
        %v7359 = vadd.f32 %v7183, %v7287
        %v7360 = vadd.f32 %v7184, %v7288
        %v7361 = vadd.f32 %v7185, %v7289
        %v7362 = vadd.f32 %v7186, %v7290
        %v7363 = vadd.f32 %v7187, %v7291
        %v7364 = vadd.f32 %v7188, %v7292
        %v7365 = vadd.f32 %v7189, %v7293
        %v7366 = vadd.f32 %v7190, %v7294
        %v7367 = vadd.f32 %v7191, %v7295
        %v7368 = vadd.f32 %v7192, %v7296
        %v7369 = vadd.f32 %v7193, %v7297
        %v7370 = vadd.f32 %v7194, %v7298
        %v7371 = vadd.f32 %v7195, %v7299
        %v7372 = vadd.f32 %v7196, %v7300
        %v7373 = vadd.f32 %v7197, %v7301
        %v7374 = vadd.f32 %v7198, %v7302
        %v7375 = vadd.f32 %v7199, %v7303
        %v7376 = vadd.f32 %v7200, %v7304
        %v7377 = vadd.f32 %v7201, %v7305
        %v7378 = vadd.f32 %v7202, %v7306
        %v7379 = vadd.f32 %v7203, %v7307
        %v7380 = vadd.f32 %v7204, %v7308
        %v7381 = vadd.f32 %v7205, %v7309
        %v7382 = vadd.f32 %v7206, %v7310
        %v7383 = vadd.f32 %v7207, %v7311
        %v7384 = vadd.f32 %v7208, %v7312
        %v7385 = vadd.f32 %v7209, %v7313
        %v7386 = vadd.f32 %v7210, %v7314
        %v7387 = vadd.f32 %v7211, %v7315
        %v7388 = vadd.f32 %v7212, %v7316
        %v7389 = vadd.f32 %v7213, %v7317
        %v7390 = vadd.f32 %v7214, %v7318
        %v7391 = vadd.f32 %v7215, %v7319
        %v7392 = vadd.f32 %v7216, %v7320
        %7393 = vset.pattern.permute.xlu0 2
        %7394 = vperm.xlu0 %7393, %v7097
        %v7395 = vpop.permute.xlu0 %7394
        %7397 = vset.pattern.permute.xlu0 2
        %7398 = vperm.xlu0 %7397, %v7098
        %v7399 = vpop.permute.xlu0 %7398
        %7401 = vset.pattern.permute.xlu0 2
        %7402 = vperm.xlu0 %7401, %v7099
        %v7403 = vpop.permute.xlu0 %7402
        %7405 = vset.pattern.permute.xlu0 2
        %7406 = vperm.xlu0 %7405, %v7100
        %v7407 = vpop.permute.xlu0 %7406
        %7409 = vset.pattern.permute.xlu0 2
        %7410 = vperm.xlu0 %7409, %v7101
        %v7411 = vpop.permute.xlu0 %7410
        %7413 = vset.pattern.permute.xlu0 2
        %7414 = vperm.xlu0 %7413, %v7102
        %v7415 = vpop.permute.xlu0 %7414
        %7417 = vset.pattern.permute.xlu0 2
        %7418 = vperm.xlu0 %7417, %v7103
        %v7419 = vpop.permute.xlu0 %7418
        %7421 = vset.pattern.permute.xlu0 2
        %7422 = vperm.xlu0 %7421, %v7104
        %v7423 = vpop.permute.xlu0 %7422
        %v7425 = vmul.f32 %v7395, %v6486
        %v7426 = vmul.f32 %v7395, %v6490
        %v7427 = vmul.f32 %v7395, %v6494
        %v7428 = vmul.f32 %v7395, %v6498
        %v7429 = vmul.f32 %v7395, %v6502
        %v7430 = vmul.f32 %v7395, %v6506
        %v7431 = vmul.f32 %v7395, %v6510
        %v7432 = vmul.f32 %v7395, %v6514
        %v7433 = vmul.f32 %v7395, %v6518
        %v7434 = vmul.f32 %v7399, %v6486
        %v7435 = vmul.f32 %v7399, %v6490
        %v7436 = vmul.f32 %v7399, %v6494
        %v7437 = vmul.f32 %v7399, %v6498
        %v7438 = vmul.f32 %v7399, %v6502
        %v7439 = vmul.f32 %v7399, %v6506
        %v7440 = vmul.f32 %v7399, %v6510
        %v7441 = vmul.f32 %v7399, %v6514
        %v7442 = vmul.f32 %v7399, %v6518
        %v7443 = vmul.f32 %v7403, %v6486
        %v7444 = vmul.f32 %v7403, %v6490
        %v7445 = vmul.f32 %v7403, %v6494
        %v7446 = vmul.f32 %v7403, %v6498
        %v7447 = vmul.f32 %v7403, %v6502
        %v7448 = vmul.f32 %v7403, %v6506
        %v7449 = vmul.f32 %v7403, %v6510
        %v7450 = vmul.f32 %v7403, %v6514
        %v7451 = vmul.f32 %v7403, %v6518
        %v7452 = vmul.f32 %v7407, %v6486
        %v7453 = vmul.f32 %v7407, %v6490
        %v7454 = vmul.f32 %v7407, %v6494
        %v7455 = vmul.f32 %v7407, %v6498
        %v7456 = vmul.f32 %v7407, %v6502
        %v7457 = vmul.f32 %v7407, %v6506
        %v7458 = vmul.f32 %v7407, %v6510
        %v7459 = vmul.f32 %v7407, %v6514
        %v7460 = vmul.f32 %v7407, %v6518
        %v7461 = vmul.f32 %v7411, %v6486
        %v7462 = vmul.f32 %v7411, %v6490
        %v7463 = vmul.f32 %v7411, %v6494
        %v7464 = vmul.f32 %v7411, %v6498
        %v7465 = vmul.f32 %v7411, %v6502
        %v7466 = vmul.f32 %v7411, %v6506
        %v7467 = vmul.f32 %v7411, %v6510
        %v7468 = vmul.f32 %v7411, %v6514
        %v7469 = vmul.f32 %v7411, %v6518
        %v7470 = vmul.f32 %v7415, %v6486
        %v7471 = vmul.f32 %v7415, %v6490
        %v7472 = vmul.f32 %v7415, %v6494
        %v7473 = vmul.f32 %v7415, %v6498
        %v7474 = vmul.f32 %v7415, %v6502
        %v7475 = vmul.f32 %v7415, %v6506
        %v7476 = vmul.f32 %v7415, %v6510
        %v7477 = vmul.f32 %v7415, %v6514
        %v7478 = vmul.f32 %v7415, %v6518
        %v7479 = vmul.f32 %v7419, %v6486
        %v7480 = vmul.f32 %v7419, %v6490
        %v7481 = vmul.f32 %v7419, %v6494
        %v7482 = vmul.f32 %v7419, %v6498
        %v7483 = vmul.f32 %v7419, %v6502
        %v7484 = vmul.f32 %v7419, %v6506
        %v7485 = vmul.f32 %v7419, %v6510
        %v7486 = vmul.f32 %v7419, %v6514
        %v7487 = vmul.f32 %v7419, %v6518
        %v7488 = vmul.f32 %v7423, %v6486
        %v7489 = vmul.f32 %v7423, %v6490
        %v7490 = vmul.f32 %v7423, %v6494
        %v7491 = vmul.f32 %v7423, %v6498
        %v7492 = vmul.f32 %v7423, %v6502
        %v7493 = vmul.f32 %v7423, %v6506
        %v7494 = vmul.f32 %v7423, %v6510
        %v7495 = vmul.f32 %v7423, %v6514
        %v7496 = vmul.f32 %v7423, %v6518
        %v7497 = vadd.f32 %v7321, %v7425
        %v7498 = vadd.f32 %v7322, %v7426
        %v7499 = vadd.f32 %v7323, %v7427
        %v7500 = vadd.f32 %v7324, %v7428
        %v7501 = vadd.f32 %v7325, %v7429
        %v7502 = vadd.f32 %v7326, %v7430
        %v7503 = vadd.f32 %v7327, %v7431
        %v7504 = vadd.f32 %v7328, %v7432
        %v7505 = vadd.f32 %v7329, %v7433
        %v7506 = vadd.f32 %v7330, %v7434
        %v7507 = vadd.f32 %v7331, %v7435
        %v7508 = vadd.f32 %v7332, %v7436
        %v7509 = vadd.f32 %v7333, %v7437
        %v7510 = vadd.f32 %v7334, %v7438
        %v7511 = vadd.f32 %v7335, %v7439
        %v7512 = vadd.f32 %v7336, %v7440
        %v7513 = vadd.f32 %v7337, %v7441
        %v7514 = vadd.f32 %v7338, %v7442
        %v7515 = vadd.f32 %v7339, %v7443
        %v7516 = vadd.f32 %v7340, %v7444
        %v7517 = vadd.f32 %v7341, %v7445
        %v7518 = vadd.f32 %v7342, %v7446
        %v7519 = vadd.f32 %v7343, %v7447
        %v7520 = vadd.f32 %v7344, %v7448
        %v7521 = vadd.f32 %v7345, %v7449
        %v7522 = vadd.f32 %v7346, %v7450
        %v7523 = vadd.f32 %v7347, %v7451
        %v7524 = vadd.f32 %v7348, %v7452
        %v7525 = vadd.f32 %v7349, %v7453
        %v7526 = vadd.f32 %v7350, %v7454
        %v7527 = vadd.f32 %v7351, %v7455
        %v7528 = vadd.f32 %v7352, %v7456
        %v7529 = vadd.f32 %v7353, %v7457
        %v7530 = vadd.f32 %v7354, %v7458
        %v7531 = vadd.f32 %v7355, %v7459
        %v7532 = vadd.f32 %v7356, %v7460
        %v7533 = vadd.f32 %v7357, %v7461
        %v7534 = vadd.f32 %v7358, %v7462
        %v7535 = vadd.f32 %v7359, %v7463
        %v7536 = vadd.f32 %v7360, %v7464
        %v7537 = vadd.f32 %v7361, %v7465
        %v7538 = vadd.f32 %v7362, %v7466
        %v7539 = vadd.f32 %v7363, %v7467
        %v7540 = vadd.f32 %v7364, %v7468
        %v7541 = vadd.f32 %v7365, %v7469
        %v7542 = vadd.f32 %v7366, %v7470
        %v7543 = vadd.f32 %v7367, %v7471
        %v7544 = vadd.f32 %v7368, %v7472
        %v7545 = vadd.f32 %v7369, %v7473
        %v7546 = vadd.f32 %v7370, %v7474
        %v7547 = vadd.f32 %v7371, %v7475
        %v7548 = vadd.f32 %v7372, %v7476
        %v7549 = vadd.f32 %v7373, %v7477
        %v7550 = vadd.f32 %v7374, %v7478
        %v7551 = vadd.f32 %v7375, %v7479
        %v7552 = vadd.f32 %v7376, %v7480
        %v7553 = vadd.f32 %v7377, %v7481
        %v7554 = vadd.f32 %v7378, %v7482
        %v7555 = vadd.f32 %v7379, %v7483
        %v7556 = vadd.f32 %v7380, %v7484
        %v7557 = vadd.f32 %v7381, %v7485
        %v7558 = vadd.f32 %v7382, %v7486
        %v7559 = vadd.f32 %v7383, %v7487
        %v7560 = vadd.f32 %v7384, %v7488
        %v7561 = vadd.f32 %v7385, %v7489
        %v7562 = vadd.f32 %v7386, %v7490
        %v7563 = vadd.f32 %v7387, %v7491
        %v7564 = vadd.f32 %v7388, %v7492
        %v7565 = vadd.f32 %v7389, %v7493
        %v7566 = vadd.f32 %v7390, %v7494
        %v7567 = vadd.f32 %v7391, %v7495
        %v7568 = vadd.f32 %v7392, %v7496
        %7641 = vrot.lane.b32.xlu0 %v7497, 55
        %v7642 = vpop.permute.xlu0 %7641
        %7643 = vrot.lane.b32.xlu0 %v7498, 55
        %v7644 = vpop.permute.xlu0 %7643
        %7645 = vrot.lane.b32.xlu0 %v7499, 55
        %v7646 = vpop.permute.xlu0 %7645
        %7647 = vrot.lane.b32.xlu0 %v7500, 55
        %v7648 = vpop.permute.xlu0 %7647
        %7649 = vrot.lane.b32.xlu0 %v7501, 55
        %v7650 = vpop.permute.xlu0 %7649
        %7651 = vrot.lane.b32.xlu0 %v7502, 55
        %v7652 = vpop.permute.xlu0 %7651
        %7653 = vrot.lane.b32.xlu0 %v7503, 55
        %v7654 = vpop.permute.xlu0 %7653
        %7655 = vrot.lane.b32.xlu0 %v7504, 55
        %v7656 = vpop.permute.xlu0 %7655
        %7657 = vrot.lane.b32.xlu0 %v7505, 55
        %v7658 = vpop.permute.xlu0 %7657
        %7659 = vrot.lane.b32.xlu0 %v7506, 55
        %v7660 = vpop.permute.xlu0 %7659
        %7661 = vrot.lane.b32.xlu0 %v7507, 55
        %v7662 = vpop.permute.xlu0 %7661
        %7663 = vrot.lane.b32.xlu0 %v7508, 55
        %v7664 = vpop.permute.xlu0 %7663
        %7665 = vrot.lane.b32.xlu0 %v7509, 55
        %v7666 = vpop.permute.xlu0 %7665
        %7667 = vrot.lane.b32.xlu0 %v7510, 55
        %v7668 = vpop.permute.xlu0 %7667
        %7669 = vrot.lane.b32.xlu0 %v7511, 55
        %v7670 = vpop.permute.xlu0 %7669
        %7671 = vrot.lane.b32.xlu0 %v7512, 55
        %v7672 = vpop.permute.xlu0 %7671
        %7673 = vrot.lane.b32.xlu0 %v7513, 55
        %v7674 = vpop.permute.xlu0 %7673
        %7675 = vrot.lane.b32.xlu0 %v7514, 55
        %v7676 = vpop.permute.xlu0 %7675
        %7677 = vrot.lane.b32.xlu0 %v7515, 55
        %v7678 = vpop.permute.xlu0 %7677
        %7679 = vrot.lane.b32.xlu0 %v7516, 55
        %v7680 = vpop.permute.xlu0 %7679
        %7681 = vrot.lane.b32.xlu0 %v7517, 55
        %v7682 = vpop.permute.xlu0 %7681
        %7683 = vrot.lane.b32.xlu0 %v7518, 55
        %v7684 = vpop.permute.xlu0 %7683
        %7685 = vrot.lane.b32.xlu0 %v7519, 55
        %v7686 = vpop.permute.xlu0 %7685
        %7687 = vrot.lane.b32.xlu0 %v7520, 55
        %v7688 = vpop.permute.xlu0 %7687
        %7689 = vrot.lane.b32.xlu0 %v7521, 55
        %v7690 = vpop.permute.xlu0 %7689
        %7691 = vrot.lane.b32.xlu0 %v7522, 55
        %v7692 = vpop.permute.xlu0 %7691
        %7693 = vrot.lane.b32.xlu0 %v7523, 55
        %v7694 = vpop.permute.xlu0 %7693
        %7695 = vrot.lane.b32.xlu0 %v7524, 55
        %v7696 = vpop.permute.xlu0 %7695
        %7697 = vrot.lane.b32.xlu0 %v7525, 55
        %v7698 = vpop.permute.xlu0 %7697
        %7699 = vrot.lane.b32.xlu0 %v7526, 55
        %v7700 = vpop.permute.xlu0 %7699
        %7701 = vrot.lane.b32.xlu0 %v7527, 55
        %v7702 = vpop.permute.xlu0 %7701
        %7703 = vrot.lane.b32.xlu0 %v7528, 55
        %v7704 = vpop.permute.xlu0 %7703
        %7705 = vrot.lane.b32.xlu0 %v7529, 55
        %v7706 = vpop.permute.xlu0 %7705
        %7707 = vrot.lane.b32.xlu0 %v7530, 55
        %v7708 = vpop.permute.xlu0 %7707
        %7709 = vrot.lane.b32.xlu0 %v7531, 55
        %v7710 = vpop.permute.xlu0 %7709
        %7711 = vrot.lane.b32.xlu0 %v7532, 55
        %v7712 = vpop.permute.xlu0 %7711
        %7713 = vrot.lane.b32.xlu0 %v7533, 55
        %v7714 = vpop.permute.xlu0 %7713
        %7715 = vrot.lane.b32.xlu0 %v7534, 55
        %v7716 = vpop.permute.xlu0 %7715
        %7717 = vrot.lane.b32.xlu0 %v7535, 55
        %v7718 = vpop.permute.xlu0 %7717
        %7719 = vrot.lane.b32.xlu0 %v7536, 55
        %v7720 = vpop.permute.xlu0 %7719
        %7721 = vrot.lane.b32.xlu0 %v7537, 55
        %v7722 = vpop.permute.xlu0 %7721
        %7723 = vrot.lane.b32.xlu0 %v7538, 55
        %v7724 = vpop.permute.xlu0 %7723
        %7725 = vrot.lane.b32.xlu0 %v7539, 55
        %v7726 = vpop.permute.xlu0 %7725
        %7727 = vrot.lane.b32.xlu0 %v7540, 55
        %v7728 = vpop.permute.xlu0 %7727
        %7729 = vrot.lane.b32.xlu0 %v7541, 55
        %v7730 = vpop.permute.xlu0 %7729
        %7731 = vrot.lane.b32.xlu0 %v7542, 55
        %v7732 = vpop.permute.xlu0 %7731
        %7733 = vrot.lane.b32.xlu0 %v7543, 55
        %v7734 = vpop.permute.xlu0 %7733
        %7735 = vrot.lane.b32.xlu0 %v7544, 55
        %v7736 = vpop.permute.xlu0 %7735
        %7737 = vrot.lane.b32.xlu0 %v7545, 55
        %v7738 = vpop.permute.xlu0 %7737
        %7739 = vrot.lane.b32.xlu0 %v7546, 55
        %v7740 = vpop.permute.xlu0 %7739
        %7741 = vrot.lane.b32.xlu0 %v7547, 55
        %v7742 = vpop.permute.xlu0 %7741
        %7743 = vrot.lane.b32.xlu0 %v7548, 55
        %v7744 = vpop.permute.xlu0 %7743
        %7745 = vrot.lane.b32.xlu0 %v7549, 55
        %v7746 = vpop.permute.xlu0 %7745
        %7747 = vrot.lane.b32.xlu0 %v7550, 55
        %v7748 = vpop.permute.xlu0 %7747
        %7749 = vrot.lane.b32.xlu0 %v7551, 55
        %v7750 = vpop.permute.xlu0 %7749
        %7751 = vrot.lane.b32.xlu0 %v7552, 55
        %v7752 = vpop.permute.xlu0 %7751
        %7753 = vrot.lane.b32.xlu0 %v7553, 55
        %v7754 = vpop.permute.xlu0 %7753
        %7755 = vrot.lane.b32.xlu0 %v7554, 55
        %v7756 = vpop.permute.xlu0 %7755
        %7757 = vrot.lane.b32.xlu0 %v7555, 55
        %v7758 = vpop.permute.xlu0 %7757
        %7759 = vrot.lane.b32.xlu0 %v7556, 55
        %v7760 = vpop.permute.xlu0 %7759
        %7761 = vrot.lane.b32.xlu0 %v7557, 55
        %v7762 = vpop.permute.xlu0 %7761
        %7763 = vrot.lane.b32.xlu0 %v7558, 55
        %v7764 = vpop.permute.xlu0 %7763
        %7765 = vrot.lane.b32.xlu0 %v7559, 55
        %v7766 = vpop.permute.xlu0 %7765
        %7767 = vrot.lane.b32.xlu0 %v7560, 55
        %v7768 = vpop.permute.xlu0 %7767
        %7769 = vrot.lane.b32.xlu0 %v7561, 55
        %v7770 = vpop.permute.xlu0 %7769
        %7771 = vrot.lane.b32.xlu0 %v7562, 55
        %v7772 = vpop.permute.xlu0 %7771
        %7773 = vrot.lane.b32.xlu0 %v7563, 55
        %v7774 = vpop.permute.xlu0 %7773
        %7775 = vrot.lane.b32.xlu0 %v7564, 55
        %v7776 = vpop.permute.xlu0 %7775
        %7777 = vrot.lane.b32.xlu0 %v7565, 55
        %v7778 = vpop.permute.xlu0 %7777
        %7779 = vrot.lane.b32.xlu0 %v7566, 55
        %v7780 = vpop.permute.xlu0 %7779
        %7781 = vrot.lane.b32.xlu0 %v7567, 55
        %v7782 = vpop.permute.xlu0 %7781
        %7783 = vrot.lane.b32.xlu0 %v7568, 55
        %v7784 = vpop.permute.xlu0 %7783
        %vm7785 = vcmask 449536
        %v7786 = vsel %vm7785, %v7642, %v7644
        %v7787 = vsel %vm7785, %v7644, %v7646
        %v7788 = vsel %vm7785, %v7646, %v7648
        %v7789 = vsel %vm7785, %v7648, %v7650
        %v7790 = vsel %vm7785, %v7650, %v7652
        %v7791 = vsel %vm7785, %v7652, %v7654
        %v7792 = vsel %vm7785, %v7654, %v7656
        %v7793 = vsel %vm7785, %v7656, %v7658
        %v7794 = vsel %vm7785, %v7660, %v7662
        %v7795 = vsel %vm7785, %v7662, %v7664
        %v7796 = vsel %vm7785, %v7664, %v7666
        %v7797 = vsel %vm7785, %v7666, %v7668
        %v7798 = vsel %vm7785, %v7668, %v7670
        %v7799 = vsel %vm7785, %v7670, %v7672
        %v7800 = vsel %vm7785, %v7672, %v7674
        %v7801 = vsel %vm7785, %v7674, %v7676
        %v7802 = vsel %vm7785, %v7678, %v7680
        %v7803 = vsel %vm7785, %v7680, %v7682
        %v7804 = vsel %vm7785, %v7682, %v7684
        %v7805 = vsel %vm7785, %v7684, %v7686
        %v7806 = vsel %vm7785, %v7686, %v7688
        %v7807 = vsel %vm7785, %v7688, %v7690
        %v7808 = vsel %vm7785, %v7690, %v7692
        %v7809 = vsel %vm7785, %v7692, %v7694
        %v7810 = vsel %vm7785, %v7696, %v7698
        %v7811 = vsel %vm7785, %v7698, %v7700
        %v7812 = vsel %vm7785, %v7700, %v7702
        %v7813 = vsel %vm7785, %v7702, %v7704
        %v7814 = vsel %vm7785, %v7704, %v7706
        %v7815 = vsel %vm7785, %v7706, %v7708
        %v7816 = vsel %vm7785, %v7708, %v7710
        %v7817 = vsel %vm7785, %v7710, %v7712
        %v7818 = vsel %vm7785, %v7714, %v7716
        %v7819 = vsel %vm7785, %v7716, %v7718
        %v7820 = vsel %vm7785, %v7718, %v7720
        %v7821 = vsel %vm7785, %v7720, %v7722
        %v7822 = vsel %vm7785, %v7722, %v7724
        %v7823 = vsel %vm7785, %v7724, %v7726
        %v7824 = vsel %vm7785, %v7726, %v7728
        %v7825 = vsel %vm7785, %v7728, %v7730
        %v7826 = vsel %vm7785, %v7732, %v7734
        %v7827 = vsel %vm7785, %v7734, %v7736
        %v7828 = vsel %vm7785, %v7736, %v7738
        %v7829 = vsel %vm7785, %v7738, %v7740
        %v7830 = vsel %vm7785, %v7740, %v7742
        %v7831 = vsel %vm7785, %v7742, %v7744
        %v7832 = vsel %vm7785, %v7744, %v7746
        %v7833 = vsel %vm7785, %v7746, %v7748
        %v7834 = vsel %vm7785, %v7750, %v7752
        %v7835 = vsel %vm7785, %v7752, %v7754
        %v7836 = vsel %vm7785, %v7754, %v7756
        %v7837 = vsel %vm7785, %v7756, %v7758
        %v7838 = vsel %vm7785, %v7758, %v7760
        %v7839 = vsel %vm7785, %v7760, %v7762
        %v7840 = vsel %vm7785, %v7762, %v7764
        %v7841 = vsel %vm7785, %v7764, %v7766
        %v7842 = vsel %vm7785, %v7768, %v7770
        %v7843 = vsel %vm7785, %v7770, %v7772
        %v7844 = vsel %vm7785, %v7772, %v7774
        %v7845 = vsel %vm7785, %v7774, %v7776
        %v7846 = vsel %vm7785, %v7776, %v7778
        %v7847 = vsel %vm7785, %v7778, %v7780
        %v7848 = vsel %vm7785, %v7780, %v7782
        %v7849 = vsel %vm7785, %v7782, %v7784
        %v7922 = vadd.f32 %v7016, %v7786
        %v7923 = vadd.f32 %v7017, %v7787
        %v7924 = vadd.f32 %v7018, %v7788
        %v7925 = vadd.f32 %v7019, %v7789
        %v7926 = vadd.f32 %v7020, %v7790
        %v7927 = vadd.f32 %v7021, %v7791
        %v7928 = vadd.f32 %v7022, %v7792
        %v7929 = vadd.f32 %v7023, %v7793
        %v7930 = vadd.f32 %v7024, %v7658
        %v7931 = vadd.f32 %v7025, %v7794
        %v7932 = vadd.f32 %v7026, %v7795
        %v7933 = vadd.f32 %v7027, %v7796
        %v7934 = vadd.f32 %v7028, %v7797
        %v7935 = vadd.f32 %v7029, %v7798
        %v7936 = vadd.f32 %v7030, %v7799
        %v7937 = vadd.f32 %v7031, %v7800
        %v7938 = vadd.f32 %v7032, %v7801
        %v7939 = vadd.f32 %v7033, %v7676
        %v7940 = vadd.f32 %v7034, %v7802
        %v7941 = vadd.f32 %v7035, %v7803
        %v7942 = vadd.f32 %v7036, %v7804
        %v7943 = vadd.f32 %v7037, %v7805
        %v7944 = vadd.f32 %v7038, %v7806
        %v7945 = vadd.f32 %v7039, %v7807
        %v7946 = vadd.f32 %v7040, %v7808
        %v7947 = vadd.f32 %v7041, %v7809
        %v7948 = vadd.f32 %v7042, %v7694
        %v7949 = vadd.f32 %v7043, %v7810
        %v7950 = vadd.f32 %v7044, %v7811
        %v7951 = vadd.f32 %v7045, %v7812
        %v7952 = vadd.f32 %v7046, %v7813
        %v7953 = vadd.f32 %v7047, %v7814
        %v7954 = vadd.f32 %v7048, %v7815
        %v7955 = vadd.f32 %v7049, %v7816
        %v7956 = vadd.f32 %v7050, %v7817
        %v7957 = vadd.f32 %v7051, %v7712
        %v7958 = vadd.f32 %v7052, %v7818
        %v7959 = vadd.f32 %v7053, %v7819
        %v7960 = vadd.f32 %v7054, %v7820
        %v7961 = vadd.f32 %v7055, %v7821
        %v7962 = vadd.f32 %v7056, %v7822
        %v7963 = vadd.f32 %v7057, %v7823
        %v7964 = vadd.f32 %v7058, %v7824
        %v7965 = vadd.f32 %v7059, %v7825
        %v7966 = vadd.f32 %v7060, %v7730
        %v7967 = vadd.f32 %v7061, %v7826
        %v7968 = vadd.f32 %v7062, %v7827
        %v7969 = vadd.f32 %v7063, %v7828
        %v7970 = vadd.f32 %v7064, %v7829
        %v7971 = vadd.f32 %v7065, %v7830
        %v7972 = vadd.f32 %v7066, %v7831
        %v7973 = vadd.f32 %v7067, %v7832
        %v7974 = vadd.f32 %v7068, %v7833
        %v7975 = vadd.f32 %v7069, %v7748
        %v7976 = vadd.f32 %v7070, %v7834
        %v7977 = vadd.f32 %v7071, %v7835
        %v7978 = vadd.f32 %v7072, %v7836
        %v7979 = vadd.f32 %v7073, %v7837
        %v7980 = vadd.f32 %v7074, %v7838
        %v7981 = vadd.f32 %v7075, %v7839
        %v7982 = vadd.f32 %v7076, %v7840
        %v7983 = vadd.f32 %v7077, %v7841
        %v7984 = vadd.f32 %v7078, %v7766
        %v7985 = vadd.f32 %v7079, %v7842
        %v7986 = vadd.f32 %v7080, %v7843
        %v7987 = vadd.f32 %v7081, %v7844
        %v7988 = vadd.f32 %v7082, %v7845
        %v7989 = vadd.f32 %v7083, %v7846
        %v7990 = vadd.f32 %v7084, %v7847
        %v7991 = vadd.f32 %v7085, %v7848
        %v7992 = vadd.f32 %v7086, %v7849
        %v7993 = vadd.f32 %v7087, %v7784
        %s7994 = scalar_lea.vmem %s2, 256
        %v7995 = vld [vmem:[%s7994] sm:$0xf]
        %v7996 = vld [vmem:[%s7994 + $0x4] sm:$0xf]
        %v7997 = vld [vmem:[%s7994 + $0x8] sm:$0xf]
        %v7998 = vld [vmem:[%s7994 + $0xc] sm:$0xf]
        %v7999 = vld [vmem:[%s7994 + $0x10] sm:$0xf]
        %v8000 = vld [vmem:[%s7994 + $0x14] sm:$0xf]
        %v8001 = vld [vmem:[%s7994 + $0x18] sm:$0xf]
        %v8002 = vld [vmem:[%s7994 + $0x1c] sm:$0xf]
        %v8003 = vunpack.c.l.bf16 %v7995
        %v8004 = vunpack.c.l.bf16 %v7996
        %v8005 = vunpack.c.l.bf16 %v7997
        %v8006 = vunpack.c.l.bf16 %v7998
        %v8007 = vunpack.c.l.bf16 %v7999
        %v8008 = vunpack.c.l.bf16 %v8000
        %v8009 = vunpack.c.l.bf16 %v8001
        %v8010 = vunpack.c.l.bf16 %v8002
        %8012 = vset.pattern.permute.xlu0 0
        %8013 = vperm.xlu0 %8012, %v8003
        %v8014 = vpop.permute.xlu0 %8013
        %8017 = vset.pattern.permute.xlu0 0
        %8018 = vperm.xlu0 %8017, %v8004
        %v8019 = vpop.permute.xlu0 %8018
        %8022 = vset.pattern.permute.xlu0 0
        %8023 = vperm.xlu0 %8022, %v8005
        %v8024 = vpop.permute.xlu0 %8023
        %8027 = vset.pattern.permute.xlu0 0
        %8028 = vperm.xlu0 %8027, %v8006
        %v8029 = vpop.permute.xlu0 %8028
        %8032 = vset.pattern.permute.xlu0 0
        %8033 = vperm.xlu0 %8032, %v8007
        %v8034 = vpop.permute.xlu0 %8033
        %8037 = vset.pattern.permute.xlu0 0
        %8038 = vperm.xlu0 %8037, %v8008
        %v8039 = vpop.permute.xlu0 %8038
        %8042 = vset.pattern.permute.xlu0 0
        %8043 = vperm.xlu0 %8042, %v8009
        %v8044 = vpop.permute.xlu0 %8043
        %8047 = vset.pattern.permute.xlu0 0
        %8048 = vperm.xlu0 %8047, %v8010
        %v8049 = vpop.permute.xlu0 %8048
        %v8051 = vmul.f32 %v8014, %v6044
        %v8052 = vmul.f32 %v8014, %v6048
        %v8053 = vmul.f32 %v8014, %v6052
        %v8054 = vmul.f32 %v8014, %v6056
        %v8055 = vmul.f32 %v8014, %v6060
        %v8056 = vmul.f32 %v8014, %v6064
        %v8057 = vmul.f32 %v8014, %v6068
        %v8058 = vmul.f32 %v8014, %v6072
        %v8059 = vmul.f32 %v8014, %v6076
        %v8060 = vmul.f32 %v8019, %v6044
        %v8061 = vmul.f32 %v8019, %v6048
        %v8062 = vmul.f32 %v8019, %v6052
        %v8063 = vmul.f32 %v8019, %v6056
        %v8064 = vmul.f32 %v8019, %v6060
        %v8065 = vmul.f32 %v8019, %v6064
        %v8066 = vmul.f32 %v8019, %v6068
        %v8067 = vmul.f32 %v8019, %v6072
        %v8068 = vmul.f32 %v8019, %v6076
        %v8069 = vmul.f32 %v8024, %v6044
        %v8070 = vmul.f32 %v8024, %v6048
        %v8071 = vmul.f32 %v8024, %v6052
        %v8072 = vmul.f32 %v8024, %v6056
        %v8073 = vmul.f32 %v8024, %v6060
        %v8074 = vmul.f32 %v8024, %v6064
        %v8075 = vmul.f32 %v8024, %v6068
        %v8076 = vmul.f32 %v8024, %v6072
        %v8077 = vmul.f32 %v8024, %v6076
        %v8078 = vmul.f32 %v8029, %v6044
        %v8079 = vmul.f32 %v8029, %v6048
        %v8080 = vmul.f32 %v8029, %v6052
        %v8081 = vmul.f32 %v8029, %v6056
        %v8082 = vmul.f32 %v8029, %v6060
        %v8083 = vmul.f32 %v8029, %v6064
        %v8084 = vmul.f32 %v8029, %v6068
        %v8085 = vmul.f32 %v8029, %v6072
        %v8086 = vmul.f32 %v8029, %v6076
        %v8087 = vmul.f32 %v8034, %v6044
        %v8088 = vmul.f32 %v8034, %v6048
        %v8089 = vmul.f32 %v8034, %v6052
        %v8090 = vmul.f32 %v8034, %v6056
        %v8091 = vmul.f32 %v8034, %v6060
        %v8092 = vmul.f32 %v8034, %v6064
        %v8093 = vmul.f32 %v8034, %v6068
        %v8094 = vmul.f32 %v8034, %v6072
        %v8095 = vmul.f32 %v8034, %v6076
        %v8096 = vmul.f32 %v8039, %v6044
        %v8097 = vmul.f32 %v8039, %v6048
        %v8098 = vmul.f32 %v8039, %v6052
        %v8099 = vmul.f32 %v8039, %v6056
        %v8100 = vmul.f32 %v8039, %v6060
        %v8101 = vmul.f32 %v8039, %v6064
        %v8102 = vmul.f32 %v8039, %v6068
        %v8103 = vmul.f32 %v8039, %v6072
        %v8104 = vmul.f32 %v8039, %v6076
        %v8105 = vmul.f32 %v8044, %v6044
        %v8106 = vmul.f32 %v8044, %v6048
        %v8107 = vmul.f32 %v8044, %v6052
        %v8108 = vmul.f32 %v8044, %v6056
        %v8109 = vmul.f32 %v8044, %v6060
        %v8110 = vmul.f32 %v8044, %v6064
        %v8111 = vmul.f32 %v8044, %v6068
        %v8112 = vmul.f32 %v8044, %v6072
        %v8113 = vmul.f32 %v8044, %v6076
        %v8114 = vmul.f32 %v8049, %v6044
        %v8115 = vmul.f32 %v8049, %v6048
        %v8116 = vmul.f32 %v8049, %v6052
        %v8117 = vmul.f32 %v8049, %v6056
        %v8118 = vmul.f32 %v8049, %v6060
        %v8119 = vmul.f32 %v8049, %v6064
        %v8120 = vmul.f32 %v8049, %v6068
        %v8121 = vmul.f32 %v8049, %v6072
        %v8122 = vmul.f32 %v8049, %v6076
        %8123 = vset.pattern.permute.xlu0 1
        %8124 = vperm.xlu0 %8123, %v8003
        %v8125 = vpop.permute.xlu0 %8124
        %8127 = vset.pattern.permute.xlu0 1
        %8128 = vperm.xlu0 %8127, %v8004
        %v8129 = vpop.permute.xlu0 %8128
        %8131 = vset.pattern.permute.xlu0 1
        %8132 = vperm.xlu0 %8131, %v8005
        %v8133 = vpop.permute.xlu0 %8132
        %8135 = vset.pattern.permute.xlu0 1
        %8136 = vperm.xlu0 %8135, %v8006
        %v8137 = vpop.permute.xlu0 %8136
        %8139 = vset.pattern.permute.xlu0 1
        %8140 = vperm.xlu0 %8139, %v8007
        %v8141 = vpop.permute.xlu0 %8140
        %8143 = vset.pattern.permute.xlu0 1
        %8144 = vperm.xlu0 %8143, %v8008
        %v8145 = vpop.permute.xlu0 %8144
        %8147 = vset.pattern.permute.xlu0 1
        %8148 = vperm.xlu0 %8147, %v8009
        %v8149 = vpop.permute.xlu0 %8148
        %8151 = vset.pattern.permute.xlu0 1
        %8152 = vperm.xlu0 %8151, %v8010
        %v8153 = vpop.permute.xlu0 %8152
        %v8155 = vmul.f32 %v8125, %v6229
        %v8156 = vmul.f32 %v8125, %v6233
        %v8157 = vmul.f32 %v8125, %v6237
        %v8158 = vmul.f32 %v8125, %v6241
        %v8159 = vmul.f32 %v8125, %v6245
        %v8160 = vmul.f32 %v8125, %v6249
        %v8161 = vmul.f32 %v8125, %v6253
        %v8162 = vmul.f32 %v8125, %v6257
        %v8163 = vmul.f32 %v8125, %v6261
        %v8164 = vmul.f32 %v8129, %v6229
        %v8165 = vmul.f32 %v8129, %v6233
        %v8166 = vmul.f32 %v8129, %v6237
        %v8167 = vmul.f32 %v8129, %v6241
        %v8168 = vmul.f32 %v8129, %v6245
        %v8169 = vmul.f32 %v8129, %v6249
        %v8170 = vmul.f32 %v8129, %v6253
        %v8171 = vmul.f32 %v8129, %v6257
        %v8172 = vmul.f32 %v8129, %v6261
        %v8173 = vmul.f32 %v8133, %v6229
        %v8174 = vmul.f32 %v8133, %v6233
        %v8175 = vmul.f32 %v8133, %v6237
        %v8176 = vmul.f32 %v8133, %v6241
        %v8177 = vmul.f32 %v8133, %v6245
        %v8178 = vmul.f32 %v8133, %v6249
        %v8179 = vmul.f32 %v8133, %v6253
        %v8180 = vmul.f32 %v8133, %v6257
        %v8181 = vmul.f32 %v8133, %v6261
        %v8182 = vmul.f32 %v8137, %v6229
        %v8183 = vmul.f32 %v8137, %v6233
        %v8184 = vmul.f32 %v8137, %v6237
        %v8185 = vmul.f32 %v8137, %v6241
        %v8186 = vmul.f32 %v8137, %v6245
        %v8187 = vmul.f32 %v8137, %v6249
        %v8188 = vmul.f32 %v8137, %v6253
        %v8189 = vmul.f32 %v8137, %v6257
        %v8190 = vmul.f32 %v8137, %v6261
        %v8191 = vmul.f32 %v8141, %v6229
        %v8192 = vmul.f32 %v8141, %v6233
        %v8193 = vmul.f32 %v8141, %v6237
        %v8194 = vmul.f32 %v8141, %v6241
        %v8195 = vmul.f32 %v8141, %v6245
        %v8196 = vmul.f32 %v8141, %v6249
        %v8197 = vmul.f32 %v8141, %v6253
        %v8198 = vmul.f32 %v8141, %v6257
        %v8199 = vmul.f32 %v8141, %v6261
        %v8200 = vmul.f32 %v8145, %v6229
        %v8201 = vmul.f32 %v8145, %v6233
        %v8202 = vmul.f32 %v8145, %v6237
        %v8203 = vmul.f32 %v8145, %v6241
        %v8204 = vmul.f32 %v8145, %v6245
        %v8205 = vmul.f32 %v8145, %v6249
        %v8206 = vmul.f32 %v8145, %v6253
        %v8207 = vmul.f32 %v8145, %v6257
        %v8208 = vmul.f32 %v8145, %v6261
        %v8209 = vmul.f32 %v8149, %v6229
        %v8210 = vmul.f32 %v8149, %v6233
        %v8211 = vmul.f32 %v8149, %v6237
        %v8212 = vmul.f32 %v8149, %v6241
        %v8213 = vmul.f32 %v8149, %v6245
        %v8214 = vmul.f32 %v8149, %v6249
        %v8215 = vmul.f32 %v8149, %v6253
        %v8216 = vmul.f32 %v8149, %v6257
        %v8217 = vmul.f32 %v8149, %v6261
        %v8218 = vmul.f32 %v8153, %v6229
        %v8219 = vmul.f32 %v8153, %v6233
        %v8220 = vmul.f32 %v8153, %v6237
        %v8221 = vmul.f32 %v8153, %v6241
        %v8222 = vmul.f32 %v8153, %v6245
        %v8223 = vmul.f32 %v8153, %v6249
        %v8224 = vmul.f32 %v8153, %v6253
        %v8225 = vmul.f32 %v8153, %v6257
        %v8226 = vmul.f32 %v8153, %v6261
        %v8227 = vadd.f32 %v8051, %v8155
        %v8228 = vadd.f32 %v8052, %v8156
        %v8229 = vadd.f32 %v8053, %v8157
        %v8230 = vadd.f32 %v8054, %v8158
        %v8231 = vadd.f32 %v8055, %v8159
        %v8232 = vadd.f32 %v8056, %v8160
        %v8233 = vadd.f32 %v8057, %v8161
        %v8234 = vadd.f32 %v8058, %v8162
        %v8235 = vadd.f32 %v8059, %v8163
        %v8236 = vadd.f32 %v8060, %v8164
        %v8237 = vadd.f32 %v8061, %v8165
        %v8238 = vadd.f32 %v8062, %v8166
        %v8239 = vadd.f32 %v8063, %v8167
        %v8240 = vadd.f32 %v8064, %v8168
        %v8241 = vadd.f32 %v8065, %v8169
        %v8242 = vadd.f32 %v8066, %v8170
        %v8243 = vadd.f32 %v8067, %v8171
        %v8244 = vadd.f32 %v8068, %v8172
        %v8245 = vadd.f32 %v8069, %v8173
        %v8246 = vadd.f32 %v8070, %v8174
        %v8247 = vadd.f32 %v8071, %v8175
        %v8248 = vadd.f32 %v8072, %v8176
        %v8249 = vadd.f32 %v8073, %v8177
        %v8250 = vadd.f32 %v8074, %v8178
        %v8251 = vadd.f32 %v8075, %v8179
        %v8252 = vadd.f32 %v8076, %v8180
        %v8253 = vadd.f32 %v8077, %v8181
        %v8254 = vadd.f32 %v8078, %v8182
        %v8255 = vadd.f32 %v8079, %v8183
        %v8256 = vadd.f32 %v8080, %v8184
        %v8257 = vadd.f32 %v8081, %v8185
        %v8258 = vadd.f32 %v8082, %v8186
        %v8259 = vadd.f32 %v8083, %v8187
        %v8260 = vadd.f32 %v8084, %v8188
        %v8261 = vadd.f32 %v8085, %v8189
        %v8262 = vadd.f32 %v8086, %v8190
        %v8263 = vadd.f32 %v8087, %v8191
        %v8264 = vadd.f32 %v8088, %v8192
        %v8265 = vadd.f32 %v8089, %v8193
        %v8266 = vadd.f32 %v8090, %v8194
        %v8267 = vadd.f32 %v8091, %v8195
        %v8268 = vadd.f32 %v8092, %v8196
        %v8269 = vadd.f32 %v8093, %v8197
        %v8270 = vadd.f32 %v8094, %v8198
        %v8271 = vadd.f32 %v8095, %v8199
        %v8272 = vadd.f32 %v8096, %v8200
        %v8273 = vadd.f32 %v8097, %v8201
        %v8274 = vadd.f32 %v8098, %v8202
        %v8275 = vadd.f32 %v8099, %v8203
        %v8276 = vadd.f32 %v8100, %v8204
        %v8277 = vadd.f32 %v8101, %v8205
        %v8278 = vadd.f32 %v8102, %v8206
        %v8279 = vadd.f32 %v8103, %v8207
        %v8280 = vadd.f32 %v8104, %v8208
        %v8281 = vadd.f32 %v8105, %v8209
        %v8282 = vadd.f32 %v8106, %v8210
        %v8283 = vadd.f32 %v8107, %v8211
        %v8284 = vadd.f32 %v8108, %v8212
        %v8285 = vadd.f32 %v8109, %v8213
        %v8286 = vadd.f32 %v8110, %v8214
        %v8287 = vadd.f32 %v8111, %v8215
        %v8288 = vadd.f32 %v8112, %v8216
        %v8289 = vadd.f32 %v8113, %v8217
        %v8290 = vadd.f32 %v8114, %v8218
        %v8291 = vadd.f32 %v8115, %v8219
        %v8292 = vadd.f32 %v8116, %v8220
        %v8293 = vadd.f32 %v8117, %v8221
        %v8294 = vadd.f32 %v8118, %v8222
        %v8295 = vadd.f32 %v8119, %v8223
        %v8296 = vadd.f32 %v8120, %v8224
        %v8297 = vadd.f32 %v8121, %v8225
        %v8298 = vadd.f32 %v8122, %v8226
        %8299 = vset.pattern.permute.xlu0 2
        %8300 = vperm.xlu0 %8299, %v8003
        %v8301 = vpop.permute.xlu0 %8300
        %8303 = vset.pattern.permute.xlu0 2
        %8304 = vperm.xlu0 %8303, %v8004
        %v8305 = vpop.permute.xlu0 %8304
        %8307 = vset.pattern.permute.xlu0 2
        %8308 = vperm.xlu0 %8307, %v8005
        %v8309 = vpop.permute.xlu0 %8308
        %8311 = vset.pattern.permute.xlu0 2
        %8312 = vperm.xlu0 %8311, %v8006
        %v8313 = vpop.permute.xlu0 %8312
        %8315 = vset.pattern.permute.xlu0 2
        %8316 = vperm.xlu0 %8315, %v8007
        %v8317 = vpop.permute.xlu0 %8316
        %8319 = vset.pattern.permute.xlu0 2
        %8320 = vperm.xlu0 %8319, %v8008
        %v8321 = vpop.permute.xlu0 %8320
        %8323 = vset.pattern.permute.xlu0 2
        %8324 = vperm.xlu0 %8323, %v8009
        %v8325 = vpop.permute.xlu0 %8324
        %8327 = vset.pattern.permute.xlu0 2
        %8328 = vperm.xlu0 %8327, %v8010
        %v8329 = vpop.permute.xlu0 %8328
        %v8331 = vmul.f32 %v8301, %v6486
        %v8332 = vmul.f32 %v8301, %v6490
        %v8333 = vmul.f32 %v8301, %v6494
        %v8334 = vmul.f32 %v8301, %v6498
        %v8335 = vmul.f32 %v8301, %v6502
        %v8336 = vmul.f32 %v8301, %v6506
        %v8337 = vmul.f32 %v8301, %v6510
        %v8338 = vmul.f32 %v8301, %v6514
        %v8339 = vmul.f32 %v8301, %v6518
        %v8340 = vmul.f32 %v8305, %v6486
        %v8341 = vmul.f32 %v8305, %v6490
        %v8342 = vmul.f32 %v8305, %v6494
        %v8343 = vmul.f32 %v8305, %v6498
        %v8344 = vmul.f32 %v8305, %v6502
        %v8345 = vmul.f32 %v8305, %v6506
        %v8346 = vmul.f32 %v8305, %v6510
        %v8347 = vmul.f32 %v8305, %v6514
        %v8348 = vmul.f32 %v8305, %v6518
        %v8349 = vmul.f32 %v8309, %v6486
        %v8350 = vmul.f32 %v8309, %v6490
        %v8351 = vmul.f32 %v8309, %v6494
        %v8352 = vmul.f32 %v8309, %v6498
        %v8353 = vmul.f32 %v8309, %v6502
        %v8354 = vmul.f32 %v8309, %v6506
        %v8355 = vmul.f32 %v8309, %v6510
        %v8356 = vmul.f32 %v8309, %v6514
        %v8357 = vmul.f32 %v8309, %v6518
        %v8358 = vmul.f32 %v8313, %v6486
        %v8359 = vmul.f32 %v8313, %v6490
        %v8360 = vmul.f32 %v8313, %v6494
        %v8361 = vmul.f32 %v8313, %v6498
        %v8362 = vmul.f32 %v8313, %v6502
        %v8363 = vmul.f32 %v8313, %v6506
        %v8364 = vmul.f32 %v8313, %v6510
        %v8365 = vmul.f32 %v8313, %v6514
        %v8366 = vmul.f32 %v8313, %v6518
        %v8367 = vmul.f32 %v8317, %v6486
        %v8368 = vmul.f32 %v8317, %v6490
        %v8369 = vmul.f32 %v8317, %v6494
        %v8370 = vmul.f32 %v8317, %v6498
        %v8371 = vmul.f32 %v8317, %v6502
        %v8372 = vmul.f32 %v8317, %v6506
        %v8373 = vmul.f32 %v8317, %v6510
        %v8374 = vmul.f32 %v8317, %v6514
        %v8375 = vmul.f32 %v8317, %v6518
        %v8376 = vmul.f32 %v8321, %v6486
        %v8377 = vmul.f32 %v8321, %v6490
        %v8378 = vmul.f32 %v8321, %v6494
        %v8379 = vmul.f32 %v8321, %v6498
        %v8380 = vmul.f32 %v8321, %v6502
        %v8381 = vmul.f32 %v8321, %v6506
        %v8382 = vmul.f32 %v8321, %v6510
        %v8383 = vmul.f32 %v8321, %v6514
        %v8384 = vmul.f32 %v8321, %v6518
        %v8385 = vmul.f32 %v8325, %v6486
        %v8386 = vmul.f32 %v8325, %v6490
        %v8387 = vmul.f32 %v8325, %v6494
        %v8388 = vmul.f32 %v8325, %v6498
        %v8389 = vmul.f32 %v8325, %v6502
        %v8390 = vmul.f32 %v8325, %v6506
        %v8391 = vmul.f32 %v8325, %v6510
        %v8392 = vmul.f32 %v8325, %v6514
        %v8393 = vmul.f32 %v8325, %v6518
        %v8394 = vmul.f32 %v8329, %v6486
        %v8395 = vmul.f32 %v8329, %v6490
        %v8396 = vmul.f32 %v8329, %v6494
        %v8397 = vmul.f32 %v8329, %v6498
        %v8398 = vmul.f32 %v8329, %v6502
        %v8399 = vmul.f32 %v8329, %v6506
        %v8400 = vmul.f32 %v8329, %v6510
        %v8401 = vmul.f32 %v8329, %v6514
        %v8402 = vmul.f32 %v8329, %v6518
        %v8403 = vadd.f32 %v8227, %v8331
        %v8404 = vadd.f32 %v8228, %v8332
        %v8405 = vadd.f32 %v8229, %v8333
        %v8406 = vadd.f32 %v8230, %v8334
        %v8407 = vadd.f32 %v8231, %v8335
        %v8408 = vadd.f32 %v8232, %v8336
        %v8409 = vadd.f32 %v8233, %v8337
        %v8410 = vadd.f32 %v8234, %v8338
        %v8411 = vadd.f32 %v8235, %v8339
        %v8412 = vadd.f32 %v8236, %v8340
        %v8413 = vadd.f32 %v8237, %v8341
        %v8414 = vadd.f32 %v8238, %v8342
        %v8415 = vadd.f32 %v8239, %v8343
        %v8416 = vadd.f32 %v8240, %v8344
        %v8417 = vadd.f32 %v8241, %v8345
        %v8418 = vadd.f32 %v8242, %v8346
        %v8419 = vadd.f32 %v8243, %v8347
        %v8420 = vadd.f32 %v8244, %v8348
        %v8421 = vadd.f32 %v8245, %v8349
        %v8422 = vadd.f32 %v8246, %v8350
        %v8423 = vadd.f32 %v8247, %v8351
        %v8424 = vadd.f32 %v8248, %v8352
        %v8425 = vadd.f32 %v8249, %v8353
        %v8426 = vadd.f32 %v8250, %v8354
        %v8427 = vadd.f32 %v8251, %v8355
        %v8428 = vadd.f32 %v8252, %v8356
        %v8429 = vadd.f32 %v8253, %v8357
        %v8430 = vadd.f32 %v8254, %v8358
        %v8431 = vadd.f32 %v8255, %v8359
        %v8432 = vadd.f32 %v8256, %v8360
        %v8433 = vadd.f32 %v8257, %v8361
        %v8434 = vadd.f32 %v8258, %v8362
        %v8435 = vadd.f32 %v8259, %v8363
        %v8436 = vadd.f32 %v8260, %v8364
        %v8437 = vadd.f32 %v8261, %v8365
        %v8438 = vadd.f32 %v8262, %v8366
        %v8439 = vadd.f32 %v8263, %v8367
        %v8440 = vadd.f32 %v8264, %v8368
        %v8441 = vadd.f32 %v8265, %v8369
        %v8442 = vadd.f32 %v8266, %v8370
        %v8443 = vadd.f32 %v8267, %v8371
        %v8444 = vadd.f32 %v8268, %v8372
        %v8445 = vadd.f32 %v8269, %v8373
        %v8446 = vadd.f32 %v8270, %v8374
        %v8447 = vadd.f32 %v8271, %v8375
        %v8448 = vadd.f32 %v8272, %v8376
        %v8449 = vadd.f32 %v8273, %v8377
        %v8450 = vadd.f32 %v8274, %v8378
        %v8451 = vadd.f32 %v8275, %v8379
        %v8452 = vadd.f32 %v8276, %v8380
        %v8453 = vadd.f32 %v8277, %v8381
        %v8454 = vadd.f32 %v8278, %v8382
        %v8455 = vadd.f32 %v8279, %v8383
        %v8456 = vadd.f32 %v8280, %v8384
        %v8457 = vadd.f32 %v8281, %v8385
        %v8458 = vadd.f32 %v8282, %v8386
        %v8459 = vadd.f32 %v8283, %v8387
        %v8460 = vadd.f32 %v8284, %v8388
        %v8461 = vadd.f32 %v8285, %v8389
        %v8462 = vadd.f32 %v8286, %v8390
        %v8463 = vadd.f32 %v8287, %v8391
        %v8464 = vadd.f32 %v8288, %v8392
        %v8465 = vadd.f32 %v8289, %v8393
        %v8466 = vadd.f32 %v8290, %v8394
        %v8467 = vadd.f32 %v8291, %v8395
        %v8468 = vadd.f32 %v8292, %v8396
        %v8469 = vadd.f32 %v8293, %v8397
        %v8470 = vadd.f32 %v8294, %v8398
        %v8471 = vadd.f32 %v8295, %v8399
        %v8472 = vadd.f32 %v8296, %v8400
        %v8473 = vadd.f32 %v8297, %v8401
        %v8474 = vadd.f32 %v8298, %v8402
        %8547 = vrot.lane.b32.xlu0 %v8403, 54
        %v8548 = vpop.permute.xlu0 %8547
        %8549 = vrot.lane.b32.xlu0 %v8404, 54
        %v8550 = vpop.permute.xlu0 %8549
        %8551 = vrot.lane.b32.xlu0 %v8405, 54
        %v8552 = vpop.permute.xlu0 %8551
        %8553 = vrot.lane.b32.xlu0 %v8406, 54
        %v8554 = vpop.permute.xlu0 %8553
        %8555 = vrot.lane.b32.xlu0 %v8407, 54
        %v8556 = vpop.permute.xlu0 %8555
        %8557 = vrot.lane.b32.xlu0 %v8408, 54
        %v8558 = vpop.permute.xlu0 %8557
        %8559 = vrot.lane.b32.xlu0 %v8409, 54
        %v8560 = vpop.permute.xlu0 %8559
        %8561 = vrot.lane.b32.xlu0 %v8410, 54
        %v8562 = vpop.permute.xlu0 %8561
        %8563 = vrot.lane.b32.xlu0 %v8411, 54
        %v8564 = vpop.permute.xlu0 %8563
        %8565 = vrot.lane.b32.xlu0 %v8412, 54
        %v8566 = vpop.permute.xlu0 %8565
        %8567 = vrot.lane.b32.xlu0 %v8413, 54
        %v8568 = vpop.permute.xlu0 %8567
        %8569 = vrot.lane.b32.xlu0 %v8414, 54
        %v8570 = vpop.permute.xlu0 %8569
        %8571 = vrot.lane.b32.xlu0 %v8415, 54
        %v8572 = vpop.permute.xlu0 %8571
        %8573 = vrot.lane.b32.xlu0 %v8416, 54
        %v8574 = vpop.permute.xlu0 %8573
        %8575 = vrot.lane.b32.xlu0 %v8417, 54
        %v8576 = vpop.permute.xlu0 %8575
        %8577 = vrot.lane.b32.xlu0 %v8418, 54
        %v8578 = vpop.permute.xlu0 %8577
        %8579 = vrot.lane.b32.xlu0 %v8419, 54
        %v8580 = vpop.permute.xlu0 %8579
        %8581 = vrot.lane.b32.xlu0 %v8420, 54
        %v8582 = vpop.permute.xlu0 %8581
        %8583 = vrot.lane.b32.xlu0 %v8421, 54
        %v8584 = vpop.permute.xlu0 %8583
        %8585 = vrot.lane.b32.xlu0 %v8422, 54
        %v8586 = vpop.permute.xlu0 %8585
        %8587 = vrot.lane.b32.xlu0 %v8423, 54
        %v8588 = vpop.permute.xlu0 %8587
        %8589 = vrot.lane.b32.xlu0 %v8424, 54
        %v8590 = vpop.permute.xlu0 %8589
        %8591 = vrot.lane.b32.xlu0 %v8425, 54
        %v8592 = vpop.permute.xlu0 %8591
        %8593 = vrot.lane.b32.xlu0 %v8426, 54
        %v8594 = vpop.permute.xlu0 %8593
        %8595 = vrot.lane.b32.xlu0 %v8427, 54
        %v8596 = vpop.permute.xlu0 %8595
        %8597 = vrot.lane.b32.xlu0 %v8428, 54
        %v8598 = vpop.permute.xlu0 %8597
        %8599 = vrot.lane.b32.xlu0 %v8429, 54
        %v8600 = vpop.permute.xlu0 %8599
        %8601 = vrot.lane.b32.xlu0 %v8430, 54
        %v8602 = vpop.permute.xlu0 %8601
        %8603 = vrot.lane.b32.xlu0 %v8431, 54
        %v8604 = vpop.permute.xlu0 %8603
        %8605 = vrot.lane.b32.xlu0 %v8432, 54
        %v8606 = vpop.permute.xlu0 %8605
        %8607 = vrot.lane.b32.xlu0 %v8433, 54
        %v8608 = vpop.permute.xlu0 %8607
        %8609 = vrot.lane.b32.xlu0 %v8434, 54
        %v8610 = vpop.permute.xlu0 %8609
        %8611 = vrot.lane.b32.xlu0 %v8435, 54
        %v8612 = vpop.permute.xlu0 %8611
        %8613 = vrot.lane.b32.xlu0 %v8436, 54
        %v8614 = vpop.permute.xlu0 %8613
        %8615 = vrot.lane.b32.xlu0 %v8437, 54
        %v8616 = vpop.permute.xlu0 %8615
        %8617 = vrot.lane.b32.xlu0 %v8438, 54
        %v8618 = vpop.permute.xlu0 %8617
        %8619 = vrot.lane.b32.xlu0 %v8439, 54
        %v8620 = vpop.permute.xlu0 %8619
        %8621 = vrot.lane.b32.xlu0 %v8440, 54
        %v8622 = vpop.permute.xlu0 %8621
        %8623 = vrot.lane.b32.xlu0 %v8441, 54
        %v8624 = vpop.permute.xlu0 %8623
        %8625 = vrot.lane.b32.xlu0 %v8442, 54
        %v8626 = vpop.permute.xlu0 %8625
        %8627 = vrot.lane.b32.xlu0 %v8443, 54
        %v8628 = vpop.permute.xlu0 %8627
        %8629 = vrot.lane.b32.xlu0 %v8444, 54
        %v8630 = vpop.permute.xlu0 %8629
        %8631 = vrot.lane.b32.xlu0 %v8445, 54
        %v8632 = vpop.permute.xlu0 %8631
        %8633 = vrot.lane.b32.xlu0 %v8446, 54
        %v8634 = vpop.permute.xlu0 %8633
        %8635 = vrot.lane.b32.xlu0 %v8447, 54
        %v8636 = vpop.permute.xlu0 %8635
        %8637 = vrot.lane.b32.xlu0 %v8448, 54
        %v8638 = vpop.permute.xlu0 %8637
        %8639 = vrot.lane.b32.xlu0 %v8449, 54
        %v8640 = vpop.permute.xlu0 %8639
        %8641 = vrot.lane.b32.xlu0 %v8450, 54
        %v8642 = vpop.permute.xlu0 %8641
        %8643 = vrot.lane.b32.xlu0 %v8451, 54
        %v8644 = vpop.permute.xlu0 %8643
        %8645 = vrot.lane.b32.xlu0 %v8452, 54
        %v8646 = vpop.permute.xlu0 %8645
        %8647 = vrot.lane.b32.xlu0 %v8453, 54
        %v8648 = vpop.permute.xlu0 %8647
        %8649 = vrot.lane.b32.xlu0 %v8454, 54
        %v8650 = vpop.permute.xlu0 %8649
        %8651 = vrot.lane.b32.xlu0 %v8455, 54
        %v8652 = vpop.permute.xlu0 %8651
        %8653 = vrot.lane.b32.xlu0 %v8456, 54
        %v8654 = vpop.permute.xlu0 %8653
        %8655 = vrot.lane.b32.xlu0 %v8457, 54
        %v8656 = vpop.permute.xlu0 %8655
        %8657 = vrot.lane.b32.xlu0 %v8458, 54
        %v8658 = vpop.permute.xlu0 %8657
        %8659 = vrot.lane.b32.xlu0 %v8459, 54
        %v8660 = vpop.permute.xlu0 %8659
        %8661 = vrot.lane.b32.xlu0 %v8460, 54
        %v8662 = vpop.permute.xlu0 %8661
        %8663 = vrot.lane.b32.xlu0 %v8461, 54
        %v8664 = vpop.permute.xlu0 %8663
        %8665 = vrot.lane.b32.xlu0 %v8462, 54
        %v8666 = vpop.permute.xlu0 %8665
        %8667 = vrot.lane.b32.xlu0 %v8463, 54
        %v8668 = vpop.permute.xlu0 %8667
        %8669 = vrot.lane.b32.xlu0 %v8464, 54
        %v8670 = vpop.permute.xlu0 %8669
        %8671 = vrot.lane.b32.xlu0 %v8465, 54
        %v8672 = vpop.permute.xlu0 %8671
        %8673 = vrot.lane.b32.xlu0 %v8466, 54
        %v8674 = vpop.permute.xlu0 %8673
        %8675 = vrot.lane.b32.xlu0 %v8467, 54
        %v8676 = vpop.permute.xlu0 %8675
        %8677 = vrot.lane.b32.xlu0 %v8468, 54
        %v8678 = vpop.permute.xlu0 %8677
        %8679 = vrot.lane.b32.xlu0 %v8469, 54
        %v8680 = vpop.permute.xlu0 %8679
        %8681 = vrot.lane.b32.xlu0 %v8470, 54
        %v8682 = vpop.permute.xlu0 %8681
        %8683 = vrot.lane.b32.xlu0 %v8471, 54
        %v8684 = vpop.permute.xlu0 %8683
        %8685 = vrot.lane.b32.xlu0 %v8472, 54
        %v8686 = vpop.permute.xlu0 %8685
        %8687 = vrot.lane.b32.xlu0 %v8473, 54
        %v8688 = vpop.permute.xlu0 %8687
        %8689 = vrot.lane.b32.xlu0 %v8474, 54
        %v8690 = vpop.permute.xlu0 %8689
        %vm8691 = vcmask 441344
        %v8692 = vsel %vm8691, %v8548, %v8550
        %v8693 = vsel %vm8691, %v8550, %v8552
        %v8694 = vsel %vm8691, %v8552, %v8554
        %v8695 = vsel %vm8691, %v8554, %v8556
        %v8696 = vsel %vm8691, %v8556, %v8558
        %v8697 = vsel %vm8691, %v8558, %v8560
        %v8698 = vsel %vm8691, %v8560, %v8562
        %v8699 = vsel %vm8691, %v8562, %v8564
        %v8700 = vsel %vm8691, %v8566, %v8568
        %v8701 = vsel %vm8691, %v8568, %v8570
        %v8702 = vsel %vm8691, %v8570, %v8572
        %v8703 = vsel %vm8691, %v8572, %v8574
        %v8704 = vsel %vm8691, %v8574, %v8576
        %v8705 = vsel %vm8691, %v8576, %v8578
        %v8706 = vsel %vm8691, %v8578, %v8580
        %v8707 = vsel %vm8691, %v8580, %v8582
        %v8708 = vsel %vm8691, %v8584, %v8586
        %v8709 = vsel %vm8691, %v8586, %v8588
        %v8710 = vsel %vm8691, %v8588, %v8590
        %v8711 = vsel %vm8691, %v8590, %v8592
        %v8712 = vsel %vm8691, %v8592, %v8594
        %v8713 = vsel %vm8691, %v8594, %v8596
        %v8714 = vsel %vm8691, %v8596, %v8598
        %v8715 = vsel %vm8691, %v8598, %v8600
        %v8716 = vsel %vm8691, %v8602, %v8604
        %v8717 = vsel %vm8691, %v8604, %v8606
        %v8718 = vsel %vm8691, %v8606, %v8608
        %v8719 = vsel %vm8691, %v8608, %v8610
        %v8720 = vsel %vm8691, %v8610, %v8612
        %v8721 = vsel %vm8691, %v8612, %v8614
        %v8722 = vsel %vm8691, %v8614, %v8616
        %v8723 = vsel %vm8691, %v8616, %v8618
        %v8724 = vsel %vm8691, %v8620, %v8622
        %v8725 = vsel %vm8691, %v8622, %v8624
        %v8726 = vsel %vm8691, %v8624, %v8626
        %v8727 = vsel %vm8691, %v8626, %v8628
        %v8728 = vsel %vm8691, %v8628, %v8630
        %v8729 = vsel %vm8691, %v8630, %v8632
        %v8730 = vsel %vm8691, %v8632, %v8634
        %v8731 = vsel %vm8691, %v8634, %v8636
        %v8732 = vsel %vm8691, %v8638, %v8640
        %v8733 = vsel %vm8691, %v8640, %v8642
        %v8734 = vsel %vm8691, %v8642, %v8644
        %v8735 = vsel %vm8691, %v8644, %v8646
        %v8736 = vsel %vm8691, %v8646, %v8648
        %v8737 = vsel %vm8691, %v8648, %v8650
        %v8738 = vsel %vm8691, %v8650, %v8652
        %v8739 = vsel %vm8691, %v8652, %v8654
        %v8740 = vsel %vm8691, %v8656, %v8658
        %v8741 = vsel %vm8691, %v8658, %v8660
        %v8742 = vsel %vm8691, %v8660, %v8662
        %v8743 = vsel %vm8691, %v8662, %v8664
        %v8744 = vsel %vm8691, %v8664, %v8666
        %v8745 = vsel %vm8691, %v8666, %v8668
        %v8746 = vsel %vm8691, %v8668, %v8670
        %v8747 = vsel %vm8691, %v8670, %v8672
        %v8748 = vsel %vm8691, %v8674, %v8676
        %v8749 = vsel %vm8691, %v8676, %v8678
        %v8750 = vsel %vm8691, %v8678, %v8680
        %v8751 = vsel %vm8691, %v8680, %v8682
        %v8752 = vsel %vm8691, %v8682, %v8684
        %v8753 = vsel %vm8691, %v8684, %v8686
        %v8754 = vsel %vm8691, %v8686, %v8688
        %v8755 = vsel %vm8691, %v8688, %v8690
        %v8828 = vadd.f32 %v7922, %v8692
        %v8829 = vadd.f32 %v7923, %v8693
        %v8830 = vadd.f32 %v7924, %v8694
        %v8831 = vadd.f32 %v7925, %v8695
        %v8832 = vadd.f32 %v7926, %v8696
        %v8833 = vadd.f32 %v7927, %v8697
        %v8834 = vadd.f32 %v7928, %v8698
        %v8835 = vadd.f32 %v7929, %v8699
        %v8836 = vadd.f32 %v7930, %v8564
        %v8837 = vadd.f32 %v7931, %v8700
        %v8838 = vadd.f32 %v7932, %v8701
        %v8839 = vadd.f32 %v7933, %v8702
        %v8840 = vadd.f32 %v7934, %v8703
        %v8841 = vadd.f32 %v7935, %v8704
        %v8842 = vadd.f32 %v7936, %v8705
        %v8843 = vadd.f32 %v7937, %v8706
        %v8844 = vadd.f32 %v7938, %v8707
        %v8845 = vadd.f32 %v7939, %v8582
        %v8846 = vadd.f32 %v7940, %v8708
        %v8847 = vadd.f32 %v7941, %v8709
        %v8848 = vadd.f32 %v7942, %v8710
        %v8849 = vadd.f32 %v7943, %v8711
        %v8850 = vadd.f32 %v7944, %v8712
        %v8851 = vadd.f32 %v7945, %v8713
        %v8852 = vadd.f32 %v7946, %v8714
        %v8853 = vadd.f32 %v7947, %v8715
        %v8854 = vadd.f32 %v7948, %v8600
        %v8855 = vadd.f32 %v7949, %v8716
        %v8856 = vadd.f32 %v7950, %v8717
        %v8857 = vadd.f32 %v7951, %v8718
        %v8858 = vadd.f32 %v7952, %v8719
        %v8859 = vadd.f32 %v7953, %v8720
        %v8860 = vadd.f32 %v7954, %v8721
        %v8861 = vadd.f32 %v7955, %v8722
        %v8862 = vadd.f32 %v7956, %v8723
        %v8863 = vadd.f32 %v7957, %v8618
        %v8864 = vadd.f32 %v7958, %v8724
        %v8865 = vadd.f32 %v7959, %v8725
        %v8866 = vadd.f32 %v7960, %v8726
        %v8867 = vadd.f32 %v7961, %v8727
        %v8868 = vadd.f32 %v7962, %v8728
        %v8869 = vadd.f32 %v7963, %v8729
        %v8870 = vadd.f32 %v7964, %v8730
        %v8871 = vadd.f32 %v7965, %v8731
        %v8872 = vadd.f32 %v7966, %v8636
        %v8873 = vadd.f32 %v7967, %v8732
        %v8874 = vadd.f32 %v7968, %v8733
        %v8875 = vadd.f32 %v7969, %v8734
        %v8876 = vadd.f32 %v7970, %v8735
        %v8877 = vadd.f32 %v7971, %v8736
        %v8878 = vadd.f32 %v7972, %v8737
        %v8879 = vadd.f32 %v7973, %v8738
        %v8880 = vadd.f32 %v7974, %v8739
        %v8881 = vadd.f32 %v7975, %v8654
        %v8882 = vadd.f32 %v7976, %v8740
        %v8883 = vadd.f32 %v7977, %v8741
        %v8884 = vadd.f32 %v7978, %v8742
        %v8885 = vadd.f32 %v7979, %v8743
        %v8886 = vadd.f32 %v7980, %v8744
        %v8887 = vadd.f32 %v7981, %v8745
        %v8888 = vadd.f32 %v7982, %v8746
        %v8889 = vadd.f32 %v7983, %v8747
        %v8890 = vadd.f32 %v7984, %v8672
        %v8891 = vadd.f32 %v7985, %v8748
        %v8892 = vadd.f32 %v7986, %v8749
        %v8893 = vadd.f32 %v7987, %v8750
        %v8894 = vadd.f32 %v7988, %v8751
        %v8895 = vadd.f32 %v7989, %v8752
        %v8896 = vadd.f32 %v7990, %v8753
        %v8897 = vadd.f32 %v7991, %v8754
        %v8898 = vadd.f32 %v7992, %v8755
        %v8899 = vadd.f32 %v7993, %v8690
        %v8900 = vld [vmem:[%s3] sm:$0xff]
        %v8901 = vld [vmem:[%s3 + $0x8] sm:$0xff]
        %v8902 = vld [vmem:[%s3 + $0x10] sm:$0xff]
        %v8903 = vld [vmem:[%s3 + $0x18] sm:$0xff]
        %v8904 = vld [vmem:[%s3 + $0x20] sm:$0xff]
        %v8905 = vld [vmem:[%s3 + $0x28] sm:$0xff]
        %v8906 = vld [vmem:[%s3 + $0x30] sm:$0xff]
        %v8907 = vld [vmem:[%s3 + $0x38] sm:$0xff]
        %8909 = vset.pattern.permute.xlu0 0
        %8910 = vperm.xlu0 %8909, %v8900
        %v8911 = vpop.permute.xlu0 %8910
        %8914 = vset.pattern.permute.xlu0 0
        %8915 = vperm.xlu0 %8914, %v8901
        %v8916 = vpop.permute.xlu0 %8915
        %8919 = vset.pattern.permute.xlu0 0
        %8920 = vperm.xlu0 %8919, %v8902
        %v8921 = vpop.permute.xlu0 %8920
        %8924 = vset.pattern.permute.xlu0 0
        %8925 = vperm.xlu0 %8924, %v8903
        %v8926 = vpop.permute.xlu0 %8925
        %8929 = vset.pattern.permute.xlu0 0
        %8930 = vperm.xlu0 %8929, %v8904
        %v8931 = vpop.permute.xlu0 %8930
        %8934 = vset.pattern.permute.xlu0 0
        %8935 = vperm.xlu0 %8934, %v8905
        %v8936 = vpop.permute.xlu0 %8935
        %8939 = vset.pattern.permute.xlu0 0
        %8940 = vperm.xlu0 %8939, %v8906
        %v8941 = vpop.permute.xlu0 %8940
        %8944 = vset.pattern.permute.xlu0 0
        %8945 = vperm.xlu0 %8944, %v8907
        %v8946 = vpop.permute.xlu0 %8945
        %v8948 = vadd.f32 %v8828, %v8911
        %v8949 = vadd.f32 %v8829, %v8911
        %v8950 = vadd.f32 %v8830, %v8911
        %v8951 = vadd.f32 %v8831, %v8911
        %v8952 = vadd.f32 %v8832, %v8911
        %v8953 = vadd.f32 %v8833, %v8911
        %v8954 = vadd.f32 %v8834, %v8911
        %v8955 = vadd.f32 %v8835, %v8911
        %v8956 = vadd.f32 %v8836, %v8911
        %v8957 = vadd.f32 %v8837, %v8916
        %v8958 = vadd.f32 %v8838, %v8916
        %v8959 = vadd.f32 %v8839, %v8916
        %v8960 = vadd.f32 %v8840, %v8916
        %v8961 = vadd.f32 %v8841, %v8916
        %v8962 = vadd.f32 %v8842, %v8916
        %v8963 = vadd.f32 %v8843, %v8916
        %v8964 = vadd.f32 %v8844, %v8916
        %v8965 = vadd.f32 %v8845, %v8916
        %v8966 = vadd.f32 %v8846, %v8921
        %v8967 = vadd.f32 %v8847, %v8921
        %v8968 = vadd.f32 %v8848, %v8921
        %v8969 = vadd.f32 %v8849, %v8921
        %v8970 = vadd.f32 %v8850, %v8921
        %v8971 = vadd.f32 %v8851, %v8921
        %v8972 = vadd.f32 %v8852, %v8921
        %v8973 = vadd.f32 %v8853, %v8921
        %v8974 = vadd.f32 %v8854, %v8921
        %v8975 = vadd.f32 %v8855, %v8926
        %v8976 = vadd.f32 %v8856, %v8926
        %v8977 = vadd.f32 %v8857, %v8926
        %v8978 = vadd.f32 %v8858, %v8926
        %v8979 = vadd.f32 %v8859, %v8926
        %v8980 = vadd.f32 %v8860, %v8926
        %v8981 = vadd.f32 %v8861, %v8926
        %v8982 = vadd.f32 %v8862, %v8926
        %v8983 = vadd.f32 %v8863, %v8926
        %v8984 = vadd.f32 %v8864, %v8931
        %v8985 = vadd.f32 %v8865, %v8931
        %v8986 = vadd.f32 %v8866, %v8931
        %v8987 = vadd.f32 %v8867, %v8931
        %v8988 = vadd.f32 %v8868, %v8931
        %v8989 = vadd.f32 %v8869, %v8931
        %v8990 = vadd.f32 %v8870, %v8931
        %v8991 = vadd.f32 %v8871, %v8931
        %v8992 = vadd.f32 %v8872, %v8931
        %v8993 = vadd.f32 %v8873, %v8936
        %v8994 = vadd.f32 %v8874, %v8936
        %v8995 = vadd.f32 %v8875, %v8936
        %v8996 = vadd.f32 %v8876, %v8936
        %v8997 = vadd.f32 %v8877, %v8936
        %v8998 = vadd.f32 %v8878, %v8936
        %v8999 = vadd.f32 %v8879, %v8936
        %v9000 = vadd.f32 %v8880, %v8936
        %v9001 = vadd.f32 %v8881, %v8936
        %v9002 = vadd.f32 %v8882, %v8941
        %v9003 = vadd.f32 %v8883, %v8941
        %v9004 = vadd.f32 %v8884, %v8941
        %v9005 = vadd.f32 %v8885, %v8941
        %v9006 = vadd.f32 %v8886, %v8941
        %v9007 = vadd.f32 %v8887, %v8941
        %v9008 = vadd.f32 %v8888, %v8941
        %v9009 = vadd.f32 %v8889, %v8941
        %v9010 = vadd.f32 %v8890, %v8941
        %v9011 = vadd.f32 %v8891, %v8946
        %v9012 = vadd.f32 %v8892, %v8946
        %v9013 = vadd.f32 %v8893, %v8946
        %v9014 = vadd.f32 %v8894, %v8946
        %v9015 = vadd.f32 %v8895, %v8946
        %v9016 = vadd.f32 %v8896, %v8946
        %v9017 = vadd.f32 %v8897, %v8946
        %v9018 = vadd.f32 %v8898, %v8946
        %v9019 = vadd.f32 %v8899, %v8946
        %vm9020 = vcmp.gt.f32.partialorder %v8948, 0.0
        %vm9021 = vcmp.gt.f32.partialorder %v8949, 0.0
        %vm9022 = vcmp.gt.f32.partialorder %v8950, 0.0
        %vm9023 = vcmp.gt.f32.partialorder %v8951, 0.0
        %vm9024 = vcmp.gt.f32.partialorder %v8952, 0.0
        %vm9025 = vcmp.gt.f32.partialorder %v8953, 0.0
        %vm9026 = vcmp.gt.f32.partialorder %v8954, 0.0
        %vm9027 = vcmp.gt.f32.partialorder %v8955, 0.0
        %vm9028 = vcmp.gt.f32.partialorder %v8956, 0.0
        %vm9029 = vcmp.gt.f32.partialorder %v8957, 0.0
        %vm9030 = vcmp.gt.f32.partialorder %v8958, 0.0
        %vm9031 = vcmp.gt.f32.partialorder %v8959, 0.0
        %vm9032 = vcmp.gt.f32.partialorder %v8960, 0.0
        %vm9033 = vcmp.gt.f32.partialorder %v8961, 0.0
        %vm9034 = vcmp.gt.f32.partialorder %v8962, 0.0
        %vm9035 = vcmp.gt.f32.partialorder %v8963, 0.0
        %vm9036 = vcmp.gt.f32.partialorder %v8964, 0.0
        %vm9037 = vcmp.gt.f32.partialorder %v8965, 0.0
        %vm9038 = vcmp.gt.f32.partialorder %v8966, 0.0
        %vm9039 = vcmp.gt.f32.partialorder %v8967, 0.0
        %vm9040 = vcmp.gt.f32.partialorder %v8968, 0.0
        %vm9041 = vcmp.gt.f32.partialorder %v8969, 0.0
        %vm9042 = vcmp.gt.f32.partialorder %v8970, 0.0
        %vm9043 = vcmp.gt.f32.partialorder %v8971, 0.0
        %vm9044 = vcmp.gt.f32.partialorder %v8972, 0.0
        %vm9045 = vcmp.gt.f32.partialorder %v8973, 0.0
        %vm9046 = vcmp.gt.f32.partialorder %v8974, 0.0
        %vm9047 = vcmp.gt.f32.partialorder %v8975, 0.0
        %vm9048 = vcmp.gt.f32.partialorder %v8976, 0.0
        %vm9049 = vcmp.gt.f32.partialorder %v8977, 0.0
        %vm9050 = vcmp.gt.f32.partialorder %v8978, 0.0
        %vm9051 = vcmp.gt.f32.partialorder %v8979, 0.0
        %vm9052 = vcmp.gt.f32.partialorder %v8980, 0.0
        %vm9053 = vcmp.gt.f32.partialorder %v8981, 0.0
        %vm9054 = vcmp.gt.f32.partialorder %v8982, 0.0
        %vm9055 = vcmp.gt.f32.partialorder %v8983, 0.0
        %vm9056 = vcmp.gt.f32.partialorder %v8984, 0.0
        %vm9057 = vcmp.gt.f32.partialorder %v8985, 0.0
        %vm9058 = vcmp.gt.f32.partialorder %v8986, 0.0
        %vm9059 = vcmp.gt.f32.partialorder %v8987, 0.0
        %vm9060 = vcmp.gt.f32.partialorder %v8988, 0.0
        %vm9061 = vcmp.gt.f32.partialorder %v8989, 0.0
        %vm9062 = vcmp.gt.f32.partialorder %v8990, 0.0
        %vm9063 = vcmp.gt.f32.partialorder %v8991, 0.0
        %vm9064 = vcmp.gt.f32.partialorder %v8992, 0.0
        %vm9065 = vcmp.gt.f32.partialorder %v8993, 0.0
        %vm9066 = vcmp.gt.f32.partialorder %v8994, 0.0
        %vm9067 = vcmp.gt.f32.partialorder %v8995, 0.0
        %vm9068 = vcmp.gt.f32.partialorder %v8996, 0.0
        %vm9069 = vcmp.gt.f32.partialorder %v8997, 0.0
        %vm9070 = vcmp.gt.f32.partialorder %v8998, 0.0
        %vm9071 = vcmp.gt.f32.partialorder %v8999, 0.0
        %vm9072 = vcmp.gt.f32.partialorder %v9000, 0.0
        %vm9073 = vcmp.gt.f32.partialorder %v9001, 0.0
        %vm9074 = vcmp.gt.f32.partialorder %v9002, 0.0
        %vm9075 = vcmp.gt.f32.partialorder %v9003, 0.0
        %vm9076 = vcmp.gt.f32.partialorder %v9004, 0.0
        %vm9077 = vcmp.gt.f32.partialorder %v9005, 0.0
        %vm9078 = vcmp.gt.f32.partialorder %v9006, 0.0
        %vm9079 = vcmp.gt.f32.partialorder %v9007, 0.0
        %vm9080 = vcmp.gt.f32.partialorder %v9008, 0.0
        %vm9081 = vcmp.gt.f32.partialorder %v9009, 0.0
        %vm9082 = vcmp.gt.f32.partialorder %v9010, 0.0
        %vm9083 = vcmp.gt.f32.partialorder %v9011, 0.0
        %vm9084 = vcmp.gt.f32.partialorder %v9012, 0.0
        %vm9085 = vcmp.gt.f32.partialorder %v9013, 0.0
        %vm9086 = vcmp.gt.f32.partialorder %v9014, 0.0
        %vm9087 = vcmp.gt.f32.partialorder %v9015, 0.0
        %vm9088 = vcmp.gt.f32.partialorder %v9016, 0.0
        %vm9089 = vcmp.gt.f32.partialorder %v9017, 0.0
        %vm9090 = vcmp.gt.f32.partialorder %v9018, 0.0
        %vm9091 = vcmp.gt.f32.partialorder %v9019, 0.0
        %v9092 = vmin.f32 %v8948, 0.0
        %v9093 = vmin.f32 %v8949, 0.0
        %v9094 = vmin.f32 %v8950, 0.0
        %v9095 = vmin.f32 %v8951, 0.0
        %v9096 = vmin.f32 %v8952, 0.0
        %v9097 = vmin.f32 %v8953, 0.0
        %v9098 = vmin.f32 %v8954, 0.0
        %v9099 = vmin.f32 %v8955, 0.0
        %v9100 = vmin.f32 %v8956, 0.0
        %v9101 = vmin.f32 %v8957, 0.0
        %v9102 = vmin.f32 %v8958, 0.0
        %v9103 = vmin.f32 %v8959, 0.0
        %v9104 = vmin.f32 %v8960, 0.0
        %v9105 = vmin.f32 %v8961, 0.0
        %v9106 = vmin.f32 %v8962, 0.0
        %v9107 = vmin.f32 %v8963, 0.0
        %v9108 = vmin.f32 %v8964, 0.0
        %v9109 = vmin.f32 %v8965, 0.0
        %v9110 = vmin.f32 %v8966, 0.0
        %v9111 = vmin.f32 %v8967, 0.0
        %v9112 = vmin.f32 %v8968, 0.0
        %v9113 = vmin.f32 %v8969, 0.0
        %v9114 = vmin.f32 %v8970, 0.0
        %v9115 = vmin.f32 %v8971, 0.0
        %v9116 = vmin.f32 %v8972, 0.0
        %v9117 = vmin.f32 %v8973, 0.0
        %v9118 = vmin.f32 %v8974, 0.0
        %v9119 = vmin.f32 %v8975, 0.0
        %v9120 = vmin.f32 %v8976, 0.0
        %v9121 = vmin.f32 %v8977, 0.0
        %v9122 = vmin.f32 %v8978, 0.0
        %v9123 = vmin.f32 %v8979, 0.0
        %v9124 = vmin.f32 %v8980, 0.0
        %v9125 = vmin.f32 %v8981, 0.0
        %v9126 = vmin.f32 %v8982, 0.0
        %v9127 = vmin.f32 %v8983, 0.0
        %v9128 = vmin.f32 %v8984, 0.0
        %v9129 = vmin.f32 %v8985, 0.0
        %v9130 = vmin.f32 %v8986, 0.0
        %v9131 = vmin.f32 %v8987, 0.0
        %v9132 = vmin.f32 %v8988, 0.0
        %v9133 = vmin.f32 %v8989, 0.0
        %v9134 = vmin.f32 %v8990, 0.0
        %v9135 = vmin.f32 %v8991, 0.0
        %v9136 = vmin.f32 %v8992, 0.0
        %v9137 = vmin.f32 %v8993, 0.0
        %v9138 = vmin.f32 %v8994, 0.0
        %v9139 = vmin.f32 %v8995, 0.0
        %v9140 = vmin.f32 %v8996, 0.0
        %v9141 = vmin.f32 %v8997, 0.0
        %v9142 = vmin.f32 %v8998, 0.0
        %v9143 = vmin.f32 %v8999, 0.0
        %v9144 = vmin.f32 %v9000, 0.0
        %v9145 = vmin.f32 %v9001, 0.0
        %v9146 = vmin.f32 %v9002, 0.0
        %v9147 = vmin.f32 %v9003, 0.0
        %v9148 = vmin.f32 %v9004, 0.0
        %v9149 = vmin.f32 %v9005, 0.0
        %v9150 = vmin.f32 %v9006, 0.0
        %v9151 = vmin.f32 %v9007, 0.0
        %v9152 = vmin.f32 %v9008, 0.0
        %v9153 = vmin.f32 %v9009, 0.0
        %v9154 = vmin.f32 %v9010, 0.0
        %v9155 = vmin.f32 %v9011, 0.0
        %v9156 = vmin.f32 %v9012, 0.0
        %v9157 = vmin.f32 %v9013, 0.0
        %v9158 = vmin.f32 %v9014, 0.0
        %v9159 = vmin.f32 %v9015, 0.0
        %v9160 = vmin.f32 %v9016, 0.0
        %v9161 = vmin.f32 %v9017, 0.0
        %v9162 = vmin.f32 %v9018, 0.0
        %v9163 = vmin.f32 %v9019, 0.0
        %v9164 = vmul.f32 %v9092, 1.442695
        %v9165 = vpow.pop %v9164
        %v9166 = vmul.f32 %v9093, 1.442695
        %v9167 = vpow.pop %v9166
        %v9168 = vmul.f32 %v9094, 1.442695
        %v9169 = vpow.pop %v9168
        %v9170 = vmul.f32 %v9095, 1.442695
        %v9171 = vpow.pop %v9170
        %v9172 = vmul.f32 %v9096, 1.442695
        %v9173 = vpow.pop %v9172
        %v9174 = vmul.f32 %v9097, 1.442695
        %v9175 = vpow.pop %v9174
        %v9176 = vmul.f32 %v9098, 1.442695
        %v9177 = vpow.pop %v9176
        %v9178 = vmul.f32 %v9099, 1.442695
        %v9179 = vpow.pop %v9178
        %v9180 = vmul.f32 %v9100, 1.442695
        %v9181 = vpow.pop %v9180
        %v9182 = vmul.f32 %v9101, 1.442695
        %v9183 = vpow.pop %v9182
        %v9184 = vmul.f32 %v9102, 1.442695
        %v9185 = vpow.pop %v9184
        %v9186 = vmul.f32 %v9103, 1.442695
        %v9187 = vpow.pop %v9186
        %v9188 = vmul.f32 %v9104, 1.442695
        %v9189 = vpow.pop %v9188
        %v9190 = vmul.f32 %v9105, 1.442695
        %v9191 = vpow.pop %v9190
        %v9192 = vmul.f32 %v9106, 1.442695
        %v9193 = vpow.pop %v9192
        %v9194 = vmul.f32 %v9107, 1.442695
        %v9195 = vpow.pop %v9194
        %v9196 = vmul.f32 %v9108, 1.442695
        %v9197 = vpow.pop %v9196
        %v9198 = vmul.f32 %v9109, 1.442695
        %v9199 = vpow.pop %v9198
        %v9200 = vmul.f32 %v9110, 1.442695
        %v9201 = vpow.pop %v9200
        %v9202 = vmul.f32 %v9111, 1.442695
        %v9203 = vpow.pop %v9202
        %v9204 = vmul.f32 %v9112, 1.442695
        %v9205 = vpow.pop %v9204
        %v9206 = vmul.f32 %v9113, 1.442695
        %v9207 = vpow.pop %v9206
        %v9208 = vmul.f32 %v9114, 1.442695
        %v9209 = vpow.pop %v9208
        %v9210 = vmul.f32 %v9115, 1.442695
        %v9211 = vpow.pop %v9210
        %v9212 = vmul.f32 %v9116, 1.442695
        %v9213 = vpow.pop %v9212
        %v9214 = vmul.f32 %v9117, 1.442695
        %v9215 = vpow.pop %v9214
        %v9216 = vmul.f32 %v9118, 1.442695
        %v9217 = vpow.pop %v9216
        %v9218 = vmul.f32 %v9119, 1.442695
        %v9219 = vpow.pop %v9218
        %v9220 = vmul.f32 %v9120, 1.442695
        %v9221 = vpow.pop %v9220
        %v9222 = vmul.f32 %v9121, 1.442695
        %v9223 = vpow.pop %v9222
        %v9224 = vmul.f32 %v9122, 1.442695
        %v9225 = vpow.pop %v9224
        %v9226 = vmul.f32 %v9123, 1.442695
        %v9227 = vpow.pop %v9226
        %v9228 = vmul.f32 %v9124, 1.442695
        %v9229 = vpow.pop %v9228
        %v9230 = vmul.f32 %v9125, 1.442695
        %v9231 = vpow.pop %v9230
        %v9232 = vmul.f32 %v9126, 1.442695
        %v9233 = vpow.pop %v9232
        %v9234 = vmul.f32 %v9127, 1.442695
        %v9235 = vpow.pop %v9234
        %v9236 = vmul.f32 %v9128, 1.442695
        %v9237 = vpow.pop %v9236
        %v9238 = vmul.f32 %v9129, 1.442695
        %v9239 = vpow.pop %v9238
        %v9240 = vmul.f32 %v9130, 1.442695
        %v9241 = vpow.pop %v9240
        %v9242 = vmul.f32 %v9131, 1.442695
        %v9243 = vpow.pop %v9242
        %v9244 = vmul.f32 %v9132, 1.442695
        %v9245 = vpow.pop %v9244
        %v9246 = vmul.f32 %v9133, 1.442695
        %v9247 = vpow.pop %v9246
        %v9248 = vmul.f32 %v9134, 1.442695
        %v9249 = vpow.pop %v9248
        %v9250 = vmul.f32 %v9135, 1.442695
        %v9251 = vpow.pop %v9250
        %v9252 = vmul.f32 %v9136, 1.442695
        %v9253 = vpow.pop %v9252
        %v9254 = vmul.f32 %v9137, 1.442695
        %v9255 = vpow.pop %v9254
        %v9256 = vmul.f32 %v9138, 1.442695
        %v9257 = vpow.pop %v9256
        %v9258 = vmul.f32 %v9139, 1.442695
        %v9259 = vpow.pop %v9258
        %v9260 = vmul.f32 %v9140, 1.442695
        %v9261 = vpow.pop %v9260
        %v9262 = vmul.f32 %v9141, 1.442695
        %v9263 = vpow.pop %v9262
        %v9264 = vmul.f32 %v9142, 1.442695
        %v9265 = vpow.pop %v9264
        %v9266 = vmul.f32 %v9143, 1.442695
        %v9267 = vpow.pop %v9266
        %v9268 = vmul.f32 %v9144, 1.442695
        %v9269 = vpow.pop %v9268
        %v9270 = vmul.f32 %v9145, 1.442695
        %v9271 = vpow.pop %v9270
        %v9272 = vmul.f32 %v9146, 1.442695
        %v9273 = vpow.pop %v9272
        %v9274 = vmul.f32 %v9147, 1.442695
        %v9275 = vpow.pop %v9274
        %v9276 = vmul.f32 %v9148, 1.442695
        %v9277 = vpow.pop %v9276
        %v9278 = vmul.f32 %v9149, 1.442695
        %v9279 = vpow.pop %v9278
        %v9280 = vmul.f32 %v9150, 1.442695
        %v9281 = vpow.pop %v9280
        %v9282 = vmul.f32 %v9151, 1.442695
        %v9283 = vpow.pop %v9282
        %v9284 = vmul.f32 %v9152, 1.442695
        %v9285 = vpow.pop %v9284
        %v9286 = vmul.f32 %v9153, 1.442695
        %v9287 = vpow.pop %v9286
        %v9288 = vmul.f32 %v9154, 1.442695
        %v9289 = vpow.pop %v9288
        %v9290 = vmul.f32 %v9155, 1.442695
        %v9291 = vpow.pop %v9290
        %v9292 = vmul.f32 %v9156, 1.442695
        %v9293 = vpow.pop %v9292
        %v9294 = vmul.f32 %v9157, 1.442695
        %v9295 = vpow.pop %v9294
        %v9296 = vmul.f32 %v9158, 1.442695
        %v9297 = vpow.pop %v9296
        %v9298 = vmul.f32 %v9159, 1.442695
        %v9299 = vpow.pop %v9298
        %v9300 = vmul.f32 %v9160, 1.442695
        %v9301 = vpow.pop %v9300
        %v9302 = vmul.f32 %v9161, 1.442695
        %v9303 = vpow.pop %v9302
        %v9304 = vmul.f32 %v9162, 1.442695
        %v9305 = vpow.pop %v9304
        %v9306 = vmul.f32 %v9163, 1.442695
        %v9307 = vpow.pop %v9306
        %v9308 = vsub.f32 %v9165, 1.0
        %v9309 = vsub.f32 %v9167, 1.0
        %v9310 = vsub.f32 %v9169, 1.0
        %v9311 = vsub.f32 %v9171, 1.0
        %v9312 = vsub.f32 %v9173, 1.0
        %v9313 = vsub.f32 %v9175, 1.0
        %v9314 = vsub.f32 %v9177, 1.0
        %v9315 = vsub.f32 %v9179, 1.0
        %v9316 = vsub.f32 %v9181, 1.0
        %v9317 = vsub.f32 %v9183, 1.0
        %v9318 = vsub.f32 %v9185, 1.0
        %v9319 = vsub.f32 %v9187, 1.0
        %v9320 = vsub.f32 %v9189, 1.0
        %v9321 = vsub.f32 %v9191, 1.0
        %v9322 = vsub.f32 %v9193, 1.0
        %v9323 = vsub.f32 %v9195, 1.0
        %v9324 = vsub.f32 %v9197, 1.0
        %v9325 = vsub.f32 %v9199, 1.0
        %v9326 = vsub.f32 %v9201, 1.0
        %v9327 = vsub.f32 %v9203, 1.0
        %v9328 = vsub.f32 %v9205, 1.0
        %v9329 = vsub.f32 %v9207, 1.0
        %v9330 = vsub.f32 %v9209, 1.0
        %v9331 = vsub.f32 %v9211, 1.0
        %v9332 = vsub.f32 %v9213, 1.0
        %v9333 = vsub.f32 %v9215, 1.0
        %v9334 = vsub.f32 %v9217, 1.0
        %v9335 = vsub.f32 %v9219, 1.0
        %v9336 = vsub.f32 %v9221, 1.0
        %v9337 = vsub.f32 %v9223, 1.0
        %v9338 = vsub.f32 %v9225, 1.0
        %v9339 = vsub.f32 %v9227, 1.0
        %v9340 = vsub.f32 %v9229, 1.0
        %v9341 = vsub.f32 %v9231, 1.0
        %v9342 = vsub.f32 %v9233, 1.0
        %v9343 = vsub.f32 %v9235, 1.0
        %v9344 = vsub.f32 %v9237, 1.0
        %v9345 = vsub.f32 %v9239, 1.0
        %v9346 = vsub.f32 %v9241, 1.0
        %v9347 = vsub.f32 %v9243, 1.0
        %v9348 = vsub.f32 %v9245, 1.0
        %v9349 = vsub.f32 %v9247, 1.0
        %v9350 = vsub.f32 %v9249, 1.0
        %v9351 = vsub.f32 %v9251, 1.0
        %v9352 = vsub.f32 %v9253, 1.0
        %v9353 = vsub.f32 %v9255, 1.0
        %v9354 = vsub.f32 %v9257, 1.0
        %v9355 = vsub.f32 %v9259, 1.0
        %v9356 = vsub.f32 %v9261, 1.0
        %v9357 = vsub.f32 %v9263, 1.0
        %v9358 = vsub.f32 %v9265, 1.0
        %v9359 = vsub.f32 %v9267, 1.0
        %v9360 = vsub.f32 %v9269, 1.0
        %v9361 = vsub.f32 %v9271, 1.0
        %v9362 = vsub.f32 %v9273, 1.0
        %v9363 = vsub.f32 %v9275, 1.0
        %v9364 = vsub.f32 %v9277, 1.0
        %v9365 = vsub.f32 %v9279, 1.0
        %v9366 = vsub.f32 %v9281, 1.0
        %v9367 = vsub.f32 %v9283, 1.0
        %v9368 = vsub.f32 %v9285, 1.0
        %v9369 = vsub.f32 %v9287, 1.0
        %v9370 = vsub.f32 %v9289, 1.0
        %v9371 = vsub.f32 %v9291, 1.0
        %v9372 = vsub.f32 %v9293, 1.0
        %v9373 = vsub.f32 %v9295, 1.0
        %v9374 = vsub.f32 %v9297, 1.0
        %v9375 = vsub.f32 %v9299, 1.0
        %v9376 = vsub.f32 %v9301, 1.0
        %v9377 = vsub.f32 %v9303, 1.0
        %v9378 = vsub.f32 %v9305, 1.0
        %v9379 = vsub.f32 %v9307, 1.0
        %v9380 = vsel %vm9020, %v8948, %v9308
        %v9381 = vsel %vm9021, %v8949, %v9309
        %v9382 = vsel %vm9022, %v8950, %v9310
        %v9383 = vsel %vm9023, %v8951, %v9311
        %v9384 = vsel %vm9024, %v8952, %v9312
        %v9385 = vsel %vm9025, %v8953, %v9313
        %v9386 = vsel %vm9026, %v8954, %v9314
        %v9387 = vsel %vm9027, %v8955, %v9315
        %v9388 = vsel %vm9028, %v8956, %v9316
        %v9389 = vsel %vm9029, %v8957, %v9317
        %v9390 = vsel %vm9030, %v8958, %v9318
        %v9391 = vsel %vm9031, %v8959, %v9319
        %v9392 = vsel %vm9032, %v8960, %v9320
        %v9393 = vsel %vm9033, %v8961, %v9321
        %v9394 = vsel %vm9034, %v8962, %v9322
        %v9395 = vsel %vm9035, %v8963, %v9323
        %v9396 = vsel %vm9036, %v8964, %v9324
        %v9397 = vsel %vm9037, %v8965, %v9325
        %v9398 = vsel %vm9038, %v8966, %v9326
        %v9399 = vsel %vm9039, %v8967, %v9327
        %v9400 = vsel %vm9040, %v8968, %v9328
        %v9401 = vsel %vm9041, %v8969, %v9329
        %v9402 = vsel %vm9042, %v8970, %v9330
        %v9403 = vsel %vm9043, %v8971, %v9331
        %v9404 = vsel %vm9044, %v8972, %v9332
        %v9405 = vsel %vm9045, %v8973, %v9333
        %v9406 = vsel %vm9046, %v8974, %v9334
        %v9407 = vsel %vm9047, %v8975, %v9335
        %v9408 = vsel %vm9048, %v8976, %v9336
        %v9409 = vsel %vm9049, %v8977, %v9337
        %v9410 = vsel %vm9050, %v8978, %v9338
        %v9411 = vsel %vm9051, %v8979, %v9339
        %v9412 = vsel %vm9052, %v8980, %v9340
        %v9413 = vsel %vm9053, %v8981, %v9341
        %v9414 = vsel %vm9054, %v8982, %v9342
        %v9415 = vsel %vm9055, %v8983, %v9343
        %v9416 = vsel %vm9056, %v8984, %v9344
        %v9417 = vsel %vm9057, %v8985, %v9345
        %v9418 = vsel %vm9058, %v8986, %v9346
        %v9419 = vsel %vm9059, %v8987, %v9347
        %v9420 = vsel %vm9060, %v8988, %v9348
        %v9421 = vsel %vm9061, %v8989, %v9349
        %v9422 = vsel %vm9062, %v8990, %v9350
        %v9423 = vsel %vm9063, %v8991, %v9351
        %v9424 = vsel %vm9064, %v8992, %v9352
        %v9425 = vsel %vm9065, %v8993, %v9353
        %v9426 = vsel %vm9066, %v8994, %v9354
        %v9427 = vsel %vm9067, %v8995, %v9355
        %v9428 = vsel %vm9068, %v8996, %v9356
        %v9429 = vsel %vm9069, %v8997, %v9357
        %v9430 = vsel %vm9070, %v8998, %v9358
        %v9431 = vsel %vm9071, %v8999, %v9359
        %v9432 = vsel %vm9072, %v9000, %v9360
        %v9433 = vsel %vm9073, %v9001, %v9361
        %v9434 = vsel %vm9074, %v9002, %v9362
        %v9435 = vsel %vm9075, %v9003, %v9363
        %v9436 = vsel %vm9076, %v9004, %v9364
        %v9437 = vsel %vm9077, %v9005, %v9365
        %v9438 = vsel %vm9078, %v9006, %v9366
        %v9439 = vsel %vm9079, %v9007, %v9367
        %v9440 = vsel %vm9080, %v9008, %v9368
        %v9441 = vsel %vm9081, %v9009, %v9369
        %v9442 = vsel %vm9082, %v9010, %v9370
        %v9443 = vsel %vm9083, %v9011, %v9371
        %v9444 = vsel %vm9084, %v9012, %v9372
        %v9445 = vsel %vm9085, %v9013, %v9373
        %v9446 = vsel %vm9086, %v9014, %v9374
        %v9447 = vsel %vm9087, %v9015, %v9375
        %v9448 = vsel %vm9088, %v9016, %v9376
        %v9449 = vsel %vm9089, %v9017, %v9377
        %v9450 = vsel %vm9090, %v9018, %v9378
        %v9451 = vsel %vm9091, %v9019, %v9379
        %v9452 = vsel %vm194, 1, 0
        %v9453 = vlaneseq
        %v9454 = vshrl.u32 %v9453, 7
        %v9455 = vsub.s32 0, %v9454
        %v9456 = vrot.slane %v9452, %v9455
        %v9457 = vlaneseq
        %v9458 = vshrl.u32 %v9457, 7
        %v9459 = vsub.s32 1, %v9458
        %v9460 = vrot.slane %v9452, %v9459
        %v9461 = vlaneseq
        %v9462 = vshrl.u32 %v9461, 7
        %v9463 = vsub.s32 2, %v9462
        %v9464 = vrot.slane %v9452, %v9463
        %v9465 = vlaneseq
        %v9466 = vshrl.u32 %v9465, 7
        %v9467 = vsub.s32 3, %v9466
        %v9468 = vrot.slane %v9452, %v9467
        %v9469 = vlaneseq
        %v9470 = vshrl.u32 %v9469, 7
        %v9471 = vsub.s32 4, %v9470
        %v9472 = vrot.slane %v9452, %v9471
        %v9473 = vlaneseq
        %v9474 = vshrl.u32 %v9473, 7
        %v9475 = vsub.s32 5, %v9474
        %v9476 = vrot.slane %v9452, %v9475
        %v9477 = vlaneseq
        %v9478 = vshrl.u32 %v9477, 7
        %v9479 = vsub.s32 6, %v9478
        %v9480 = vrot.slane %v9452, %v9479
        %v9481 = vlaneseq
        %v9482 = vshrl.u32 %v9481, 7
        %v9483 = vsub.s32 7, %v9482
        %v9484 = vrot.slane %v9452, %v9483
        %vm9485 = vcmp.eq.s32.totalorder %v9456, 1
        %vm9486 = vcmp.eq.s32.totalorder %v9460, 1
        %vm9487 = vcmp.eq.s32.totalorder %v9464, 1
        %vm9488 = vcmp.eq.s32.totalorder %v9468, 1
        %vm9489 = vcmp.eq.s32.totalorder %v9472, 1
        %vm9490 = vcmp.eq.s32.totalorder %v9476, 1
        %vm9491 = vcmp.eq.s32.totalorder %v9480, 1
        %vm9492 = vcmp.eq.s32.totalorder %v9484, 1
        %9565 = vrot.lane.b32.xlu0 %v9380, 101
        %v9566 = vpop.permute.xlu0 %9565
        %9567 = vrot.lane.b32.xlu0 %v9381, 101
        %v9568 = vpop.permute.xlu0 %9567
        %9569 = vrot.lane.b32.xlu0 %v9382, 101
        %v9570 = vpop.permute.xlu0 %9569
        %9571 = vrot.lane.b32.xlu0 %v9383, 101
        %v9572 = vpop.permute.xlu0 %9571
        %9573 = vrot.lane.b32.xlu0 %v9384, 101
        %v9574 = vpop.permute.xlu0 %9573
        %9575 = vrot.lane.b32.xlu0 %v9385, 101
        %v9576 = vpop.permute.xlu0 %9575
        %9577 = vrot.lane.b32.xlu0 %v9386, 101
        %v9578 = vpop.permute.xlu0 %9577
        %9579 = vrot.lane.b32.xlu0 %v9387, 101
        %v9580 = vpop.permute.xlu0 %9579
        %9581 = vrot.lane.b32.xlu0 %v9388, 101
        %v9582 = vpop.permute.xlu0 %9581
        %9583 = vrot.lane.b32.xlu0 %v9389, 101
        %v9584 = vpop.permute.xlu0 %9583
        %9585 = vrot.lane.b32.xlu0 %v9390, 101
        %v9586 = vpop.permute.xlu0 %9585
        %9587 = vrot.lane.b32.xlu0 %v9391, 101
        %v9588 = vpop.permute.xlu0 %9587
        %9589 = vrot.lane.b32.xlu0 %v9392, 101
        %v9590 = vpop.permute.xlu0 %9589
        %9591 = vrot.lane.b32.xlu0 %v9393, 101
        %v9592 = vpop.permute.xlu0 %9591
        %9593 = vrot.lane.b32.xlu0 %v9394, 101
        %v9594 = vpop.permute.xlu0 %9593
        %9595 = vrot.lane.b32.xlu0 %v9395, 101
        %v9596 = vpop.permute.xlu0 %9595
        %9597 = vrot.lane.b32.xlu0 %v9396, 101
        %v9598 = vpop.permute.xlu0 %9597
        %9599 = vrot.lane.b32.xlu0 %v9397, 101
        %v9600 = vpop.permute.xlu0 %9599
        %9601 = vrot.lane.b32.xlu0 %v9398, 101
        %v9602 = vpop.permute.xlu0 %9601
        %9603 = vrot.lane.b32.xlu0 %v9399, 101
        %v9604 = vpop.permute.xlu0 %9603
        %9605 = vrot.lane.b32.xlu0 %v9400, 101
        %v9606 = vpop.permute.xlu0 %9605
        %9607 = vrot.lane.b32.xlu0 %v9401, 101
        %v9608 = vpop.permute.xlu0 %9607
        %9609 = vrot.lane.b32.xlu0 %v9402, 101
        %v9610 = vpop.permute.xlu0 %9609
        %9611 = vrot.lane.b32.xlu0 %v9403, 101
        %v9612 = vpop.permute.xlu0 %9611
        %9613 = vrot.lane.b32.xlu0 %v9404, 101
        %v9614 = vpop.permute.xlu0 %9613
        %9615 = vrot.lane.b32.xlu0 %v9405, 101
        %v9616 = vpop.permute.xlu0 %9615
        %9617 = vrot.lane.b32.xlu0 %v9406, 101
        %v9618 = vpop.permute.xlu0 %9617
        %9619 = vrot.lane.b32.xlu0 %v9407, 101
        %v9620 = vpop.permute.xlu0 %9619
        %9621 = vrot.lane.b32.xlu0 %v9408, 101
        %v9622 = vpop.permute.xlu0 %9621
        %9623 = vrot.lane.b32.xlu0 %v9409, 101
        %v9624 = vpop.permute.xlu0 %9623
        %9625 = vrot.lane.b32.xlu0 %v9410, 101
        %v9626 = vpop.permute.xlu0 %9625
        %9627 = vrot.lane.b32.xlu0 %v9411, 101
        %v9628 = vpop.permute.xlu0 %9627
        %9629 = vrot.lane.b32.xlu0 %v9412, 101
        %v9630 = vpop.permute.xlu0 %9629
        %9631 = vrot.lane.b32.xlu0 %v9413, 101
        %v9632 = vpop.permute.xlu0 %9631
        %9633 = vrot.lane.b32.xlu0 %v9414, 101
        %v9634 = vpop.permute.xlu0 %9633
        %9635 = vrot.lane.b32.xlu0 %v9415, 101
        %v9636 = vpop.permute.xlu0 %9635
        %9637 = vrot.lane.b32.xlu0 %v9416, 101
        %v9638 = vpop.permute.xlu0 %9637
        %9639 = vrot.lane.b32.xlu0 %v9417, 101
        %v9640 = vpop.permute.xlu0 %9639
        %9641 = vrot.lane.b32.xlu0 %v9418, 101
        %v9642 = vpop.permute.xlu0 %9641
        %9643 = vrot.lane.b32.xlu0 %v9419, 101
        %v9644 = vpop.permute.xlu0 %9643
        %9645 = vrot.lane.b32.xlu0 %v9420, 101
        %v9646 = vpop.permute.xlu0 %9645
        %9647 = vrot.lane.b32.xlu0 %v9421, 101
        %v9648 = vpop.permute.xlu0 %9647
        %9649 = vrot.lane.b32.xlu0 %v9422, 101
        %v9650 = vpop.permute.xlu0 %9649
        %9651 = vrot.lane.b32.xlu0 %v9423, 101
        %v9652 = vpop.permute.xlu0 %9651
        %9653 = vrot.lane.b32.xlu0 %v9424, 101
        %v9654 = vpop.permute.xlu0 %9653
        %9655 = vrot.lane.b32.xlu0 %v9425, 101
        %v9656 = vpop.permute.xlu0 %9655
        %9657 = vrot.lane.b32.xlu0 %v9426, 101
        %v9658 = vpop.permute.xlu0 %9657
        %9659 = vrot.lane.b32.xlu0 %v9427, 101
        %v9660 = vpop.permute.xlu0 %9659
        %9661 = vrot.lane.b32.xlu0 %v9428, 101
        %v9662 = vpop.permute.xlu0 %9661
        %9663 = vrot.lane.b32.xlu0 %v9429, 101
        %v9664 = vpop.permute.xlu0 %9663
        %9665 = vrot.lane.b32.xlu0 %v9430, 101
        %v9666 = vpop.permute.xlu0 %9665
        %9667 = vrot.lane.b32.xlu0 %v9431, 101
        %v9668 = vpop.permute.xlu0 %9667
        %9669 = vrot.lane.b32.xlu0 %v9432, 101
        %v9670 = vpop.permute.xlu0 %9669
        %9671 = vrot.lane.b32.xlu0 %v9433, 101
        %v9672 = vpop.permute.xlu0 %9671
        %9673 = vrot.lane.b32.xlu0 %v9434, 101
        %v9674 = vpop.permute.xlu0 %9673
        %9675 = vrot.lane.b32.xlu0 %v9435, 101
        %v9676 = vpop.permute.xlu0 %9675
        %9677 = vrot.lane.b32.xlu0 %v9436, 101
        %v9678 = vpop.permute.xlu0 %9677
        %9679 = vrot.lane.b32.xlu0 %v9437, 101
        %v9680 = vpop.permute.xlu0 %9679
        %9681 = vrot.lane.b32.xlu0 %v9438, 101
        %v9682 = vpop.permute.xlu0 %9681
        %9683 = vrot.lane.b32.xlu0 %v9439, 101
        %v9684 = vpop.permute.xlu0 %9683
        %9685 = vrot.lane.b32.xlu0 %v9440, 101
        %v9686 = vpop.permute.xlu0 %9685
        %9687 = vrot.lane.b32.xlu0 %v9441, 101
        %v9688 = vpop.permute.xlu0 %9687
        %9689 = vrot.lane.b32.xlu0 %v9442, 101
        %v9690 = vpop.permute.xlu0 %9689
        %9691 = vrot.lane.b32.xlu0 %v9443, 101
        %v9692 = vpop.permute.xlu0 %9691
        %9693 = vrot.lane.b32.xlu0 %v9444, 101
        %v9694 = vpop.permute.xlu0 %9693
        %9695 = vrot.lane.b32.xlu0 %v9445, 101
        %v9696 = vpop.permute.xlu0 %9695
        %9697 = vrot.lane.b32.xlu0 %v9446, 101
        %v9698 = vpop.permute.xlu0 %9697
        %9699 = vrot.lane.b32.xlu0 %v9447, 101
        %v9700 = vpop.permute.xlu0 %9699
        %9701 = vrot.lane.b32.xlu0 %v9448, 101
        %v9702 = vpop.permute.xlu0 %9701
        %9703 = vrot.lane.b32.xlu0 %v9449, 101
        %v9704 = vpop.permute.xlu0 %9703
        %9705 = vrot.lane.b32.xlu0 %v9450, 101
        %v9706 = vpop.permute.xlu0 %9705
        %9707 = vrot.lane.b32.xlu0 %v9451, 101
        %v9708 = vpop.permute.xlu0 %9707
        %vm9709 = vcmask 826368
        %v9710 = vsel %vm9709, %v9566, %v9568
        %v9711 = vsel %vm9709, %v9568, %v9570
        %v9712 = vsel %vm9709, %v9570, %v9572
        %v9713 = vsel %vm9709, %v9572, %v9574
        %v9714 = vsel %vm9709, %v9574, %v9576
        %v9715 = vsel %vm9709, %v9576, %v9578
        %v9716 = vsel %vm9709, %v9578, %v9580
        %v9717 = vsel %vm9709, %v9580, %v9582
        %v9718 = vsel %vm9709, %v9584, %v9586
        %v9719 = vsel %vm9709, %v9586, %v9588
        %v9720 = vsel %vm9709, %v9588, %v9590
        %v9721 = vsel %vm9709, %v9590, %v9592
        %v9722 = vsel %vm9709, %v9592, %v9594
        %v9723 = vsel %vm9709, %v9594, %v9596
        %v9724 = vsel %vm9709, %v9596, %v9598
        %v9725 = vsel %vm9709, %v9598, %v9600
        %v9726 = vsel %vm9709, %v9602, %v9604
        %v9727 = vsel %vm9709, %v9604, %v9606
        %v9728 = vsel %vm9709, %v9606, %v9608
        %v9729 = vsel %vm9709, %v9608, %v9610
        %v9730 = vsel %vm9709, %v9610, %v9612
        %v9731 = vsel %vm9709, %v9612, %v9614
        %v9732 = vsel %vm9709, %v9614, %v9616
        %v9733 = vsel %vm9709, %v9616, %v9618
        %v9734 = vsel %vm9709, %v9620, %v9622
        %v9735 = vsel %vm9709, %v9622, %v9624
        %v9736 = vsel %vm9709, %v9624, %v9626
        %v9737 = vsel %vm9709, %v9626, %v9628
        %v9738 = vsel %vm9709, %v9628, %v9630
        %v9739 = vsel %vm9709, %v9630, %v9632
        %v9740 = vsel %vm9709, %v9632, %v9634
        %v9741 = vsel %vm9709, %v9634, %v9636
        %v9742 = vsel %vm9709, %v9638, %v9640
        %v9743 = vsel %vm9709, %v9640, %v9642
        %v9744 = vsel %vm9709, %v9642, %v9644
        %v9745 = vsel %vm9709, %v9644, %v9646
        %v9746 = vsel %vm9709, %v9646, %v9648
        %v9747 = vsel %vm9709, %v9648, %v9650
        %v9748 = vsel %vm9709, %v9650, %v9652
        %v9749 = vsel %vm9709, %v9652, %v9654
        %v9750 = vsel %vm9709, %v9656, %v9658
        %v9751 = vsel %vm9709, %v9658, %v9660
        %v9752 = vsel %vm9709, %v9660, %v9662
        %v9753 = vsel %vm9709, %v9662, %v9664
        %v9754 = vsel %vm9709, %v9664, %v9666
        %v9755 = vsel %vm9709, %v9666, %v9668
        %v9756 = vsel %vm9709, %v9668, %v9670
        %v9757 = vsel %vm9709, %v9670, %v9672
        %v9758 = vsel %vm9709, %v9674, %v9676
        %v9759 = vsel %vm9709, %v9676, %v9678
        %v9760 = vsel %vm9709, %v9678, %v9680
        %v9761 = vsel %vm9709, %v9680, %v9682
        %v9762 = vsel %vm9709, %v9682, %v9684
        %v9763 = vsel %vm9709, %v9684, %v9686
        %v9764 = vsel %vm9709, %v9686, %v9688
        %v9765 = vsel %vm9709, %v9688, %v9690
        %v9766 = vsel %vm9709, %v9692, %v9694
        %v9767 = vsel %vm9709, %v9694, %v9696
        %v9768 = vsel %vm9709, %v9696, %v9698
        %v9769 = vsel %vm9709, %v9698, %v9700
        %v9770 = vsel %vm9709, %v9700, %v9702
        %v9771 = vsel %vm9709, %v9702, %v9704
        %v9772 = vsel %vm9709, %v9704, %v9706
        %v9773 = vsel %vm9709, %v9706, %v9708
        %v9838 = vsel %vm9485, %v9710, 0.0
        %v9839 = vsel %vm9486, %v9711, 0.0
        %v9840 = vsel %vm9487, %v9712, 0.0
        %v9841 = vsel %vm9488, %v9713, 0.0
        %v9842 = vsel %vm9489, %v9714, 0.0
        %v9843 = vsel %vm9490, %v9715, 0.0
        %v9844 = vsel %vm9491, %v9716, 0.0
        %v9845 = vsel %vm9492, %v9717, 0.0
        %v9846 = vsel %vm9485, %v9718, 0.0
        %v9847 = vsel %vm9486, %v9719, 0.0
        %v9848 = vsel %vm9487, %v9720, 0.0
        %v9849 = vsel %vm9488, %v9721, 0.0
        %v9850 = vsel %vm9489, %v9722, 0.0
        %v9851 = vsel %vm9490, %v9723, 0.0
        %v9852 = vsel %vm9491, %v9724, 0.0
        %v9853 = vsel %vm9492, %v9725, 0.0
        %v9854 = vsel %vm9485, %v9726, 0.0
        %v9855 = vsel %vm9486, %v9727, 0.0
        %v9856 = vsel %vm9487, %v9728, 0.0
        %v9857 = vsel %vm9488, %v9729, 0.0
        %v9858 = vsel %vm9489, %v9730, 0.0
        %v9859 = vsel %vm9490, %v9731, 0.0
        %v9860 = vsel %vm9491, %v9732, 0.0
        %v9861 = vsel %vm9492, %v9733, 0.0
        %v9862 = vsel %vm9485, %v9734, 0.0
        %v9863 = vsel %vm9486, %v9735, 0.0
        %v9864 = vsel %vm9487, %v9736, 0.0
        %v9865 = vsel %vm9488, %v9737, 0.0
        %v9866 = vsel %vm9489, %v9738, 0.0
        %v9867 = vsel %vm9490, %v9739, 0.0
        %v9868 = vsel %vm9491, %v9740, 0.0
        %v9869 = vsel %vm9492, %v9741, 0.0
        %v9870 = vsel %vm9485, %v9742, 0.0
        %v9871 = vsel %vm9486, %v9743, 0.0
        %v9872 = vsel %vm9487, %v9744, 0.0
        %v9873 = vsel %vm9488, %v9745, 0.0
        %v9874 = vsel %vm9489, %v9746, 0.0
        %v9875 = vsel %vm9490, %v9747, 0.0
        %v9876 = vsel %vm9491, %v9748, 0.0
        %v9877 = vsel %vm9492, %v9749, 0.0
        %v9878 = vsel %vm9485, %v9750, 0.0
        %v9879 = vsel %vm9486, %v9751, 0.0
        %v9880 = vsel %vm9487, %v9752, 0.0
        %v9881 = vsel %vm9488, %v9753, 0.0
        %v9882 = vsel %vm9489, %v9754, 0.0
        %v9883 = vsel %vm9490, %v9755, 0.0
        %v9884 = vsel %vm9491, %v9756, 0.0
        %v9885 = vsel %vm9492, %v9757, 0.0
        %v9886 = vsel %vm9485, %v9758, 0.0
        %v9887 = vsel %vm9486, %v9759, 0.0
        %v9888 = vsel %vm9487, %v9760, 0.0
        %v9889 = vsel %vm9488, %v9761, 0.0
        %v9890 = vsel %vm9489, %v9762, 0.0
        %v9891 = vsel %vm9490, %v9763, 0.0
        %v9892 = vsel %vm9491, %v9764, 0.0
        %v9893 = vsel %vm9492, %v9765, 0.0
        %v9894 = vsel %vm9485, %v9766, 0.0
        %v9895 = vsel %vm9486, %v9767, 0.0
        %v9896 = vsel %vm9487, %v9768, 0.0
        %v9897 = vsel %vm9488, %v9769, 0.0
        %v9898 = vsel %vm9489, %v9770, 0.0
        %v9899 = vsel %vm9490, %v9771, 0.0
        %v9900 = vsel %vm9491, %v9772, 0.0
        %v9901 = vsel %vm9492, %v9773, 0.0
        %9902 = vst [vmem:[%s188] sm:$0xff] %v9838
        %9903 = vst [vmem:[%s188 + $0x8] sm:$0xff] %v9839
        %9904 = vst [vmem:[%s188 + $0x10] sm:$0xff] %v9840
        %9905 = vst [vmem:[%s188 + $0x18] sm:$0xff] %v9841
        %9906 = vst [vmem:[%s188 + $0x20] sm:$0xff] %v9842
        %9907 = vst [vmem:[%s188 + $0x28] sm:$0xff] %v9843
        %9908 = vst [vmem:[%s188 + $0x30] sm:$0xff] %v9844
        %vm9909 = vcmask 850944
        %9910 = vst.msk [vmem:[%s188 + $0x38] sm:$0xff] %vm9909, %v9845
        %9911 = vst [vmem:[%s188 + $0x40] sm:$0xff] %v9846
        %9912 = vst [vmem:[%s188 + $0x48] sm:$0xff] %v9847
        %9913 = vst [vmem:[%s188 + $0x50] sm:$0xff] %v9848
        %9914 = vst [vmem:[%s188 + $0x58] sm:$0xff] %v9849
        %9915 = vst [vmem:[%s188 + $0x60] sm:$0xff] %v9850
        %9916 = vst [vmem:[%s188 + $0x68] sm:$0xff] %v9851
        %9917 = vst [vmem:[%s188 + $0x70] sm:$0xff] %v9852
        %9918 = vst.msk [vmem:[%s188 + $0x78] sm:$0xff] %vm9909, %v9853
        %9919 = vst [vmem:[%s188 + $0x80] sm:$0xff] %v9854
        %9920 = vst [vmem:[%s188 + $0x88] sm:$0xff] %v9855
        %9921 = vst [vmem:[%s188 + $0x90] sm:$0xff] %v9856
        %9922 = vst [vmem:[%s188 + $0x98] sm:$0xff] %v9857
        %9923 = vst [vmem:[%s188 + $0xa0] sm:$0xff] %v9858
        %9924 = vst [vmem:[%s188 + $0xa8] sm:$0xff] %v9859
        %9925 = vst [vmem:[%s188 + $0xb0] sm:$0xff] %v9860
        %9926 = vst.msk [vmem:[%s188 + $0xb8] sm:$0xff] %vm9909, %v9861
        %9927 = vst [vmem:[%s188 + $0xc0] sm:$0xff] %v9862
        %9928 = vst [vmem:[%s188 + $0xc8] sm:$0xff] %v9863
        %9929 = vst [vmem:[%s188 + $0xd0] sm:$0xff] %v9864
        %9930 = vst [vmem:[%s188 + $0xd8] sm:$0xff] %v9865
        %9931 = vst [vmem:[%s188 + $0xe0] sm:$0xff] %v9866
        %9932 = vst [vmem:[%s188 + $0xe8] sm:$0xff] %v9867
        %9933 = vst [vmem:[%s188 + $0xf0] sm:$0xff] %v9868
        %9934 = vst.msk [vmem:[%s188 + $0xf8] sm:$0xff] %vm9909, %v9869
        %9935 = vst [vmem:[%s188 + $0x100] sm:$0xff] %v9870
        %9936 = vst [vmem:[%s188 + $0x108] sm:$0xff] %v9871
        %9937 = vst [vmem:[%s188 + $0x110] sm:$0xff] %v9872
        %9938 = vst [vmem:[%s188 + $0x118] sm:$0xff] %v9873
        %9939 = vst [vmem:[%s188 + $0x120] sm:$0xff] %v9874
        %9940 = vst [vmem:[%s188 + $0x128] sm:$0xff] %v9875
        %9941 = vst [vmem:[%s188 + $0x130] sm:$0xff] %v9876
        %9942 = vst.msk [vmem:[%s188 + $0x138] sm:$0xff] %vm9909, %v9877
        %9943 = vst [vmem:[%s188 + $0x140] sm:$0xff] %v9878
        %9944 = vst [vmem:[%s188 + $0x148] sm:$0xff] %v9879
        %9945 = vst [vmem:[%s188 + $0x150] sm:$0xff] %v9880
        %9946 = vst [vmem:[%s188 + $0x158] sm:$0xff] %v9881
        %9947 = vst [vmem:[%s188 + $0x160] sm:$0xff] %v9882
        %9948 = vst [vmem:[%s188 + $0x168] sm:$0xff] %v9883
        %9949 = vst [vmem:[%s188 + $0x170] sm:$0xff] %v9884
        %9950 = vst.msk [vmem:[%s188 + $0x178] sm:$0xff] %vm9909, %v9885
        %9951 = vst [vmem:[%s188 + $0x180] sm:$0xff] %v9886
        %9952 = vst [vmem:[%s188 + $0x188] sm:$0xff] %v9887
        %9953 = vst [vmem:[%s188 + $0x190] sm:$0xff] %v9888
        %9954 = vst [vmem:[%s188 + $0x198] sm:$0xff] %v9889
        %9955 = vst [vmem:[%s188 + $0x1a0] sm:$0xff] %v9890
        %9956 = vst [vmem:[%s188 + $0x1a8] sm:$0xff] %v9891
        %9957 = vst [vmem:[%s188 + $0x1b0] sm:$0xff] %v9892
        %9958 = vst.msk [vmem:[%s188 + $0x1b8] sm:$0xff] %vm9909, %v9893
        %9959 = vst [vmem:[%s188 + $0x1c0] sm:$0xff] %v9894
        %9960 = vst [vmem:[%s188 + $0x1c8] sm:$0xff] %v9895
        %9961 = vst [vmem:[%s188 + $0x1d0] sm:$0xff] %v9896
        %9962 = vst [vmem:[%s188 + $0x1d8] sm:$0xff] %v9897
        %9963 = vst [vmem:[%s188 + $0x1e0] sm:$0xff] %v9898
        %9964 = vst [vmem:[%s188 + $0x1e8] sm:$0xff] %v9899
        %9965 = vst [vmem:[%s188 + $0x1f0] sm:$0xff] %v9900
        %9966 = vst.msk [vmem:[%s188 + $0x1f8] sm:$0xff] %vm9909, %v9901
        %s9967 = sand.u32 %s115, 1
        %s9968 = scalar_lea.sflag [#allocation4], %s9967
        %s9969 = sand.u32 %s115, 1
        %s9970 = smul.addr %s9969, 512
        %s9971 = scalar_lea.vmem [#allocation3], %s9970
        // Predicated region
        $region37: #{tpu_custom_call.1} parent=35 // pred_check
          %p9972 = pneg %p125
        $region38: #{tpu_custom_call.1} parent=35 // pred_check_branch
          %9974 = sbr.rel (%p9972) target = $region40
        $region39: #{tpu_custom_call.1} parent=35 // pred_region
          %s9976 = ssub.s32 8192, 8192
          %9977 = vsyncadd %s9968, %s9976
          %s9978 = smul.addr %s18, 64
          %s9979 = smul.addr %s9978, 128
          %s9980 = scalar_lea.hbm %s4, %s9979
          %s9981 = sshll.u32 %s9971, 4
          %s9982 = int_to_ptr.vmem [resolvable:$true] %s9981
          %9987 = dma.vmem_to_hbm [thread:$0]  %s9982, 8192, %s9980, %s9968, 1024, 1024, 64
        $region40: #{tpu_custom_call.1} parent=35 // pred_fallthru
          _
      $region36: #{tpu_custom_call.1} parent=5 // pred_fallthru
        _
      %p9988 = scmp.le.s32.totalorder 2, %s13
      // Predicated region
      $region41: #{tpu_custom_call.1} parent=5 // pred_check
        %p9989 = pneg %p9988
      $region42: #{tpu_custom_call.1} parent=5 // pred_check_branch
        %9991 = sbr.rel (%p9989) target = $region44
      $region43: #{tpu_custom_call.1} parent=5 // pred_region
        %s9992 = ssub.s32 %s13, 2
        // Predicated region
        $region45: #{tpu_custom_call.1} parent=43 // pred_check
          %p9993 = pneg %p131
        $region46: #{tpu_custom_call.1} parent=43 // pred_check_branch
          %9995 = sbr.rel (%p9993) target = $region48
        $region47: #{tpu_custom_call.1} parent=43 // pred_region
          %s9996 = sand.u32 %s116, 1
          %s9997 = scalar_lea.sflag [#allocation4], %s9996
          %s9998 = sand.u32 %s116, 1
          %s9999 = smul.addr %s9998, 512
          %s10000 = scalar_lea.vmem [#allocation3], %s9999
          %10001 = dma.done %s9997, 8192
        $region48: #{tpu_custom_call.1} parent=43 // pred_fallthru
          _
      $region44: #{tpu_custom_call.1} parent=5 // pred_fallthru
        _
    $region6: #{tpu_custom_call.1} parent=1 // loop_footer
      %s17 = sadd.s32 1, %s13
    $region7: #{tpu_custom_call.1} parent=1 // loop_footer_branch
      %12 = sbr.rel target = $region3
    $region8: #{tpu_custom_call.1} parent=1 // loop_exit
      _
    %10002 = vsyncpa [#allocation4], 1
    %s10003 = scalar_lea.sflag [#allocation4], 1
    %10004 = vsyncpa %s10003, 1

</llo_original>
